<compile_context>
chip_gen: v5e
topology: v5e:2x2
jax: 0.10.0
libtpu: 0.0.40
codegen_flags: <defaults>
</compile_context>

<pallas_src>
import functools

import jax
import jax.numpy as jnp
from jax.experimental import pallas as pl
from jax.experimental.pallas import tpu as pltpu

LATENT = 32          # latent_size
OUTPUT = 4           # output_size
NUM_LAYERS = 2       # num_layers -> MLP widths [32, 32, out] (3 linears)
MP_STEPS = 2         # message_passing_steps
LN_EPS = 1e-5        # torch.nn.LayerNorm default eps
PAD = 128            # lane-dense width for activations / weights / output


# ---------------------------------------------------------------------------
# Fused kernel
# ---------------------------------------------------------------------------

def _wblk(w_ref, i):
    """i-th (PAD, PAD) bf16 weight block of the weight slab (static slice)."""
    return w_ref[i * PAD:(i + 1) * PAD, :]


def _vrow(v_ref, i):
    """i-th (1, PAD) f32 bias / LayerNorm row of the vector slab."""
    return v_ref[i:i + 1, :]


def _fused_epd_kernel(nf_ref, ef_ref, idx_ref, w_ref, v_ref, o_ref, *, mp_steps):
    """Encoder -> mp_steps GraphNetBlocks -> Decoder for one graph-group."""
    f32, bf16 = jnp.float32, jnp.bfloat16
    N = nf_ref.shape[0]          # node rows in this group
    E = ef_ref.shape[0]          # edge rows in this group

    def mlp(pieces, wi, vi, layer_norm):
        """Linear-ReLU-Linear-ReLU-Linear (+ optional LayerNorm), 128-lane padded.

        torch.cat(..., dim=-1) is fused by row-splitting the first-layer weight
        across `pieces`.  MXU operands bf16, accumulation + VPU/EUP math f32.
        """
        h = _vrow(v_ref, vi)                                      # b0 (1, PAD)
        for k, piece in enumerate(pieces):
            h = h + jnp.dot(piece.astype(bf16), _wblk(w_ref, wi + k),
                            preferred_element_type=f32)
        h = jnp.maximum(h, 0.0)
        h = jnp.dot(h.astype(bf16), _wblk(w_ref, wi + len(pieces)),
                    preferred_element_type=f32) + _vrow(v_ref, vi + 1)
        h = jnp.maximum(h, 0.0)
        y = jnp.dot(h.astype(bf16), _wblk(w_ref, wi + len(pieces) + 1),
                    preferred_element_type=f32) + _vrow(v_ref, vi + 2)
        if layer_norm:
            # Lanes >= LATENT are exactly zero, so moments over the logical
            # 32-wide feature axis are sum(.)/LATENT and sum(.^2)/LATENT.
            mu = jnp.sum(y, axis=-1, keepdims=True) * (1.0 / LATENT)
            ms = jnp.sum(y * y, axis=-1, keepdims=True) * (1.0 / LATENT)
            inv = jax.lax.rsqrt(ms - mu * mu + LN_EPS)
            # gamma/beta rows are zero past LATENT -> padded lanes stay 0.
            y = (y - mu) * inv * _vrow(v_ref, vi + 3) + _vrow(v_ref, vi + 4)
        return y

    # One-hot gather / scatter-add matrices (group-local node ids), built once.
    snd = idx_ref[:, 0:1]                                        # (E, 1) int32
    rcv = idx_ref[:, 1:2]                                        # (E, 1) int32
    cols = jax.lax.broadcasted_iota(jnp.int32, (E, N), 1)
    snd_oh = (snd == cols).astype(f32).astype(bf16)              # (E, N) gather
    rcv_eq = (rcv == cols).astype(f32)
    rcv_oh = rcv_eq.astype(bf16)                                 # (E, N) gather
    scat_oh = jnp.transpose(rcv_eq).astype(bf16)                 # (N, E) scatter-add

    # --- Encoder (LayerNorm on) ---
    wi = vi = 0
    x = mlp([nf_ref[...]], wi, vi, True); wi += 3; vi += 5       # nodes (N, PAD)
    e = mlp([ef_ref[...]], wi, vi, True); wi += 3; vi += 5       # edges (E, PAD)

    # --- Processor: GraphNetBlocks with residual connections ---
    for _ in range(mp_steps):
        xb = x.astype(bf16)
        sender_f = jnp.dot(snd_oh, xb, preferred_element_type=f32)    # x[senders]
        receiver_f = jnp.dot(rcv_oh, xb, preferred_element_type=f32)  # x[receivers]
        # edge_model([sender | receiver | edge])  (cat fused via W0 row split)
        new_e = mlp([sender_f, receiver_f, e], wi, vi, True); wi += 5; vi += 5
        # unsorted_segment_sum(new_e, receivers, N)  -> aggregator='sum'
        agg = jnp.dot(scat_oh, new_e.astype(bf16), preferred_element_type=f32)
        # node_model([node | aggregated edges])
        new_x = mlp([x, agg], wi, vi, True); wi += 4; vi += 5
        x = x + new_x                            # residual on nodes (fused)
        e = e + new_e                            # residual on edges (fused)

    # --- Decoder (no LayerNorm); zero-padded to 128 lanes -> unmasked full vst ---
    o_ref[...] = mlp([x], wi, vi, False).astype(o_ref.dtype)


@functools.partial(jax.jit, static_argnames=("groups", "mp_steps"))
def encode_process_decode(node_feat, edge_feat, senders, receivers,
                          w_slab, v_slab, *, groups, mp_steps=MP_STEPS):
    """senders/receivers are group-LOCAL node indices (graphs never cross groups)."""
    N_total, node_dim = node_feat.shape
    E_total, edge_dim = edge_feat.shape
    Ng, Eg = N_total // groups, E_total // groups

    # Lane-dense zero-padded inputs (weight rows past the logical width are zero,
    # so padded lanes contribute nothing).
    nf = jnp.zeros((N_total, PAD), jnp.float32).at[:, :node_dim].set(node_feat)
    ef = jnp.zeros((E_total, PAD), jnp.float32).at[:, :edge_dim].set(edge_feat)
    # senders/receivers packed into ONE int32 input.
    idx = jnp.stack([senders, receivers], axis=-1).astype(jnp.int32)   # (E_total, 2)

    out = pl.pallas_call(
        functools.partial(_fused_epd_kernel, mp_steps=mp_steps),
        out_shape=jax.ShapeDtypeStruct((N_total, PAD), jnp.float32),
        grid=(groups,),
        in_specs=[
            pl.BlockSpec((Ng, PAD), lambda g: (g, 0)),
            pl.BlockSpec((Eg, PAD), lambda g: (g, 0)),
            pl.BlockSpec((Eg, 2), lambda g: (g, 0)),
            # Grid-invariant weight slabs: same block every step -> fetched once.
            pl.BlockSpec(w_slab.shape, lambda g: (0, 0)),
            pl.BlockSpec(v_slab.shape, lambda g: (0, 0)),
        ],
        out_specs=pl.BlockSpec((Ng, PAD), lambda g: (g, 0)),
        compiler_params=pltpu.CompilerParams(
            dimension_semantics=("parallel",)),   # shard groups across TCs on v7x
    )(nf, ef, idx, w_slab, v_slab)
    return out[:, :OUTPUT]


# ---------------------------------------------------------------------------
# Parameter construction & lane-dense slab packing
# ---------------------------------------------------------------------------

def init_mlp(key, din, dout):
    """widths = [LATENT]*NUM_LAYERS + [dout]  (matches _make_mlp / LazyMLP)."""
    dims = [din] + [LATENT] * NUM_LAYERS + [dout]
    keys = jax.random.split(key, len(dims) - 1)
    params = []
    for k, (a, b) in zip(keys, zip(dims[:-1], dims[1:])):
        kw, kb = jax.random.split(k)
        params.append(jax.random.normal(kw, (a, b), jnp.float32) / jnp.sqrt(a))
        params.append(jax.random.normal(kb, (1, b), jnp.float32) * 0.01)
    params.append(jnp.ones((1, dims[-1]), jnp.float32))     # LayerNorm gamma
    params.append(jnp.zeros((1, dims[-1]), jnp.float32))    # LayerNorm beta
    return tuple(params)


def init_model(key, node_dim, edge_dim):
    ks = jax.random.split(key, 3 + 2 * MP_STEPS)
    params = {
        "enc_node": init_mlp(ks[0], node_dim, LATENT),
        "enc_edge": init_mlp(ks[1], edge_dim, LATENT),
        "blocks": [],
        "dec": init_mlp(ks[2], LATENT, OUTPUT),
    }
    for s in range(MP_STEPS):
        params["blocks"].append({
            "edge": init_mlp(ks[3 + 2 * s], 3 * LATENT, LATENT),   # [s|r|e]
            "node": init_mlp(ks[4 + 2 * s], 2 * LATENT, LATENT),   # [x|agg]
        })
    return params


def pack_params(params):
    """Pack all weights/biases/LN params into two lane-dense slabs.

    w_slab : (num_blocks*128, 128) bf16 -- each logical weight (or row-split
             piece of a first-layer weight) embedded top-left of a zero block.
    v_slab : (rows_padded, 128) f32 -- biases and LayerNorm gamma/beta rows.
    """
    blocks, vrows = [], []

    def pad_w(w):
        return jnp.zeros((PAD, PAD), jnp.float32).at[:w.shape[0], :w.shape[1]].set(w)

    def pad_v(v):
        return jnp.zeros((1, PAD), jnp.float32).at[:, :v.shape[1]].set(v)

    def add_mlp(prm, piece_dims, layer_norm):
        w0, b0, w1, b1, w2, b2 = prm[:6]
        off = 0
        for d in piece_dims:                      # row-split of the cat'ed W0
            blocks.append(pad_w(w0[off:off + d, :])); off += d
        blocks.append(pad_w(w1)); blocks.append(pad_w(w2))
        vrows.extend([pad_v(b0), pad_v(b1), pad_v(b2)])
        if layer_norm:
            vrows.extend([pad_v(prm[6]), pad_v(prm[7])])

    add_mlp(params["enc_node"], [params["enc_node"][0].shape[0]], True)
    add_mlp(params["enc_edge"], [params["enc_edge"][0].shape[0]], True)
    for blk in params["blocks"]:
        add_mlp(blk["edge"], [LATENT, LATENT, LATENT], True)
        add_mlp(blk["node"], [LATENT, LATENT], True)
    add_mlp(params["dec"], [LATENT], False)

    w_slab = jnp.concatenate(blocks, axis=0).astype(jnp.bfloat16)
    v_slab = jnp.concatenate(vrows, axis=0)
    pad_rows = (-v_slab.shape[0]) % 8
    if pad_rows:
        v_slab = jnp.concatenate([v_slab, jnp.zeros((pad_rows, PAD), jnp.float32)], 0)
    return w_slab, v_slab


# ---------------------------------------------------------------------------
# Pure-JAX references (correctness check only)
# ---------------------------------------------------------------------------

def _mlp_ref(h, prm, layer_norm, emulate_bf16):
    w0, b0, w1, b1, w2, b2 = prm[:6]

    def dot(a, w):
        if emulate_bf16:
            return jnp.dot(a.astype(jnp.bfloat16), w.astype(jnp.bfloat16),
                           preferred_element_type=jnp.float32)
        return a @ w

    h = jax.nn.relu(dot(h, w0) + b0)
    h = jax.nn.relu(dot(h, w1) + b1)
    y = dot(h, w2) + b2
    if layer_norm:
        g, be = prm[6], prm[7]
        mu = y.mean(-1, keepdims=True)
        var = ((y - mu) ** 2).mean(-1, keepdims=True)
        y = (y - mu) / jnp.sqrt(var + LN_EPS) * g + be
    return y


def _reference(node_features, edge_features, senders, receivers, params,
               emulate_bf16=False):
    N = node_features.shape[0]
    rd = (lambda a: a.astype(jnp.bfloat16).astype(jnp.float32)) if emulate_bf16 \
        else (lambda a: a)
    x = _mlp_ref(node_features, params["enc_node"], True, emulate_bf16)
    e = _mlp_ref(edge_features, params["enc_edge"], True, emulate_bf16)
    for blk in params["blocks"]:
        xg = rd(x)
        s_f, r_f = xg[senders], xg[receivers]
        new_e = _mlp_ref(jnp.concatenate([s_f, r_f, e], -1), blk["edge"], True,
                         emulate_bf16)
        agg = jax.ops.segment_sum(rd(new_e), receivers, num_segments=N)
        new_x = _mlp_ref(jnp.concatenate([x, agg], -1), blk["node"], True,
                         emulate_bf16)
        x = x + new_x
        e = e + new_e
    return _mlp_ref(x, params["dec"], False, emulate_bf16)


# ---------------------------------------------------------------------------
# Main
# ---------------------------------------------------------------------------

if __name__ == "__main__":
    NUM_GRAPHS, GROUPS = 16, 2
    GRAPHS_PER_GROUP = NUM_GRAPHS // GROUPS
    NODES_PER_GRAPH, EDGES_PER_GRAPH = 16, 32
    NODE_DIM, EDGE_DIM = 12, 8
    N_TOTAL = NUM_GRAPHS * NODES_PER_GRAPH          # 256 node rows
    E_TOTAL = NUM_GRAPHS * EDGES_PER_GRAPH          # 512 edge rows

    key = jax.random.PRNGKey(0)
    k_nf, k_ef, k_s, k_r, k_p = jax.random.split(key, 5)

    node_features = jax.random.normal(k_nf, (N_TOTAL, NODE_DIM), jnp.float32)
    edge_features = jax.random.normal(k_ef, (E_TOTAL, EDGE_DIM), jnp.float32)
    s_loc = jax.random.randint(k_s, (NUM_GRAPHS, EDGES_PER_GRAPH), 0,
                               NODES_PER_GRAPH, jnp.int32)
    r_loc = jax.random.randint(k_r, (NUM_GRAPHS, EDGES_PER_GRAPH), 0,
                               NODES_PER_GRAPH, jnp.int32)
    gid = jnp.arange(NUM_GRAPHS, dtype=jnp.int32)[:, None]
    senders_global = (gid * NODES_PER_GRAPH + s_loc).reshape(-1)
    receivers_global = (gid * NODES_PER_GRAPH + r_loc).reshape(-1)
    senders_group = ((gid % GRAPHS_PER_GROUP) * NODES_PER_GRAPH + s_loc).reshape(-1)
    receivers_group = ((gid % GRAPHS_PER_GROUP) * NODES_PER_GRAPH + r_loc).reshape(-1)

    params = init_model(k_p, NODE_DIM, EDGE_DIM)
    w_slab, v_slab = pack_params(params)

    out = encode_process_decode(node_features, edge_features,
                                senders_group, receivers_group,
                                w_slab, v_slab, groups=GROUPS)
    jax.block_until_ready(out)
    assert out.shape == (N_TOTAL, OUTPUT) and out.dtype == jnp.float32
    assert bool(jnp.all(jnp.isfinite(out)))

    # (a) Reference with the same bf16 MXU-operand rounding -> must match tightly.
    ref_bf16 = _reference(node_features, edge_features, senders_global,
                          receivers_global, params, emulate_bf16=True)
    assert float(jnp.max(jnp.abs(out - ref_bf16))) < 1e-2, \
        "mismatch vs bf16-matched reference"

    # (b) Pure-f32 reference -> loose sanity bound on expected bf16 drift.
    ref_f32 = _reference(node_features, edge_features, senders_global,
                         receivers_global, params, emulate_bf16=False)
    rel = float(jnp.linalg.norm(out - ref_f32) / jnp.linalg.norm(ref_f32))
    assert rel < 0.1, f"bf16 drift vs f32 reference too large: {rel}"

    print("KERNEL_OK")
</pallas_src>

<mosaic_0001>
module attributes {stable_mosaic.version = 11 : i64} {
  func.func @_fused_epd_kernel(%arg0: i32, %arg1: memref<128x128xf32, #tpu.memory_space<vmem>>, %arg2: memref<256x128xf32, #tpu.memory_space<vmem>>, %arg3: memref<256x2xi32, #tpu.memory_space<vmem>>, %arg4: memref<3456x128xbf16, #tpu.memory_space<vmem>>, %arg5: memref<40x128xf32, #tpu.memory_space<vmem>>, %arg6: memref<128x128xf32, #tpu.memory_space<vmem>>) attributes {dimension_semantics = [#tpu.dimension_semantics<parallel>], iteration_bounds = array<i64: 2>, scalar_prefetch = 0 : i64, scratch_operands = 0 : i64, tpu.core_type = #tpu.core_type<tc>, window_params = [{transform_indices = @transform_0, window_bounds = array<i64: 128, 128>}, {transform_indices = @transform_1, window_bounds = array<i64: 256, 128>}, {transform_indices = @transform_2, window_bounds = array<i64: 256, 2>}, {pipeline_mode = #tpu.pipeline_mode<synchronous>, transform_indices = @transform_3, window_bounds = array<i64: 3456, 128>}, {pipeline_mode = #tpu.pipeline_mode<synchronous>, transform_indices = @transform_4, window_bounds = array<i64: 40, 128>}, {transform_indices = @transform_5, window_bounds = array<i64: 128, 128>}]} {
    %c0 = arith.constant 0 : index
    %c0_0 = arith.constant 0 : index
    %0 = vector.load %arg3[%c0, %c0_0] : memref<256x2xi32, #tpu.memory_space<vmem>>, vector<256x1xi32>
    %c0_1 = arith.constant 0 : index
    %c1 = arith.constant 1 : index
    %1 = vector.load %arg3[%c0_1, %c1] : memref<256x2xi32, #tpu.memory_space<vmem>>, vector<256x1xi32>
    %2 = tpu.iota {dimensions = array<i32: 1>} : vector<256x128xi32>
    %3 = vector.broadcast %0 : vector<256x1xi32> to vector<256x128xi32>
    %4 = arith.cmpi eq, %3, %2 : vector<256x128xi32>
    %5 = arith.extui %4 : vector<256x128xi1> to vector<256x128xi32>
    %6 = arith.sitofp %5 : vector<256x128xi32> to vector<256x128xf32>
    %7 = arith.truncf %6 : vector<256x128xf32> to vector<256x128xbf16>
    %8 = vector.broadcast %1 : vector<256x1xi32> to vector<256x128xi32>
    %9 = arith.cmpi eq, %8, %2 : vector<256x128xi32>
    %10 = arith.extui %9 : vector<256x128xi1> to vector<256x128xi32>
    %11 = arith.sitofp %10 : vector<256x128xi32> to vector<256x128xf32>
    %12 = arith.truncf %11 : vector<256x128xf32> to vector<256x128xbf16>
    %13 = tpu.transpose %11, [1, 0] : vector<256x128xf32> -> vector<128x256xf32>
    %14 = arith.truncf %13 : vector<128x256xf32> to vector<128x256xbf16>
    %c0_2 = arith.constant 0 : index
    %c0_3 = arith.constant 0 : index
    %15 = vector.load %arg1[%c0_2, %c0_3] : memref<128x128xf32, #tpu.memory_space<vmem>>, vector<128x128xf32>
    %c0_4 = arith.constant 0 : index
    %c0_5 = arith.constant 0 : index
    %16 = vector.load %arg5[%c0_4, %c0_5] : memref<40x128xf32, #tpu.memory_space<vmem>>, vector<1x128xf32>
    %17 = arith.truncf %15 : vector<128x128xf32> to vector<128x128xbf16>
    %c0_6 = arith.constant 0 : index
    %c0_7 = arith.constant 0 : index
    %18 = vector.load %arg4[%c0_6, %c0_7] : memref<3456x128xbf16, #tpu.memory_space<vmem>>, vector<128x128xbf16>
    %cst = arith.constant dense<0.000000e+00> : vector<128x128xf32>
    %19 = tpu.matmul %17, %18, %cst {dimension_numbers = #tpu.dot_dimension_numbers<[1], [0], [0], [1], [0, 0, 1, 1], [], []>} : vector<128x128xbf16>, vector<128x128xbf16>, vector<128x128xf32> -> vector<128x128xf32>
    %20 = vector.broadcast %16 : vector<1x128xf32> to vector<128x128xf32>
    %21 = arith.addf %20, %19 : vector<128x128xf32>
    %cst_8 = arith.constant 0.000000e+00 : f32
    %22 = vector.broadcast %cst_8 : f32 to vector<128x128xf32>
    %23 = arith.maximumf %21, %22 : vector<128x128xf32>
    %24 = arith.truncf %23 : vector<128x128xf32> to vector<128x128xbf16>
    %c128 = arith.constant 128 : index
    %c0_9 = arith.constant 0 : index
    %25 = vector.load %arg4[%c128, %c0_9] : memref<3456x128xbf16, #tpu.memory_space<vmem>>, vector<128x128xbf16>
    %cst_10 = arith.constant dense<0.000000e+00> : vector<128x128xf32>
    %26 = tpu.matmul %24, %25, %cst_10 {dimension_numbers = #tpu.dot_dimension_numbers<[1], [0], [0], [1], [0, 0, 1, 1], [], []>} : vector<128x128xbf16>, vector<128x128xbf16>, vector<128x128xf32> -> vector<128x128xf32>
    %c1_11 = arith.constant 1 : index
    %c0_12 = arith.constant 0 : index
    %27 = vector.load %arg5[%c1_11, %c0_12] : memref<40x128xf32, #tpu.memory_space<vmem>>, vector<1x128xf32>
    %28 = vector.broadcast %27 : vector<1x128xf32> to vector<128x128xf32>
    %29 = arith.addf %26, %28 : vector<128x128xf32>
    %cst_13 = arith.constant 0.000000e+00 : f32
    %30 = vector.broadcast %cst_13 : f32 to vector<128x128xf32>
    %31 = arith.maximumf %29, %30 : vector<128x128xf32>
    %32 = arith.truncf %31 : vector<128x128xf32> to vector<128x128xbf16>
    %c256 = arith.constant 256 : index
    %c0_14 = arith.constant 0 : index
    %33 = vector.load %arg4[%c256, %c0_14] : memref<3456x128xbf16, #tpu.memory_space<vmem>>, vector<128x128xbf16>
    %cst_15 = arith.constant dense<0.000000e+00> : vector<128x128xf32>
    %34 = tpu.matmul %32, %33, %cst_15 {dimension_numbers = #tpu.dot_dimension_numbers<[1], [0], [0], [1], [0, 0, 1, 1], [], []>} : vector<128x128xbf16>, vector<128x128xbf16>, vector<128x128xf32> -> vector<128x128xf32>
    %c2 = arith.constant 2 : index
    %c0_16 = arith.constant 0 : index
    %35 = vector.load %arg5[%c2, %c0_16] : memref<40x128xf32, #tpu.memory_space<vmem>>, vector<1x128xf32>
    %36 = vector.broadcast %35 : vector<1x128xf32> to vector<128x128xf32>
    %37 = arith.addf %34, %36 : vector<128x128xf32>
    %cst_17 = arith.constant dense<0.000000e+00> : vector<128xf32>
    %38 = vector.multi_reduction <add>, %37, %cst_17 [1] : vector<128x128xf32> to vector<128xf32>
    %39 = vector.shape_cast %38 : vector<128xf32> to vector<128x1xf32>
    %cst_18 = arith.constant 3.125000e-02 : f32
    %40 = vector.broadcast %cst_18 : f32 to vector<128x1xf32>
    %41 = arith.mulf %39, %40 : vector<128x1xf32>
    %42 = arith.mulf %37, %37 : vector<128x128xf32>
    %cst_19 = arith.constant dense<0.000000e+00> : vector<128xf32>
    %43 = vector.multi_reduction <add>, %42, %cst_19 [1] : vector<128x128xf32> to vector<128xf32>
    %44 = vector.shape_cast %43 : vector<128xf32> to vector<128x1xf32>
    %cst_20 = arith.constant 3.125000e-02 : f32
    %45 = vector.broadcast %cst_20 : f32 to vector<128x1xf32>
    %46 = arith.mulf %44, %45 : vector<128x1xf32>
    %47 = arith.mulf %41, %41 : vector<128x1xf32>
    %48 = arith.subf %46, %47 : vector<128x1xf32>
    %cst_21 = arith.constant 9.99999974E-6 : f32
    %49 = vector.broadcast %cst_21 : f32 to vector<128x1xf32>
    %50 = arith.addf %48, %49 : vector<128x1xf32>
    %51 = math.rsqrt %50 : vector<128x1xf32>
    %52 = vector.broadcast %41 : vector<128x1xf32> to vector<128x128xf32>
    %53 = arith.subf %37, %52 : vector<128x128xf32>
    %54 = vector.broadcast %51 : vector<128x1xf32> to vector<128x128xf32>
    %55 = arith.mulf %53, %54 : vector<128x128xf32>
    %c3 = arith.constant 3 : index
    %c0_22 = arith.constant 0 : index
    %56 = vector.load %arg5[%c3, %c0_22] : memref<40x128xf32, #tpu.memory_space<vmem>>, vector<1x128xf32>
    %57 = vector.broadcast %56 : vector<1x128xf32> to vector<128x128xf32>
    %58 = arith.mulf %55, %57 : vector<128x128xf32>
    %c4 = arith.constant 4 : index
    %c0_23 = arith.constant 0 : index
    %59 = vector.load %arg5[%c4, %c0_23] : memref<40x128xf32, #tpu.memory_space<vmem>>, vector<1x128xf32>
    %60 = vector.broadcast %59 : vector<1x128xf32> to vector<128x128xf32>
    %61 = arith.addf %58, %60 : vector<128x128xf32>
    %c0_24 = arith.constant 0 : index
    %c0_25 = arith.constant 0 : index
    %62 = vector.load %arg2[%c0_24, %c0_25] : memref<256x128xf32, #tpu.memory_space<vmem>>, vector<256x128xf32>
    %c5 = arith.constant 5 : index
    %c0_26 = arith.constant 0 : index
    %63 = vector.load %arg5[%c5, %c0_26] : memref<40x128xf32, #tpu.memory_space<vmem>>, vector<1x128xf32>
    %64 = arith.truncf %62 : vector<256x128xf32> to vector<256x128xbf16>
    %c384 = arith.constant 384 : index
    %c0_27 = arith.constant 0 : index
    %65 = vector.load %arg4[%c384, %c0_27] : memref<3456x128xbf16, #tpu.memory_space<vmem>>, vector<128x128xbf16>
    %cst_28 = arith.constant dense<0.000000e+00> : vector<256x128xf32>
    %66 = tpu.matmul %64, %65, %cst_28 {dimension_numbers = #tpu.dot_dimension_numbers<[1], [0], [0], [1], [0, 0, 1, 1], [], []>} : vector<256x128xbf16>, vector<128x128xbf16>, vector<256x128xf32> -> vector<256x128xf32>
    %67 = vector.broadcast %63 : vector<1x128xf32> to vector<256x128xf32>
    %68 = arith.addf %67, %66 : vector<256x128xf32>
    %cst_29 = arith.constant 0.000000e+00 : f32
    %69 = vector.broadcast %cst_29 : f32 to vector<256x128xf32>
    %70 = arith.maximumf %68, %69 : vector<256x128xf32>
    %71 = arith.truncf %70 : vector<256x128xf32> to vector<256x128xbf16>
    %c512 = arith.constant 512 : index
    %c0_30 = arith.constant 0 : index
    %72 = vector.load %arg4[%c512, %c0_30] : memref<3456x128xbf16, #tpu.memory_space<vmem>>, vector<128x128xbf16>
    %cst_31 = arith.constant dense<0.000000e+00> : vector<256x128xf32>
    %73 = tpu.matmul %71, %72, %cst_31 {dimension_numbers = #tpu.dot_dimension_numbers<[1], [0], [0], [1], [0, 0, 1, 1], [], []>} : vector<256x128xbf16>, vector<128x128xbf16>, vector<256x128xf32> -> vector<256x128xf32>
    %c6 = arith.constant 6 : index
    %c0_32 = arith.constant 0 : index
    %74 = vector.load %arg5[%c6, %c0_32] : memref<40x128xf32, #tpu.memory_space<vmem>>, vector<1x128xf32>
    %75 = vector.broadcast %74 : vector<1x128xf32> to vector<256x128xf32>
    %76 = arith.addf %73, %75 : vector<256x128xf32>
    %cst_33 = arith.constant 0.000000e+00 : f32
    %77 = vector.broadcast %cst_33 : f32 to vector<256x128xf32>
    %78 = arith.maximumf %76, %77 : vector<256x128xf32>
    %79 = arith.truncf %78 : vector<256x128xf32> to vector<256x128xbf16>
    %c640 = arith.constant 640 : index
    %c0_34 = arith.constant 0 : index
    %80 = vector.load %arg4[%c640, %c0_34] : memref<3456x128xbf16, #tpu.memory_space<vmem>>, vector<128x128xbf16>
    %cst_35 = arith.constant dense<0.000000e+00> : vector<256x128xf32>
    %81 = tpu.matmul %79, %80, %cst_35 {dimension_numbers = #tpu.dot_dimension_numbers<[1], [0], [0], [1], [0, 0, 1, 1], [], []>} : vector<256x128xbf16>, vector<128x128xbf16>, vector<256x128xf32> -> vector<256x128xf32>
    %c7 = arith.constant 7 : index
    %c0_36 = arith.constant 0 : index
    %82 = vector.load %arg5[%c7, %c0_36] : memref<40x128xf32, #tpu.memory_space<vmem>>, vector<1x128xf32>
    %83 = vector.broadcast %82 : vector<1x128xf32> to vector<256x128xf32>
    %84 = arith.addf %81, %83 : vector<256x128xf32>
    %cst_37 = arith.constant dense<0.000000e+00> : vector<256xf32>
    %85 = vector.multi_reduction <add>, %84, %cst_37 [1] : vector<256x128xf32> to vector<256xf32>
    %86 = vector.shape_cast %85 : vector<256xf32> to vector<256x1xf32>
    %cst_38 = arith.constant 3.125000e-02 : f32
    %87 = vector.broadcast %cst_38 : f32 to vector<256x1xf32>
    %88 = arith.mulf %86, %87 : vector<256x1xf32>
    %89 = arith.mulf %84, %84 : vector<256x128xf32>
    %cst_39 = arith.constant dense<0.000000e+00> : vector<256xf32>
    %90 = vector.multi_reduction <add>, %89, %cst_39 [1] : vector<256x128xf32> to vector<256xf32>
    %91 = vector.shape_cast %90 : vector<256xf32> to vector<256x1xf32>
    %cst_40 = arith.constant 3.125000e-02 : f32
    %92 = vector.broadcast %cst_40 : f32 to vector<256x1xf32>
    %93 = arith.mulf %91, %92 : vector<256x1xf32>
    %94 = arith.mulf %88, %88 : vector<256x1xf32>
    %95 = arith.subf %93, %94 : vector<256x1xf32>
    %cst_41 = arith.constant 9.99999974E-6 : f32
    %96 = vector.broadcast %cst_41 : f32 to vector<256x1xf32>
    %97 = arith.addf %95, %96 : vector<256x1xf32>
    %98 = math.rsqrt %97 : vector<256x1xf32>
    %99 = vector.broadcast %88 : vector<256x1xf32> to vector<256x128xf32>
    %100 = arith.subf %84, %99 : vector<256x128xf32>
    %101 = vector.broadcast %98 : vector<256x1xf32> to vector<256x128xf32>
    %102 = arith.mulf %100, %101 : vector<256x128xf32>
    %c8 = arith.constant 8 : index
    %c0_42 = arith.constant 0 : index
    %103 = vector.load %arg5[%c8, %c0_42] : memref<40x128xf32, #tpu.memory_space<vmem>>, vector<1x128xf32>
    %104 = vector.broadcast %103 : vector<1x128xf32> to vector<256x128xf32>
    %105 = arith.mulf %102, %104 : vector<256x128xf32>
    %c9 = arith.constant 9 : index
    %c0_43 = arith.constant 0 : index
    %106 = vector.load %arg5[%c9, %c0_43] : memref<40x128xf32, #tpu.memory_space<vmem>>, vector<1x128xf32>
    %107 = vector.broadcast %106 : vector<1x128xf32> to vector<256x128xf32>
    %108 = arith.addf %105, %107 : vector<256x128xf32>
    %109 = arith.truncf %61 : vector<128x128xf32> to vector<128x128xbf16>
    %cst_44 = arith.constant dense<0.000000e+00> : vector<256x128xf32>
    %110 = tpu.matmul %7, %109, %cst_44 {dimension_numbers = #tpu.dot_dimension_numbers<[1], [0], [0], [1], [0, 0, 1, 1], [], []>} : vector<256x128xbf16>, vector<128x128xbf16>, vector<256x128xf32> -> vector<256x128xf32>
    %cst_45 = arith.constant dense<0.000000e+00> : vector<256x128xf32>
    %111 = tpu.matmul %12, %109, %cst_45 {dimension_numbers = #tpu.dot_dimension_numbers<[1], [0], [0], [1], [0, 0, 1, 1], [], []>} : vector<256x128xbf16>, vector<128x128xbf16>, vector<256x128xf32> -> vector<256x128xf32>
    %c10 = arith.constant 10 : index
    %c0_46 = arith.constant 0 : index
    %112 = vector.load %arg5[%c10, %c0_46] : memref<40x128xf32, #tpu.memory_space<vmem>>, vector<1x128xf32>
    %113 = arith.truncf %110 : vector<256x128xf32> to vector<256x128xbf16>
    %c768 = arith.constant 768 : index
    %c0_47 = arith.constant 0 : index
    %114 = vector.load %arg4[%c768, %c0_47] : memref<3456x128xbf16, #tpu.memory_space<vmem>>, vector<128x128xbf16>
    %cst_48 = arith.constant dense<0.000000e+00> : vector<256x128xf32>
    %115 = tpu.matmul %113, %114, %cst_48 {dimension_numbers = #tpu.dot_dimension_numbers<[1], [0], [0], [1], [0, 0, 1, 1], [], []>} : vector<256x128xbf16>, vector<128x128xbf16>, vector<256x128xf32> -> vector<256x128xf32>
    %116 = vector.broadcast %112 : vector<1x128xf32> to vector<256x128xf32>
    %117 = arith.addf %116, %115 : vector<256x128xf32>
    %118 = arith.truncf %111 : vector<256x128xf32> to vector<256x128xbf16>
    %c896 = arith.constant 896 : index
    %c0_49 = arith.constant 0 : index
    %119 = vector.load %arg4[%c896, %c0_49] : memref<3456x128xbf16, #tpu.memory_space<vmem>>, vector<128x128xbf16>
    %cst_50 = arith.constant dense<0.000000e+00> : vector<256x128xf32>
    %120 = tpu.matmul %118, %119, %cst_50 {dimension_numbers = #tpu.dot_dimension_numbers<[1], [0], [0], [1], [0, 0, 1, 1], [], []>} : vector<256x128xbf16>, vector<128x128xbf16>, vector<256x128xf32> -> vector<256x128xf32>
    %121 = arith.addf %117, %120 : vector<256x128xf32>
    %122 = arith.truncf %108 : vector<256x128xf32> to vector<256x128xbf16>
    %c1024 = arith.constant 1024 : index
    %c0_51 = arith.constant 0 : index
    %123 = vector.load %arg4[%c1024, %c0_51] : memref<3456x128xbf16, #tpu.memory_space<vmem>>, vector<128x128xbf16>
    %cst_52 = arith.constant dense<0.000000e+00> : vector<256x128xf32>
    %124 = tpu.matmul %122, %123, %cst_52 {dimension_numbers = #tpu.dot_dimension_numbers<[1], [0], [0], [1], [0, 0, 1, 1], [], []>} : vector<256x128xbf16>, vector<128x128xbf16>, vector<256x128xf32> -> vector<256x128xf32>
    %125 = arith.addf %121, %124 : vector<256x128xf32>
    %cst_53 = arith.constant 0.000000e+00 : f32
    %126 = vector.broadcast %cst_53 : f32 to vector<256x128xf32>
    %127 = arith.maximumf %125, %126 : vector<256x128xf32>
    %128 = arith.truncf %127 : vector<256x128xf32> to vector<256x128xbf16>
    %c1152 = arith.constant 1152 : index
    %c0_54 = arith.constant 0 : index
    %129 = vector.load %arg4[%c1152, %c0_54] : memref<3456x128xbf16, #tpu.memory_space<vmem>>, vector<128x128xbf16>
    %cst_55 = arith.constant dense<0.000000e+00> : vector<256x128xf32>
    %130 = tpu.matmul %128, %129, %cst_55 {dimension_numbers = #tpu.dot_dimension_numbers<[1], [0], [0], [1], [0, 0, 1, 1], [], []>} : vector<256x128xbf16>, vector<128x128xbf16>, vector<256x128xf32> -> vector<256x128xf32>
    %c11 = arith.constant 11 : index
    %c0_56 = arith.constant 0 : index
    %131 = vector.load %arg5[%c11, %c0_56] : memref<40x128xf32, #tpu.memory_space<vmem>>, vector<1x128xf32>
    %132 = vector.broadcast %131 : vector<1x128xf32> to vector<256x128xf32>
    %133 = arith.addf %130, %132 : vector<256x128xf32>
    %cst_57 = arith.constant 0.000000e+00 : f32
    %134 = vector.broadcast %cst_57 : f32 to vector<256x128xf32>
    %135 = arith.maximumf %133, %134 : vector<256x128xf32>
    %136 = arith.truncf %135 : vector<256x128xf32> to vector<256x128xbf16>
    %c1280 = arith.constant 1280 : index
    %c0_58 = arith.constant 0 : index
    %137 = vector.load %arg4[%c1280, %c0_58] : memref<3456x128xbf16, #tpu.memory_space<vmem>>, vector<128x128xbf16>
    %cst_59 = arith.constant dense<0.000000e+00> : vector<256x128xf32>
    %138 = tpu.matmul %136, %137, %cst_59 {dimension_numbers = #tpu.dot_dimension_numbers<[1], [0], [0], [1], [0, 0, 1, 1], [], []>} : vector<256x128xbf16>, vector<128x128xbf16>, vector<256x128xf32> -> vector<256x128xf32>
    %c12 = arith.constant 12 : index
    %c0_60 = arith.constant 0 : index
    %139 = vector.load %arg5[%c12, %c0_60] : memref<40x128xf32, #tpu.memory_space<vmem>>, vector<1x128xf32>
    %140 = vector.broadcast %139 : vector<1x128xf32> to vector<256x128xf32>
    %141 = arith.addf %138, %140 : vector<256x128xf32>
    %cst_61 = arith.constant dense<0.000000e+00> : vector<256xf32>
    %142 = vector.multi_reduction <add>, %141, %cst_61 [1] : vector<256x128xf32> to vector<256xf32>
    %143 = vector.shape_cast %142 : vector<256xf32> to vector<256x1xf32>
    %cst_62 = arith.constant 3.125000e-02 : f32
    %144 = vector.broadcast %cst_62 : f32 to vector<256x1xf32>
    %145 = arith.mulf %143, %144 : vector<256x1xf32>
    %146 = arith.mulf %141, %141 : vector<256x128xf32>
    %cst_63 = arith.constant dense<0.000000e+00> : vector<256xf32>
    %147 = vector.multi_reduction <add>, %146, %cst_63 [1] : vector<256x128xf32> to vector<256xf32>
    %148 = vector.shape_cast %147 : vector<256xf32> to vector<256x1xf32>
    %cst_64 = arith.constant 3.125000e-02 : f32
    %149 = vector.broadcast %cst_64 : f32 to vector<256x1xf32>
    %150 = arith.mulf %148, %149 : vector<256x1xf32>
    %151 = arith.mulf %145, %145 : vector<256x1xf32>
    %152 = arith.subf %150, %151 : vector<256x1xf32>
    %cst_65 = arith.constant 9.99999974E-6 : f32
    %153 = vector.broadcast %cst_65 : f32 to vector<256x1xf32>
    %154 = arith.addf %152, %153 : vector<256x1xf32>
    %155 = math.rsqrt %154 : vector<256x1xf32>
    %156 = vector.broadcast %145 : vector<256x1xf32> to vector<256x128xf32>
    %157 = arith.subf %141, %156 : vector<256x128xf32>
    %158 = vector.broadcast %155 : vector<256x1xf32> to vector<256x128xf32>
    %159 = arith.mulf %157, %158 : vector<256x128xf32>
    %c13 = arith.constant 13 : index
    %c0_66 = arith.constant 0 : index
    %160 = vector.load %arg5[%c13, %c0_66] : memref<40x128xf32, #tpu.memory_space<vmem>>, vector<1x128xf32>
    %161 = vector.broadcast %160 : vector<1x128xf32> to vector<256x128xf32>
    %162 = arith.mulf %159, %161 : vector<256x128xf32>
    %c14 = arith.constant 14 : index
    %c0_67 = arith.constant 0 : index
    %163 = vector.load %arg5[%c14, %c0_67] : memref<40x128xf32, #tpu.memory_space<vmem>>, vector<1x128xf32>
    %164 = vector.broadcast %163 : vector<1x128xf32> to vector<256x128xf32>
    %165 = arith.addf %162, %164 : vector<256x128xf32>
    %166 = arith.truncf %165 : vector<256x128xf32> to vector<256x128xbf16>
    %cst_68 = arith.constant dense<0.000000e+00> : vector<128x128xf32>
    %167 = tpu.matmul %14, %166, %cst_68 {dimension_numbers = #tpu.dot_dimension_numbers<[1], [0], [0], [1], [0, 0, 1, 1], [], []>} : vector<128x256xbf16>, vector<256x128xbf16>, vector<128x128xf32> -> vector<128x128xf32>
    %c15 = arith.constant 15 : index
    %c0_69 = arith.constant 0 : index
    %168 = vector.load %arg5[%c15, %c0_69] : memref<40x128xf32, #tpu.memory_space<vmem>>, vector<1x128xf32>
    %169 = arith.truncf %61 : vector<128x128xf32> to vector<128x128xbf16>
    %c1408 = arith.constant 1408 : index
    %c0_70 = arith.constant 0 : index
    %170 = vector.load %arg4[%c1408, %c0_70] : memref<3456x128xbf16, #tpu.memory_space<vmem>>, vector<128x128xbf16>
    %cst_71 = arith.constant dense<0.000000e+00> : vector<128x128xf32>
    %171 = tpu.matmul %169, %170, %cst_71 {dimension_numbers = #tpu.dot_dimension_numbers<[1], [0], [0], [1], [0, 0, 1, 1], [], []>} : vector<128x128xbf16>, vector<128x128xbf16>, vector<128x128xf32> -> vector<128x128xf32>
    %172 = vector.broadcast %168 : vector<1x128xf32> to vector<128x128xf32>
    %173 = arith.addf %172, %171 : vector<128x128xf32>
    %174 = arith.truncf %167 : vector<128x128xf32> to vector<128x128xbf16>
    %c1536 = arith.constant 1536 : index
    %c0_72 = arith.constant 0 : index
    %175 = vector.load %arg4[%c1536, %c0_72] : memref<3456x128xbf16, #tpu.memory_space<vmem>>, vector<128x128xbf16>
    %cst_73 = arith.constant dense<0.000000e+00> : vector<128x128xf32>
    %176 = tpu.matmul %174, %175, %cst_73 {dimension_numbers = #tpu.dot_dimension_numbers<[1], [0], [0], [1], [0, 0, 1, 1], [], []>} : vector<128x128xbf16>, vector<128x128xbf16>, vector<128x128xf32> -> vector<128x128xf32>
    %177 = arith.addf %173, %176 : vector<128x128xf32>
    %cst_74 = arith.constant 0.000000e+00 : f32
    %178 = vector.broadcast %cst_74 : f32 to vector<128x128xf32>
    %179 = arith.maximumf %177, %178 : vector<128x128xf32>
    %180 = arith.truncf %179 : vector<128x128xf32> to vector<128x128xbf16>
    %c1664 = arith.constant 1664 : index
    %c0_75 = arith.constant 0 : index
    %181 = vector.load %arg4[%c1664, %c0_75] : memref<3456x128xbf16, #tpu.memory_space<vmem>>, vector<128x128xbf16>
    %cst_76 = arith.constant dense<0.000000e+00> : vector<128x128xf32>
    %182 = tpu.matmul %180, %181, %cst_76 {dimension_numbers = #tpu.dot_dimension_numbers<[1], [0], [0], [1], [0, 0, 1, 1], [], []>} : vector<128x128xbf16>, vector<128x128xbf16>, vector<128x128xf32> -> vector<128x128xf32>
    %c16 = arith.constant 16 : index
    %c0_77 = arith.constant 0 : index
    %183 = vector.load %arg5[%c16, %c0_77] : memref<40x128xf32, #tpu.memory_space<vmem>>, vector<1x128xf32>
    %184 = vector.broadcast %183 : vector<1x128xf32> to vector<128x128xf32>
    %185 = arith.addf %182, %184 : vector<128x128xf32>
    %cst_78 = arith.constant 0.000000e+00 : f32
    %186 = vector.broadcast %cst_78 : f32 to vector<128x128xf32>
    %187 = arith.maximumf %185, %186 : vector<128x128xf32>
    %188 = arith.truncf %187 : vector<128x128xf32> to vector<128x128xbf16>
    %c1792 = arith.constant 1792 : index
    %c0_79 = arith.constant 0 : index
    %189 = vector.load %arg4[%c1792, %c0_79] : memref<3456x128xbf16, #tpu.memory_space<vmem>>, vector<128x128xbf16>
    %cst_80 = arith.constant dense<0.000000e+00> : vector<128x128xf32>
    %190 = tpu.matmul %188, %189, %cst_80 {dimension_numbers = #tpu.dot_dimension_numbers<[1], [0], [0], [1], [0, 0, 1, 1], [], []>} : vector<128x128xbf16>, vector<128x128xbf16>, vector<128x128xf32> -> vector<128x128xf32>
    %c17 = arith.constant 17 : index
    %c0_81 = arith.constant 0 : index
    %191 = vector.load %arg5[%c17, %c0_81] : memref<40x128xf32, #tpu.memory_space<vmem>>, vector<1x128xf32>
    %192 = vector.broadcast %191 : vector<1x128xf32> to vector<128x128xf32>
    %193 = arith.addf %190, %192 : vector<128x128xf32>
    %cst_82 = arith.constant dense<0.000000e+00> : vector<128xf32>
    %194 = vector.multi_reduction <add>, %193, %cst_82 [1] : vector<128x128xf32> to vector<128xf32>
    %195 = vector.shape_cast %194 : vector<128xf32> to vector<128x1xf32>
    %cst_83 = arith.constant 3.125000e-02 : f32
    %196 = vector.broadcast %cst_83 : f32 to vector<128x1xf32>
    %197 = arith.mulf %195, %196 : vector<128x1xf32>
    %198 = arith.mulf %193, %193 : vector<128x128xf32>
    %cst_84 = arith.constant dense<0.000000e+00> : vector<128xf32>
    %199 = vector.multi_reduction <add>, %198, %cst_84 [1] : vector<128x128xf32> to vector<128xf32>
    %200 = vector.shape_cast %199 : vector<128xf32> to vector<128x1xf32>
    %cst_85 = arith.constant 3.125000e-02 : f32
    %201 = vector.broadcast %cst_85 : f32 to vector<128x1xf32>
    %202 = arith.mulf %200, %201 : vector<128x1xf32>
    %203 = arith.mulf %197, %197 : vector<128x1xf32>
    %204 = arith.subf %202, %203 : vector<128x1xf32>
    %cst_86 = arith.constant 9.99999974E-6 : f32
    %205 = vector.broadcast %cst_86 : f32 to vector<128x1xf32>
    %206 = arith.addf %204, %205 : vector<128x1xf32>
    %207 = math.rsqrt %206 : vector<128x1xf32>
    %208 = vector.broadcast %197 : vector<128x1xf32> to vector<128x128xf32>
    %209 = arith.subf %193, %208 : vector<128x128xf32>
    %210 = vector.broadcast %207 : vector<128x1xf32> to vector<128x128xf32>
    %211 = arith.mulf %209, %210 : vector<128x128xf32>
    %c18 = arith.constant 18 : index
    %c0_87 = arith.constant 0 : index
    %212 = vector.load %arg5[%c18, %c0_87] : memref<40x128xf32, #tpu.memory_space<vmem>>, vector<1x128xf32>
    %213 = vector.broadcast %212 : vector<1x128xf32> to vector<128x128xf32>
    %214 = arith.mulf %211, %213 : vector<128x128xf32>
    %c19 = arith.constant 19 : index
    %c0_88 = arith.constant 0 : index
    %215 = vector.load %arg5[%c19, %c0_88] : memref<40x128xf32, #tpu.memory_space<vmem>>, vector<1x128xf32>
    %216 = vector.broadcast %215 : vector<1x128xf32> to vector<128x128xf32>
    %217 = arith.addf %214, %216 : vector<128x128xf32>
    %218 = arith.addf %61, %217 : vector<128x128xf32>
    %219 = arith.addf %108, %165 : vector<256x128xf32>
    %220 = arith.truncf %218 : vector<128x128xf32> to vector<128x128xbf16>
    %cst_89 = arith.constant dense<0.000000e+00> : vector<256x128xf32>
    %221 = tpu.matmul %7, %220, %cst_89 {dimension_numbers = #tpu.dot_dimension_numbers<[1], [0], [0], [1], [0, 0, 1, 1], [], []>} : vector<256x128xbf16>, vector<128x128xbf16>, vector<256x128xf32> -> vector<256x128xf32>
    %cst_90 = arith.constant dense<0.000000e+00> : vector<256x128xf32>
    %222 = tpu.matmul %12, %220, %cst_90 {dimension_numbers = #tpu.dot_dimension_numbers<[1], [0], [0], [1], [0, 0, 1, 1], [], []>} : vector<256x128xbf16>, vector<128x128xbf16>, vector<256x128xf32> -> vector<256x128xf32>
    %c20 = arith.constant 20 : index
    %c0_91 = arith.constant 0 : index
    %223 = vector.load %arg5[%c20, %c0_91] : memref<40x128xf32, #tpu.memory_space<vmem>>, vector<1x128xf32>
    %224 = arith.truncf %221 : vector<256x128xf32> to vector<256x128xbf16>
    %c1920 = arith.constant 1920 : index
    %c0_92 = arith.constant 0 : index
    %225 = vector.load %arg4[%c1920, %c0_92] : memref<3456x128xbf16, #tpu.memory_space<vmem>>, vector<128x128xbf16>
    %cst_93 = arith.constant dense<0.000000e+00> : vector<256x128xf32>
    %226 = tpu.matmul %224, %225, %cst_93 {dimension_numbers = #tpu.dot_dimension_numbers<[1], [0], [0], [1], [0, 0, 1, 1], [], []>} : vector<256x128xbf16>, vector<128x128xbf16>, vector<256x128xf32> -> vector<256x128xf32>
    %227 = vector.broadcast %223 : vector<1x128xf32> to vector<256x128xf32>
    %228 = arith.addf %227, %226 : vector<256x128xf32>
    %229 = arith.truncf %222 : vector<256x128xf32> to vector<256x128xbf16>
    %c2048 = arith.constant 2048 : index
    %c0_94 = arith.constant 0 : index
    %230 = vector.load %arg4[%c2048, %c0_94] : memref<3456x128xbf16, #tpu.memory_space<vmem>>, vector<128x128xbf16>
    %cst_95 = arith.constant dense<0.000000e+00> : vector<256x128xf32>
    %231 = tpu.matmul %229, %230, %cst_95 {dimension_numbers = #tpu.dot_dimension_numbers<[1], [0], [0], [1], [0, 0, 1, 1], [], []>} : vector<256x128xbf16>, vector<128x128xbf16>, vector<256x128xf32> -> vector<256x128xf32>
    %232 = arith.addf %228, %231 : vector<256x128xf32>
    %233 = arith.truncf %219 : vector<256x128xf32> to vector<256x128xbf16>
    %c2176 = arith.constant 2176 : index
    %c0_96 = arith.constant 0 : index
    %234 = vector.load %arg4[%c2176, %c0_96] : memref<3456x128xbf16, #tpu.memory_space<vmem>>, vector<128x128xbf16>
    %cst_97 = arith.constant dense<0.000000e+00> : vector<256x128xf32>
    %235 = tpu.matmul %233, %234, %cst_97 {dimension_numbers = #tpu.dot_dimension_numbers<[1], [0], [0], [1], [0, 0, 1, 1], [], []>} : vector<256x128xbf16>, vector<128x128xbf16>, vector<256x128xf32> -> vector<256x128xf32>
    %236 = arith.addf %232, %235 : vector<256x128xf32>
    %cst_98 = arith.constant 0.000000e+00 : f32
    %237 = vector.broadcast %cst_98 : f32 to vector<256x128xf32>
    %238 = arith.maximumf %236, %237 : vector<256x128xf32>
    %239 = arith.truncf %238 : vector<256x128xf32> to vector<256x128xbf16>
    %c2304 = arith.constant 2304 : index
    %c0_99 = arith.constant 0 : index
    %240 = vector.load %arg4[%c2304, %c0_99] : memref<3456x128xbf16, #tpu.memory_space<vmem>>, vector<128x128xbf16>
    %cst_100 = arith.constant dense<0.000000e+00> : vector<256x128xf32>
    %241 = tpu.matmul %239, %240, %cst_100 {dimension_numbers = #tpu.dot_dimension_numbers<[1], [0], [0], [1], [0, 0, 1, 1], [], []>} : vector<256x128xbf16>, vector<128x128xbf16>, vector<256x128xf32> -> vector<256x128xf32>
    %c21 = arith.constant 21 : index
    %c0_101 = arith.constant 0 : index
    %242 = vector.load %arg5[%c21, %c0_101] : memref<40x128xf32, #tpu.memory_space<vmem>>, vector<1x128xf32>
    %243 = vector.broadcast %242 : vector<1x128xf32> to vector<256x128xf32>
    %244 = arith.addf %241, %243 : vector<256x128xf32>
    %cst_102 = arith.constant 0.000000e+00 : f32
    %245 = vector.broadcast %cst_102 : f32 to vector<256x128xf32>
    %246 = arith.maximumf %244, %245 : vector<256x128xf32>
    %247 = arith.truncf %246 : vector<256x128xf32> to vector<256x128xbf16>
    %c2432 = arith.constant 2432 : index
    %c0_103 = arith.constant 0 : index
    %248 = vector.load %arg4[%c2432, %c0_103] : memref<3456x128xbf16, #tpu.memory_space<vmem>>, vector<128x128xbf16>
    %cst_104 = arith.constant dense<0.000000e+00> : vector<256x128xf32>
    %249 = tpu.matmul %247, %248, %cst_104 {dimension_numbers = #tpu.dot_dimension_numbers<[1], [0], [0], [1], [0, 0, 1, 1], [], []>} : vector<256x128xbf16>, vector<128x128xbf16>, vector<256x128xf32> -> vector<256x128xf32>
    %c22 = arith.constant 22 : index
    %c0_105 = arith.constant 0 : index
    %250 = vector.load %arg5[%c22, %c0_105] : memref<40x128xf32, #tpu.memory_space<vmem>>, vector<1x128xf32>
    %251 = vector.broadcast %250 : vector<1x128xf32> to vector<256x128xf32>
    %252 = arith.addf %249, %251 : vector<256x128xf32>
    %cst_106 = arith.constant dense<0.000000e+00> : vector<256xf32>
    %253 = vector.multi_reduction <add>, %252, %cst_106 [1] : vector<256x128xf32> to vector<256xf32>
    %254 = vector.shape_cast %253 : vector<256xf32> to vector<256x1xf32>
    %cst_107 = arith.constant 3.125000e-02 : f32
    %255 = vector.broadcast %cst_107 : f32 to vector<256x1xf32>
    %256 = arith.mulf %254, %255 : vector<256x1xf32>
    %257 = arith.mulf %252, %252 : vector<256x128xf32>
    %cst_108 = arith.constant dense<0.000000e+00> : vector<256xf32>
    %258 = vector.multi_reduction <add>, %257, %cst_108 [1] : vector<256x128xf32> to vector<256xf32>
    %259 = vector.shape_cast %258 : vector<256xf32> to vector<256x1xf32>
    %cst_109 = arith.constant 3.125000e-02 : f32
    %260 = vector.broadcast %cst_109 : f32 to vector<256x1xf32>
    %261 = arith.mulf %259, %260 : vector<256x1xf32>
    %262 = arith.mulf %256, %256 : vector<256x1xf32>
    %263 = arith.subf %261, %262 : vector<256x1xf32>
    %cst_110 = arith.constant 9.99999974E-6 : f32
    %264 = vector.broadcast %cst_110 : f32 to vector<256x1xf32>
    %265 = arith.addf %263, %264 : vector<256x1xf32>
    %266 = math.rsqrt %265 : vector<256x1xf32>
    %267 = vector.broadcast %256 : vector<256x1xf32> to vector<256x128xf32>
    %268 = arith.subf %252, %267 : vector<256x128xf32>
    %269 = vector.broadcast %266 : vector<256x1xf32> to vector<256x128xf32>
    %270 = arith.mulf %268, %269 : vector<256x128xf32>
    %c23 = arith.constant 23 : index
    %c0_111 = arith.constant 0 : index
    %271 = vector.load %arg5[%c23, %c0_111] : memref<40x128xf32, #tpu.memory_space<vmem>>, vector<1x128xf32>
    %272 = vector.broadcast %271 : vector<1x128xf32> to vector<256x128xf32>
    %273 = arith.mulf %270, %272 : vector<256x128xf32>
    %c24 = arith.constant 24 : index
    %c0_112 = arith.constant 0 : index
    %274 = vector.load %arg5[%c24, %c0_112] : memref<40x128xf32, #tpu.memory_space<vmem>>, vector<1x128xf32>
    %275 = vector.broadcast %274 : vector<1x128xf32> to vector<256x128xf32>
    %276 = arith.addf %273, %275 : vector<256x128xf32>
    %277 = arith.truncf %276 : vector<256x128xf32> to vector<256x128xbf16>
    %cst_113 = arith.constant dense<0.000000e+00> : vector<128x128xf32>
    %278 = tpu.matmul %14, %277, %cst_113 {dimension_numbers = #tpu.dot_dimension_numbers<[1], [0], [0], [1], [0, 0, 1, 1], [], []>} : vector<128x256xbf16>, vector<256x128xbf16>, vector<128x128xf32> -> vector<128x128xf32>
    %c25 = arith.constant 25 : index
    %c0_114 = arith.constant 0 : index
    %279 = vector.load %arg5[%c25, %c0_114] : memref<40x128xf32, #tpu.memory_space<vmem>>, vector<1x128xf32>
    %280 = arith.truncf %218 : vector<128x128xf32> to vector<128x128xbf16>
    %c2560 = arith.constant 2560 : index
    %c0_115 = arith.constant 0 : index
    %281 = vector.load %arg4[%c2560, %c0_115] : memref<3456x128xbf16, #tpu.memory_space<vmem>>, vector<128x128xbf16>
    %cst_116 = arith.constant dense<0.000000e+00> : vector<128x128xf32>
    %282 = tpu.matmul %280, %281, %cst_116 {dimension_numbers = #tpu.dot_dimension_numbers<[1], [0], [0], [1], [0, 0, 1, 1], [], []>} : vector<128x128xbf16>, vector<128x128xbf16>, vector<128x128xf32> -> vector<128x128xf32>
    %283 = vector.broadcast %279 : vector<1x128xf32> to vector<128x128xf32>
    %284 = arith.addf %283, %282 : vector<128x128xf32>
    %285 = arith.truncf %278 : vector<128x128xf32> to vector<128x128xbf16>
    %c2688 = arith.constant 2688 : index
    %c0_117 = arith.constant 0 : index
    %286 = vector.load %arg4[%c2688, %c0_117] : memref<3456x128xbf16, #tpu.memory_space<vmem>>, vector<128x128xbf16>
    %cst_118 = arith.constant dense<0.000000e+00> : vector<128x128xf32>
    %287 = tpu.matmul %285, %286, %cst_118 {dimension_numbers = #tpu.dot_dimension_numbers<[1], [0], [0], [1], [0, 0, 1, 1], [], []>} : vector<128x128xbf16>, vector<128x128xbf16>, vector<128x128xf32> -> vector<128x128xf32>
    %288 = arith.addf %284, %287 : vector<128x128xf32>
    %cst_119 = arith.constant 0.000000e+00 : f32
    %289 = vector.broadcast %cst_119 : f32 to vector<128x128xf32>
    %290 = arith.maximumf %288, %289 : vector<128x128xf32>
    %291 = arith.truncf %290 : vector<128x128xf32> to vector<128x128xbf16>
    %c2816 = arith.constant 2816 : index
    %c0_120 = arith.constant 0 : index
    %292 = vector.load %arg4[%c2816, %c0_120] : memref<3456x128xbf16, #tpu.memory_space<vmem>>, vector<128x128xbf16>
    %cst_121 = arith.constant dense<0.000000e+00> : vector<128x128xf32>
    %293 = tpu.matmul %291, %292, %cst_121 {dimension_numbers = #tpu.dot_dimension_numbers<[1], [0], [0], [1], [0, 0, 1, 1], [], []>} : vector<128x128xbf16>, vector<128x128xbf16>, vector<128x128xf32> -> vector<128x128xf32>
    %c26 = arith.constant 26 : index
    %c0_122 = arith.constant 0 : index
    %294 = vector.load %arg5[%c26, %c0_122] : memref<40x128xf32, #tpu.memory_space<vmem>>, vector<1x128xf32>
    %295 = vector.broadcast %294 : vector<1x128xf32> to vector<128x128xf32>
    %296 = arith.addf %293, %295 : vector<128x128xf32>
    %cst_123 = arith.constant 0.000000e+00 : f32
    %297 = vector.broadcast %cst_123 : f32 to vector<128x128xf32>
    %298 = arith.maximumf %296, %297 : vector<128x128xf32>
    %299 = arith.truncf %298 : vector<128x128xf32> to vector<128x128xbf16>
    %c2944 = arith.constant 2944 : index
    %c0_124 = arith.constant 0 : index
    %300 = vector.load %arg4[%c2944, %c0_124] : memref<3456x128xbf16, #tpu.memory_space<vmem>>, vector<128x128xbf16>
    %cst_125 = arith.constant dense<0.000000e+00> : vector<128x128xf32>
    %301 = tpu.matmul %299, %300, %cst_125 {dimension_numbers = #tpu.dot_dimension_numbers<[1], [0], [0], [1], [0, 0, 1, 1], [], []>} : vector<128x128xbf16>, vector<128x128xbf16>, vector<128x128xf32> -> vector<128x128xf32>
    %c27 = arith.constant 27 : index
    %c0_126 = arith.constant 0 : index
    %302 = vector.load %arg5[%c27, %c0_126] : memref<40x128xf32, #tpu.memory_space<vmem>>, vector<1x128xf32>
    %303 = vector.broadcast %302 : vector<1x128xf32> to vector<128x128xf32>
    %304 = arith.addf %301, %303 : vector<128x128xf32>
    %cst_127 = arith.constant dense<0.000000e+00> : vector<128xf32>
    %305 = vector.multi_reduction <add>, %304, %cst_127 [1] : vector<128x128xf32> to vector<128xf32>
    %306 = vector.shape_cast %305 : vector<128xf32> to vector<128x1xf32>
    %cst_128 = arith.constant 3.125000e-02 : f32
    %307 = vector.broadcast %cst_128 : f32 to vector<128x1xf32>
    %308 = arith.mulf %306, %307 : vector<128x1xf32>
    %309 = arith.mulf %304, %304 : vector<128x128xf32>
    %cst_129 = arith.constant dense<0.000000e+00> : vector<128xf32>
    %310 = vector.multi_reduction <add>, %309, %cst_129 [1] : vector<128x128xf32> to vector<128xf32>
    %311 = vector.shape_cast %310 : vector<128xf32> to vector<128x1xf32>
    %cst_130 = arith.constant 3.125000e-02 : f32
    %312 = vector.broadcast %cst_130 : f32 to vector<128x1xf32>
    %313 = arith.mulf %311, %312 : vector<128x1xf32>
    %314 = arith.mulf %308, %308 : vector<128x1xf32>
    %315 = arith.subf %313, %314 : vector<128x1xf32>
    %cst_131 = arith.constant 9.99999974E-6 : f32
    %316 = vector.broadcast %cst_131 : f32 to vector<128x1xf32>
    %317 = arith.addf %315, %316 : vector<128x1xf32>
    %318 = math.rsqrt %317 : vector<128x1xf32>
    %319 = vector.broadcast %308 : vector<128x1xf32> to vector<128x128xf32>
    %320 = arith.subf %304, %319 : vector<128x128xf32>
    %321 = vector.broadcast %318 : vector<128x1xf32> to vector<128x128xf32>
    %322 = arith.mulf %320, %321 : vector<128x128xf32>
    %c28 = arith.constant 28 : index
    %c0_132 = arith.constant 0 : index
    %323 = vector.load %arg5[%c28, %c0_132] : memref<40x128xf32, #tpu.memory_space<vmem>>, vector<1x128xf32>
    %324 = vector.broadcast %323 : vector<1x128xf32> to vector<128x128xf32>
    %325 = arith.mulf %322, %324 : vector<128x128xf32>
    %c29 = arith.constant 29 : index
    %c0_133 = arith.constant 0 : index
    %326 = vector.load %arg5[%c29, %c0_133] : memref<40x128xf32, #tpu.memory_space<vmem>>, vector<1x128xf32>
    %327 = vector.broadcast %326 : vector<1x128xf32> to vector<128x128xf32>
    %328 = arith.addf %325, %327 : vector<128x128xf32>
    %329 = arith.addf %218, %328 : vector<128x128xf32>
    %c30 = arith.constant 30 : index
    %c0_134 = arith.constant 0 : index
    %330 = vector.load %arg5[%c30, %c0_134] : memref<40x128xf32, #tpu.memory_space<vmem>>, vector<1x128xf32>
    %331 = arith.truncf %329 : vector<128x128xf32> to vector<128x128xbf16>
    %c3072 = arith.constant 3072 : index
    %c0_135 = arith.constant 0 : index
    %332 = vector.load %arg4[%c3072, %c0_135] : memref<3456x128xbf16, #tpu.memory_space<vmem>>, vector<128x128xbf16>
    %cst_136 = arith.constant dense<0.000000e+00> : vector<128x128xf32>
    %333 = tpu.matmul %331, %332, %cst_136 {dimension_numbers = #tpu.dot_dimension_numbers<[1], [0], [0], [1], [0, 0, 1, 1], [], []>} : vector<128x128xbf16>, vector<128x128xbf16>, vector<128x128xf32> -> vector<128x128xf32>
    %334 = vector.broadcast %330 : vector<1x128xf32> to vector<128x128xf32>
    %335 = arith.addf %334, %333 : vector<128x128xf32>
    %cst_137 = arith.constant 0.000000e+00 : f32
    %336 = vector.broadcast %cst_137 : f32 to vector<128x128xf32>
    %337 = arith.maximumf %335, %336 : vector<128x128xf32>
    %338 = arith.truncf %337 : vector<128x128xf32> to vector<128x128xbf16>
    %c3200 = arith.constant 3200 : index
    %c0_138 = arith.constant 0 : index
    %339 = vector.load %arg4[%c3200, %c0_138] : memref<3456x128xbf16, #tpu.memory_space<vmem>>, vector<128x128xbf16>
    %cst_139 = arith.constant dense<0.000000e+00> : vector<128x128xf32>
    %340 = tpu.matmul %338, %339, %cst_139 {dimension_numbers = #tpu.dot_dimension_numbers<[1], [0], [0], [1], [0, 0, 1, 1], [], []>} : vector<128x128xbf16>, vector<128x128xbf16>, vector<128x128xf32> -> vector<128x128xf32>
    %c31 = arith.constant 31 : index
    %c0_140 = arith.constant 0 : index
    %341 = vector.load %arg5[%c31, %c0_140] : memref<40x128xf32, #tpu.memory_space<vmem>>, vector<1x128xf32>
    %342 = vector.broadcast %341 : vector<1x128xf32> to vector<128x128xf32>
    %343 = arith.addf %340, %342 : vector<128x128xf32>
    %cst_141 = arith.constant 0.000000e+00 : f32
    %344 = vector.broadcast %cst_141 : f32 to vector<128x128xf32>
    %345 = arith.maximumf %343, %344 : vector<128x128xf32>
    %346 = arith.truncf %345 : vector<128x128xf32> to vector<128x128xbf16>
    %c3328 = arith.constant 3328 : index
    %c0_142 = arith.constant 0 : index
    %347 = vector.load %arg4[%c3328, %c0_142] : memref<3456x128xbf16, #tpu.memory_space<vmem>>, vector<128x128xbf16>
    %cst_143 = arith.constant dense<0.000000e+00> : vector<128x128xf32>
    %348 = tpu.matmul %346, %347, %cst_143 {dimension_numbers = #tpu.dot_dimension_numbers<[1], [0], [0], [1], [0, 0, 1, 1], [], []>} : vector<128x128xbf16>, vector<128x128xbf16>, vector<128x128xf32> -> vector<128x128xf32>
    %c32 = arith.constant 32 : index
    %c0_144 = arith.constant 0 : index
    %349 = vector.load %arg5[%c32, %c0_144] : memref<40x128xf32, #tpu.memory_space<vmem>>, vector<1x128xf32>
    %350 = vector.broadcast %349 : vector<1x128xf32> to vector<128x128xf32>
    %351 = arith.addf %348, %350 : vector<128x128xf32>
    %c0_145 = arith.constant 0 : index
    %c0_146 = arith.constant 0 : index
    %352 = vector.load %arg6[%c0_145, %c0_146] : memref<128x128xf32, #tpu.memory_space<vmem>>, vector<128x128xf32>
    tpu.vector_store %arg6[%c0_145, %c0_146], %351 {strides = array<i32>} : memref<128x128xf32, #tpu.memory_space<vmem>>, vector<128x128xf32>,
    return
  }
  func.func @transform_0(%arg0: i32) -> (i32, i32) {
    %c0_i32 = arith.constant 0 : i32
    %c0_i32_0 = arith.constant 0 : i32
    return %arg0, %c0_i32 : i32, i32
  }
  func.func @transform_1(%arg0: i32) -> (i32, i32) {
    %c0_i32 = arith.constant 0 : i32
    %c0_i32_0 = arith.constant 0 : i32
    return %arg0, %c0_i32 : i32, i32
  }
  func.func @transform_2(%arg0: i32) -> (i32, i32) {
    %c0_i32 = arith.constant 0 : i32
    %c0_i32_0 = arith.constant 0 : i32
    return %arg0, %c0_i32 : i32, i32
  }
  func.func @transform_3(%arg0: i32) -> (i32, i32) {
    %c0_i32 = arith.constant 0 : i32
    %c0_i32_0 = arith.constant 0 : i32
    %c0_i32_1 = arith.constant 0 : i32
    return %c0_i32, %c0_i32_0 : i32, i32
  }
  func.func @transform_4(%arg0: i32) -> (i32, i32) {
    %c0_i32 = arith.constant 0 : i32
    %c0_i32_0 = arith.constant 0 : i32
    %c0_i32_1 = arith.constant 0 : i32
    return %c0_i32, %c0_i32_0 : i32, i32
  }
  func.func @transform_5(%arg0: i32) -> (i32, i32) {
    %c0_i32 = arith.constant 0 : i32
    %c0_i32_0 = arith.constant 0 : i32
    return %arg0, %c0_i32 : i32, i32
  }
}

</mosaic_0001>

<llo_original>
// kernel: encode_process_decode.1
$region0: #{encode_process_decode.1}
  #allocation0 [shape = 'u32[]', space=smem, size = 0x4, offset = 0x4, fixed_abs, tag = 'smem constant byte address 0x4 - core index']
  #allocation1 [shape = 'u32[72,128]{1,0:T(1,128)}', space=vmem, size = 0x9000, scoped, tag = 'internal scratch']
  %s0 = inlined_call_operand.vmem [shape: f32[256,128], index: 0, kind: input, shape index: {}]
  %s1 = inlined_call_operand.vmem [shape: f32[512,128], index: 1, kind: input, shape index: {}]
  %s2 = inlined_call_operand.vmem [shape: s32[512,2], index: 2, kind: input, shape index: {}]
  %s3 = inlined_call_operand.vmem [shape: bf16[3456,128], index: 3, kind: input, shape index: {}]
  %s4 = inlined_call_operand.vmem [shape: f32[40,128], index: 4, kind: input, shape index: {}]
  %s5 = inlined_call_operand.vmem [shape: f32[256,128], index: 5, kind: output, shape index: {}]
  %s6 = sld [smem:[#allocation0]]
  $region53: #{encode_process_decode.1} parent=0
    _
  %s8 = ssub.s32 1, %s6
  %s9 = scalar_select 0, %s8, %s6
  loop: start=0, step=1, limit=4
  $region2: #{encode_process_decode.1} parent=0 // loop_pre_header
    _
  $region3: #{encode_process_decode.1} parent=0 // loop_header
    %s11 = sphi 0, %s15
    %p12 = scmp.ge.s32.totalorder %s11, 4
    %s21 = sphi 0, %s23
    %s24 = sphi 0, %s21
    %s25 = sphi 0, %s24
    %s41 = sphi 0, %s25
    %s47 = sphi 0, %s49
    %s50 = sphi 0, %s47
    %s51 = sphi 0, %s50
    %s67 = sphi 0, %s51
    %s73 = sphi 0, %s75
    %s76 = sphi 0, %s73
    %s77 = sphi 0, %s76
    %s93 = sphi 0, %s77
    %s97 = sphi 0, %s97
    %s99 = sphi 0, %s97
    %s100 = sphi 0, %s99
    %s114 = sphi 0, %s100
    %s118 = sphi 0, %s118
    %s120 = sphi 0, %s118
    %s121 = sphi 0, %s120
    %s135 = sphi 0, %s121
    %s141 = sphi 0, %s143
    %s144 = sphi 0, %s141
    %s145 = sphi 0, %s144
    %s161 = sphi 0, %s145
  $region4: #{encode_process_decode.1} parent=0 // loop_header_branch
    %14 = sbr.rel (%p12) target = $region8
  $region5: #{encode_process_decode.1} parent=0 // loop_body
    %s16 = ssub.s32 %s11, 1
    %s17 = ssub.s32 %s11, 2
    %s18 = sadd.s32 %s11, 1
    %s19 = ssub.s32 %s11, %s18
    %p20 = scmp.eq.s32.totalorder %s19, 0
    %s22 = sadd.s32 %s21, 1
    %s23 = scalar_select %p20, %s21, %s22
    %p26 = pneg %p20
    %p27 = scmp.eq.s32.totalorder %s11, 1
    %p28 = por %p26, %p27
    %p29 = scmp.ne.s32.totalorder %s21, %s24
    %p30 = scmp.eq.s32.totalorder %s11, 0
    %p31 = por %p29, %p30
    %p32 = scmp.ne.s32.totalorder %s21, %s24
    %p33 = scmp.eq.s32.totalorder %s16, 1
    %p34 = por %p32, %p33
    %p35 = scmp.ne.s32.totalorder %s24, %s25
    %p36 = scmp.eq.s32.totalorder %s16, 0
    %p37 = por %p35, %p36
    %p38 = scmp.ne.s32.totalorder %s24, %s25
    %p39 = scmp.eq.s32.totalorder %s17, 1
    %p40 = por %p38, %p39
    %p42 = scmp.ne.s32.totalorder %s25, %s41
    %p43 = scmp.eq.s32.totalorder %s17, 0
    %p44 = por %p42, %p43
    %s45 = ssub.s32 %s11, %s18
    %p46 = scmp.eq.s32.totalorder %s45, 0
    %s48 = sadd.s32 %s47, 1
    %s49 = scalar_select %p46, %s47, %s48
    %p52 = pneg %p46
    %p53 = scmp.eq.s32.totalorder %s11, 1
    %p54 = por %p52, %p53
    %p55 = scmp.ne.s32.totalorder %s47, %s50
    %p56 = scmp.eq.s32.totalorder %s11, 0
    %p57 = por %p55, %p56
    %p58 = scmp.ne.s32.totalorder %s47, %s50
    %p59 = scmp.eq.s32.totalorder %s16, 1
    %p60 = por %p58, %p59
    %p61 = scmp.ne.s32.totalorder %s50, %s51
    %p62 = scmp.eq.s32.totalorder %s16, 0
    %p63 = por %p61, %p62
    %p64 = scmp.ne.s32.totalorder %s50, %s51
    %p65 = scmp.eq.s32.totalorder %s17, 1
    %p66 = por %p64, %p65
    %p68 = scmp.ne.s32.totalorder %s51, %s67
    %p69 = scmp.eq.s32.totalorder %s17, 0
    %p70 = por %p68, %p69
    %s71 = ssub.s32 %s11, %s18
    %p72 = scmp.eq.s32.totalorder %s71, 0
    %s74 = sadd.s32 %s73, 1
    %s75 = scalar_select %p72, %s73, %s74
    %p78 = pneg %p72
    %p79 = scmp.eq.s32.totalorder %s11, 1
    %p80 = por %p78, %p79
    %p81 = scmp.ne.s32.totalorder %s73, %s76
    %p82 = scmp.eq.s32.totalorder %s11, 0
    %p83 = por %p81, %p82
    %p84 = scmp.ne.s32.totalorder %s73, %s76
    %p85 = scmp.eq.s32.totalorder %s16, 1
    %p86 = por %p84, %p85
    %p87 = scmp.ne.s32.totalorder %s76, %s77
    %p88 = scmp.eq.s32.totalorder %s16, 0
    %p89 = por %p87, %p88
    %p90 = scmp.ne.s32.totalorder %s76, %s77
    %p91 = scmp.eq.s32.totalorder %s17, 1
    %p92 = por %p90, %p91
    %p94 = scmp.ne.s32.totalorder %s77, %s93
    %p95 = scmp.eq.s32.totalorder %s17, 0
    %p96 = por %p94, %p95
    %s98 = sadd.s32 %s97, 1
    %p101 = scmp.eq.s32.totalorder %s11, 1
    %p102 = scmp.ne.s32.totalorder %s97, %s99
    %p103 = scmp.eq.s32.totalorder %s11, 0
    %p104 = por %p102, %p103
    %p105 = scmp.ne.s32.totalorder %s97, %s99
    %p106 = scmp.eq.s32.totalorder %s16, 1
    %p107 = por %p105, %p106
    %p108 = scmp.ne.s32.totalorder %s99, %s100
    %p109 = scmp.eq.s32.totalorder %s16, 0
    %p110 = por %p108, %p109
    %p111 = scmp.ne.s32.totalorder %s99, %s100
    %p112 = scmp.eq.s32.totalorder %s17, 1
    %p113 = por %p111, %p112
    %p115 = scmp.ne.s32.totalorder %s100, %s114
    %p116 = scmp.eq.s32.totalorder %s17, 0
    %p117 = por %p115, %p116
    %s119 = sadd.s32 %s118, 1
    %p122 = scmp.eq.s32.totalorder %s11, 1
    %p123 = scmp.ne.s32.totalorder %s118, %s120
    %p124 = scmp.eq.s32.totalorder %s11, 0
    %p125 = por %p123, %p124
    %p126 = scmp.ne.s32.totalorder %s118, %s120
    %p127 = scmp.eq.s32.totalorder %s16, 1
    %p128 = por %p126, %p127
    %p129 = scmp.ne.s32.totalorder %s120, %s121
    %p130 = scmp.eq.s32.totalorder %s16, 0
    %p131 = por %p129, %p130
    %p132 = scmp.ne.s32.totalorder %s120, %s121
    %p133 = scmp.eq.s32.totalorder %s17, 1
    %p134 = por %p132, %p133
    %p136 = scmp.ne.s32.totalorder %s121, %s135
    %p137 = scmp.eq.s32.totalorder %s17, 0
    %p138 = por %p136, %p137
    %s139 = ssub.s32 %s11, %s18
    %p140 = scmp.eq.s32.totalorder %s139, 0
    %s142 = sadd.s32 %s141, 1
    %s143 = scalar_select %p140, %s141, %s142
    %p146 = pneg %p140
    %p147 = scmp.eq.s32.totalorder %s11, 1
    %p148 = por %p146, %p147
    %p149 = scmp.ne.s32.totalorder %s141, %s144
    %p150 = scmp.eq.s32.totalorder %s11, 0
    %p151 = por %p149, %p150
    %p152 = scmp.ne.s32.totalorder %s141, %s144
    %p153 = scmp.eq.s32.totalorder %s16, 1
    %p154 = por %p152, %p153
    %p155 = scmp.ne.s32.totalorder %s144, %s145
    %p156 = scmp.eq.s32.totalorder %s16, 0
    %p157 = por %p155, %p156
    %p158 = scmp.ne.s32.totalorder %s144, %s145
    %p159 = scmp.eq.s32.totalorder %s17, 1
    %p160 = por %p158, %p159
    %p162 = scmp.ne.s32.totalorder %s145, %s161
    %p163 = scmp.eq.s32.totalorder %s17, 0
    %p164 = por %p162, %p163
    %p165 = scmp.le.s32.totalorder 1, %s11
    %p166 = scmp.lt.s32.totalorder %s11, 3
    %p167 = pnand %p165, %p166
    %p168 = pneg %p167
    // Predicated region
    $region9: #{encode_process_decode.1} parent=5 // pred_check
      _
    $region10: #{encode_process_decode.1} parent=5 // pred_check_branch
      %170 = sbr.rel (%p167) target = $region12
    $region11: #{encode_process_decode.1} parent=5 // pred_region
      %s171 = ssub.s32 %s11, 1
      // Predicated region
      $region13: #{encode_process_decode.1} parent=11 // pred_check
        %p172 = pneg %p110
      $region14: #{encode_process_decode.1} parent=11 // pred_check_branch
        %174 = sbr.rel (%p172) target = $region16
      $region15: #{encode_process_decode.1} parent=11 // pred_region
        _
      $region16: #{encode_process_decode.1} parent=11 // pred_fallthru
        _
      // Predicated region
      $region17: #{encode_process_decode.1} parent=11 // pred_check
        %p175 = pneg %p131
      $region18: #{encode_process_decode.1} parent=11 // pred_check_branch
        %177 = sbr.rel (%p175) target = $region20
      $region19: #{encode_process_decode.1} parent=11 // pred_region
        _
      $region20: #{encode_process_decode.1} parent=11 // pred_fallthru
        _
    $region12: #{encode_process_decode.1} parent=5 // pred_fallthru
      _
    %p178 = scmp.lt.s32.totalorder %s11, 2
    // Predicated region
    $region21: #{encode_process_decode.1} parent=5 // pred_check
      %p179 = pneg %p178
    $region22: #{encode_process_decode.1} parent=5 // pred_check_branch
      %181 = sbr.rel (%p179) target = $region24
    $region23: #{encode_process_decode.1} parent=5 // pred_region
      // Predicated region
      $region25: #{encode_process_decode.1} parent=23 // pred_check
        %p182 = pneg %p31
      $region26: #{encode_process_decode.1} parent=23 // pred_check_branch
        %184 = sbr.rel (%p182) target = $region28
      $region27: #{encode_process_decode.1} parent=23 // pred_region
        %s185 = smul.u32 16, %s11
        %p186 = scmp.lt.s32.totalorder %s185, 31
        %s187 = scalar_select %p186, %s185, 31
        %s188 = smul.addr %s187, 8
        %s189 = scalar_lea.vmem %s0, %s188
        %s190 = smul.u32 16, %s11
      $region28: #{encode_process_decode.1} parent=23 // pred_fallthru
        _
      // Predicated region
      $region29: #{encode_process_decode.1} parent=23 // pred_check
        %p191 = pneg %p57
      $region30: #{encode_process_decode.1} parent=23 // pred_check_branch
        %193 = sbr.rel (%p191) target = $region32
      $region31: #{encode_process_decode.1} parent=23 // pred_region
        %s194 = smul.u32 32, %s11
        %p195 = scmp.lt.s32.totalorder %s194, 63
        %s196 = scalar_select %p195, %s194, 63
        %s197 = smul.addr %s196, 8
        %s198 = scalar_lea.vmem %s1, %s197
        %s199 = smul.u32 32, %s11
      $region32: #{encode_process_decode.1} parent=23 // pred_fallthru
        _
      // Predicated region
      $region33: #{encode_process_decode.1} parent=23 // pred_check
        %p200 = pneg %p83
      $region34: #{encode_process_decode.1} parent=23 // pred_check_branch
        %202 = sbr.rel (%p200) target = $region36
      $region35: #{encode_process_decode.1} parent=23 // pred_region
        %s203 = smul.u32 32, %s11
        %p204 = scmp.lt.s32.totalorder %s203, 63
        %s205 = scalar_select %p204, %s203, 63
        %s206 = smul.addr %s205, 8
        %s207 = scalar_lea.vmem %s2, %s206
        %s208 = smul.u32 32, %s11
      $region36: #{encode_process_decode.1} parent=23 // pred_fallthru
        _
    $region24: #{encode_process_decode.1} parent=5 // pred_fallthru
      _
    %p209 = scmp.le.s32.totalorder 1, %s11
    %p210 = scmp.lt.s32.totalorder %s11, 3
    %p211 = pnand %p209, %p210
    %p212 = pneg %p211
    // Predicated region
    $region37: #{encode_process_decode.1} parent=5 // pred_check
      _
    $region38: #{encode_process_decode.1} parent=5 // pred_check_branch
      %214 = sbr.rel (%p211) target = $region40
    $region39: #{encode_process_decode.1} parent=5 // pred_region
      %s215 = ssub.s32 %s11, 1
      %s216 = smul.u32 16, %s16
      %p217 = scmp.lt.s32.totalorder %s216, 31
      %s218 = scalar_select %p217, %s216, 31
      %s219 = smul.addr %s218, 8
      %s220 = scalar_lea.vmem %s0, %s219
      %p221 = pneg %p37
      %p222 = pneg %p34
      %s223 = smul.u32 32, %s16
      %p224 = scmp.lt.s32.totalorder %s223, 63
      %s225 = scalar_select %p224, %s223, 63
      %s226 = smul.addr %s225, 8
      %s227 = scalar_lea.vmem %s1, %s226
      %p228 = pneg %p63
      %p229 = pneg %p60
      %s230 = smul.u32 32, %s16
      %p231 = scmp.lt.s32.totalorder %s230, 63
      %s232 = scalar_select %p231, %s230, 63
      %s233 = smul.addr %s232, 8
      %s234 = scalar_lea.vmem %s2, %s233
      %p235 = pneg %p89
      %p236 = pneg %p86
      %p237 = pneg %p110
      %p238 = pneg %p107
      %p239 = pneg %p131
      %p240 = pneg %p128
      %p241 = pneg %p157
      %p242 = pneg %p154
      %s243 = smul.u32 16, %s16
      %p244 = scmp.lt.s32.totalorder %s243, 31
      %s245 = scalar_select %p244, %s243, 31
      %s246 = smul.addr %s245, 8
      %s247 = scalar_lea.vmem %s5, %s246
      %s248 = smul.u32 16, %s16
      %p249 = scmp.lt.s32.totalorder %s248, 31
      %s250 = scalar_select %p249, %s248, 31
      %s251 = smul.addr %s250, 8
      %s252 = scalar_lea.vmem %s0, %s251
      %s253 = smul.u32 16, %s16
      %s254 = smul.u32 32, %s16
      %p255 = scmp.lt.s32.totalorder %s254, 63
      %s256 = scalar_select %p255, %s254, 63
      %s257 = smul.addr %s256, 8
      %s258 = scalar_lea.vmem %s1, %s257
      %s259 = smul.u32 32, %s16
      %s260 = smul.u32 32, %s16
      %p261 = scmp.lt.s32.totalorder %s260, 63
      %s262 = scalar_select %p261, %s260, 63
      %s263 = smul.addr %s262, 8
      %s264 = scalar_lea.vmem %s2, %s263
      %s265 = smul.u32 32, %s16
      %s266 = smul.u32 16, %s16
      %p267 = scmp.lt.s32.totalorder %s266, 31
      %s268 = scalar_select %p267, %s266, 31
      %s269 = smul.addr %s268, 8
      %s270 = scalar_lea.vmem %s5, %s269
      %s271 = smul.u32 16, %s16
      %v272 = vld [vmem:[%s264] sm:$0xff]
      %v273 = vld [vmem:[%s264 + $0x8] sm:$0xff]
      %v274 = vld [vmem:[%s264 + $0x10] sm:$0xff]
      %v275 = vld [vmem:[%s264 + $0x18] sm:$0xff]
      %v276 = vld [vmem:[%s264 + $0x20] sm:$0xff]
      %v277 = vld [vmem:[%s264 + $0x28] sm:$0xff]
      %v278 = vld [vmem:[%s264 + $0x30] sm:$0xff]
      %v279 = vld [vmem:[%s264 + $0x38] sm:$0xff]
      %v280 = vld [vmem:[%s264 + $0x40] sm:$0xff]
      %v281 = vld [vmem:[%s264 + $0x48] sm:$0xff]
      %v282 = vld [vmem:[%s264 + $0x50] sm:$0xff]
      %v283 = vld [vmem:[%s264 + $0x58] sm:$0xff]
      %v284 = vld [vmem:[%s264 + $0x60] sm:$0xff]
      %v285 = vld [vmem:[%s264 + $0x68] sm:$0xff]
      %v286 = vld [vmem:[%s264 + $0x70] sm:$0xff]
      %v287 = vld [vmem:[%s264 + $0x78] sm:$0xff]
      %v288 = vld [vmem:[%s264 + $0x80] sm:$0xff]
      %v289 = vld [vmem:[%s264 + $0x88] sm:$0xff]
      %v290 = vld [vmem:[%s264 + $0x90] sm:$0xff]
      %v291 = vld [vmem:[%s264 + $0x98] sm:$0xff]
      %v292 = vld [vmem:[%s264 + $0xa0] sm:$0xff]
      %v293 = vld [vmem:[%s264 + $0xa8] sm:$0xff]
      %v294 = vld [vmem:[%s264 + $0xb0] sm:$0xff]
      %v295 = vld [vmem:[%s264 + $0xb8] sm:$0xff]
      %v296 = vld [vmem:[%s264 + $0xc0] sm:$0xff]
      %v297 = vld [vmem:[%s264 + $0xc8] sm:$0xff]
      %v298 = vld [vmem:[%s264 + $0xd0] sm:$0xff]
      %v299 = vld [vmem:[%s264 + $0xd8] sm:$0xff]
      %v300 = vld [vmem:[%s264 + $0xe0] sm:$0xff]
      %v301 = vld [vmem:[%s264 + $0xe8] sm:$0xff]
      %v302 = vld [vmem:[%s264 + $0xf0] sm:$0xff]
      %v303 = vld [vmem:[%s264 + $0xf8] sm:$0xff]
      %v304 = vlaneseq
      %v305 = vand.u32 %v304, 127
      %306 = vset.pattern.permute.xlu0 0
      %307 = vperm.xlu0 %306, %v272
      %v308 = vpop.permute.xlu0 %307
      %309 = vset.pattern.permute.xlu0 0
      %310 = vperm.xlu0 %309, %v273
      %v311 = vpop.permute.xlu0 %310
      %312 = vset.pattern.permute.xlu0 0
      %313 = vperm.xlu0 %312, %v274
      %v314 = vpop.permute.xlu0 %313
      %315 = vset.pattern.permute.xlu0 0
      %316 = vperm.xlu0 %315, %v275
      %v317 = vpop.permute.xlu0 %316
      %318 = vset.pattern.permute.xlu0 0
      %319 = vperm.xlu0 %318, %v276
      %v320 = vpop.permute.xlu0 %319
      %321 = vset.pattern.permute.xlu0 0
      %322 = vperm.xlu0 %321, %v277
      %v323 = vpop.permute.xlu0 %322
      %324 = vset.pattern.permute.xlu0 0
      %325 = vperm.xlu0 %324, %v278
      %v326 = vpop.permute.xlu0 %325
      %327 = vset.pattern.permute.xlu0 0
      %328 = vperm.xlu0 %327, %v279
      %v329 = vpop.permute.xlu0 %328
      %330 = vset.pattern.permute.xlu0 0
      %331 = vperm.xlu0 %330, %v280
      %v332 = vpop.permute.xlu0 %331
      %333 = vset.pattern.permute.xlu0 0
      %334 = vperm.xlu0 %333, %v281
      %v335 = vpop.permute.xlu0 %334
      %336 = vset.pattern.permute.xlu0 0
      %337 = vperm.xlu0 %336, %v282
      %v338 = vpop.permute.xlu0 %337
      %339 = vset.pattern.permute.xlu0 0
      %340 = vperm.xlu0 %339, %v283
      %v341 = vpop.permute.xlu0 %340
      %342 = vset.pattern.permute.xlu0 0
      %343 = vperm.xlu0 %342, %v284
      %v344 = vpop.permute.xlu0 %343
      %345 = vset.pattern.permute.xlu0 0
      %346 = vperm.xlu0 %345, %v285
      %v347 = vpop.permute.xlu0 %346
      %348 = vset.pattern.permute.xlu0 0
      %349 = vperm.xlu0 %348, %v286
      %v350 = vpop.permute.xlu0 %349
      %351 = vset.pattern.permute.xlu0 0
      %352 = vperm.xlu0 %351, %v287
      %v353 = vpop.permute.xlu0 %352
      %354 = vset.pattern.permute.xlu0 0
      %355 = vperm.xlu0 %354, %v288
      %v356 = vpop.permute.xlu0 %355
      %357 = vset.pattern.permute.xlu0 0
      %358 = vperm.xlu0 %357, %v289
      %v359 = vpop.permute.xlu0 %358
      %360 = vset.pattern.permute.xlu0 0
      %361 = vperm.xlu0 %360, %v290
      %v362 = vpop.permute.xlu0 %361
      %363 = vset.pattern.permute.xlu0 0
      %364 = vperm.xlu0 %363, %v291
      %v365 = vpop.permute.xlu0 %364
      %366 = vset.pattern.permute.xlu0 0
      %367 = vperm.xlu0 %366, %v292
      %v368 = vpop.permute.xlu0 %367
      %369 = vset.pattern.permute.xlu0 0
      %370 = vperm.xlu0 %369, %v293
      %v371 = vpop.permute.xlu0 %370
      %372 = vset.pattern.permute.xlu0 0
      %373 = vperm.xlu0 %372, %v294
      %v374 = vpop.permute.xlu0 %373
      %375 = vset.pattern.permute.xlu0 0
      %376 = vperm.xlu0 %375, %v295
      %v377 = vpop.permute.xlu0 %376
      %378 = vset.pattern.permute.xlu0 0
      %379 = vperm.xlu0 %378, %v296
      %v380 = vpop.permute.xlu0 %379
      %381 = vset.pattern.permute.xlu0 0
      %382 = vperm.xlu0 %381, %v297
      %v383 = vpop.permute.xlu0 %382
      %384 = vset.pattern.permute.xlu0 0
      %385 = vperm.xlu0 %384, %v298
      %v386 = vpop.permute.xlu0 %385
      %387 = vset.pattern.permute.xlu0 0
      %388 = vperm.xlu0 %387, %v299
      %v389 = vpop.permute.xlu0 %388
      %390 = vset.pattern.permute.xlu0 0
      %391 = vperm.xlu0 %390, %v300
      %v392 = vpop.permute.xlu0 %391
      %393 = vset.pattern.permute.xlu0 0
      %394 = vperm.xlu0 %393, %v301
      %v395 = vpop.permute.xlu0 %394
      %396 = vset.pattern.permute.xlu0 0
      %397 = vperm.xlu0 %396, %v302
      %v398 = vpop.permute.xlu0 %397
      %399 = vset.pattern.permute.xlu0 0
      %400 = vperm.xlu0 %399, %v303
      %v401 = vpop.permute.xlu0 %400
      %vm402 = vcmp.eq.s32.totalorder %v308, %v305
      %vm403 = vcmp.eq.s32.totalorder %v311, %v305
      %vm404 = vcmp.eq.s32.totalorder %v314, %v305
      %vm405 = vcmp.eq.s32.totalorder %v317, %v305
      %vm406 = vcmp.eq.s32.totalorder %v320, %v305
      %vm407 = vcmp.eq.s32.totalorder %v323, %v305
      %vm408 = vcmp.eq.s32.totalorder %v326, %v305
      %vm409 = vcmp.eq.s32.totalorder %v329, %v305
      %vm410 = vcmp.eq.s32.totalorder %v332, %v305
      %vm411 = vcmp.eq.s32.totalorder %v335, %v305
      %vm412 = vcmp.eq.s32.totalorder %v338, %v305
      %vm413 = vcmp.eq.s32.totalorder %v341, %v305
      %vm414 = vcmp.eq.s32.totalorder %v344, %v305
      %vm415 = vcmp.eq.s32.totalorder %v347, %v305
      %vm416 = vcmp.eq.s32.totalorder %v350, %v305
      %vm417 = vcmp.eq.s32.totalorder %v353, %v305
      %vm418 = vcmp.eq.s32.totalorder %v356, %v305
      %vm419 = vcmp.eq.s32.totalorder %v359, %v305
      %vm420 = vcmp.eq.s32.totalorder %v362, %v305
      %vm421 = vcmp.eq.s32.totalorder %v365, %v305
      %vm422 = vcmp.eq.s32.totalorder %v368, %v305
      %vm423 = vcmp.eq.s32.totalorder %v371, %v305
      %vm424 = vcmp.eq.s32.totalorder %v374, %v305
      %vm425 = vcmp.eq.s32.totalorder %v377, %v305
      %vm426 = vcmp.eq.s32.totalorder %v380, %v305
      %vm427 = vcmp.eq.s32.totalorder %v383, %v305
      %vm428 = vcmp.eq.s32.totalorder %v386, %v305
      %vm429 = vcmp.eq.s32.totalorder %v389, %v305
      %vm430 = vcmp.eq.s32.totalorder %v392, %v305
      %vm431 = vcmp.eq.s32.totalorder %v395, %v305
      %vm432 = vcmp.eq.s32.totalorder %v398, %v305
      %vm433 = vcmp.eq.s32.totalorder %v401, %v305
      %v434 = vsel %vm402, 1, 0
      %v435 = vsel %vm403, 1, 0
      %v436 = vsel %vm404, 1, 0
      %v437 = vsel %vm405, 1, 0
      %v438 = vsel %vm406, 1, 0
      %v439 = vsel %vm407, 1, 0
      %v440 = vsel %vm408, 1, 0
      %v441 = vsel %vm409, 1, 0
      %v442 = vsel %vm410, 1, 0
      %v443 = vsel %vm411, 1, 0
      %v444 = vsel %vm412, 1, 0
      %v445 = vsel %vm413, 1, 0
      %v446 = vsel %vm414, 1, 0
      %v447 = vsel %vm415, 1, 0
      %v448 = vsel %vm416, 1, 0
      %v449 = vsel %vm417, 1, 0
      %v450 = vsel %vm418, 1, 0
      %v451 = vsel %vm419, 1, 0
      %v452 = vsel %vm420, 1, 0
      %v453 = vsel %vm421, 1, 0
      %v454 = vsel %vm422, 1, 0
      %v455 = vsel %vm423, 1, 0
      %v456 = vsel %vm424, 1, 0
      %v457 = vsel %vm425, 1, 0
      %v458 = vsel %vm426, 1, 0
      %v459 = vsel %vm427, 1, 0
      %v460 = vsel %vm428, 1, 0
      %v461 = vsel %vm429, 1, 0
      %v462 = vsel %vm430, 1, 0
      %v463 = vsel %vm431, 1, 0
      %v464 = vsel %vm432, 1, 0
      %v465 = vsel %vm433, 1, 0
      %v466 = vcvt.s32.f32 %v434
      %v467 = vcvt.s32.f32 %v435
      %v468 = vcvt.s32.f32 %v436
      %v469 = vcvt.s32.f32 %v437
      %v470 = vcvt.s32.f32 %v438
      %v471 = vcvt.s32.f32 %v439
      %v472 = vcvt.s32.f32 %v440
      %v473 = vcvt.s32.f32 %v441
      %v474 = vcvt.s32.f32 %v442
      %v475 = vcvt.s32.f32 %v443
      %v476 = vcvt.s32.f32 %v444
      %v477 = vcvt.s32.f32 %v445
      %v478 = vcvt.s32.f32 %v446
      %v479 = vcvt.s32.f32 %v447
      %v480 = vcvt.s32.f32 %v448
      %v481 = vcvt.s32.f32 %v449
      %v482 = vcvt.s32.f32 %v450
      %v483 = vcvt.s32.f32 %v451
      %v484 = vcvt.s32.f32 %v452
      %v485 = vcvt.s32.f32 %v453
      %v486 = vcvt.s32.f32 %v454
      %v487 = vcvt.s32.f32 %v455
      %v488 = vcvt.s32.f32 %v456
      %v489 = vcvt.s32.f32 %v457
      %v490 = vcvt.s32.f32 %v458
      %v491 = vcvt.s32.f32 %v459
      %v492 = vcvt.s32.f32 %v460
      %v493 = vcvt.s32.f32 %v461
      %v494 = vcvt.s32.f32 %v462
      %v495 = vcvt.s32.f32 %v463
      %v496 = vcvt.s32.f32 %v464
      %v497 = vcvt.s32.f32 %v465
      %v498 = vpack.c.bf16 %v467, %v466
      %v499 = vpack.c.bf16 %v469, %v468
      %v500 = vpack.c.bf16 %v471, %v470
      %v501 = vpack.c.bf16 %v473, %v472
      %v502 = vpack.c.bf16 %v475, %v474
      %v503 = vpack.c.bf16 %v477, %v476
      %v504 = vpack.c.bf16 %v479, %v478
      %v505 = vpack.c.bf16 %v481, %v480
      %v506 = vpack.c.bf16 %v483, %v482
      %v507 = vpack.c.bf16 %v485, %v484
      %v508 = vpack.c.bf16 %v487, %v486
      %v509 = vpack.c.bf16 %v489, %v488
      %v510 = vpack.c.bf16 %v491, %v490
      %v511 = vpack.c.bf16 %v493, %v492
      %v512 = vpack.c.bf16 %v495, %v494
      %v513 = vpack.c.bf16 %v497, %v496
      %514 = vset.pattern.permute.xlu0 1
      %515 = vperm.xlu0 %514, %v272
      %v516 = vpop.permute.xlu0 %515
      %517 = vset.pattern.permute.xlu0 1
      %518 = vperm.xlu0 %517, %v273
      %v519 = vpop.permute.xlu0 %518
      %520 = vset.pattern.permute.xlu0 1
      %521 = vperm.xlu0 %520, %v274
      %v522 = vpop.permute.xlu0 %521
      %523 = vset.pattern.permute.xlu0 1
      %524 = vperm.xlu0 %523, %v275
      %v525 = vpop.permute.xlu0 %524
      %526 = vset.pattern.permute.xlu0 1
      %527 = vperm.xlu0 %526, %v276
      %v528 = vpop.permute.xlu0 %527
      %529 = vset.pattern.permute.xlu0 1
      %530 = vperm.xlu0 %529, %v277
      %v531 = vpop.permute.xlu0 %530
      %532 = vset.pattern.permute.xlu0 1
      %533 = vperm.xlu0 %532, %v278
      %v534 = vpop.permute.xlu0 %533
      %535 = vset.pattern.permute.xlu0 1
      %536 = vperm.xlu0 %535, %v279
      %v537 = vpop.permute.xlu0 %536
      %538 = vset.pattern.permute.xlu0 1
      %539 = vperm.xlu0 %538, %v280
      %v540 = vpop.permute.xlu0 %539
      %541 = vset.pattern.permute.xlu0 1
      %542 = vperm.xlu0 %541, %v281
      %v543 = vpop.permute.xlu0 %542
      %544 = vset.pattern.permute.xlu0 1
      %545 = vperm.xlu0 %544, %v282
      %v546 = vpop.permute.xlu0 %545
      %547 = vset.pattern.permute.xlu0 1
      %548 = vperm.xlu0 %547, %v283
      %v549 = vpop.permute.xlu0 %548
      %550 = vset.pattern.permute.xlu0 1
      %551 = vperm.xlu0 %550, %v284
      %v552 = vpop.permute.xlu0 %551
      %553 = vset.pattern.permute.xlu0 1
      %554 = vperm.xlu0 %553, %v285
      %v555 = vpop.permute.xlu0 %554
      %556 = vset.pattern.permute.xlu0 1
      %557 = vperm.xlu0 %556, %v286
      %v558 = vpop.permute.xlu0 %557
      %559 = vset.pattern.permute.xlu0 1
      %560 = vperm.xlu0 %559, %v287
      %v561 = vpop.permute.xlu0 %560
      %562 = vset.pattern.permute.xlu0 1
      %563 = vperm.xlu0 %562, %v288
      %v564 = vpop.permute.xlu0 %563
      %565 = vset.pattern.permute.xlu0 1
      %566 = vperm.xlu0 %565, %v289
      %v567 = vpop.permute.xlu0 %566
      %568 = vset.pattern.permute.xlu0 1
      %569 = vperm.xlu0 %568, %v290
      %v570 = vpop.permute.xlu0 %569
      %571 = vset.pattern.permute.xlu0 1
      %572 = vperm.xlu0 %571, %v291
      %v573 = vpop.permute.xlu0 %572
      %574 = vset.pattern.permute.xlu0 1
      %575 = vperm.xlu0 %574, %v292
      %v576 = vpop.permute.xlu0 %575
      %577 = vset.pattern.permute.xlu0 1
      %578 = vperm.xlu0 %577, %v293
      %v579 = vpop.permute.xlu0 %578
      %580 = vset.pattern.permute.xlu0 1
      %581 = vperm.xlu0 %580, %v294
      %v582 = vpop.permute.xlu0 %581
      %583 = vset.pattern.permute.xlu0 1
      %584 = vperm.xlu0 %583, %v295
      %v585 = vpop.permute.xlu0 %584
      %586 = vset.pattern.permute.xlu0 1
      %587 = vperm.xlu0 %586, %v296
      %v588 = vpop.permute.xlu0 %587
      %589 = vset.pattern.permute.xlu0 1
      %590 = vperm.xlu0 %589, %v297
      %v591 = vpop.permute.xlu0 %590
      %592 = vset.pattern.permute.xlu0 1
      %593 = vperm.xlu0 %592, %v298
      %v594 = vpop.permute.xlu0 %593
      %595 = vset.pattern.permute.xlu0 1
      %596 = vperm.xlu0 %595, %v299
      %v597 = vpop.permute.xlu0 %596
      %598 = vset.pattern.permute.xlu0 1
      %599 = vperm.xlu0 %598, %v300
      %v600 = vpop.permute.xlu0 %599
      %601 = vset.pattern.permute.xlu0 1
      %602 = vperm.xlu0 %601, %v301
      %v603 = vpop.permute.xlu0 %602
      %604 = vset.pattern.permute.xlu0 1
      %605 = vperm.xlu0 %604, %v302
      %v606 = vpop.permute.xlu0 %605
      %607 = vset.pattern.permute.xlu0 1
      %608 = vperm.xlu0 %607, %v303
      %v609 = vpop.permute.xlu0 %608
      %vm610 = vcmp.eq.s32.totalorder %v516, %v305
      %vm611 = vcmp.eq.s32.totalorder %v519, %v305
      %vm612 = vcmp.eq.s32.totalorder %v522, %v305
      %vm613 = vcmp.eq.s32.totalorder %v525, %v305
      %vm614 = vcmp.eq.s32.totalorder %v528, %v305
      %vm615 = vcmp.eq.s32.totalorder %v531, %v305
      %vm616 = vcmp.eq.s32.totalorder %v534, %v305
      %vm617 = vcmp.eq.s32.totalorder %v537, %v305
      %vm618 = vcmp.eq.s32.totalorder %v540, %v305
      %vm619 = vcmp.eq.s32.totalorder %v543, %v305
      %vm620 = vcmp.eq.s32.totalorder %v546, %v305
      %vm621 = vcmp.eq.s32.totalorder %v549, %v305
      %vm622 = vcmp.eq.s32.totalorder %v552, %v305
      %vm623 = vcmp.eq.s32.totalorder %v555, %v305
      %vm624 = vcmp.eq.s32.totalorder %v558, %v305
      %vm625 = vcmp.eq.s32.totalorder %v561, %v305
      %vm626 = vcmp.eq.s32.totalorder %v564, %v305
      %vm627 = vcmp.eq.s32.totalorder %v567, %v305
      %vm628 = vcmp.eq.s32.totalorder %v570, %v305
      %vm629 = vcmp.eq.s32.totalorder %v573, %v305
      %vm630 = vcmp.eq.s32.totalorder %v576, %v305
      %vm631 = vcmp.eq.s32.totalorder %v579, %v305
      %vm632 = vcmp.eq.s32.totalorder %v582, %v305
      %vm633 = vcmp.eq.s32.totalorder %v585, %v305
      %vm634 = vcmp.eq.s32.totalorder %v588, %v305
      %vm635 = vcmp.eq.s32.totalorder %v591, %v305
      %vm636 = vcmp.eq.s32.totalorder %v594, %v305
      %vm637 = vcmp.eq.s32.totalorder %v597, %v305
      %vm638 = vcmp.eq.s32.totalorder %v600, %v305
      %vm639 = vcmp.eq.s32.totalorder %v603, %v305
      %vm640 = vcmp.eq.s32.totalorder %v606, %v305
      %vm641 = vcmp.eq.s32.totalorder %v609, %v305
      %v642 = vsel %vm610, 1, 0
      %v643 = vsel %vm611, 1, 0
      %v644 = vsel %vm612, 1, 0
      %v645 = vsel %vm613, 1, 0
      %v646 = vsel %vm614, 1, 0
      %v647 = vsel %vm615, 1, 0
      %v648 = vsel %vm616, 1, 0
      %v649 = vsel %vm617, 1, 0
      %v650 = vsel %vm618, 1, 0
      %v651 = vsel %vm619, 1, 0
      %v652 = vsel %vm620, 1, 0
      %v653 = vsel %vm621, 1, 0
      %v654 = vsel %vm622, 1, 0
      %v655 = vsel %vm623, 1, 0
      %v656 = vsel %vm624, 1, 0
      %v657 = vsel %vm625, 1, 0
      %v658 = vsel %vm626, 1, 0
      %v659 = vsel %vm627, 1, 0
      %v660 = vsel %vm628, 1, 0
      %v661 = vsel %vm629, 1, 0
      %v662 = vsel %vm630, 1, 0
      %v663 = vsel %vm631, 1, 0
      %v664 = vsel %vm632, 1, 0
      %v665 = vsel %vm633, 1, 0
      %v666 = vsel %vm634, 1, 0
      %v667 = vsel %vm635, 1, 0
      %v668 = vsel %vm636, 1, 0
      %v669 = vsel %vm637, 1, 0
      %v670 = vsel %vm638, 1, 0
      %v671 = vsel %vm639, 1, 0
      %v672 = vsel %vm640, 1, 0
      %v673 = vsel %vm641, 1, 0
      %v674 = vcvt.s32.f32 %v642
      %v675 = vcvt.s32.f32 %v643
      %v676 = vcvt.s32.f32 %v644
      %v677 = vcvt.s32.f32 %v645
      %v678 = vcvt.s32.f32 %v646
      %v679 = vcvt.s32.f32 %v647
      %v680 = vcvt.s32.f32 %v648
      %v681 = vcvt.s32.f32 %v649
      %v682 = vcvt.s32.f32 %v650
      %v683 = vcvt.s32.f32 %v651
      %v684 = vcvt.s32.f32 %v652
      %v685 = vcvt.s32.f32 %v653
      %v686 = vcvt.s32.f32 %v654
      %v687 = vcvt.s32.f32 %v655
      %v688 = vcvt.s32.f32 %v656
      %v689 = vcvt.s32.f32 %v657
      %v690 = vcvt.s32.f32 %v658
      %v691 = vcvt.s32.f32 %v659
      %v692 = vcvt.s32.f32 %v660
      %v693 = vcvt.s32.f32 %v661
      %v694 = vcvt.s32.f32 %v662
      %v695 = vcvt.s32.f32 %v663
      %v696 = vcvt.s32.f32 %v664
      %v697 = vcvt.s32.f32 %v665
      %v698 = vcvt.s32.f32 %v666
      %v699 = vcvt.s32.f32 %v667
      %v700 = vcvt.s32.f32 %v668
      %v701 = vcvt.s32.f32 %v669
      %v702 = vcvt.s32.f32 %v670
      %v703 = vcvt.s32.f32 %v671
      %v704 = vcvt.s32.f32 %v672
      %v705 = vcvt.s32.f32 %v673
      %v706 = vpack.c.bf16 %v675, %v674
      %v707 = vpack.c.bf16 %v677, %v676
      %v708 = vpack.c.bf16 %v679, %v678
      %v709 = vpack.c.bf16 %v681, %v680
      %v710 = vpack.c.bf16 %v683, %v682
      %v711 = vpack.c.bf16 %v685, %v684
      %v712 = vpack.c.bf16 %v687, %v686
      %v713 = vpack.c.bf16 %v689, %v688
      %v714 = vpack.c.bf16 %v691, %v690
      %v715 = vpack.c.bf16 %v693, %v692
      %v716 = vpack.c.bf16 %v695, %v694
      %v717 = vpack.c.bf16 %v697, %v696
      %v718 = vpack.c.bf16 %v699, %v698
      %v719 = vpack.c.bf16 %v701, %v700
      %v720 = vpack.c.bf16 %v703, %v702
      %v721 = vpack.c.bf16 %v705, %v704
      %722 = vxpose.xlu0.b32.start [1/16] %v674, 128
      %723 = vxpose.xlu0.b32.cont [2/16] %v675, 128
      %724 = vxpose.xlu0.b32.cont [3/16] %v676, 128
      %725 = vxpose.xlu0.b32.cont [4/16] %v677, 128
      %726 = vxpose.xlu0.b32.cont [5/16] %v678, 128
      %727 = vxpose.xlu0.b32.cont [6/16] %v679, 128
      %728 = vxpose.xlu0.b32.cont [7/16] %v680, 128
      %729 = vxpose.xlu0.b32.cont [8/16] %v681, 128
      %730 = vxpose.xlu0.b32.cont [9/16] %v682, 128
      %731 = vxpose.xlu0.b32.cont [10/16] %v683, 128
      %732 = vxpose.xlu0.b32.cont [11/16] %v684, 128
      %733 = vxpose.xlu0.b32.cont [12/16] %v685, 128
      %734 = vxpose.xlu0.b32.cont [13/16] %v686, 128
      %735 = vxpose.xlu0.b32.cont [14/16] %v687, 128
      %736 = vxpose.xlu0.b32.cont [15/16] %v688, 128
      %737 = vxpose.xlu0.b32.end [16/16] %v689, 128
      %v738 = vpop.trf.xlu0
      %v739 = vpop.trf.xlu0
      %v740 = vpop.trf.xlu0
      %v741 = vpop.trf.xlu0
      %v742 = vpop.trf.xlu0
      %v743 = vpop.trf.xlu0
      %v744 = vpop.trf.xlu0
      %v745 = vpop.trf.xlu0
      %v746 = vpop.trf.xlu0
      %v747 = vpop.trf.xlu0
      %v748 = vpop.trf.xlu0
      %v749 = vpop.trf.xlu0
      %v750 = vpop.trf.xlu0
      %v751 = vpop.trf.xlu0
      %v752 = vpop.trf.xlu0
      %v753 = vpop.trf.xlu0
      %754 = vxpose.xlu0.b32.start [1/16] %v690, 128
      %755 = vxpose.xlu0.b32.cont [2/16] %v691, 128
      %756 = vxpose.xlu0.b32.cont [3/16] %v692, 128
      %757 = vxpose.xlu0.b32.cont [4/16] %v693, 128
      %758 = vxpose.xlu0.b32.cont [5/16] %v694, 128
      %759 = vxpose.xlu0.b32.cont [6/16] %v695, 128
      %760 = vxpose.xlu0.b32.cont [7/16] %v696, 128
      %761 = vxpose.xlu0.b32.cont [8/16] %v697, 128
      %762 = vxpose.xlu0.b32.cont [9/16] %v698, 128
      %763 = vxpose.xlu0.b32.cont [10/16] %v699, 128
      %764 = vxpose.xlu0.b32.cont [11/16] %v700, 128
      %765 = vxpose.xlu0.b32.cont [12/16] %v701, 128
      %766 = vxpose.xlu0.b32.cont [13/16] %v702, 128
      %767 = vxpose.xlu0.b32.cont [14/16] %v703, 128
      %768 = vxpose.xlu0.b32.cont [15/16] %v704, 128
      %769 = vxpose.xlu0.b32.end [16/16] %v705, 128
      %v770 = vpop.trf.xlu0
      %v771 = vpop.trf.xlu0
      %v772 = vpop.trf.xlu0
      %v773 = vpop.trf.xlu0
      %v774 = vpop.trf.xlu0
      %v775 = vpop.trf.xlu0
      %v776 = vpop.trf.xlu0
      %v777 = vpop.trf.xlu0
      %v778 = vpop.trf.xlu0
      %v779 = vpop.trf.xlu0
      %v780 = vpop.trf.xlu0
      %v781 = vpop.trf.xlu0
      %v782 = vpop.trf.xlu0
      %v783 = vpop.trf.xlu0
      %v784 = vpop.trf.xlu0
      %v785 = vpop.trf.xlu0
      %v786 = vpack.c.bf16 %v739, %v738
      %v787 = vpack.c.bf16 %v771, %v770
      %v788 = vpack.c.bf16 %v741, %v740
      %v789 = vpack.c.bf16 %v773, %v772
      %v790 = vpack.c.bf16 %v743, %v742
      %v791 = vpack.c.bf16 %v775, %v774
      %v792 = vpack.c.bf16 %v745, %v744
      %v793 = vpack.c.bf16 %v777, %v776
      %v794 = vpack.c.bf16 %v747, %v746
      %v795 = vpack.c.bf16 %v779, %v778
      %v796 = vpack.c.bf16 %v749, %v748
      %v797 = vpack.c.bf16 %v781, %v780
      %v798 = vpack.c.bf16 %v751, %v750
      %v799 = vpack.c.bf16 %v783, %v782
      %v800 = vpack.c.bf16 %v753, %v752
      %v801 = vpack.c.bf16 %v785, %v784
      %v802 = vld [vmem:[%s252] sm:$0xff]
      %v803 = vld [vmem:[%s252 + $0x8] sm:$0xff]
      %v804 = vld [vmem:[%s252 + $0x10] sm:$0xff]
      %v805 = vld [vmem:[%s252 + $0x18] sm:$0xff]
      %v806 = vld [vmem:[%s252 + $0x20] sm:$0xff]
      %v807 = vld [vmem:[%s252 + $0x28] sm:$0xff]
      %v808 = vld [vmem:[%s252 + $0x30] sm:$0xff]
      %v809 = vld [vmem:[%s252 + $0x38] sm:$0xff]
      %v810 = vld [vmem:[%s252 + $0x40] sm:$0xff]
      %v811 = vld [vmem:[%s252 + $0x48] sm:$0xff]
      %v812 = vld [vmem:[%s252 + $0x50] sm:$0xff]
      %v813 = vld [vmem:[%s252 + $0x58] sm:$0xff]
      %v814 = vld [vmem:[%s252 + $0x60] sm:$0xff]
      %v815 = vld [vmem:[%s252 + $0x68] sm:$0xff]
      %v816 = vld [vmem:[%s252 + $0x70] sm:$0xff]
      %v817 = vld [vmem:[%s252 + $0x78] sm:$0xff]
      %v818 = vld [vmem:[%s4] sm:$0x1]
      %v819 = vpack.c.bf16 %v803, %v802
      %v820 = vpack.c.bf16 %v805, %v804
      %v821 = vpack.c.bf16 %v807, %v806
      %v822 = vpack.c.bf16 %v809, %v808
      %v823 = vpack.c.bf16 %v811, %v810
      %v824 = vpack.c.bf16 %v813, %v812
      %v825 = vpack.c.bf16 %v815, %v814
      %v826 = vpack.c.bf16 %v817, %v816
      %v827 = vld [vmem:[%s3] sm:$0xf]
      %v828 = vld [vmem:[%s3 + $0x4] sm:$0xf]
      %v829 = vld [vmem:[%s3 + $0x8] sm:$0xf]
      %v830 = vld [vmem:[%s3 + $0xc] sm:$0xf]
      %v831 = vld [vmem:[%s3 + $0x10] sm:$0xf]
      %v832 = vld [vmem:[%s3 + $0x14] sm:$0xf]
      %v833 = vld [vmem:[%s3 + $0x18] sm:$0xf]
      %v834 = vld [vmem:[%s3 + $0x1c] sm:$0xf]
      %v835 = vld [vmem:[%s3 + $0x20] sm:$0xf]
      %v836 = vld [vmem:[%s3 + $0x24] sm:$0xf]
      %v837 = vld [vmem:[%s3 + $0x28] sm:$0xf]
      %v838 = vld [vmem:[%s3 + $0x2c] sm:$0xf]
      %v839 = vld [vmem:[%s3 + $0x30] sm:$0xf]
      %v840 = vld [vmem:[%s3 + $0x34] sm:$0xf]
      %v841 = vld [vmem:[%s3 + $0x38] sm:$0xf]
      %v842 = vld [vmem:[%s3 + $0x3c] sm:$0xf]
      %v859 = vunpack.c.l.b16 %v827
      %v860 = vunpack.c.l.b16 %v828
      %v861 = vunpack.c.l.b16 %v829
      %v862 = vunpack.c.l.b16 %v830
      %v863 = vunpack.c.l.b16 %v831
      %v864 = vunpack.c.l.b16 %v832
      %v865 = vunpack.c.l.b16 %v833
      %v866 = vunpack.c.l.b16 %v834
      %v867 = vunpack.c.l.b16 %v835
      %v868 = vunpack.c.l.b16 %v836
      %v869 = vunpack.c.l.b16 %v837
      %v870 = vunpack.c.l.b16 %v838
      %v871 = vunpack.c.l.b16 %v839
      %v872 = vunpack.c.l.b16 %v840
      %v873 = vunpack.c.l.b16 %v841
      %v874 = vunpack.c.l.b16 %v842
      %v875 = vpack.c.b16 %v860, %v859
      %v876 = vpack.c.b16 %v862, %v861
      %v877 = vpack.c.b16 %v864, %v863
      %v878 = vpack.c.b16 %v866, %v865
      %v879 = vpack.c.b16 %v868, %v867
      %v880 = vpack.c.b16 %v870, %v869
      %v881 = vpack.c.b16 %v872, %v871
      %v882 = vpack.c.b16 %v874, %v873
      %891 = vmatpush.bf16.msra.mxu0 %v882
      %892 = vmatpush.bf16.msra.mxu0 %v881
      %893 = vmatpush.bf16.msra.mxu0 %v880
      %894 = vmatpush.bf16.msra.mxu0 %v879
      %895 = vmatpush.bf16.msra.mxu0 %v878
      %896 = vmatpush.bf16.msra.mxu0 %v877
      %897 = vmatpush.bf16.msra.mxu0 %v876
      %898 = vmatpush.bf16.msra.mxu0 %v875
      %899 = vmatmul.bf16.gmra.mxu0 %v819
      %v900 = vpop.f32.mrf.mxu0
      %v901 = vadd.f32 0.0, %v900
      %v902 = vpop.f32.mrf.mxu0
      %v903 = vadd.f32 0.0, %v902
      %904 = vmatmul.bf16.gmra.mxu0 %v820
      %v905 = vpop.f32.mrf.mxu0
      %v906 = vadd.f32 0.0, %v905
      %v907 = vpop.f32.mrf.mxu0
      %v908 = vadd.f32 0.0, %v907
      %909 = vmatmul.bf16.gmra.mxu0 %v821
      %v910 = vpop.f32.mrf.mxu0
      %v911 = vadd.f32 0.0, %v910
      %v912 = vpop.f32.mrf.mxu0
      %v913 = vadd.f32 0.0, %v912
      %914 = vmatmul.bf16.gmra.mxu0 %v822
      %v915 = vpop.f32.mrf.mxu0
      %v916 = vadd.f32 0.0, %v915
      %v917 = vpop.f32.mrf.mxu0
      %v918 = vadd.f32 0.0, %v917
      %919 = vmatmul.bf16.gmra.mxu0 %v823
      %v920 = vpop.f32.mrf.mxu0
      %v921 = vadd.f32 0.0, %v920
      %v922 = vpop.f32.mrf.mxu0
      %v923 = vadd.f32 0.0, %v922
      %924 = vmatmul.bf16.gmra.mxu0 %v824
      %v925 = vpop.f32.mrf.mxu0
      %v926 = vadd.f32 0.0, %v925
      %v927 = vpop.f32.mrf.mxu0
      %v928 = vadd.f32 0.0, %v927
      %929 = vmatmul.bf16.gmra.mxu0 %v825
      %v930 = vpop.f32.mrf.mxu0
      %v931 = vadd.f32 0.0, %v930
      %v932 = vpop.f32.mrf.mxu0
      %v933 = vadd.f32 0.0, %v932
      %934 = vmatmul.bf16.gmra.mxu0 %v826
      %v935 = vpop.f32.mrf.mxu0
      %v936 = vadd.f32 0.0, %v935
      %v937 = vpop.f32.mrf.mxu0
      %v938 = vadd.f32 0.0, %v937
      %939 = vdwg.mxu0
      %v940 = vperm.slane %v818, 0
      %v941 = vadd.f32 %v940, %v901
      %v942 = vadd.f32 %v940, %v903
      %v943 = vadd.f32 %v940, %v906
      %v944 = vadd.f32 %v940, %v908
      %v945 = vadd.f32 %v940, %v911
      %v946 = vadd.f32 %v940, %v913
      %v947 = vadd.f32 %v940, %v916
      %v948 = vadd.f32 %v940, %v918
      %v949 = vadd.f32 %v940, %v921
      %v950 = vadd.f32 %v940, %v923
      %v951 = vadd.f32 %v940, %v926
      %v952 = vadd.f32 %v940, %v928
      %v953 = vadd.f32 %v940, %v931
      %v954 = vadd.f32 %v940, %v933
      %v955 = vadd.f32 %v940, %v936
      %v956 = vadd.f32 %v940, %v938
      %v957 = vmax.f32 %v941, 0.0
      %v958 = vmax.f32 %v942, 0.0
      %v959 = vmax.f32 %v943, 0.0
      %v960 = vmax.f32 %v944, 0.0
      %v961 = vmax.f32 %v945, 0.0
      %v962 = vmax.f32 %v946, 0.0
      %v963 = vmax.f32 %v947, 0.0
      %v964 = vmax.f32 %v948, 0.0
      %v965 = vmax.f32 %v949, 0.0
      %v966 = vmax.f32 %v950, 0.0
      %v967 = vmax.f32 %v951, 0.0
      %v968 = vmax.f32 %v952, 0.0
      %v969 = vmax.f32 %v953, 0.0
      %v970 = vmax.f32 %v954, 0.0
      %v971 = vmax.f32 %v955, 0.0
      %v972 = vmax.f32 %v956, 0.0
      %v973 = vpack.c.bf16 %v958, %v957
      %v974 = vpack.c.bf16 %v960, %v959
      %v975 = vpack.c.bf16 %v962, %v961
      %v976 = vpack.c.bf16 %v964, %v963
      %v977 = vpack.c.bf16 %v966, %v965
      %v978 = vpack.c.bf16 %v968, %v967
      %v979 = vpack.c.bf16 %v970, %v969
      %v980 = vpack.c.bf16 %v972, %v971
      %v981 = vld [vmem:[%s3 + $0x40] sm:$0xf]
      %v982 = vld [vmem:[%s3 + $0x44] sm:$0xf]
      %v983 = vld [vmem:[%s3 + $0x48] sm:$0xf]
      %v984 = vld [vmem:[%s3 + $0x4c] sm:$0xf]
      %v985 = vld [vmem:[%s3 + $0x50] sm:$0xf]
      %v986 = vld [vmem:[%s3 + $0x54] sm:$0xf]
      %v987 = vld [vmem:[%s3 + $0x58] sm:$0xf]
      %v988 = vld [vmem:[%s3 + $0x5c] sm:$0xf]
      %v989 = vld [vmem:[%s3 + $0x60] sm:$0xf]
      %v990 = vld [vmem:[%s3 + $0x64] sm:$0xf]
      %v991 = vld [vmem:[%s3 + $0x68] sm:$0xf]
      %v992 = vld [vmem:[%s3 + $0x6c] sm:$0xf]
      %v993 = vld [vmem:[%s3 + $0x70] sm:$0xf]
      %v994 = vld [vmem:[%s3 + $0x74] sm:$0xf]
      %v995 = vld [vmem:[%s3 + $0x78] sm:$0xf]
      %v996 = vld [vmem:[%s3 + $0x7c] sm:$0xf]
      %v997 = vld [vmem:[%s4 + $0x1] sm:$0x1]
      %v998 = vperm.slane %v997, 0
      %v1015 = vunpack.c.l.b16 %v981
      %v1016 = vunpack.c.l.b16 %v982
      %v1017 = vunpack.c.l.b16 %v983
      %v1018 = vunpack.c.l.b16 %v984
      %v1019 = vunpack.c.l.b16 %v985
      %v1020 = vunpack.c.l.b16 %v986
      %v1021 = vunpack.c.l.b16 %v987
      %v1022 = vunpack.c.l.b16 %v988
      %v1023 = vunpack.c.l.b16 %v989
      %v1024 = vunpack.c.l.b16 %v990
      %v1025 = vunpack.c.l.b16 %v991
      %v1026 = vunpack.c.l.b16 %v992
      %v1027 = vunpack.c.l.b16 %v993
      %v1028 = vunpack.c.l.b16 %v994
      %v1029 = vunpack.c.l.b16 %v995
      %v1030 = vunpack.c.l.b16 %v996
      %v1031 = vpack.c.b16 %v1016, %v1015
      %v1032 = vpack.c.b16 %v1018, %v1017
      %v1033 = vpack.c.b16 %v1020, %v1019
      %v1034 = vpack.c.b16 %v1022, %v1021
      %v1035 = vpack.c.b16 %v1024, %v1023
      %v1036 = vpack.c.b16 %v1026, %v1025
      %v1037 = vpack.c.b16 %v1028, %v1027
      %v1038 = vpack.c.b16 %v1030, %v1029
      %1047 = vmatpush.bf16.msra.mxu0 %v1038
      %1048 = vmatpush.bf16.msra.mxu0 %v1037
      %1049 = vmatpush.bf16.msra.mxu0 %v1036
      %1050 = vmatpush.bf16.msra.mxu0 %v1035
      %1051 = vmatpush.bf16.msra.mxu0 %v1034
      %1052 = vmatpush.bf16.msra.mxu0 %v1033
      %1053 = vmatpush.bf16.msra.mxu0 %v1032
      %1054 = vmatpush.bf16.msra.mxu0 %v1031
      %1055 = vmatmul.bf16.gmra.mxu0 %v973
      %v1056 = vpop.f32.mrf.mxu0
      %v1057 = vadd.f32 %v998, %v1056
      %v1058 = vpop.f32.mrf.mxu0
      %v1059 = vadd.f32 %v998, %v1058
      %1060 = vmatmul.bf16.gmra.mxu0 %v974
      %v1061 = vpop.f32.mrf.mxu0
      %v1062 = vadd.f32 %v998, %v1061
      %v1063 = vpop.f32.mrf.mxu0
      %v1064 = vadd.f32 %v998, %v1063
      %1065 = vmatmul.bf16.gmra.mxu0 %v975
      %v1066 = vpop.f32.mrf.mxu0
      %v1067 = vadd.f32 %v998, %v1066
      %v1068 = vpop.f32.mrf.mxu0
      %v1069 = vadd.f32 %v998, %v1068
      %1070 = vmatmul.bf16.gmra.mxu0 %v976
      %v1071 = vpop.f32.mrf.mxu0
      %v1072 = vadd.f32 %v998, %v1071
      %v1073 = vpop.f32.mrf.mxu0
      %v1074 = vadd.f32 %v998, %v1073
      %1075 = vmatmul.bf16.gmra.mxu0 %v977
      %v1076 = vpop.f32.mrf.mxu0
      %v1077 = vadd.f32 %v998, %v1076
      %v1078 = vpop.f32.mrf.mxu0
      %v1079 = vadd.f32 %v998, %v1078
      %1080 = vmatmul.bf16.gmra.mxu0 %v978
      %v1081 = vpop.f32.mrf.mxu0
      %v1082 = vadd.f32 %v998, %v1081
      %v1083 = vpop.f32.mrf.mxu0
      %v1084 = vadd.f32 %v998, %v1083
      %1085 = vmatmul.bf16.gmra.mxu0 %v979
      %v1086 = vpop.f32.mrf.mxu0
      %v1087 = vadd.f32 %v998, %v1086
      %v1088 = vpop.f32.mrf.mxu0
      %v1089 = vadd.f32 %v998, %v1088
      %1090 = vmatmul.bf16.gmra.mxu0 %v980
      %v1091 = vpop.f32.mrf.mxu0
      %v1092 = vadd.f32 %v998, %v1091
      %v1093 = vpop.f32.mrf.mxu0
      %v1094 = vadd.f32 %v998, %v1093
      %1095 = vdwg.mxu0
      %v1096 = vmax.f32 %v1057, 0.0
      %v1097 = vmax.f32 %v1059, 0.0
      %v1098 = vmax.f32 %v1062, 0.0
      %v1099 = vmax.f32 %v1064, 0.0
      %v1100 = vmax.f32 %v1067, 0.0
      %v1101 = vmax.f32 %v1069, 0.0
      %v1102 = vmax.f32 %v1072, 0.0
      %v1103 = vmax.f32 %v1074, 0.0
      %v1104 = vmax.f32 %v1077, 0.0
      %v1105 = vmax.f32 %v1079, 0.0
      %v1106 = vmax.f32 %v1082, 0.0
      %v1107 = vmax.f32 %v1084, 0.0
      %v1108 = vmax.f32 %v1087, 0.0
      %v1109 = vmax.f32 %v1089, 0.0
      %v1110 = vmax.f32 %v1092, 0.0
      %v1111 = vmax.f32 %v1094, 0.0
      %v1112 = vpack.c.bf16 %v1097, %v1096
      %v1113 = vpack.c.bf16 %v1099, %v1098
      %v1114 = vpack.c.bf16 %v1101, %v1100
      %v1115 = vpack.c.bf16 %v1103, %v1102
      %v1116 = vpack.c.bf16 %v1105, %v1104
      %v1117 = vpack.c.bf16 %v1107, %v1106
      %v1118 = vpack.c.bf16 %v1109, %v1108
      %v1119 = vpack.c.bf16 %v1111, %v1110
      %v1120 = vld [vmem:[%s3 + $0x80] sm:$0xf]
      %v1121 = vld [vmem:[%s3 + $0x84] sm:$0xf]
      %v1122 = vld [vmem:[%s3 + $0x88] sm:$0xf]
      %v1123 = vld [vmem:[%s3 + $0x8c] sm:$0xf]
      %v1124 = vld [vmem:[%s3 + $0x90] sm:$0xf]
      %v1125 = vld [vmem:[%s3 + $0x94] sm:$0xf]
      %v1126 = vld [vmem:[%s3 + $0x98] sm:$0xf]
      %v1127 = vld [vmem:[%s3 + $0x9c] sm:$0xf]
      %v1128 = vld [vmem:[%s3 + $0xa0] sm:$0xf]
      %v1129 = vld [vmem:[%s3 + $0xa4] sm:$0xf]
      %v1130 = vld [vmem:[%s3 + $0xa8] sm:$0xf]
      %v1131 = vld [vmem:[%s3 + $0xac] sm:$0xf]
      %v1132 = vld [vmem:[%s3 + $0xb0] sm:$0xf]
      %v1133 = vld [vmem:[%s3 + $0xb4] sm:$0xf]
      %v1134 = vld [vmem:[%s3 + $0xb8] sm:$0xf]
      %v1135 = vld [vmem:[%s3 + $0xbc] sm:$0xf]
      %v1136 = vld [vmem:[%s4 + $0x2] sm:$0x1]
      %v1137 = vperm.slane %v1136, 0
      %v1154 = vunpack.c.l.b16 %v1120
      %v1155 = vunpack.c.l.b16 %v1121
      %v1156 = vunpack.c.l.b16 %v1122
      %v1157 = vunpack.c.l.b16 %v1123
      %v1158 = vunpack.c.l.b16 %v1124
      %v1159 = vunpack.c.l.b16 %v1125
      %v1160 = vunpack.c.l.b16 %v1126
      %v1161 = vunpack.c.l.b16 %v1127
      %v1162 = vunpack.c.l.b16 %v1128
      %v1163 = vunpack.c.l.b16 %v1129
      %v1164 = vunpack.c.l.b16 %v1130
      %v1165 = vunpack.c.l.b16 %v1131
      %v1166 = vunpack.c.l.b16 %v1132
      %v1167 = vunpack.c.l.b16 %v1133
      %v1168 = vunpack.c.l.b16 %v1134
      %v1169 = vunpack.c.l.b16 %v1135
      %v1170 = vpack.c.b16 %v1155, %v1154
      %v1171 = vpack.c.b16 %v1157, %v1156
      %v1172 = vpack.c.b16 %v1159, %v1158
      %v1173 = vpack.c.b16 %v1161, %v1160
      %v1174 = vpack.c.b16 %v1163, %v1162
      %v1175 = vpack.c.b16 %v1165, %v1164
      %v1176 = vpack.c.b16 %v1167, %v1166
      %v1177 = vpack.c.b16 %v1169, %v1168
      %1186 = vmatpush.bf16.msra.mxu0 %v1177
      %1187 = vmatpush.bf16.msra.mxu0 %v1176
      %1188 = vmatpush.bf16.msra.mxu0 %v1175
      %1189 = vmatpush.bf16.msra.mxu0 %v1174
      %1190 = vmatpush.bf16.msra.mxu0 %v1173
      %1191 = vmatpush.bf16.msra.mxu0 %v1172
      %1192 = vmatpush.bf16.msra.mxu0 %v1171
      %1193 = vmatpush.bf16.msra.mxu0 %v1170
      %1194 = vmatmul.bf16.gmra.mxu0 %v1112
      %v1195 = vpop.f32.mrf.mxu0
      %v1196 = vadd.f32 %v1137, %v1195
      %v1197 = vpop.f32.mrf.mxu0
      %v1198 = vadd.f32 %v1137, %v1197
      %1199 = vmatmul.bf16.gmra.mxu0 %v1113
      %v1200 = vpop.f32.mrf.mxu0
      %v1201 = vadd.f32 %v1137, %v1200
      %v1202 = vpop.f32.mrf.mxu0
      %v1203 = vadd.f32 %v1137, %v1202
      %1204 = vmatmul.bf16.gmra.mxu0 %v1114
      %v1205 = vpop.f32.mrf.mxu0
      %v1206 = vadd.f32 %v1137, %v1205
      %v1207 = vpop.f32.mrf.mxu0
      %v1208 = vadd.f32 %v1137, %v1207
      %1209 = vmatmul.bf16.gmra.mxu0 %v1115
      %v1210 = vpop.f32.mrf.mxu0
      %v1211 = vadd.f32 %v1137, %v1210
      %v1212 = vpop.f32.mrf.mxu0
      %v1213 = vadd.f32 %v1137, %v1212
      %1214 = vmatmul.bf16.gmra.mxu0 %v1116
      %v1215 = vpop.f32.mrf.mxu0
      %v1216 = vadd.f32 %v1137, %v1215
      %v1217 = vpop.f32.mrf.mxu0
      %v1218 = vadd.f32 %v1137, %v1217
      %1219 = vmatmul.bf16.gmra.mxu0 %v1117
      %v1220 = vpop.f32.mrf.mxu0
      %v1221 = vadd.f32 %v1137, %v1220
      %v1222 = vpop.f32.mrf.mxu0
      %v1223 = vadd.f32 %v1137, %v1222
      %1224 = vmatmul.bf16.gmra.mxu0 %v1118
      %v1225 = vpop.f32.mrf.mxu0
      %v1226 = vadd.f32 %v1137, %v1225
      %v1227 = vpop.f32.mrf.mxu0
      %v1228 = vadd.f32 %v1137, %v1227
      %1229 = vmatmul.bf16.gmra.mxu0 %v1119
      %v1230 = vpop.f32.mrf.mxu0
      %v1231 = vadd.f32 %v1137, %v1230
      %v1232 = vpop.f32.mrf.mxu0
      %v1233 = vadd.f32 %v1137, %v1232
      %1234 = vdwg.mxu0
      %1235 = vadd.xlane.f32.xlu0 %v1196
      %v1236 = vpop.xlane.xlu0 %1235
      %1237 = vadd.xlane.f32.xlu0 %v1198
      %v1238 = vpop.xlane.xlu0 %1237
      %1239 = vadd.xlane.f32.xlu0 %v1201
      %v1240 = vpop.xlane.xlu0 %1239
      %1241 = vadd.xlane.f32.xlu0 %v1203
      %v1242 = vpop.xlane.xlu0 %1241
      %1243 = vadd.xlane.f32.xlu0 %v1206
      %v1244 = vpop.xlane.xlu0 %1243
      %1245 = vadd.xlane.f32.xlu0 %v1208
      %v1246 = vpop.xlane.xlu0 %1245
      %1247 = vadd.xlane.f32.xlu0 %v1211
      %v1248 = vpop.xlane.xlu0 %1247
      %1249 = vadd.xlane.f32.xlu0 %v1213
      %v1250 = vpop.xlane.xlu0 %1249
      %1251 = vadd.xlane.f32.xlu0 %v1216
      %v1252 = vpop.xlane.xlu0 %1251
      %1253 = vadd.xlane.f32.xlu0 %v1218
      %v1254 = vpop.xlane.xlu0 %1253
      %1255 = vadd.xlane.f32.xlu0 %v1221
      %v1256 = vpop.xlane.xlu0 %1255
      %1257 = vadd.xlane.f32.xlu0 %v1223
      %v1258 = vpop.xlane.xlu0 %1257
      %1259 = vadd.xlane.f32.xlu0 %v1226
      %v1260 = vpop.xlane.xlu0 %1259
      %1261 = vadd.xlane.f32.xlu0 %v1228
      %v1262 = vpop.xlane.xlu0 %1261
      %1263 = vadd.xlane.f32.xlu0 %v1231
      %v1264 = vpop.xlane.xlu0 %1263
      %1265 = vadd.xlane.f32.xlu0 %v1233
      %v1266 = vpop.xlane.xlu0 %1265
      %v1267 = vmul.f32 %v1236, 0.03125
      %v1268 = vmul.f32 %v1238, 0.03125
      %v1269 = vmul.f32 %v1240, 0.03125
      %v1270 = vmul.f32 %v1242, 0.03125
      %v1271 = vmul.f32 %v1244, 0.03125
      %v1272 = vmul.f32 %v1246, 0.03125
      %v1273 = vmul.f32 %v1248, 0.03125
      %v1274 = vmul.f32 %v1250, 0.03125
      %v1275 = vmul.f32 %v1252, 0.03125
      %v1276 = vmul.f32 %v1254, 0.03125
      %v1277 = vmul.f32 %v1256, 0.03125
      %v1278 = vmul.f32 %v1258, 0.03125
      %v1279 = vmul.f32 %v1260, 0.03125
      %v1280 = vmul.f32 %v1262, 0.03125
      %v1281 = vmul.f32 %v1264, 0.03125
      %v1282 = vmul.f32 %v1266, 0.03125
      %v1283 = vmul.f32 %v1196, %v1196
      %v1284 = vmul.f32 %v1198, %v1198
      %v1285 = vmul.f32 %v1201, %v1201
      %v1286 = vmul.f32 %v1203, %v1203
      %v1287 = vmul.f32 %v1206, %v1206
      %v1288 = vmul.f32 %v1208, %v1208
      %v1289 = vmul.f32 %v1211, %v1211
      %v1290 = vmul.f32 %v1213, %v1213
      %v1291 = vmul.f32 %v1216, %v1216
      %v1292 = vmul.f32 %v1218, %v1218
      %v1293 = vmul.f32 %v1221, %v1221
      %v1294 = vmul.f32 %v1223, %v1223
      %v1295 = vmul.f32 %v1226, %v1226
      %v1296 = vmul.f32 %v1228, %v1228
      %v1297 = vmul.f32 %v1231, %v1231
      %v1298 = vmul.f32 %v1233, %v1233
      %1299 = vadd.xlane.f32.xlu0 %v1283
      %v1300 = vpop.xlane.xlu0 %1299
      %1301 = vadd.xlane.f32.xlu0 %v1284
      %v1302 = vpop.xlane.xlu0 %1301
      %1303 = vadd.xlane.f32.xlu0 %v1285
      %v1304 = vpop.xlane.xlu0 %1303
      %1305 = vadd.xlane.f32.xlu0 %v1286
      %v1306 = vpop.xlane.xlu0 %1305
      %1307 = vadd.xlane.f32.xlu0 %v1287
      %v1308 = vpop.xlane.xlu0 %1307
      %1309 = vadd.xlane.f32.xlu0 %v1288
      %v1310 = vpop.xlane.xlu0 %1309
      %1311 = vadd.xlane.f32.xlu0 %v1289
      %v1312 = vpop.xlane.xlu0 %1311
      %1313 = vadd.xlane.f32.xlu0 %v1290
      %v1314 = vpop.xlane.xlu0 %1313
      %1315 = vadd.xlane.f32.xlu0 %v1291
      %v1316 = vpop.xlane.xlu0 %1315
      %1317 = vadd.xlane.f32.xlu0 %v1292
      %v1318 = vpop.xlane.xlu0 %1317
      %1319 = vadd.xlane.f32.xlu0 %v1293
      %v1320 = vpop.xlane.xlu0 %1319
      %1321 = vadd.xlane.f32.xlu0 %v1294
      %v1322 = vpop.xlane.xlu0 %1321
      %1323 = vadd.xlane.f32.xlu0 %v1295
      %v1324 = vpop.xlane.xlu0 %1323
      %1325 = vadd.xlane.f32.xlu0 %v1296
      %v1326 = vpop.xlane.xlu0 %1325
      %1327 = vadd.xlane.f32.xlu0 %v1297
      %v1328 = vpop.xlane.xlu0 %1327
      %1329 = vadd.xlane.f32.xlu0 %v1298
      %v1330 = vpop.xlane.xlu0 %1329
      %v1331 = vmul.f32 %v1300, 0.03125
      %v1332 = vmul.f32 %v1302, 0.03125
      %v1333 = vmul.f32 %v1304, 0.03125
      %v1334 = vmul.f32 %v1306, 0.03125
      %v1335 = vmul.f32 %v1308, 0.03125
      %v1336 = vmul.f32 %v1310, 0.03125
      %v1337 = vmul.f32 %v1312, 0.03125
      %v1338 = vmul.f32 %v1314, 0.03125
      %v1339 = vmul.f32 %v1316, 0.03125
      %v1340 = vmul.f32 %v1318, 0.03125
      %v1341 = vmul.f32 %v1320, 0.03125
      %v1342 = vmul.f32 %v1322, 0.03125
      %v1343 = vmul.f32 %v1324, 0.03125
      %v1344 = vmul.f32 %v1326, 0.03125
      %v1345 = vmul.f32 %v1328, 0.03125
      %v1346 = vmul.f32 %v1330, 0.03125
      %v1347 = vmul.f32 %v1267, %v1267
      %v1348 = vmul.f32 %v1268, %v1268
      %v1349 = vmul.f32 %v1269, %v1269
      %v1350 = vmul.f32 %v1270, %v1270
      %v1351 = vmul.f32 %v1271, %v1271
      %v1352 = vmul.f32 %v1272, %v1272
      %v1353 = vmul.f32 %v1273, %v1273
      %v1354 = vmul.f32 %v1274, %v1274
      %v1355 = vmul.f32 %v1275, %v1275
      %v1356 = vmul.f32 %v1276, %v1276
      %v1357 = vmul.f32 %v1277, %v1277
      %v1358 = vmul.f32 %v1278, %v1278
      %v1359 = vmul.f32 %v1279, %v1279
      %v1360 = vmul.f32 %v1280, %v1280
      %v1361 = vmul.f32 %v1281, %v1281
      %v1362 = vmul.f32 %v1282, %v1282
      %v1363 = vsub.f32 %v1331, %v1347
      %v1364 = vsub.f32 %v1332, %v1348
      %v1365 = vsub.f32 %v1333, %v1349
      %v1366 = vsub.f32 %v1334, %v1350
      %v1367 = vsub.f32 %v1335, %v1351
      %v1368 = vsub.f32 %v1336, %v1352
      %v1369 = vsub.f32 %v1337, %v1353
      %v1370 = vsub.f32 %v1338, %v1354
      %v1371 = vsub.f32 %v1339, %v1355
      %v1372 = vsub.f32 %v1340, %v1356
      %v1373 = vsub.f32 %v1341, %v1357
      %v1374 = vsub.f32 %v1342, %v1358
      %v1375 = vsub.f32 %v1343, %v1359
      %v1376 = vsub.f32 %v1344, %v1360
      %v1377 = vsub.f32 %v1345, %v1361
      %v1378 = vsub.f32 %v1346, %v1362
      %v1379 = vadd.f32 %v1363, 1e-05
      %v1380 = vadd.f32 %v1364, 1e-05
      %v1381 = vadd.f32 %v1365, 1e-05
      %v1382 = vadd.f32 %v1366, 1e-05
      %v1383 = vadd.f32 %v1367, 1e-05
      %v1384 = vadd.f32 %v1368, 1e-05
      %v1385 = vadd.f32 %v1369, 1e-05
      %v1386 = vadd.f32 %v1370, 1e-05
      %v1387 = vadd.f32 %v1371, 1e-05
      %v1388 = vadd.f32 %v1372, 1e-05
      %v1389 = vadd.f32 %v1373, 1e-05
      %v1390 = vadd.f32 %v1374, 1e-05
      %v1391 = vadd.f32 %v1375, 1e-05
      %v1392 = vadd.f32 %v1376, 1e-05
      %v1393 = vadd.f32 %v1377, 1e-05
      %v1394 = vadd.f32 %v1378, 1e-05
      %v1395 = vrsqrt.pop %v1379
      %v1396 = vmul.f32 %v1395, %v1379
      %v1397 = vmul.f32 %v1396, %v1395
      %v1398 = vmul.f32 0.5, %v1397
      %v1399 = vsub.f32 1.5, %v1398
      %v1400 = vmul.f32 %v1395, %v1399
      %vm1401 = vweird.f32 %v1379
      %vm1402 = vweird.f32 %v1395
      %vm1403 = vmor %vm1401, %vm1402
      %v1404 = vsel %vm1403, %v1395, %v1400
      %v1405 = vrsqrt.pop %v1380
      %v1406 = vmul.f32 %v1405, %v1380
      %v1407 = vmul.f32 %v1406, %v1405
      %v1408 = vmul.f32 0.5, %v1407
      %v1409 = vsub.f32 1.5, %v1408
      %v1410 = vmul.f32 %v1405, %v1409
      %vm1411 = vweird.f32 %v1380
      %vm1412 = vweird.f32 %v1405
      %vm1413 = vmor %vm1411, %vm1412
      %v1414 = vsel %vm1413, %v1405, %v1410
      %v1415 = vrsqrt.pop %v1381
      %v1416 = vmul.f32 %v1415, %v1381
      %v1417 = vmul.f32 %v1416, %v1415
      %v1418 = vmul.f32 0.5, %v1417
      %v1419 = vsub.f32 1.5, %v1418
      %v1420 = vmul.f32 %v1415, %v1419
      %vm1421 = vweird.f32 %v1381
      %vm1422 = vweird.f32 %v1415
      %vm1423 = vmor %vm1421, %vm1422
      %v1424 = vsel %vm1423, %v1415, %v1420
      %v1425 = vrsqrt.pop %v1382
      %v1426 = vmul.f32 %v1425, %v1382
      %v1427 = vmul.f32 %v1426, %v1425
      %v1428 = vmul.f32 0.5, %v1427
      %v1429 = vsub.f32 1.5, %v1428
      %v1430 = vmul.f32 %v1425, %v1429
      %vm1431 = vweird.f32 %v1382
      %vm1432 = vweird.f32 %v1425
      %vm1433 = vmor %vm1431, %vm1432
      %v1434 = vsel %vm1433, %v1425, %v1430
      %v1435 = vrsqrt.pop %v1383
      %v1436 = vmul.f32 %v1435, %v1383
      %v1437 = vmul.f32 %v1436, %v1435
      %v1438 = vmul.f32 0.5, %v1437
      %v1439 = vsub.f32 1.5, %v1438
      %v1440 = vmul.f32 %v1435, %v1439
      %vm1441 = vweird.f32 %v1383
      %vm1442 = vweird.f32 %v1435
      %vm1443 = vmor %vm1441, %vm1442
      %v1444 = vsel %vm1443, %v1435, %v1440
      %v1445 = vrsqrt.pop %v1384
      %v1446 = vmul.f32 %v1445, %v1384
      %v1447 = vmul.f32 %v1446, %v1445
      %v1448 = vmul.f32 0.5, %v1447
      %v1449 = vsub.f32 1.5, %v1448
      %v1450 = vmul.f32 %v1445, %v1449
      %vm1451 = vweird.f32 %v1384
      %vm1452 = vweird.f32 %v1445
      %vm1453 = vmor %vm1451, %vm1452
      %v1454 = vsel %vm1453, %v1445, %v1450
      %v1455 = vrsqrt.pop %v1385
      %v1456 = vmul.f32 %v1455, %v1385
      %v1457 = vmul.f32 %v1456, %v1455
      %v1458 = vmul.f32 0.5, %v1457
      %v1459 = vsub.f32 1.5, %v1458
      %v1460 = vmul.f32 %v1455, %v1459
      %vm1461 = vweird.f32 %v1385
      %vm1462 = vweird.f32 %v1455
      %vm1463 = vmor %vm1461, %vm1462
      %v1464 = vsel %vm1463, %v1455, %v1460
      %v1465 = vrsqrt.pop %v1386
      %v1466 = vmul.f32 %v1465, %v1386
      %v1467 = vmul.f32 %v1466, %v1465
      %v1468 = vmul.f32 0.5, %v1467
      %v1469 = vsub.f32 1.5, %v1468
      %v1470 = vmul.f32 %v1465, %v1469
      %vm1471 = vweird.f32 %v1386
      %vm1472 = vweird.f32 %v1465
      %vm1473 = vmor %vm1471, %vm1472
      %v1474 = vsel %vm1473, %v1465, %v1470
      %v1475 = vrsqrt.pop %v1387
      %v1476 = vmul.f32 %v1475, %v1387
      %v1477 = vmul.f32 %v1476, %v1475
      %v1478 = vmul.f32 0.5, %v1477
      %v1479 = vsub.f32 1.5, %v1478
      %v1480 = vmul.f32 %v1475, %v1479
      %vm1481 = vweird.f32 %v1387
      %vm1482 = vweird.f32 %v1475
      %vm1483 = vmor %vm1481, %vm1482
      %v1484 = vsel %vm1483, %v1475, %v1480
      %v1485 = vrsqrt.pop %v1388
      %v1486 = vmul.f32 %v1485, %v1388
      %v1487 = vmul.f32 %v1486, %v1485
      %v1488 = vmul.f32 0.5, %v1487
      %v1489 = vsub.f32 1.5, %v1488
      %v1490 = vmul.f32 %v1485, %v1489
      %vm1491 = vweird.f32 %v1388
      %vm1492 = vweird.f32 %v1485
      %vm1493 = vmor %vm1491, %vm1492
      %v1494 = vsel %vm1493, %v1485, %v1490
      %v1495 = vrsqrt.pop %v1389
      %v1496 = vmul.f32 %v1495, %v1389
      %v1497 = vmul.f32 %v1496, %v1495
      %v1498 = vmul.f32 0.5, %v1497
      %v1499 = vsub.f32 1.5, %v1498
      %v1500 = vmul.f32 %v1495, %v1499
      %vm1501 = vweird.f32 %v1389
      %vm1502 = vweird.f32 %v1495
      %vm1503 = vmor %vm1501, %vm1502
      %v1504 = vsel %vm1503, %v1495, %v1500
      %v1505 = vrsqrt.pop %v1390
      %v1506 = vmul.f32 %v1505, %v1390
      %v1507 = vmul.f32 %v1506, %v1505
      %v1508 = vmul.f32 0.5, %v1507
      %v1509 = vsub.f32 1.5, %v1508
      %v1510 = vmul.f32 %v1505, %v1509
      %vm1511 = vweird.f32 %v1390
      %vm1512 = vweird.f32 %v1505
      %vm1513 = vmor %vm1511, %vm1512
      %v1514 = vsel %vm1513, %v1505, %v1510
      %v1515 = vrsqrt.pop %v1391
      %v1516 = vmul.f32 %v1515, %v1391
      %v1517 = vmul.f32 %v1516, %v1515
      %v1518 = vmul.f32 0.5, %v1517
      %v1519 = vsub.f32 1.5, %v1518
      %v1520 = vmul.f32 %v1515, %v1519
      %vm1521 = vweird.f32 %v1391
      %vm1522 = vweird.f32 %v1515
      %vm1523 = vmor %vm1521, %vm1522
      %v1524 = vsel %vm1523, %v1515, %v1520
      %v1525 = vrsqrt.pop %v1392
      %v1526 = vmul.f32 %v1525, %v1392
      %v1527 = vmul.f32 %v1526, %v1525
      %v1528 = vmul.f32 0.5, %v1527
      %v1529 = vsub.f32 1.5, %v1528
      %v1530 = vmul.f32 %v1525, %v1529
      %vm1531 = vweird.f32 %v1392
      %vm1532 = vweird.f32 %v1525
      %vm1533 = vmor %vm1531, %vm1532
      %v1534 = vsel %vm1533, %v1525, %v1530
      %v1535 = vrsqrt.pop %v1393
      %v1536 = vmul.f32 %v1535, %v1393
      %v1537 = vmul.f32 %v1536, %v1535
      %v1538 = vmul.f32 0.5, %v1537
      %v1539 = vsub.f32 1.5, %v1538
      %v1540 = vmul.f32 %v1535, %v1539
      %vm1541 = vweird.f32 %v1393
      %vm1542 = vweird.f32 %v1535
      %vm1543 = vmor %vm1541, %vm1542
      %v1544 = vsel %vm1543, %v1535, %v1540
      %v1545 = vrsqrt.pop %v1394
      %v1546 = vmul.f32 %v1545, %v1394
      %v1547 = vmul.f32 %v1546, %v1545
      %v1548 = vmul.f32 0.5, %v1547
      %v1549 = vsub.f32 1.5, %v1548
      %v1550 = vmul.f32 %v1545, %v1549
      %vm1551 = vweird.f32 %v1394
      %vm1552 = vweird.f32 %v1545
      %vm1553 = vmor %vm1551, %vm1552
      %v1554 = vsel %vm1553, %v1545, %v1550
      %v1555 = vsub.f32 %v1196, %v1267
      %v1556 = vsub.f32 %v1198, %v1268
      %v1557 = vsub.f32 %v1201, %v1269
      %v1558 = vsub.f32 %v1203, %v1270
      %v1559 = vsub.f32 %v1206, %v1271
      %v1560 = vsub.f32 %v1208, %v1272
      %v1561 = vsub.f32 %v1211, %v1273
      %v1562 = vsub.f32 %v1213, %v1274
      %v1563 = vsub.f32 %v1216, %v1275
      %v1564 = vsub.f32 %v1218, %v1276
      %v1565 = vsub.f32 %v1221, %v1277
      %v1566 = vsub.f32 %v1223, %v1278
      %v1567 = vsub.f32 %v1226, %v1279
      %v1568 = vsub.f32 %v1228, %v1280
      %v1569 = vsub.f32 %v1231, %v1281
      %v1570 = vsub.f32 %v1233, %v1282
      %v1571 = vmul.f32 %v1555, %v1404
      %v1572 = vmul.f32 %v1556, %v1414
      %v1573 = vmul.f32 %v1557, %v1424
      %v1574 = vmul.f32 %v1558, %v1434
      %v1575 = vmul.f32 %v1559, %v1444
      %v1576 = vmul.f32 %v1560, %v1454
      %v1577 = vmul.f32 %v1561, %v1464
      %v1578 = vmul.f32 %v1562, %v1474
      %v1579 = vmul.f32 %v1563, %v1484
      %v1580 = vmul.f32 %v1564, %v1494
      %v1581 = vmul.f32 %v1565, %v1504
      %v1582 = vmul.f32 %v1566, %v1514
      %v1583 = vmul.f32 %v1567, %v1524
      %v1584 = vmul.f32 %v1568, %v1534
      %v1585 = vmul.f32 %v1569, %v1544
      %v1586 = vmul.f32 %v1570, %v1554
      %v1587 = vld [vmem:[%s4 + $0x3] sm:$0x1]
      %v1588 = vperm.slane %v1587, 0
      %v1589 = vmul.f32 %v1571, %v1588
      %v1590 = vmul.f32 %v1572, %v1588
      %v1591 = vmul.f32 %v1573, %v1588
      %v1592 = vmul.f32 %v1574, %v1588
      %v1593 = vmul.f32 %v1575, %v1588
      %v1594 = vmul.f32 %v1576, %v1588
      %v1595 = vmul.f32 %v1577, %v1588
      %v1596 = vmul.f32 %v1578, %v1588
      %v1597 = vmul.f32 %v1579, %v1588
      %v1598 = vmul.f32 %v1580, %v1588
      %v1599 = vmul.f32 %v1581, %v1588
      %v1600 = vmul.f32 %v1582, %v1588
      %v1601 = vmul.f32 %v1583, %v1588
      %v1602 = vmul.f32 %v1584, %v1588
      %v1603 = vmul.f32 %v1585, %v1588
      %v1604 = vmul.f32 %v1586, %v1588
      %v1605 = vld [vmem:[%s4 + $0x4] sm:$0x1]
      %v1606 = vperm.slane %v1605, 0
      %v1607 = vadd.f32 %v1589, %v1606
      %v1608 = vadd.f32 %v1590, %v1606
      %v1609 = vadd.f32 %v1591, %v1606
      %v1610 = vadd.f32 %v1592, %v1606
      %v1611 = vadd.f32 %v1593, %v1606
      %v1612 = vadd.f32 %v1594, %v1606
      %v1613 = vadd.f32 %v1595, %v1606
      %v1614 = vadd.f32 %v1596, %v1606
      %v1615 = vadd.f32 %v1597, %v1606
      %v1616 = vadd.f32 %v1598, %v1606
      %v1617 = vadd.f32 %v1599, %v1606
      %v1618 = vadd.f32 %v1600, %v1606
      %v1619 = vadd.f32 %v1601, %v1606
      %v1620 = vadd.f32 %v1602, %v1606
      %v1621 = vadd.f32 %v1603, %v1606
      %v1622 = vadd.f32 %v1604, %v1606
      %v1623 = vld [vmem:[%s258] sm:$0xff]
      %v1624 = vld [vmem:[%s258 + $0x8] sm:$0xff]
      %v1625 = vld [vmem:[%s258 + $0x10] sm:$0xff]
      %v1626 = vld [vmem:[%s258 + $0x18] sm:$0xff]
      %v1627 = vld [vmem:[%s258 + $0x20] sm:$0xff]
      %v1628 = vld [vmem:[%s258 + $0x28] sm:$0xff]
      %v1629 = vld [vmem:[%s258 + $0x30] sm:$0xff]
      %v1630 = vld [vmem:[%s258 + $0x38] sm:$0xff]
      %v1631 = vld [vmem:[%s258 + $0x40] sm:$0xff]
      %v1632 = vld [vmem:[%s258 + $0x48] sm:$0xff]
      %v1633 = vld [vmem:[%s258 + $0x50] sm:$0xff]
      %v1634 = vld [vmem:[%s258 + $0x58] sm:$0xff]
      %v1635 = vld [vmem:[%s258 + $0x60] sm:$0xff]
      %v1636 = vld [vmem:[%s258 + $0x68] sm:$0xff]
      %v1637 = vld [vmem:[%s258 + $0x70] sm:$0xff]
      %v1638 = vld [vmem:[%s258 + $0x78] sm:$0xff]
      %v1639 = vld [vmem:[%s258 + $0x80] sm:$0xff]
      %v1640 = vld [vmem:[%s258 + $0x88] sm:$0xff]
      %v1641 = vld [vmem:[%s258 + $0x90] sm:$0xff]
      %v1642 = vld [vmem:[%s258 + $0x98] sm:$0xff]
      %v1643 = vld [vmem:[%s258 + $0xa0] sm:$0xff]
      %v1644 = vld [vmem:[%s258 + $0xa8] sm:$0xff]
      %v1645 = vld [vmem:[%s258 + $0xb0] sm:$0xff]
      %v1646 = vld [vmem:[%s258 + $0xb8] sm:$0xff]
      %v1647 = vld [vmem:[%s258 + $0xc0] sm:$0xff]
      %v1648 = vld [vmem:[%s258 + $0xc8] sm:$0xff]
      %v1649 = vld [vmem:[%s258 + $0xd0] sm:$0xff]
      %v1650 = vld [vmem:[%s258 + $0xd8] sm:$0xff]
      %v1651 = vld [vmem:[%s258 + $0xe0] sm:$0xff]
      %v1652 = vld [vmem:[%s258 + $0xe8] sm:$0xff]
      %v1653 = vld [vmem:[%s258 + $0xf0] sm:$0xff]
      %v1654 = vld [vmem:[%s258 + $0xf8] sm:$0xff]
      %v1655 = vld [vmem:[%s4 + $0x5] sm:$0x1]
      %v1656 = vpack.c.bf16 %v1624, %v1623
      %v1657 = vpack.c.bf16 %v1626, %v1625
      %v1658 = vpack.c.bf16 %v1628, %v1627
      %v1659 = vpack.c.bf16 %v1630, %v1629
      %v1660 = vpack.c.bf16 %v1632, %v1631
      %v1661 = vpack.c.bf16 %v1634, %v1633
      %v1662 = vpack.c.bf16 %v1636, %v1635
      %v1663 = vpack.c.bf16 %v1638, %v1637
      %v1664 = vpack.c.bf16 %v1640, %v1639
      %v1665 = vpack.c.bf16 %v1642, %v1641
      %v1666 = vpack.c.bf16 %v1644, %v1643
      %v1667 = vpack.c.bf16 %v1646, %v1645
      %v1668 = vpack.c.bf16 %v1648, %v1647
      %v1669 = vpack.c.bf16 %v1650, %v1649
      %v1670 = vpack.c.bf16 %v1652, %v1651
      %v1671 = vpack.c.bf16 %v1654, %v1653
      %v1672 = vld [vmem:[%s3 + $0xc0] sm:$0xf]
      %v1673 = vld [vmem:[%s3 + $0xc4] sm:$0xf]
      %v1674 = vld [vmem:[%s3 + $0xc8] sm:$0xf]
      %v1675 = vld [vmem:[%s3 + $0xcc] sm:$0xf]
      %v1676 = vld [vmem:[%s3 + $0xd0] sm:$0xf]
      %v1677 = vld [vmem:[%s3 + $0xd4] sm:$0xf]
      %v1678 = vld [vmem:[%s3 + $0xd8] sm:$0xf]
      %v1679 = vld [vmem:[%s3 + $0xdc] sm:$0xf]
      %v1680 = vld [vmem:[%s3 + $0xe0] sm:$0xf]
      %v1681 = vld [vmem:[%s3 + $0xe4] sm:$0xf]
      %v1682 = vld [vmem:[%s3 + $0xe8] sm:$0xf]
      %v1683 = vld [vmem:[%s3 + $0xec] sm:$0xf]
      %v1684 = vld [vmem:[%s3 + $0xf0] sm:$0xf]
      %v1685 = vld [vmem:[%s3 + $0xf4] sm:$0xf]
      %v1686 = vld [vmem:[%s3 + $0xf8] sm:$0xf]
      %v1687 = vld [vmem:[%s3 + $0xfc] sm:$0xf]
      %v1704 = vunpack.c.l.b16 %v1672
      %v1705 = vunpack.c.l.b16 %v1673
      %v1706 = vunpack.c.l.b16 %v1674
      %v1707 = vunpack.c.l.b16 %v1675
      %v1708 = vunpack.c.l.b16 %v1676
      %v1709 = vunpack.c.l.b16 %v1677
      %v1710 = vunpack.c.l.b16 %v1678
      %v1711 = vunpack.c.l.b16 %v1679
      %v1712 = vunpack.c.l.b16 %v1680
      %v1713 = vunpack.c.l.b16 %v1681
      %v1714 = vunpack.c.l.b16 %v1682
      %v1715 = vunpack.c.l.b16 %v1683
      %v1716 = vunpack.c.l.b16 %v1684
      %v1717 = vunpack.c.l.b16 %v1685
      %v1718 = vunpack.c.l.b16 %v1686
      %v1719 = vunpack.c.l.b16 %v1687
      %v1720 = vpack.c.b16 %v1705, %v1704
      %v1721 = vpack.c.b16 %v1707, %v1706
      %v1722 = vpack.c.b16 %v1709, %v1708
      %v1723 = vpack.c.b16 %v1711, %v1710
      %v1724 = vpack.c.b16 %v1713, %v1712
      %v1725 = vpack.c.b16 %v1715, %v1714
      %v1726 = vpack.c.b16 %v1717, %v1716
      %v1727 = vpack.c.b16 %v1719, %v1718
      %1736 = vmatpush.bf16.msra.mxu0 %v1727
      %1737 = vmatpush.bf16.msra.mxu0 %v1726
      %1738 = vmatpush.bf16.msra.mxu0 %v1725
      %1739 = vmatpush.bf16.msra.mxu0 %v1724
      %1740 = vmatpush.bf16.msra.mxu0 %v1723
      %1741 = vmatpush.bf16.msra.mxu0 %v1722
      %1742 = vmatpush.bf16.msra.mxu0 %v1721
      %1743 = vmatpush.bf16.msra.mxu0 %v1720
      %1744 = vmatmul.bf16.gmra.mxu0 %v1656
      %v1745 = vpop.f32.mrf.mxu0
      %v1746 = vadd.f32 0.0, %v1745
      %v1747 = vpop.f32.mrf.mxu0
      %v1748 = vadd.f32 0.0, %v1747
      %1749 = vmatmul.bf16.gmra.mxu0 %v1657
      %v1750 = vpop.f32.mrf.mxu0
      %v1751 = vadd.f32 0.0, %v1750
      %v1752 = vpop.f32.mrf.mxu0
      %v1753 = vadd.f32 0.0, %v1752
      %1754 = vmatmul.bf16.gmra.mxu0 %v1658
      %v1755 = vpop.f32.mrf.mxu0
      %v1756 = vadd.f32 0.0, %v1755
      %v1757 = vpop.f32.mrf.mxu0
      %v1758 = vadd.f32 0.0, %v1757
      %1759 = vmatmul.bf16.gmra.mxu0 %v1659
      %v1760 = vpop.f32.mrf.mxu0
      %v1761 = vadd.f32 0.0, %v1760
      %v1762 = vpop.f32.mrf.mxu0
      %v1763 = vadd.f32 0.0, %v1762
      %1764 = vmatmul.bf16.gmra.mxu0 %v1660
      %v1765 = vpop.f32.mrf.mxu0
      %v1766 = vadd.f32 0.0, %v1765
      %v1767 = vpop.f32.mrf.mxu0
      %v1768 = vadd.f32 0.0, %v1767
      %1769 = vmatmul.bf16.gmra.mxu0 %v1661
      %v1770 = vpop.f32.mrf.mxu0
      %v1771 = vadd.f32 0.0, %v1770
      %v1772 = vpop.f32.mrf.mxu0
      %v1773 = vadd.f32 0.0, %v1772
      %1774 = vmatmul.bf16.gmra.mxu0 %v1662
      %v1775 = vpop.f32.mrf.mxu0
      %v1776 = vadd.f32 0.0, %v1775
      %v1777 = vpop.f32.mrf.mxu0
      %v1778 = vadd.f32 0.0, %v1777
      %1779 = vmatmul.bf16.gmra.mxu0 %v1663
      %v1780 = vpop.f32.mrf.mxu0
      %v1781 = vadd.f32 0.0, %v1780
      %v1782 = vpop.f32.mrf.mxu0
      %v1783 = vadd.f32 0.0, %v1782
      %1784 = vmatmul.bf16.gmra.mxu0 %v1664
      %v1785 = vpop.f32.mrf.mxu0
      %v1786 = vadd.f32 0.0, %v1785
      %v1787 = vpop.f32.mrf.mxu0
      %v1788 = vadd.f32 0.0, %v1787
      %1789 = vmatmul.bf16.gmra.mxu0 %v1665
      %v1790 = vpop.f32.mrf.mxu0
      %v1791 = vadd.f32 0.0, %v1790
      %v1792 = vpop.f32.mrf.mxu0
      %v1793 = vadd.f32 0.0, %v1792
      %1794 = vmatmul.bf16.gmra.mxu0 %v1666
      %v1795 = vpop.f32.mrf.mxu0
      %v1796 = vadd.f32 0.0, %v1795
      %v1797 = vpop.f32.mrf.mxu0
      %v1798 = vadd.f32 0.0, %v1797
      %1799 = vmatmul.bf16.gmra.mxu0 %v1667
      %v1800 = vpop.f32.mrf.mxu0
      %v1801 = vadd.f32 0.0, %v1800
      %v1802 = vpop.f32.mrf.mxu0
      %v1803 = vadd.f32 0.0, %v1802
      %1804 = vmatmul.bf16.gmra.mxu0 %v1668
      %v1805 = vpop.f32.mrf.mxu0
      %v1806 = vadd.f32 0.0, %v1805
      %v1807 = vpop.f32.mrf.mxu0
      %v1808 = vadd.f32 0.0, %v1807
      %1809 = vmatmul.bf16.gmra.mxu0 %v1669
      %v1810 = vpop.f32.mrf.mxu0
      %v1811 = vadd.f32 0.0, %v1810
      %v1812 = vpop.f32.mrf.mxu0
      %v1813 = vadd.f32 0.0, %v1812
      %1814 = vmatmul.bf16.gmra.mxu0 %v1670
      %v1815 = vpop.f32.mrf.mxu0
      %v1816 = vadd.f32 0.0, %v1815
      %v1817 = vpop.f32.mrf.mxu0
      %v1818 = vadd.f32 0.0, %v1817
      %1819 = vmatmul.bf16.gmra.mxu0 %v1671
      %v1820 = vpop.f32.mrf.mxu0
      %v1821 = vadd.f32 0.0, %v1820
      %v1822 = vpop.f32.mrf.mxu0
      %v1823 = vadd.f32 0.0, %v1822
      %1824 = vdwg.mxu0
      %v1825 = vperm.slane %v1655, 0
      %v1826 = vadd.f32 %v1825, %v1746
      %v1827 = vadd.f32 %v1825, %v1748
      %v1828 = vadd.f32 %v1825, %v1751
      %v1829 = vadd.f32 %v1825, %v1753
      %v1830 = vadd.f32 %v1825, %v1756
      %v1831 = vadd.f32 %v1825, %v1758
      %v1832 = vadd.f32 %v1825, %v1761
      %v1833 = vadd.f32 %v1825, %v1763
      %v1834 = vadd.f32 %v1825, %v1766
      %v1835 = vadd.f32 %v1825, %v1768
      %v1836 = vadd.f32 %v1825, %v1771
      %v1837 = vadd.f32 %v1825, %v1773
      %v1838 = vadd.f32 %v1825, %v1776
      %v1839 = vadd.f32 %v1825, %v1778
      %v1840 = vadd.f32 %v1825, %v1781
      %v1841 = vadd.f32 %v1825, %v1783
      %v1842 = vadd.f32 %v1825, %v1786
      %v1843 = vadd.f32 %v1825, %v1788
      %v1844 = vadd.f32 %v1825, %v1791
      %v1845 = vadd.f32 %v1825, %v1793
      %v1846 = vadd.f32 %v1825, %v1796
      %v1847 = vadd.f32 %v1825, %v1798
      %v1848 = vadd.f32 %v1825, %v1801
      %v1849 = vadd.f32 %v1825, %v1803
      %v1850 = vadd.f32 %v1825, %v1806
      %v1851 = vadd.f32 %v1825, %v1808
      %v1852 = vadd.f32 %v1825, %v1811
      %v1853 = vadd.f32 %v1825, %v1813
      %v1854 = vadd.f32 %v1825, %v1816
      %v1855 = vadd.f32 %v1825, %v1818
      %v1856 = vadd.f32 %v1825, %v1821
      %v1857 = vadd.f32 %v1825, %v1823
      %v1858 = vmax.f32 %v1826, 0.0
      %v1859 = vmax.f32 %v1827, 0.0
      %v1860 = vmax.f32 %v1828, 0.0
      %v1861 = vmax.f32 %v1829, 0.0
      %v1862 = vmax.f32 %v1830, 0.0
      %v1863 = vmax.f32 %v1831, 0.0
      %v1864 = vmax.f32 %v1832, 0.0
      %v1865 = vmax.f32 %v1833, 0.0
      %v1866 = vmax.f32 %v1834, 0.0
      %v1867 = vmax.f32 %v1835, 0.0
      %v1868 = vmax.f32 %v1836, 0.0
      %v1869 = vmax.f32 %v1837, 0.0
      %v1870 = vmax.f32 %v1838, 0.0
      %v1871 = vmax.f32 %v1839, 0.0
      %v1872 = vmax.f32 %v1840, 0.0
      %v1873 = vmax.f32 %v1841, 0.0
      %v1874 = vmax.f32 %v1842, 0.0
      %v1875 = vmax.f32 %v1843, 0.0
      %v1876 = vmax.f32 %v1844, 0.0
      %v1877 = vmax.f32 %v1845, 0.0
      %v1878 = vmax.f32 %v1846, 0.0
      %v1879 = vmax.f32 %v1847, 0.0
      %v1880 = vmax.f32 %v1848, 0.0
      %v1881 = vmax.f32 %v1849, 0.0
      %v1882 = vmax.f32 %v1850, 0.0
      %v1883 = vmax.f32 %v1851, 0.0
      %v1884 = vmax.f32 %v1852, 0.0
      %v1885 = vmax.f32 %v1853, 0.0
      %v1886 = vmax.f32 %v1854, 0.0
      %v1887 = vmax.f32 %v1855, 0.0
      %v1888 = vmax.f32 %v1856, 0.0
      %v1889 = vmax.f32 %v1857, 0.0
      %v1890 = vpack.c.bf16 %v1859, %v1858
      %v1891 = vpack.c.bf16 %v1861, %v1860
      %v1892 = vpack.c.bf16 %v1863, %v1862
      %v1893 = vpack.c.bf16 %v1865, %v1864
      %v1894 = vpack.c.bf16 %v1867, %v1866
      %v1895 = vpack.c.bf16 %v1869, %v1868
      %v1896 = vpack.c.bf16 %v1871, %v1870
      %v1897 = vpack.c.bf16 %v1873, %v1872
      %v1898 = vpack.c.bf16 %v1875, %v1874
      %v1899 = vpack.c.bf16 %v1877, %v1876
      %v1900 = vpack.c.bf16 %v1879, %v1878
      %v1901 = vpack.c.bf16 %v1881, %v1880
      %v1902 = vpack.c.bf16 %v1883, %v1882
      %v1903 = vpack.c.bf16 %v1885, %v1884
      %v1904 = vpack.c.bf16 %v1887, %v1886
      %v1905 = vpack.c.bf16 %v1889, %v1888
      %v1906 = vld [vmem:[%s3 + $0x100] sm:$0xf]
      %v1907 = vld [vmem:[%s3 + $0x104] sm:$0xf]
      %v1908 = vld [vmem:[%s3 + $0x108] sm:$0xf]
      %v1909 = vld [vmem:[%s3 + $0x10c] sm:$0xf]
      %v1910 = vld [vmem:[%s3 + $0x110] sm:$0xf]
      %v1911 = vld [vmem:[%s3 + $0x114] sm:$0xf]
      %v1912 = vld [vmem:[%s3 + $0x118] sm:$0xf]
      %v1913 = vld [vmem:[%s3 + $0x11c] sm:$0xf]
      %v1914 = vld [vmem:[%s3 + $0x120] sm:$0xf]
      %v1915 = vld [vmem:[%s3 + $0x124] sm:$0xf]
      %v1916 = vld [vmem:[%s3 + $0x128] sm:$0xf]
      %v1917 = vld [vmem:[%s3 + $0x12c] sm:$0xf]
      %v1918 = vld [vmem:[%s3 + $0x130] sm:$0xf]
      %v1919 = vld [vmem:[%s3 + $0x134] sm:$0xf]
      %v1920 = vld [vmem:[%s3 + $0x138] sm:$0xf]
      %v1921 = vld [vmem:[%s3 + $0x13c] sm:$0xf]
      %v1922 = vld [vmem:[%s4 + $0x6] sm:$0x1]
      %v1923 = vperm.slane %v1922, 0
      %v1940 = vunpack.c.l.b16 %v1906
      %v1941 = vunpack.c.l.b16 %v1907
      %v1942 = vunpack.c.l.b16 %v1908
      %v1943 = vunpack.c.l.b16 %v1909
      %v1944 = vunpack.c.l.b16 %v1910
      %v1945 = vunpack.c.l.b16 %v1911
      %v1946 = vunpack.c.l.b16 %v1912
      %v1947 = vunpack.c.l.b16 %v1913
      %v1948 = vunpack.c.l.b16 %v1914
      %v1949 = vunpack.c.l.b16 %v1915
      %v1950 = vunpack.c.l.b16 %v1916
      %v1951 = vunpack.c.l.b16 %v1917
      %v1952 = vunpack.c.l.b16 %v1918
      %v1953 = vunpack.c.l.b16 %v1919
      %v1954 = vunpack.c.l.b16 %v1920
      %v1955 = vunpack.c.l.b16 %v1921
      %v1956 = vpack.c.b16 %v1941, %v1940
      %v1957 = vpack.c.b16 %v1943, %v1942
      %v1958 = vpack.c.b16 %v1945, %v1944
      %v1959 = vpack.c.b16 %v1947, %v1946
      %v1960 = vpack.c.b16 %v1949, %v1948
      %v1961 = vpack.c.b16 %v1951, %v1950
      %v1962 = vpack.c.b16 %v1953, %v1952
      %v1963 = vpack.c.b16 %v1955, %v1954
      %1972 = vmatpush.bf16.msra.mxu0 %v1963
      %1973 = vmatpush.bf16.msra.mxu0 %v1962
      %1974 = vmatpush.bf16.msra.mxu0 %v1961
      %1975 = vmatpush.bf16.msra.mxu0 %v1960
      %1976 = vmatpush.bf16.msra.mxu0 %v1959
      %1977 = vmatpush.bf16.msra.mxu0 %v1958
      %1978 = vmatpush.bf16.msra.mxu0 %v1957
      %1979 = vmatpush.bf16.msra.mxu0 %v1956
      %1980 = vmatmul.bf16.gmra.mxu0 %v1890
      %v1981 = vpop.f32.mrf.mxu0
      %v1982 = vadd.f32 %v1923, %v1981
      %v1983 = vpop.f32.mrf.mxu0
      %v1984 = vadd.f32 %v1923, %v1983
      %1985 = vmatmul.bf16.gmra.mxu0 %v1891
      %v1986 = vpop.f32.mrf.mxu0
      %v1987 = vadd.f32 %v1923, %v1986
      %v1988 = vpop.f32.mrf.mxu0
      %v1989 = vadd.f32 %v1923, %v1988
      %1990 = vmatmul.bf16.gmra.mxu0 %v1892
      %v1991 = vpop.f32.mrf.mxu0
      %v1992 = vadd.f32 %v1923, %v1991
      %v1993 = vpop.f32.mrf.mxu0
      %v1994 = vadd.f32 %v1923, %v1993
      %1995 = vmatmul.bf16.gmra.mxu0 %v1893
      %v1996 = vpop.f32.mrf.mxu0
      %v1997 = vadd.f32 %v1923, %v1996
      %v1998 = vpop.f32.mrf.mxu0
      %v1999 = vadd.f32 %v1923, %v1998
      %2000 = vmatmul.bf16.gmra.mxu0 %v1894
      %v2001 = vpop.f32.mrf.mxu0
      %v2002 = vadd.f32 %v1923, %v2001
      %v2003 = vpop.f32.mrf.mxu0
      %v2004 = vadd.f32 %v1923, %v2003
      %2005 = vmatmul.bf16.gmra.mxu0 %v1895
      %v2006 = vpop.f32.mrf.mxu0
      %v2007 = vadd.f32 %v1923, %v2006
      %v2008 = vpop.f32.mrf.mxu0
      %v2009 = vadd.f32 %v1923, %v2008
      %2010 = vmatmul.bf16.gmra.mxu0 %v1896
      %v2011 = vpop.f32.mrf.mxu0
      %v2012 = vadd.f32 %v1923, %v2011
      %v2013 = vpop.f32.mrf.mxu0
      %v2014 = vadd.f32 %v1923, %v2013
      %2015 = vmatmul.bf16.gmra.mxu0 %v1897
      %v2016 = vpop.f32.mrf.mxu0
      %v2017 = vadd.f32 %v1923, %v2016
      %v2018 = vpop.f32.mrf.mxu0
      %v2019 = vadd.f32 %v1923, %v2018
      %2020 = vmatmul.bf16.gmra.mxu0 %v1898
      %v2021 = vpop.f32.mrf.mxu0
      %v2022 = vadd.f32 %v1923, %v2021
      %v2023 = vpop.f32.mrf.mxu0
      %v2024 = vadd.f32 %v1923, %v2023
      %2025 = vmatmul.bf16.gmra.mxu0 %v1899
      %v2026 = vpop.f32.mrf.mxu0
      %v2027 = vadd.f32 %v1923, %v2026
      %v2028 = vpop.f32.mrf.mxu0
      %v2029 = vadd.f32 %v1923, %v2028
      %2030 = vmatmul.bf16.gmra.mxu0 %v1900
      %v2031 = vpop.f32.mrf.mxu0
      %v2032 = vadd.f32 %v1923, %v2031
      %v2033 = vpop.f32.mrf.mxu0
      %v2034 = vadd.f32 %v1923, %v2033
      %2035 = vmatmul.bf16.gmra.mxu0 %v1901
      %v2036 = vpop.f32.mrf.mxu0
      %v2037 = vadd.f32 %v1923, %v2036
      %v2038 = vpop.f32.mrf.mxu0
      %v2039 = vadd.f32 %v1923, %v2038
      %2040 = vmatmul.bf16.gmra.mxu0 %v1902
      %v2041 = vpop.f32.mrf.mxu0
      %v2042 = vadd.f32 %v1923, %v2041
      %v2043 = vpop.f32.mrf.mxu0
      %v2044 = vadd.f32 %v1923, %v2043
      %2045 = vmatmul.bf16.gmra.mxu0 %v1903
      %v2046 = vpop.f32.mrf.mxu0
      %v2047 = vadd.f32 %v1923, %v2046
      %v2048 = vpop.f32.mrf.mxu0
      %v2049 = vadd.f32 %v1923, %v2048
      %2050 = vmatmul.bf16.gmra.mxu0 %v1904
      %v2051 = vpop.f32.mrf.mxu0
      %v2052 = vadd.f32 %v1923, %v2051
      %v2053 = vpop.f32.mrf.mxu0
      %v2054 = vadd.f32 %v1923, %v2053
      %2055 = vmatmul.bf16.gmra.mxu0 %v1905
      %v2056 = vpop.f32.mrf.mxu0
      %v2057 = vadd.f32 %v1923, %v2056
      %v2058 = vpop.f32.mrf.mxu0
      %v2059 = vadd.f32 %v1923, %v2058
      %2060 = vdwg.mxu0
      %v2061 = vmax.f32 %v1982, 0.0
      %v2062 = vmax.f32 %v1984, 0.0
      %v2063 = vmax.f32 %v1987, 0.0
      %v2064 = vmax.f32 %v1989, 0.0
      %v2065 = vmax.f32 %v1992, 0.0
      %v2066 = vmax.f32 %v1994, 0.0
      %v2067 = vmax.f32 %v1997, 0.0
      %v2068 = vmax.f32 %v1999, 0.0
      %v2069 = vmax.f32 %v2002, 0.0
      %v2070 = vmax.f32 %v2004, 0.0
      %v2071 = vmax.f32 %v2007, 0.0
      %v2072 = vmax.f32 %v2009, 0.0
      %v2073 = vmax.f32 %v2012, 0.0
      %v2074 = vmax.f32 %v2014, 0.0
      %v2075 = vmax.f32 %v2017, 0.0
      %v2076 = vmax.f32 %v2019, 0.0
      %v2077 = vmax.f32 %v2022, 0.0
      %v2078 = vmax.f32 %v2024, 0.0
      %v2079 = vmax.f32 %v2027, 0.0
      %v2080 = vmax.f32 %v2029, 0.0
      %v2081 = vmax.f32 %v2032, 0.0
      %v2082 = vmax.f32 %v2034, 0.0
      %v2083 = vmax.f32 %v2037, 0.0
      %v2084 = vmax.f32 %v2039, 0.0
      %v2085 = vmax.f32 %v2042, 0.0
      %v2086 = vmax.f32 %v2044, 0.0
      %v2087 = vmax.f32 %v2047, 0.0
      %v2088 = vmax.f32 %v2049, 0.0
      %v2089 = vmax.f32 %v2052, 0.0
      %v2090 = vmax.f32 %v2054, 0.0
      %v2091 = vmax.f32 %v2057, 0.0
      %v2092 = vmax.f32 %v2059, 0.0
      %v2093 = vpack.c.bf16 %v2062, %v2061
      %v2094 = vpack.c.bf16 %v2064, %v2063
      %v2095 = vpack.c.bf16 %v2066, %v2065
      %v2096 = vpack.c.bf16 %v2068, %v2067
      %v2097 = vpack.c.bf16 %v2070, %v2069
      %v2098 = vpack.c.bf16 %v2072, %v2071
      %v2099 = vpack.c.bf16 %v2074, %v2073
      %v2100 = vpack.c.bf16 %v2076, %v2075
      %v2101 = vpack.c.bf16 %v2078, %v2077
      %v2102 = vpack.c.bf16 %v2080, %v2079
      %v2103 = vpack.c.bf16 %v2082, %v2081
      %v2104 = vpack.c.bf16 %v2084, %v2083
      %v2105 = vpack.c.bf16 %v2086, %v2085
      %v2106 = vpack.c.bf16 %v2088, %v2087
      %v2107 = vpack.c.bf16 %v2090, %v2089
      %v2108 = vpack.c.bf16 %v2092, %v2091
      %v2109 = vld [vmem:[%s3 + $0x140] sm:$0xf]
      %v2110 = vld [vmem:[%s3 + $0x144] sm:$0xf]
      %v2111 = vld [vmem:[%s3 + $0x148] sm:$0xf]
      %v2112 = vld [vmem:[%s3 + $0x14c] sm:$0xf]
      %v2113 = vld [vmem:[%s3 + $0x150] sm:$0xf]
      %v2114 = vld [vmem:[%s3 + $0x154] sm:$0xf]
      %v2115 = vld [vmem:[%s3 + $0x158] sm:$0xf]
      %v2116 = vld [vmem:[%s3 + $0x15c] sm:$0xf]
      %v2117 = vld [vmem:[%s3 + $0x160] sm:$0xf]
      %v2118 = vld [vmem:[%s3 + $0x164] sm:$0xf]
      %v2119 = vld [vmem:[%s3 + $0x168] sm:$0xf]
      %v2120 = vld [vmem:[%s3 + $0x16c] sm:$0xf]
      %v2121 = vld [vmem:[%s3 + $0x170] sm:$0xf]
      %v2122 = vld [vmem:[%s3 + $0x174] sm:$0xf]
      %v2123 = vld [vmem:[%s3 + $0x178] sm:$0xf]
      %v2124 = vld [vmem:[%s3 + $0x17c] sm:$0xf]
      %v2125 = vld [vmem:[%s4 + $0x7] sm:$0x1]
      %v2126 = vperm.slane %v2125, 0
      %v2143 = vunpack.c.l.b16 %v2109
      %v2144 = vunpack.c.l.b16 %v2110
      %v2145 = vunpack.c.l.b16 %v2111
      %v2146 = vunpack.c.l.b16 %v2112
      %v2147 = vunpack.c.l.b16 %v2113
      %v2148 = vunpack.c.l.b16 %v2114
      %v2149 = vunpack.c.l.b16 %v2115
      %v2150 = vunpack.c.l.b16 %v2116
      %v2151 = vunpack.c.l.b16 %v2117
      %v2152 = vunpack.c.l.b16 %v2118
      %v2153 = vunpack.c.l.b16 %v2119
      %v2154 = vunpack.c.l.b16 %v2120
      %v2155 = vunpack.c.l.b16 %v2121
      %v2156 = vunpack.c.l.b16 %v2122
      %v2157 = vunpack.c.l.b16 %v2123
      %v2158 = vunpack.c.l.b16 %v2124
      %v2159 = vpack.c.b16 %v2144, %v2143
      %v2160 = vpack.c.b16 %v2146, %v2145
      %v2161 = vpack.c.b16 %v2148, %v2147
      %v2162 = vpack.c.b16 %v2150, %v2149
      %v2163 = vpack.c.b16 %v2152, %v2151
      %v2164 = vpack.c.b16 %v2154, %v2153
      %v2165 = vpack.c.b16 %v2156, %v2155
      %v2166 = vpack.c.b16 %v2158, %v2157
      %2175 = vmatpush.bf16.msra.mxu0 %v2166
      %2176 = vmatpush.bf16.msra.mxu0 %v2165
      %2177 = vmatpush.bf16.msra.mxu0 %v2164
      %2178 = vmatpush.bf16.msra.mxu0 %v2163
      %2179 = vmatpush.bf16.msra.mxu0 %v2162
      %2180 = vmatpush.bf16.msra.mxu0 %v2161
      %2181 = vmatpush.bf16.msra.mxu0 %v2160
      %2182 = vmatpush.bf16.msra.mxu0 %v2159
      %2183 = vmatmul.bf16.gmra.mxu0 %v2093
      %v2184 = vpop.f32.mrf.mxu0
      %v2185 = vadd.f32 %v2126, %v2184
      %v2186 = vpop.f32.mrf.mxu0
      %v2187 = vadd.f32 %v2126, %v2186
      %2188 = vmatmul.bf16.gmra.mxu0 %v2094
      %v2189 = vpop.f32.mrf.mxu0
      %v2190 = vadd.f32 %v2126, %v2189
      %v2191 = vpop.f32.mrf.mxu0
      %v2192 = vadd.f32 %v2126, %v2191
      %2193 = vmatmul.bf16.gmra.mxu0 %v2095
      %v2194 = vpop.f32.mrf.mxu0
      %v2195 = vadd.f32 %v2126, %v2194
      %v2196 = vpop.f32.mrf.mxu0
      %v2197 = vadd.f32 %v2126, %v2196
      %2198 = vmatmul.bf16.gmra.mxu0 %v2096
      %v2199 = vpop.f32.mrf.mxu0
      %v2200 = vadd.f32 %v2126, %v2199
      %v2201 = vpop.f32.mrf.mxu0
      %v2202 = vadd.f32 %v2126, %v2201
      %2203 = vmatmul.bf16.gmra.mxu0 %v2097
      %v2204 = vpop.f32.mrf.mxu0
      %v2205 = vadd.f32 %v2126, %v2204
      %v2206 = vpop.f32.mrf.mxu0
      %v2207 = vadd.f32 %v2126, %v2206
      %2208 = vmatmul.bf16.gmra.mxu0 %v2098
      %v2209 = vpop.f32.mrf.mxu0
      %v2210 = vadd.f32 %v2126, %v2209
      %v2211 = vpop.f32.mrf.mxu0
      %v2212 = vadd.f32 %v2126, %v2211
      %2213 = vmatmul.bf16.gmra.mxu0 %v2099
      %v2214 = vpop.f32.mrf.mxu0
      %v2215 = vadd.f32 %v2126, %v2214
      %v2216 = vpop.f32.mrf.mxu0
      %v2217 = vadd.f32 %v2126, %v2216
      %2218 = vmatmul.bf16.gmra.mxu0 %v2100
      %v2219 = vpop.f32.mrf.mxu0
      %v2220 = vadd.f32 %v2126, %v2219
      %v2221 = vpop.f32.mrf.mxu0
      %v2222 = vadd.f32 %v2126, %v2221
      %2223 = vmatmul.bf16.gmra.mxu0 %v2101
      %v2224 = vpop.f32.mrf.mxu0
      %v2225 = vadd.f32 %v2126, %v2224
      %v2226 = vpop.f32.mrf.mxu0
      %v2227 = vadd.f32 %v2126, %v2226
      %2228 = vmatmul.bf16.gmra.mxu0 %v2102
      %v2229 = vpop.f32.mrf.mxu0
      %v2230 = vadd.f32 %v2126, %v2229
      %v2231 = vpop.f32.mrf.mxu0
      %v2232 = vadd.f32 %v2126, %v2231
      %2233 = vmatmul.bf16.gmra.mxu0 %v2103
      %v2234 = vpop.f32.mrf.mxu0
      %v2235 = vadd.f32 %v2126, %v2234
      %v2236 = vpop.f32.mrf.mxu0
      %v2237 = vadd.f32 %v2126, %v2236
      %2238 = vmatmul.bf16.gmra.mxu0 %v2104
      %v2239 = vpop.f32.mrf.mxu0
      %v2240 = vadd.f32 %v2126, %v2239
      %v2241 = vpop.f32.mrf.mxu0
      %v2242 = vadd.f32 %v2126, %v2241
      %2243 = vmatmul.bf16.gmra.mxu0 %v2105
      %v2244 = vpop.f32.mrf.mxu0
      %v2245 = vadd.f32 %v2126, %v2244
      %v2246 = vpop.f32.mrf.mxu0
      %v2247 = vadd.f32 %v2126, %v2246
      %2248 = vmatmul.bf16.gmra.mxu0 %v2106
      %v2249 = vpop.f32.mrf.mxu0
      %v2250 = vadd.f32 %v2126, %v2249
      %v2251 = vpop.f32.mrf.mxu0
      %v2252 = vadd.f32 %v2126, %v2251
      %2253 = vmatmul.bf16.gmra.mxu0 %v2107
      %v2254 = vpop.f32.mrf.mxu0
      %v2255 = vadd.f32 %v2126, %v2254
      %v2256 = vpop.f32.mrf.mxu0
      %v2257 = vadd.f32 %v2126, %v2256
      %2258 = vmatmul.bf16.gmra.mxu0 %v2108
      %v2259 = vpop.f32.mrf.mxu0
      %v2260 = vadd.f32 %v2126, %v2259
      %v2261 = vpop.f32.mrf.mxu0
      %v2262 = vadd.f32 %v2126, %v2261
      %2263 = vdwg.mxu0
      %2264 = vadd.xlane.f32.xlu0 %v2185
      %v2265 = vpop.xlane.xlu0 %2264
      %2266 = vadd.xlane.f32.xlu0 %v2187
      %v2267 = vpop.xlane.xlu0 %2266
      %2268 = vadd.xlane.f32.xlu0 %v2190
      %v2269 = vpop.xlane.xlu0 %2268
      %2270 = vadd.xlane.f32.xlu0 %v2192
      %v2271 = vpop.xlane.xlu0 %2270
      %2272 = vadd.xlane.f32.xlu0 %v2195
      %v2273 = vpop.xlane.xlu0 %2272
      %2274 = vadd.xlane.f32.xlu0 %v2197
      %v2275 = vpop.xlane.xlu0 %2274
      %2276 = vadd.xlane.f32.xlu0 %v2200
      %v2277 = vpop.xlane.xlu0 %2276
      %2278 = vadd.xlane.f32.xlu0 %v2202
      %v2279 = vpop.xlane.xlu0 %2278
      %2280 = vadd.xlane.f32.xlu0 %v2205
      %v2281 = vpop.xlane.xlu0 %2280
      %2282 = vadd.xlane.f32.xlu0 %v2207
      %v2283 = vpop.xlane.xlu0 %2282
      %2284 = vadd.xlane.f32.xlu0 %v2210
      %v2285 = vpop.xlane.xlu0 %2284
      %2286 = vadd.xlane.f32.xlu0 %v2212
      %v2287 = vpop.xlane.xlu0 %2286
      %2288 = vadd.xlane.f32.xlu0 %v2215
      %v2289 = vpop.xlane.xlu0 %2288
      %2290 = vadd.xlane.f32.xlu0 %v2217
      %v2291 = vpop.xlane.xlu0 %2290
      %2292 = vadd.xlane.f32.xlu0 %v2220
      %v2293 = vpop.xlane.xlu0 %2292
      %2294 = vadd.xlane.f32.xlu0 %v2222
      %v2295 = vpop.xlane.xlu0 %2294
      %2296 = vadd.xlane.f32.xlu0 %v2225
      %v2297 = vpop.xlane.xlu0 %2296
      %2298 = vadd.xlane.f32.xlu0 %v2227
      %v2299 = vpop.xlane.xlu0 %2298
      %2300 = vadd.xlane.f32.xlu0 %v2230
      %v2301 = vpop.xlane.xlu0 %2300
      %2302 = vadd.xlane.f32.xlu0 %v2232
      %v2303 = vpop.xlane.xlu0 %2302
      %2304 = vadd.xlane.f32.xlu0 %v2235
      %v2305 = vpop.xlane.xlu0 %2304
      %2306 = vadd.xlane.f32.xlu0 %v2237
      %v2307 = vpop.xlane.xlu0 %2306
      %2308 = vadd.xlane.f32.xlu0 %v2240
      %v2309 = vpop.xlane.xlu0 %2308
      %2310 = vadd.xlane.f32.xlu0 %v2242
      %v2311 = vpop.xlane.xlu0 %2310
      %2312 = vadd.xlane.f32.xlu0 %v2245
      %v2313 = vpop.xlane.xlu0 %2312
      %2314 = vadd.xlane.f32.xlu0 %v2247
      %v2315 = vpop.xlane.xlu0 %2314
      %2316 = vadd.xlane.f32.xlu0 %v2250
      %v2317 = vpop.xlane.xlu0 %2316
      %2318 = vadd.xlane.f32.xlu0 %v2252
      %v2319 = vpop.xlane.xlu0 %2318
      %2320 = vadd.xlane.f32.xlu0 %v2255
      %v2321 = vpop.xlane.xlu0 %2320
      %2322 = vadd.xlane.f32.xlu0 %v2257
      %v2323 = vpop.xlane.xlu0 %2322
      %2324 = vadd.xlane.f32.xlu0 %v2260
      %v2325 = vpop.xlane.xlu0 %2324
      %2326 = vadd.xlane.f32.xlu0 %v2262
      %v2327 = vpop.xlane.xlu0 %2326
      %v2328 = vmul.f32 %v2265, 0.03125
      %v2329 = vmul.f32 %v2267, 0.03125
      %v2330 = vmul.f32 %v2269, 0.03125
      %v2331 = vmul.f32 %v2271, 0.03125
      %v2332 = vmul.f32 %v2273, 0.03125
      %v2333 = vmul.f32 %v2275, 0.03125
      %v2334 = vmul.f32 %v2277, 0.03125
      %v2335 = vmul.f32 %v2279, 0.03125
      %v2336 = vmul.f32 %v2281, 0.03125
      %v2337 = vmul.f32 %v2283, 0.03125
      %v2338 = vmul.f32 %v2285, 0.03125
      %v2339 = vmul.f32 %v2287, 0.03125
      %v2340 = vmul.f32 %v2289, 0.03125
      %v2341 = vmul.f32 %v2291, 0.03125
      %v2342 = vmul.f32 %v2293, 0.03125
      %v2343 = vmul.f32 %v2295, 0.03125
      %v2344 = vmul.f32 %v2297, 0.03125
      %v2345 = vmul.f32 %v2299, 0.03125
      %v2346 = vmul.f32 %v2301, 0.03125
      %v2347 = vmul.f32 %v2303, 0.03125
      %v2348 = vmul.f32 %v2305, 0.03125
      %v2349 = vmul.f32 %v2307, 0.03125
      %v2350 = vmul.f32 %v2309, 0.03125
      %v2351 = vmul.f32 %v2311, 0.03125
      %v2352 = vmul.f32 %v2313, 0.03125
      %v2353 = vmul.f32 %v2315, 0.03125
      %v2354 = vmul.f32 %v2317, 0.03125
      %v2355 = vmul.f32 %v2319, 0.03125
      %v2356 = vmul.f32 %v2321, 0.03125
      %v2357 = vmul.f32 %v2323, 0.03125
      %v2358 = vmul.f32 %v2325, 0.03125
      %v2359 = vmul.f32 %v2327, 0.03125
      %v2360 = vmul.f32 %v2185, %v2185
      %v2361 = vmul.f32 %v2187, %v2187
      %v2362 = vmul.f32 %v2190, %v2190
      %v2363 = vmul.f32 %v2192, %v2192
      %v2364 = vmul.f32 %v2195, %v2195
      %v2365 = vmul.f32 %v2197, %v2197
      %v2366 = vmul.f32 %v2200, %v2200
      %v2367 = vmul.f32 %v2202, %v2202
      %v2368 = vmul.f32 %v2205, %v2205
      %v2369 = vmul.f32 %v2207, %v2207
      %v2370 = vmul.f32 %v2210, %v2210
      %v2371 = vmul.f32 %v2212, %v2212
      %v2372 = vmul.f32 %v2215, %v2215
      %v2373 = vmul.f32 %v2217, %v2217
      %v2374 = vmul.f32 %v2220, %v2220
      %v2375 = vmul.f32 %v2222, %v2222
      %v2376 = vmul.f32 %v2225, %v2225
      %v2377 = vmul.f32 %v2227, %v2227
      %v2378 = vmul.f32 %v2230, %v2230
      %v2379 = vmul.f32 %v2232, %v2232
      %v2380 = vmul.f32 %v2235, %v2235
      %v2381 = vmul.f32 %v2237, %v2237
      %v2382 = vmul.f32 %v2240, %v2240
      %v2383 = vmul.f32 %v2242, %v2242
      %v2384 = vmul.f32 %v2245, %v2245
      %v2385 = vmul.f32 %v2247, %v2247
      %v2386 = vmul.f32 %v2250, %v2250
      %v2387 = vmul.f32 %v2252, %v2252
      %v2388 = vmul.f32 %v2255, %v2255
      %v2389 = vmul.f32 %v2257, %v2257
      %v2390 = vmul.f32 %v2260, %v2260
      %v2391 = vmul.f32 %v2262, %v2262
      %2392 = vadd.xlane.f32.xlu0 %v2360
      %v2393 = vpop.xlane.xlu0 %2392
      %2394 = vadd.xlane.f32.xlu0 %v2361
      %v2395 = vpop.xlane.xlu0 %2394
      %2396 = vadd.xlane.f32.xlu0 %v2362
      %v2397 = vpop.xlane.xlu0 %2396
      %2398 = vadd.xlane.f32.xlu0 %v2363
      %v2399 = vpop.xlane.xlu0 %2398
      %2400 = vadd.xlane.f32.xlu0 %v2364
      %v2401 = vpop.xlane.xlu0 %2400
      %2402 = vadd.xlane.f32.xlu0 %v2365
      %v2403 = vpop.xlane.xlu0 %2402
      %2404 = vadd.xlane.f32.xlu0 %v2366
      %v2405 = vpop.xlane.xlu0 %2404
      %2406 = vadd.xlane.f32.xlu0 %v2367
      %v2407 = vpop.xlane.xlu0 %2406
      %2408 = vadd.xlane.f32.xlu0 %v2368
      %v2409 = vpop.xlane.xlu0 %2408
      %2410 = vadd.xlane.f32.xlu0 %v2369
      %v2411 = vpop.xlane.xlu0 %2410
      %2412 = vadd.xlane.f32.xlu0 %v2370
      %v2413 = vpop.xlane.xlu0 %2412
      %2414 = vadd.xlane.f32.xlu0 %v2371
      %v2415 = vpop.xlane.xlu0 %2414
      %2416 = vadd.xlane.f32.xlu0 %v2372
      %v2417 = vpop.xlane.xlu0 %2416
      %2418 = vadd.xlane.f32.xlu0 %v2373
      %v2419 = vpop.xlane.xlu0 %2418
      %2420 = vadd.xlane.f32.xlu0 %v2374
      %v2421 = vpop.xlane.xlu0 %2420
      %2422 = vadd.xlane.f32.xlu0 %v2375
      %v2423 = vpop.xlane.xlu0 %2422
      %2424 = vadd.xlane.f32.xlu0 %v2376
      %v2425 = vpop.xlane.xlu0 %2424
      %2426 = vadd.xlane.f32.xlu0 %v2377
      %v2427 = vpop.xlane.xlu0 %2426
      %2428 = vadd.xlane.f32.xlu0 %v2378
      %v2429 = vpop.xlane.xlu0 %2428
      %2430 = vadd.xlane.f32.xlu0 %v2379
      %v2431 = vpop.xlane.xlu0 %2430
      %2432 = vadd.xlane.f32.xlu0 %v2380
      %v2433 = vpop.xlane.xlu0 %2432
      %2434 = vadd.xlane.f32.xlu0 %v2381
      %v2435 = vpop.xlane.xlu0 %2434
      %2436 = vadd.xlane.f32.xlu0 %v2382
      %v2437 = vpop.xlane.xlu0 %2436
      %2438 = vadd.xlane.f32.xlu0 %v2383
      %v2439 = vpop.xlane.xlu0 %2438
      %2440 = vadd.xlane.f32.xlu0 %v2384
      %v2441 = vpop.xlane.xlu0 %2440
      %2442 = vadd.xlane.f32.xlu0 %v2385
      %v2443 = vpop.xlane.xlu0 %2442
      %2444 = vadd.xlane.f32.xlu0 %v2386
      %v2445 = vpop.xlane.xlu0 %2444
      %2446 = vadd.xlane.f32.xlu0 %v2387
      %v2447 = vpop.xlane.xlu0 %2446
      %2448 = vadd.xlane.f32.xlu0 %v2388
      %v2449 = vpop.xlane.xlu0 %2448
      %2450 = vadd.xlane.f32.xlu0 %v2389
      %v2451 = vpop.xlane.xlu0 %2450
      %2452 = vadd.xlane.f32.xlu0 %v2390
      %v2453 = vpop.xlane.xlu0 %2452
      %2454 = vadd.xlane.f32.xlu0 %v2391
      %v2455 = vpop.xlane.xlu0 %2454
      %v2456 = vmul.f32 %v2393, 0.03125
      %v2457 = vmul.f32 %v2395, 0.03125
      %v2458 = vmul.f32 %v2397, 0.03125
      %v2459 = vmul.f32 %v2399, 0.03125
      %v2460 = vmul.f32 %v2401, 0.03125
      %v2461 = vmul.f32 %v2403, 0.03125
      %v2462 = vmul.f32 %v2405, 0.03125
      %v2463 = vmul.f32 %v2407, 0.03125
      %v2464 = vmul.f32 %v2409, 0.03125
      %v2465 = vmul.f32 %v2411, 0.03125
      %v2466 = vmul.f32 %v2413, 0.03125
      %v2467 = vmul.f32 %v2415, 0.03125
      %v2468 = vmul.f32 %v2417, 0.03125
      %v2469 = vmul.f32 %v2419, 0.03125
      %v2470 = vmul.f32 %v2421, 0.03125
      %v2471 = vmul.f32 %v2423, 0.03125
      %v2472 = vmul.f32 %v2425, 0.03125
      %v2473 = vmul.f32 %v2427, 0.03125
      %v2474 = vmul.f32 %v2429, 0.03125
      %v2475 = vmul.f32 %v2431, 0.03125
      %v2476 = vmul.f32 %v2433, 0.03125
      %v2477 = vmul.f32 %v2435, 0.03125
      %v2478 = vmul.f32 %v2437, 0.03125
      %v2479 = vmul.f32 %v2439, 0.03125
      %v2480 = vmul.f32 %v2441, 0.03125
      %v2481 = vmul.f32 %v2443, 0.03125
      %v2482 = vmul.f32 %v2445, 0.03125
      %v2483 = vmul.f32 %v2447, 0.03125
      %v2484 = vmul.f32 %v2449, 0.03125
      %v2485 = vmul.f32 %v2451, 0.03125
      %v2486 = vmul.f32 %v2453, 0.03125
      %v2487 = vmul.f32 %v2455, 0.03125
      %v2488 = vmul.f32 %v2328, %v2328
      %v2489 = vmul.f32 %v2329, %v2329
      %v2490 = vmul.f32 %v2330, %v2330
      %v2491 = vmul.f32 %v2331, %v2331
      %v2492 = vmul.f32 %v2332, %v2332
      %v2493 = vmul.f32 %v2333, %v2333
      %v2494 = vmul.f32 %v2334, %v2334
      %v2495 = vmul.f32 %v2335, %v2335
      %v2496 = vmul.f32 %v2336, %v2336
      %v2497 = vmul.f32 %v2337, %v2337
      %v2498 = vmul.f32 %v2338, %v2338
      %v2499 = vmul.f32 %v2339, %v2339
      %v2500 = vmul.f32 %v2340, %v2340
      %v2501 = vmul.f32 %v2341, %v2341
      %v2502 = vmul.f32 %v2342, %v2342
      %v2503 = vmul.f32 %v2343, %v2343
      %v2504 = vmul.f32 %v2344, %v2344
      %v2505 = vmul.f32 %v2345, %v2345
      %v2506 = vmul.f32 %v2346, %v2346
      %v2507 = vmul.f32 %v2347, %v2347
      %v2508 = vmul.f32 %v2348, %v2348
      %v2509 = vmul.f32 %v2349, %v2349
      %v2510 = vmul.f32 %v2350, %v2350
      %v2511 = vmul.f32 %v2351, %v2351
      %v2512 = vmul.f32 %v2352, %v2352
      %v2513 = vmul.f32 %v2353, %v2353
      %v2514 = vmul.f32 %v2354, %v2354
      %v2515 = vmul.f32 %v2355, %v2355
      %v2516 = vmul.f32 %v2356, %v2356
      %v2517 = vmul.f32 %v2357, %v2357
      %v2518 = vmul.f32 %v2358, %v2358
      %v2519 = vmul.f32 %v2359, %v2359
      %v2520 = vsub.f32 %v2456, %v2488
      %v2521 = vsub.f32 %v2457, %v2489
      %v2522 = vsub.f32 %v2458, %v2490
      %v2523 = vsub.f32 %v2459, %v2491
      %v2524 = vsub.f32 %v2460, %v2492
      %v2525 = vsub.f32 %v2461, %v2493
      %v2526 = vsub.f32 %v2462, %v2494
      %v2527 = vsub.f32 %v2463, %v2495
      %v2528 = vsub.f32 %v2464, %v2496
      %v2529 = vsub.f32 %v2465, %v2497
      %v2530 = vsub.f32 %v2466, %v2498
      %v2531 = vsub.f32 %v2467, %v2499
      %v2532 = vsub.f32 %v2468, %v2500
      %v2533 = vsub.f32 %v2469, %v2501
      %v2534 = vsub.f32 %v2470, %v2502
      %v2535 = vsub.f32 %v2471, %v2503
      %v2536 = vsub.f32 %v2472, %v2504
      %v2537 = vsub.f32 %v2473, %v2505
      %v2538 = vsub.f32 %v2474, %v2506
      %v2539 = vsub.f32 %v2475, %v2507
      %v2540 = vsub.f32 %v2476, %v2508
      %v2541 = vsub.f32 %v2477, %v2509
      %v2542 = vsub.f32 %v2478, %v2510
      %v2543 = vsub.f32 %v2479, %v2511
      %v2544 = vsub.f32 %v2480, %v2512
      %v2545 = vsub.f32 %v2481, %v2513
      %v2546 = vsub.f32 %v2482, %v2514
      %v2547 = vsub.f32 %v2483, %v2515
      %v2548 = vsub.f32 %v2484, %v2516
      %v2549 = vsub.f32 %v2485, %v2517
      %v2550 = vsub.f32 %v2486, %v2518
      %v2551 = vsub.f32 %v2487, %v2519
      %v2552 = vadd.f32 %v2520, 1e-05
      %v2553 = vadd.f32 %v2521, 1e-05
      %v2554 = vadd.f32 %v2522, 1e-05
      %v2555 = vadd.f32 %v2523, 1e-05
      %v2556 = vadd.f32 %v2524, 1e-05
      %v2557 = vadd.f32 %v2525, 1e-05
      %v2558 = vadd.f32 %v2526, 1e-05
      %v2559 = vadd.f32 %v2527, 1e-05
      %v2560 = vadd.f32 %v2528, 1e-05
      %v2561 = vadd.f32 %v2529, 1e-05
      %v2562 = vadd.f32 %v2530, 1e-05
      %v2563 = vadd.f32 %v2531, 1e-05
      %v2564 = vadd.f32 %v2532, 1e-05
      %v2565 = vadd.f32 %v2533, 1e-05
      %v2566 = vadd.f32 %v2534, 1e-05
      %v2567 = vadd.f32 %v2535, 1e-05
      %v2568 = vadd.f32 %v2536, 1e-05
      %v2569 = vadd.f32 %v2537, 1e-05
      %v2570 = vadd.f32 %v2538, 1e-05
      %v2571 = vadd.f32 %v2539, 1e-05
      %v2572 = vadd.f32 %v2540, 1e-05
      %v2573 = vadd.f32 %v2541, 1e-05
      %v2574 = vadd.f32 %v2542, 1e-05
      %v2575 = vadd.f32 %v2543, 1e-05
      %v2576 = vadd.f32 %v2544, 1e-05
      %v2577 = vadd.f32 %v2545, 1e-05
      %v2578 = vadd.f32 %v2546, 1e-05
      %v2579 = vadd.f32 %v2547, 1e-05
      %v2580 = vadd.f32 %v2548, 1e-05
      %v2581 = vadd.f32 %v2549, 1e-05
      %v2582 = vadd.f32 %v2550, 1e-05
      %v2583 = vadd.f32 %v2551, 1e-05
      %v2584 = vrsqrt.pop %v2552
      %v2585 = vmul.f32 %v2584, %v2552
      %v2586 = vmul.f32 %v2585, %v2584
      %v2587 = vmul.f32 0.5, %v2586
      %v2588 = vsub.f32 1.5, %v2587
      %v2589 = vmul.f32 %v2584, %v2588
      %vm2590 = vweird.f32 %v2552
      %vm2591 = vweird.f32 %v2584
      %vm2592 = vmor %vm2590, %vm2591
      %v2593 = vsel %vm2592, %v2584, %v2589
      %v2594 = vrsqrt.pop %v2553
      %v2595 = vmul.f32 %v2594, %v2553
      %v2596 = vmul.f32 %v2595, %v2594
      %v2597 = vmul.f32 0.5, %v2596
      %v2598 = vsub.f32 1.5, %v2597
      %v2599 = vmul.f32 %v2594, %v2598
      %vm2600 = vweird.f32 %v2553
      %vm2601 = vweird.f32 %v2594
      %vm2602 = vmor %vm2600, %vm2601
      %v2603 = vsel %vm2602, %v2594, %v2599
      %v2604 = vrsqrt.pop %v2554
      %v2605 = vmul.f32 %v2604, %v2554
      %v2606 = vmul.f32 %v2605, %v2604
      %v2607 = vmul.f32 0.5, %v2606
      %v2608 = vsub.f32 1.5, %v2607
      %v2609 = vmul.f32 %v2604, %v2608
      %vm2610 = vweird.f32 %v2554
      %vm2611 = vweird.f32 %v2604
      %vm2612 = vmor %vm2610, %vm2611
      %v2613 = vsel %vm2612, %v2604, %v2609
      %v2614 = vrsqrt.pop %v2555
      %v2615 = vmul.f32 %v2614, %v2555
      %v2616 = vmul.f32 %v2615, %v2614
      %v2617 = vmul.f32 0.5, %v2616
      %v2618 = vsub.f32 1.5, %v2617
      %v2619 = vmul.f32 %v2614, %v2618
      %vm2620 = vweird.f32 %v2555
      %vm2621 = vweird.f32 %v2614
      %vm2622 = vmor %vm2620, %vm2621
      %v2623 = vsel %vm2622, %v2614, %v2619
      %v2624 = vrsqrt.pop %v2556
      %v2625 = vmul.f32 %v2624, %v2556
      %v2626 = vmul.f32 %v2625, %v2624
      %v2627 = vmul.f32 0.5, %v2626
      %v2628 = vsub.f32 1.5, %v2627
      %v2629 = vmul.f32 %v2624, %v2628
      %vm2630 = vweird.f32 %v2556
      %vm2631 = vweird.f32 %v2624
      %vm2632 = vmor %vm2630, %vm2631
      %v2633 = vsel %vm2632, %v2624, %v2629
      %v2634 = vrsqrt.pop %v2557
      %v2635 = vmul.f32 %v2634, %v2557
      %v2636 = vmul.f32 %v2635, %v2634
      %v2637 = vmul.f32 0.5, %v2636
      %v2638 = vsub.f32 1.5, %v2637
      %v2639 = vmul.f32 %v2634, %v2638
      %vm2640 = vweird.f32 %v2557
      %vm2641 = vweird.f32 %v2634
      %vm2642 = vmor %vm2640, %vm2641
      %v2643 = vsel %vm2642, %v2634, %v2639
      %v2644 = vrsqrt.pop %v2558
      %v2645 = vmul.f32 %v2644, %v2558
      %v2646 = vmul.f32 %v2645, %v2644
      %v2647 = vmul.f32 0.5, %v2646
      %v2648 = vsub.f32 1.5, %v2647
      %v2649 = vmul.f32 %v2644, %v2648
      %vm2650 = vweird.f32 %v2558
      %vm2651 = vweird.f32 %v2644
      %vm2652 = vmor %vm2650, %vm2651
      %v2653 = vsel %vm2652, %v2644, %v2649
      %v2654 = vrsqrt.pop %v2559
      %v2655 = vmul.f32 %v2654, %v2559
      %v2656 = vmul.f32 %v2655, %v2654
      %v2657 = vmul.f32 0.5, %v2656
      %v2658 = vsub.f32 1.5, %v2657
      %v2659 = vmul.f32 %v2654, %v2658
      %vm2660 = vweird.f32 %v2559
      %vm2661 = vweird.f32 %v2654
      %vm2662 = vmor %vm2660, %vm2661
      %v2663 = vsel %vm2662, %v2654, %v2659
      %v2664 = vrsqrt.pop %v2560
      %v2665 = vmul.f32 %v2664, %v2560
      %v2666 = vmul.f32 %v2665, %v2664
      %v2667 = vmul.f32 0.5, %v2666
      %v2668 = vsub.f32 1.5, %v2667
      %v2669 = vmul.f32 %v2664, %v2668
      %vm2670 = vweird.f32 %v2560
      %vm2671 = vweird.f32 %v2664
      %vm2672 = vmor %vm2670, %vm2671
      %v2673 = vsel %vm2672, %v2664, %v2669
      %v2674 = vrsqrt.pop %v2561
      %v2675 = vmul.f32 %v2674, %v2561
      %v2676 = vmul.f32 %v2675, %v2674
      %v2677 = vmul.f32 0.5, %v2676
      %v2678 = vsub.f32 1.5, %v2677
      %v2679 = vmul.f32 %v2674, %v2678
      %vm2680 = vweird.f32 %v2561
      %vm2681 = vweird.f32 %v2674
      %vm2682 = vmor %vm2680, %vm2681
      %v2683 = vsel %vm2682, %v2674, %v2679
      %v2684 = vrsqrt.pop %v2562
      %v2685 = vmul.f32 %v2684, %v2562
      %v2686 = vmul.f32 %v2685, %v2684
      %v2687 = vmul.f32 0.5, %v2686
      %v2688 = vsub.f32 1.5, %v2687
      %v2689 = vmul.f32 %v2684, %v2688
      %vm2690 = vweird.f32 %v2562
      %vm2691 = vweird.f32 %v2684
      %vm2692 = vmor %vm2690, %vm2691
      %v2693 = vsel %vm2692, %v2684, %v2689
      %v2694 = vrsqrt.pop %v2563
      %v2695 = vmul.f32 %v2694, %v2563
      %v2696 = vmul.f32 %v2695, %v2694
      %v2697 = vmul.f32 0.5, %v2696
      %v2698 = vsub.f32 1.5, %v2697
      %v2699 = vmul.f32 %v2694, %v2698
      %vm2700 = vweird.f32 %v2563
      %vm2701 = vweird.f32 %v2694
      %vm2702 = vmor %vm2700, %vm2701
      %v2703 = vsel %vm2702, %v2694, %v2699
      %v2704 = vrsqrt.pop %v2564
      %v2705 = vmul.f32 %v2704, %v2564
      %v2706 = vmul.f32 %v2705, %v2704
      %v2707 = vmul.f32 0.5, %v2706
      %v2708 = vsub.f32 1.5, %v2707
      %v2709 = vmul.f32 %v2704, %v2708
      %vm2710 = vweird.f32 %v2564
      %vm2711 = vweird.f32 %v2704
      %vm2712 = vmor %vm2710, %vm2711
      %v2713 = vsel %vm2712, %v2704, %v2709
      %v2714 = vrsqrt.pop %v2565
      %v2715 = vmul.f32 %v2714, %v2565
      %v2716 = vmul.f32 %v2715, %v2714
      %v2717 = vmul.f32 0.5, %v2716
      %v2718 = vsub.f32 1.5, %v2717
      %v2719 = vmul.f32 %v2714, %v2718
      %vm2720 = vweird.f32 %v2565
      %vm2721 = vweird.f32 %v2714
      %vm2722 = vmor %vm2720, %vm2721
      %v2723 = vsel %vm2722, %v2714, %v2719
      %v2724 = vrsqrt.pop %v2566
      %v2725 = vmul.f32 %v2724, %v2566
      %v2726 = vmul.f32 %v2725, %v2724
      %v2727 = vmul.f32 0.5, %v2726
      %v2728 = vsub.f32 1.5, %v2727
      %v2729 = vmul.f32 %v2724, %v2728
      %vm2730 = vweird.f32 %v2566
      %vm2731 = vweird.f32 %v2724
      %vm2732 = vmor %vm2730, %vm2731
      %v2733 = vsel %vm2732, %v2724, %v2729
      %v2734 = vrsqrt.pop %v2567
      %v2735 = vmul.f32 %v2734, %v2567
      %v2736 = vmul.f32 %v2735, %v2734
      %v2737 = vmul.f32 0.5, %v2736
      %v2738 = vsub.f32 1.5, %v2737
      %v2739 = vmul.f32 %v2734, %v2738
      %vm2740 = vweird.f32 %v2567
      %vm2741 = vweird.f32 %v2734
      %vm2742 = vmor %vm2740, %vm2741
      %v2743 = vsel %vm2742, %v2734, %v2739
      %v2744 = vrsqrt.pop %v2568
      %v2745 = vmul.f32 %v2744, %v2568
      %v2746 = vmul.f32 %v2745, %v2744
      %v2747 = vmul.f32 0.5, %v2746
      %v2748 = vsub.f32 1.5, %v2747
      %v2749 = vmul.f32 %v2744, %v2748
      %vm2750 = vweird.f32 %v2568
      %vm2751 = vweird.f32 %v2744
      %vm2752 = vmor %vm2750, %vm2751
      %v2753 = vsel %vm2752, %v2744, %v2749
      %v2754 = vrsqrt.pop %v2569
      %v2755 = vmul.f32 %v2754, %v2569
      %v2756 = vmul.f32 %v2755, %v2754
      %v2757 = vmul.f32 0.5, %v2756
      %v2758 = vsub.f32 1.5, %v2757
      %v2759 = vmul.f32 %v2754, %v2758
      %vm2760 = vweird.f32 %v2569
      %vm2761 = vweird.f32 %v2754
      %vm2762 = vmor %vm2760, %vm2761
      %v2763 = vsel %vm2762, %v2754, %v2759
      %v2764 = vrsqrt.pop %v2570
      %v2765 = vmul.f32 %v2764, %v2570
      %v2766 = vmul.f32 %v2765, %v2764
      %v2767 = vmul.f32 0.5, %v2766
      %v2768 = vsub.f32 1.5, %v2767
      %v2769 = vmul.f32 %v2764, %v2768
      %vm2770 = vweird.f32 %v2570
      %vm2771 = vweird.f32 %v2764
      %vm2772 = vmor %vm2770, %vm2771
      %v2773 = vsel %vm2772, %v2764, %v2769
      %v2774 = vrsqrt.pop %v2571
      %v2775 = vmul.f32 %v2774, %v2571
      %v2776 = vmul.f32 %v2775, %v2774
      %v2777 = vmul.f32 0.5, %v2776
      %v2778 = vsub.f32 1.5, %v2777
      %v2779 = vmul.f32 %v2774, %v2778
      %vm2780 = vweird.f32 %v2571
      %vm2781 = vweird.f32 %v2774
      %vm2782 = vmor %vm2780, %vm2781
      %v2783 = vsel %vm2782, %v2774, %v2779
      %v2784 = vrsqrt.pop %v2572
      %v2785 = vmul.f32 %v2784, %v2572
      %v2786 = vmul.f32 %v2785, %v2784
      %v2787 = vmul.f32 0.5, %v2786
      %v2788 = vsub.f32 1.5, %v2787
      %v2789 = vmul.f32 %v2784, %v2788
      %vm2790 = vweird.f32 %v2572
      %vm2791 = vweird.f32 %v2784
      %vm2792 = vmor %vm2790, %vm2791
      %v2793 = vsel %vm2792, %v2784, %v2789
      %v2794 = vrsqrt.pop %v2573
      %v2795 = vmul.f32 %v2794, %v2573
      %v2796 = vmul.f32 %v2795, %v2794
      %v2797 = vmul.f32 0.5, %v2796
      %v2798 = vsub.f32 1.5, %v2797
      %v2799 = vmul.f32 %v2794, %v2798
      %vm2800 = vweird.f32 %v2573
      %vm2801 = vweird.f32 %v2794
      %vm2802 = vmor %vm2800, %vm2801
      %v2803 = vsel %vm2802, %v2794, %v2799
      %v2804 = vrsqrt.pop %v2574
      %v2805 = vmul.f32 %v2804, %v2574
      %v2806 = vmul.f32 %v2805, %v2804
      %v2807 = vmul.f32 0.5, %v2806
      %v2808 = vsub.f32 1.5, %v2807
      %v2809 = vmul.f32 %v2804, %v2808
      %vm2810 = vweird.f32 %v2574
      %vm2811 = vweird.f32 %v2804
      %vm2812 = vmor %vm2810, %vm2811
      %v2813 = vsel %vm2812, %v2804, %v2809
      %v2814 = vrsqrt.pop %v2575
      %v2815 = vmul.f32 %v2814, %v2575
      %v2816 = vmul.f32 %v2815, %v2814
      %v2817 = vmul.f32 0.5, %v2816
      %v2818 = vsub.f32 1.5, %v2817
      %v2819 = vmul.f32 %v2814, %v2818
      %vm2820 = vweird.f32 %v2575
      %vm2821 = vweird.f32 %v2814
      %vm2822 = vmor %vm2820, %vm2821
      %v2823 = vsel %vm2822, %v2814, %v2819
      %v2824 = vrsqrt.pop %v2576
      %v2825 = vmul.f32 %v2824, %v2576
      %v2826 = vmul.f32 %v2825, %v2824
      %v2827 = vmul.f32 0.5, %v2826
      %v2828 = vsub.f32 1.5, %v2827
      %v2829 = vmul.f32 %v2824, %v2828
      %vm2830 = vweird.f32 %v2576
      %vm2831 = vweird.f32 %v2824
      %vm2832 = vmor %vm2830, %vm2831
      %v2833 = vsel %vm2832, %v2824, %v2829
      %v2834 = vrsqrt.pop %v2577
      %v2835 = vmul.f32 %v2834, %v2577
      %v2836 = vmul.f32 %v2835, %v2834
      %v2837 = vmul.f32 0.5, %v2836
      %v2838 = vsub.f32 1.5, %v2837
      %v2839 = vmul.f32 %v2834, %v2838
      %vm2840 = vweird.f32 %v2577
      %vm2841 = vweird.f32 %v2834
      %vm2842 = vmor %vm2840, %vm2841
      %v2843 = vsel %vm2842, %v2834, %v2839
      %v2844 = vrsqrt.pop %v2578
      %v2845 = vmul.f32 %v2844, %v2578
      %v2846 = vmul.f32 %v2845, %v2844
      %v2847 = vmul.f32 0.5, %v2846
      %v2848 = vsub.f32 1.5, %v2847
      %v2849 = vmul.f32 %v2844, %v2848
      %vm2850 = vweird.f32 %v2578
      %vm2851 = vweird.f32 %v2844
      %vm2852 = vmor %vm2850, %vm2851
      %v2853 = vsel %vm2852, %v2844, %v2849
      %v2854 = vrsqrt.pop %v2579
      %v2855 = vmul.f32 %v2854, %v2579
      %v2856 = vmul.f32 %v2855, %v2854
      %v2857 = vmul.f32 0.5, %v2856
      %v2858 = vsub.f32 1.5, %v2857
      %v2859 = vmul.f32 %v2854, %v2858
      %vm2860 = vweird.f32 %v2579
      %vm2861 = vweird.f32 %v2854
      %vm2862 = vmor %vm2860, %vm2861
      %v2863 = vsel %vm2862, %v2854, %v2859
      %v2864 = vrsqrt.pop %v2580
      %v2865 = vmul.f32 %v2864, %v2580
      %v2866 = vmul.f32 %v2865, %v2864
      %v2867 = vmul.f32 0.5, %v2866
      %v2868 = vsub.f32 1.5, %v2867
      %v2869 = vmul.f32 %v2864, %v2868
      %vm2870 = vweird.f32 %v2580
      %vm2871 = vweird.f32 %v2864
      %vm2872 = vmor %vm2870, %vm2871
      %v2873 = vsel %vm2872, %v2864, %v2869
      %v2874 = vrsqrt.pop %v2581
      %v2875 = vmul.f32 %v2874, %v2581
      %v2876 = vmul.f32 %v2875, %v2874
      %v2877 = vmul.f32 0.5, %v2876
      %v2878 = vsub.f32 1.5, %v2877
      %v2879 = vmul.f32 %v2874, %v2878
      %vm2880 = vweird.f32 %v2581
      %vm2881 = vweird.f32 %v2874
      %vm2882 = vmor %vm2880, %vm2881
      %v2883 = vsel %vm2882, %v2874, %v2879
      %v2884 = vrsqrt.pop %v2582
      %v2885 = vmul.f32 %v2884, %v2582
      %v2886 = vmul.f32 %v2885, %v2884
      %v2887 = vmul.f32 0.5, %v2886
      %v2888 = vsub.f32 1.5, %v2887
      %v2889 = vmul.f32 %v2884, %v2888
      %vm2890 = vweird.f32 %v2582
      %vm2891 = vweird.f32 %v2884
      %vm2892 = vmor %vm2890, %vm2891
      %v2893 = vsel %vm2892, %v2884, %v2889
      %v2894 = vrsqrt.pop %v2583
      %v2895 = vmul.f32 %v2894, %v2583
      %v2896 = vmul.f32 %v2895, %v2894
      %v2897 = vmul.f32 0.5, %v2896
      %v2898 = vsub.f32 1.5, %v2897
      %v2899 = vmul.f32 %v2894, %v2898
      %vm2900 = vweird.f32 %v2583
      %vm2901 = vweird.f32 %v2894
      %vm2902 = vmor %vm2900, %vm2901
      %v2903 = vsel %vm2902, %v2894, %v2899
      %v2904 = vsub.f32 %v2185, %v2328
      %v2905 = vsub.f32 %v2187, %v2329
      %v2906 = vsub.f32 %v2190, %v2330
      %v2907 = vsub.f32 %v2192, %v2331
      %v2908 = vsub.f32 %v2195, %v2332
      %v2909 = vsub.f32 %v2197, %v2333
      %v2910 = vsub.f32 %v2200, %v2334
      %v2911 = vsub.f32 %v2202, %v2335
      %v2912 = vsub.f32 %v2205, %v2336
      %v2913 = vsub.f32 %v2207, %v2337
      %v2914 = vsub.f32 %v2210, %v2338
      %v2915 = vsub.f32 %v2212, %v2339
      %v2916 = vsub.f32 %v2215, %v2340
      %v2917 = vsub.f32 %v2217, %v2341
      %v2918 = vsub.f32 %v2220, %v2342
      %v2919 = vsub.f32 %v2222, %v2343
      %v2920 = vsub.f32 %v2225, %v2344
      %v2921 = vsub.f32 %v2227, %v2345
      %v2922 = vsub.f32 %v2230, %v2346
      %v2923 = vsub.f32 %v2232, %v2347
      %v2924 = vsub.f32 %v2235, %v2348
      %v2925 = vsub.f32 %v2237, %v2349
      %v2926 = vsub.f32 %v2240, %v2350
      %v2927 = vsub.f32 %v2242, %v2351
      %v2928 = vsub.f32 %v2245, %v2352
      %v2929 = vsub.f32 %v2247, %v2353
      %v2930 = vsub.f32 %v2250, %v2354
      %v2931 = vsub.f32 %v2252, %v2355
      %v2932 = vsub.f32 %v2255, %v2356
      %v2933 = vsub.f32 %v2257, %v2357
      %v2934 = vsub.f32 %v2260, %v2358
      %v2935 = vsub.f32 %v2262, %v2359
      %v2936 = vmul.f32 %v2904, %v2593
      %v2937 = vmul.f32 %v2905, %v2603
      %v2938 = vmul.f32 %v2906, %v2613
      %v2939 = vmul.f32 %v2907, %v2623
      %v2940 = vmul.f32 %v2908, %v2633
      %v2941 = vmul.f32 %v2909, %v2643
      %v2942 = vmul.f32 %v2910, %v2653
      %v2943 = vmul.f32 %v2911, %v2663
      %v2944 = vmul.f32 %v2912, %v2673
      %v2945 = vmul.f32 %v2913, %v2683
      %v2946 = vmul.f32 %v2914, %v2693
      %v2947 = vmul.f32 %v2915, %v2703
      %v2948 = vmul.f32 %v2916, %v2713
      %v2949 = vmul.f32 %v2917, %v2723
      %v2950 = vmul.f32 %v2918, %v2733
      %v2951 = vmul.f32 %v2919, %v2743
      %v2952 = vmul.f32 %v2920, %v2753
      %v2953 = vmul.f32 %v2921, %v2763
      %v2954 = vmul.f32 %v2922, %v2773
      %v2955 = vmul.f32 %v2923, %v2783
      %v2956 = vmul.f32 %v2924, %v2793
      %v2957 = vmul.f32 %v2925, %v2803
      %v2958 = vmul.f32 %v2926, %v2813
      %v2959 = vmul.f32 %v2927, %v2823
      %v2960 = vmul.f32 %v2928, %v2833
      %v2961 = vmul.f32 %v2929, %v2843
      %v2962 = vmul.f32 %v2930, %v2853
      %v2963 = vmul.f32 %v2931, %v2863
      %v2964 = vmul.f32 %v2932, %v2873
      %v2965 = vmul.f32 %v2933, %v2883
      %v2966 = vmul.f32 %v2934, %v2893
      %v2967 = vmul.f32 %v2935, %v2903
      %v2968 = vld [vmem:[%s4 + $0x8] sm:$0x1]
      %v2969 = vperm.slane %v2968, 0
      %v2970 = vmul.f32 %v2936, %v2969
      %v2971 = vmul.f32 %v2937, %v2969
      %v2972 = vmul.f32 %v2938, %v2969
      %v2973 = vmul.f32 %v2939, %v2969
      %v2974 = vmul.f32 %v2940, %v2969
      %v2975 = vmul.f32 %v2941, %v2969
      %v2976 = vmul.f32 %v2942, %v2969
      %v2977 = vmul.f32 %v2943, %v2969
      %v2978 = vmul.f32 %v2944, %v2969
      %v2979 = vmul.f32 %v2945, %v2969
      %v2980 = vmul.f32 %v2946, %v2969
      %v2981 = vmul.f32 %v2947, %v2969
      %v2982 = vmul.f32 %v2948, %v2969
      %v2983 = vmul.f32 %v2949, %v2969
      %v2984 = vmul.f32 %v2950, %v2969
      %v2985 = vmul.f32 %v2951, %v2969
      %v2986 = vmul.f32 %v2952, %v2969
      %v2987 = vmul.f32 %v2953, %v2969
      %v2988 = vmul.f32 %v2954, %v2969
      %v2989 = vmul.f32 %v2955, %v2969
      %v2990 = vmul.f32 %v2956, %v2969
      %v2991 = vmul.f32 %v2957, %v2969
      %v2992 = vmul.f32 %v2958, %v2969
      %v2993 = vmul.f32 %v2959, %v2969
      %v2994 = vmul.f32 %v2960, %v2969
      %v2995 = vmul.f32 %v2961, %v2969
      %v2996 = vmul.f32 %v2962, %v2969
      %v2997 = vmul.f32 %v2963, %v2969
      %v2998 = vmul.f32 %v2964, %v2969
      %v2999 = vmul.f32 %v2965, %v2969
      %v3000 = vmul.f32 %v2966, %v2969
      %v3001 = vmul.f32 %v2967, %v2969
      %v3002 = vld [vmem:[%s4 + $0x9] sm:$0x1]
      %v3003 = vperm.slane %v3002, 0
      %v3004 = vadd.f32 %v2970, %v3003
      %v3005 = vadd.f32 %v2971, %v3003
      %v3006 = vadd.f32 %v2972, %v3003
      %v3007 = vadd.f32 %v2973, %v3003
      %v3008 = vadd.f32 %v2974, %v3003
      %v3009 = vadd.f32 %v2975, %v3003
      %v3010 = vadd.f32 %v2976, %v3003
      %v3011 = vadd.f32 %v2977, %v3003
      %v3012 = vadd.f32 %v2978, %v3003
      %v3013 = vadd.f32 %v2979, %v3003
      %v3014 = vadd.f32 %v2980, %v3003
      %v3015 = vadd.f32 %v2981, %v3003
      %v3016 = vadd.f32 %v2982, %v3003
      %v3017 = vadd.f32 %v2983, %v3003
      %v3018 = vadd.f32 %v2984, %v3003
      %v3019 = vadd.f32 %v2985, %v3003
      %v3020 = vadd.f32 %v2986, %v3003
      %v3021 = vadd.f32 %v2987, %v3003
      %v3022 = vadd.f32 %v2988, %v3003
      %v3023 = vadd.f32 %v2989, %v3003
      %v3024 = vadd.f32 %v2990, %v3003
      %v3025 = vadd.f32 %v2991, %v3003
      %v3026 = vadd.f32 %v2992, %v3003
      %v3027 = vadd.f32 %v2993, %v3003
      %v3028 = vadd.f32 %v2994, %v3003
      %v3029 = vadd.f32 %v2995, %v3003
      %v3030 = vadd.f32 %v2996, %v3003
      %v3031 = vadd.f32 %v2997, %v3003
      %v3032 = vadd.f32 %v2998, %v3003
      %v3033 = vadd.f32 %v2999, %v3003
      %v3034 = vadd.f32 %v3000, %v3003
      %v3035 = vadd.f32 %v3001, %v3003
      %v3036 = vpack.c.bf16 %v1608, %v1607
      %v3037 = vpack.c.bf16 %v1610, %v1609
      %v3038 = vpack.c.bf16 %v1612, %v1611
      %v3039 = vpack.c.bf16 %v1614, %v1613
      %v3040 = vpack.c.bf16 %v1616, %v1615
      %v3041 = vpack.c.bf16 %v1618, %v1617
      %v3042 = vpack.c.bf16 %v1620, %v1619
      %v3043 = vpack.c.bf16 %v1622, %v1621
      %3044 = vmatpush.bf16.msra.mxu0 %v3043
      %3045 = vmatpush.bf16.msra.mxu0 %v3042
      %3046 = vmatpush.bf16.msra.mxu0 %v3041
      %3047 = vmatpush.bf16.msra.mxu0 %v3040
      %3048 = vmatpush.bf16.msra.mxu0 %v3039
      %3049 = vmatpush.bf16.msra.mxu0 %v3038
      %3050 = vmatpush.bf16.msra.mxu0 %v3037
      %3051 = vmatpush.bf16.msra.mxu0 %v3036
      %3052 = vmatmul.bf16.gmra.mxu0 %v498
      %v3053 = vpop.f32.mrf.mxu0
      %v3054 = vadd.f32 0.0, %v3053
      %v3055 = vpop.f32.mrf.mxu0
      %v3056 = vadd.f32 0.0, %v3055
      %3057 = vmatmul.bf16.gmra.mxu0 %v499
      %v3058 = vpop.f32.mrf.mxu0
      %v3059 = vadd.f32 0.0, %v3058
      %v3060 = vpop.f32.mrf.mxu0
      %v3061 = vadd.f32 0.0, %v3060
      %3062 = vmatmul.bf16.gmra.mxu0 %v500
      %v3063 = vpop.f32.mrf.mxu0
      %v3064 = vadd.f32 0.0, %v3063
      %v3065 = vpop.f32.mrf.mxu0
      %v3066 = vadd.f32 0.0, %v3065
      %3067 = vmatmul.bf16.gmra.mxu0 %v501
      %v3068 = vpop.f32.mrf.mxu0
      %v3069 = vadd.f32 0.0, %v3068
      %v3070 = vpop.f32.mrf.mxu0
      %v3071 = vadd.f32 0.0, %v3070
      %3072 = vmatmul.bf16.gmra.mxu0 %v502
      %v3073 = vpop.f32.mrf.mxu0
      %v3074 = vadd.f32 0.0, %v3073
      %v3075 = vpop.f32.mrf.mxu0
      %v3076 = vadd.f32 0.0, %v3075
      %3077 = vmatmul.bf16.gmra.mxu0 %v503
      %v3078 = vpop.f32.mrf.mxu0
      %v3079 = vadd.f32 0.0, %v3078
      %v3080 = vpop.f32.mrf.mxu0
      %v3081 = vadd.f32 0.0, %v3080
      %3082 = vmatmul.bf16.gmra.mxu0 %v504
      %v3083 = vpop.f32.mrf.mxu0
      %v3084 = vadd.f32 0.0, %v3083
      %v3085 = vpop.f32.mrf.mxu0
      %v3086 = vadd.f32 0.0, %v3085
      %3087 = vmatmul.bf16.gmra.mxu0 %v505
      %v3088 = vpop.f32.mrf.mxu0
      %v3089 = vadd.f32 0.0, %v3088
      %v3090 = vpop.f32.mrf.mxu0
      %v3091 = vadd.f32 0.0, %v3090
      %3092 = vmatmul.bf16.gmra.mxu0 %v506
      %v3093 = vpop.f32.mrf.mxu0
      %v3094 = vadd.f32 0.0, %v3093
      %v3095 = vpop.f32.mrf.mxu0
      %v3096 = vadd.f32 0.0, %v3095
      %3097 = vmatmul.bf16.gmra.mxu0 %v507
      %v3098 = vpop.f32.mrf.mxu0
      %v3099 = vadd.f32 0.0, %v3098
      %v3100 = vpop.f32.mrf.mxu0
      %v3101 = vadd.f32 0.0, %v3100
      %3102 = vmatmul.bf16.gmra.mxu0 %v508
      %v3103 = vpop.f32.mrf.mxu0
      %v3104 = vadd.f32 0.0, %v3103
      %v3105 = vpop.f32.mrf.mxu0
      %v3106 = vadd.f32 0.0, %v3105
      %3107 = vmatmul.bf16.gmra.mxu0 %v509
      %v3108 = vpop.f32.mrf.mxu0
      %v3109 = vadd.f32 0.0, %v3108
      %v3110 = vpop.f32.mrf.mxu0
      %v3111 = vadd.f32 0.0, %v3110
      %3112 = vmatmul.bf16.gmra.mxu0 %v510
      %v3113 = vpop.f32.mrf.mxu0
      %v3114 = vadd.f32 0.0, %v3113
      %v3115 = vpop.f32.mrf.mxu0
      %v3116 = vadd.f32 0.0, %v3115
      %3117 = vmatmul.bf16.gmra.mxu0 %v511
      %v3118 = vpop.f32.mrf.mxu0
      %v3119 = vadd.f32 0.0, %v3118
      %v3120 = vpop.f32.mrf.mxu0
      %v3121 = vadd.f32 0.0, %v3120
      %3122 = vmatmul.bf16.gmra.mxu0 %v512
      %v3123 = vpop.f32.mrf.mxu0
      %v3124 = vadd.f32 0.0, %v3123
      %v3125 = vpop.f32.mrf.mxu0
      %v3126 = vadd.f32 0.0, %v3125
      %3127 = vmatmul.bf16.gmra.mxu0 %v513
      %v3128 = vpop.f32.mrf.mxu0
      %v3129 = vadd.f32 0.0, %v3128
      %v3130 = vpop.f32.mrf.mxu0
      %v3131 = vadd.f32 0.0, %v3130
      %3132 = vdwg.mxu0
      %3133 = vmatpush.bf16.msra.mxu0 %v3043
      %3134 = vmatpush.bf16.msra.mxu0 %v3042
      %3135 = vmatpush.bf16.msra.mxu0 %v3041
      %3136 = vmatpush.bf16.msra.mxu0 %v3040
      %3137 = vmatpush.bf16.msra.mxu0 %v3039
      %3138 = vmatpush.bf16.msra.mxu0 %v3038
      %3139 = vmatpush.bf16.msra.mxu0 %v3037
      %3140 = vmatpush.bf16.msra.mxu0 %v3036
      %3141 = vmatmul.bf16.gmra.mxu0 %v706
      %v3142 = vpop.f32.mrf.mxu0
      %v3143 = vadd.f32 0.0, %v3142
      %v3144 = vpop.f32.mrf.mxu0
      %v3145 = vadd.f32 0.0, %v3144
      %3146 = vmatmul.bf16.gmra.mxu0 %v707
      %v3147 = vpop.f32.mrf.mxu0
      %v3148 = vadd.f32 0.0, %v3147
      %v3149 = vpop.f32.mrf.mxu0
      %v3150 = vadd.f32 0.0, %v3149
      %3151 = vmatmul.bf16.gmra.mxu0 %v708
      %v3152 = vpop.f32.mrf.mxu0
      %v3153 = vadd.f32 0.0, %v3152
      %v3154 = vpop.f32.mrf.mxu0
      %v3155 = vadd.f32 0.0, %v3154
      %3156 = vmatmul.bf16.gmra.mxu0 %v709
      %v3157 = vpop.f32.mrf.mxu0
      %v3158 = vadd.f32 0.0, %v3157
      %v3159 = vpop.f32.mrf.mxu0
      %v3160 = vadd.f32 0.0, %v3159
      %3161 = vmatmul.bf16.gmra.mxu0 %v710
      %v3162 = vpop.f32.mrf.mxu0
      %v3163 = vadd.f32 0.0, %v3162
      %v3164 = vpop.f32.mrf.mxu0
      %v3165 = vadd.f32 0.0, %v3164
      %3166 = vmatmul.bf16.gmra.mxu0 %v711
      %v3167 = vpop.f32.mrf.mxu0
      %v3168 = vadd.f32 0.0, %v3167
      %v3169 = vpop.f32.mrf.mxu0
      %v3170 = vadd.f32 0.0, %v3169
      %3171 = vmatmul.bf16.gmra.mxu0 %v712
      %v3172 = vpop.f32.mrf.mxu0
      %v3173 = vadd.f32 0.0, %v3172
      %v3174 = vpop.f32.mrf.mxu0
      %v3175 = vadd.f32 0.0, %v3174
      %3176 = vmatmul.bf16.gmra.mxu0 %v713
      %v3177 = vpop.f32.mrf.mxu0
      %v3178 = vadd.f32 0.0, %v3177
      %v3179 = vpop.f32.mrf.mxu0
      %v3180 = vadd.f32 0.0, %v3179
      %3181 = vmatmul.bf16.gmra.mxu0 %v714
      %v3182 = vpop.f32.mrf.mxu0
      %v3183 = vadd.f32 0.0, %v3182
      %v3184 = vpop.f32.mrf.mxu0
      %v3185 = vadd.f32 0.0, %v3184
      %3186 = vmatmul.bf16.gmra.mxu0 %v715
      %v3187 = vpop.f32.mrf.mxu0
      %v3188 = vadd.f32 0.0, %v3187
      %v3189 = vpop.f32.mrf.mxu0
      %v3190 = vadd.f32 0.0, %v3189
      %3191 = vmatmul.bf16.gmra.mxu0 %v716
      %v3192 = vpop.f32.mrf.mxu0
      %v3193 = vadd.f32 0.0, %v3192
      %v3194 = vpop.f32.mrf.mxu0
      %v3195 = vadd.f32 0.0, %v3194
      %3196 = vmatmul.bf16.gmra.mxu0 %v717
      %v3197 = vpop.f32.mrf.mxu0
      %v3198 = vadd.f32 0.0, %v3197
      %v3199 = vpop.f32.mrf.mxu0
      %v3200 = vadd.f32 0.0, %v3199
      %3201 = vmatmul.bf16.gmra.mxu0 %v718
      %v3202 = vpop.f32.mrf.mxu0
      %v3203 = vadd.f32 0.0, %v3202
      %v3204 = vpop.f32.mrf.mxu0
      %v3205 = vadd.f32 0.0, %v3204
      %3206 = vmatmul.bf16.gmra.mxu0 %v719
      %v3207 = vpop.f32.mrf.mxu0
      %v3208 = vadd.f32 0.0, %v3207
      %v3209 = vpop.f32.mrf.mxu0
      %v3210 = vadd.f32 0.0, %v3209
      %3211 = vmatmul.bf16.gmra.mxu0 %v720
      %v3212 = vpop.f32.mrf.mxu0
      %v3213 = vadd.f32 0.0, %v3212
      %v3214 = vpop.f32.mrf.mxu0
      %v3215 = vadd.f32 0.0, %v3214
      %3216 = vmatmul.bf16.gmra.mxu0 %v721
      %v3217 = vpop.f32.mrf.mxu0
      %v3218 = vadd.f32 0.0, %v3217
      %v3219 = vpop.f32.mrf.mxu0
      %v3220 = vadd.f32 0.0, %v3219
      %3221 = vdwg.mxu0
      %v3222 = vld [vmem:[%s4 + $0xa] sm:$0x1]
      %v3223 = vpack.c.bf16 %v3056, %v3054
      %v3224 = vpack.c.bf16 %v3061, %v3059
      %v3225 = vpack.c.bf16 %v3066, %v3064
      %v3226 = vpack.c.bf16 %v3071, %v3069
      %v3227 = vpack.c.bf16 %v3076, %v3074
      %v3228 = vpack.c.bf16 %v3081, %v3079
      %v3229 = vpack.c.bf16 %v3086, %v3084
      %v3230 = vpack.c.bf16 %v3091, %v3089
      %v3231 = vpack.c.bf16 %v3096, %v3094
      %v3232 = vpack.c.bf16 %v3101, %v3099
      %v3233 = vpack.c.bf16 %v3106, %v3104
      %v3234 = vpack.c.bf16 %v3111, %v3109
      %v3235 = vpack.c.bf16 %v3116, %v3114
      %v3236 = vpack.c.bf16 %v3121, %v3119
      %v3237 = vpack.c.bf16 %v3126, %v3124
      %v3238 = vpack.c.bf16 %v3131, %v3129
      %v3239 = vld [vmem:[%s3 + $0x180] sm:$0xf]
      %v3240 = vld [vmem:[%s3 + $0x184] sm:$0xf]
      %v3241 = vld [vmem:[%s3 + $0x188] sm:$0xf]
      %v3242 = vld [vmem:[%s3 + $0x18c] sm:$0xf]
      %v3243 = vld [vmem:[%s3 + $0x190] sm:$0xf]
      %v3244 = vld [vmem:[%s3 + $0x194] sm:$0xf]
      %v3245 = vld [vmem:[%s3 + $0x198] sm:$0xf]
      %v3246 = vld [vmem:[%s3 + $0x19c] sm:$0xf]
      %v3247 = vld [vmem:[%s3 + $0x1a0] sm:$0xf]
      %v3248 = vld [vmem:[%s3 + $0x1a4] sm:$0xf]
      %v3249 = vld [vmem:[%s3 + $0x1a8] sm:$0xf]
      %v3250 = vld [vmem:[%s3 + $0x1ac] sm:$0xf]
      %v3251 = vld [vmem:[%s3 + $0x1b0] sm:$0xf]
      %v3252 = vld [vmem:[%s3 + $0x1b4] sm:$0xf]
      %v3253 = vld [vmem:[%s3 + $0x1b8] sm:$0xf]
      %v3254 = vld [vmem:[%s3 + $0x1bc] sm:$0xf]
      %v3271 = vunpack.c.l.b16 %v3239
      %v3272 = vunpack.c.l.b16 %v3240
      %v3273 = vunpack.c.l.b16 %v3241
      %v3274 = vunpack.c.l.b16 %v3242
      %v3275 = vunpack.c.l.b16 %v3243
      %v3276 = vunpack.c.l.b16 %v3244
      %v3277 = vunpack.c.l.b16 %v3245
      %v3278 = vunpack.c.l.b16 %v3246
      %v3279 = vunpack.c.l.b16 %v3247
      %v3280 = vunpack.c.l.b16 %v3248
      %v3281 = vunpack.c.l.b16 %v3249
      %v3282 = vunpack.c.l.b16 %v3250
      %v3283 = vunpack.c.l.b16 %v3251
      %v3284 = vunpack.c.l.b16 %v3252
      %v3285 = vunpack.c.l.b16 %v3253
      %v3286 = vunpack.c.l.b16 %v3254
      %v3287 = vpack.c.b16 %v3272, %v3271
      %v3288 = vpack.c.b16 %v3274, %v3273
      %v3289 = vpack.c.b16 %v3276, %v3275
      %v3290 = vpack.c.b16 %v3278, %v3277
      %v3291 = vpack.c.b16 %v3280, %v3279
      %v3292 = vpack.c.b16 %v3282, %v3281
      %v3293 = vpack.c.b16 %v3284, %v3283
      %v3294 = vpack.c.b16 %v3286, %v3285
      %3303 = vmatpush.bf16.msra.mxu0 %v3294
      %3304 = vmatpush.bf16.msra.mxu0 %v3293
      %3305 = vmatpush.bf16.msra.mxu0 %v3292
      %3306 = vmatpush.bf16.msra.mxu0 %v3291
      %3307 = vmatpush.bf16.msra.mxu0 %v3290
      %3308 = vmatpush.bf16.msra.mxu0 %v3289
      %3309 = vmatpush.bf16.msra.mxu0 %v3288
      %3310 = vmatpush.bf16.msra.mxu0 %v3287
      %3311 = vmatmul.bf16.gmra.mxu0 %v3223
      %v3312 = vpop.f32.mrf.mxu0
      %v3313 = vadd.f32 0.0, %v3312
      %v3314 = vpop.f32.mrf.mxu0
      %v3315 = vadd.f32 0.0, %v3314
      %3316 = vmatmul.bf16.gmra.mxu0 %v3224
      %v3317 = vpop.f32.mrf.mxu0
      %v3318 = vadd.f32 0.0, %v3317
      %v3319 = vpop.f32.mrf.mxu0
      %v3320 = vadd.f32 0.0, %v3319
      %3321 = vmatmul.bf16.gmra.mxu0 %v3225
      %v3322 = vpop.f32.mrf.mxu0
      %v3323 = vadd.f32 0.0, %v3322
      %v3324 = vpop.f32.mrf.mxu0
      %v3325 = vadd.f32 0.0, %v3324
      %3326 = vmatmul.bf16.gmra.mxu0 %v3226
      %v3327 = vpop.f32.mrf.mxu0
      %v3328 = vadd.f32 0.0, %v3327
      %v3329 = vpop.f32.mrf.mxu0
      %v3330 = vadd.f32 0.0, %v3329
      %3331 = vmatmul.bf16.gmra.mxu0 %v3227
      %v3332 = vpop.f32.mrf.mxu0
      %v3333 = vadd.f32 0.0, %v3332
      %v3334 = vpop.f32.mrf.mxu0
      %v3335 = vadd.f32 0.0, %v3334
      %3336 = vmatmul.bf16.gmra.mxu0 %v3228
      %v3337 = vpop.f32.mrf.mxu0
      %v3338 = vadd.f32 0.0, %v3337
      %v3339 = vpop.f32.mrf.mxu0
      %v3340 = vadd.f32 0.0, %v3339
      %3341 = vmatmul.bf16.gmra.mxu0 %v3229
      %v3342 = vpop.f32.mrf.mxu0
      %v3343 = vadd.f32 0.0, %v3342
      %v3344 = vpop.f32.mrf.mxu0
      %v3345 = vadd.f32 0.0, %v3344
      %3346 = vmatmul.bf16.gmra.mxu0 %v3230
      %v3347 = vpop.f32.mrf.mxu0
      %v3348 = vadd.f32 0.0, %v3347
      %v3349 = vpop.f32.mrf.mxu0
      %v3350 = vadd.f32 0.0, %v3349
      %3351 = vmatmul.bf16.gmra.mxu0 %v3231
      %v3352 = vpop.f32.mrf.mxu0
      %v3353 = vadd.f32 0.0, %v3352
      %v3354 = vpop.f32.mrf.mxu0
      %v3355 = vadd.f32 0.0, %v3354
      %3356 = vmatmul.bf16.gmra.mxu0 %v3232
      %v3357 = vpop.f32.mrf.mxu0
      %v3358 = vadd.f32 0.0, %v3357
      %v3359 = vpop.f32.mrf.mxu0
      %v3360 = vadd.f32 0.0, %v3359
      %3361 = vmatmul.bf16.gmra.mxu0 %v3233
      %v3362 = vpop.f32.mrf.mxu0
      %v3363 = vadd.f32 0.0, %v3362
      %v3364 = vpop.f32.mrf.mxu0
      %v3365 = vadd.f32 0.0, %v3364
      %3366 = vmatmul.bf16.gmra.mxu0 %v3234
      %v3367 = vpop.f32.mrf.mxu0
      %v3368 = vadd.f32 0.0, %v3367
      %v3369 = vpop.f32.mrf.mxu0
      %v3370 = vadd.f32 0.0, %v3369
      %3371 = vmatmul.bf16.gmra.mxu0 %v3235
      %v3372 = vpop.f32.mrf.mxu0
      %v3373 = vadd.f32 0.0, %v3372
      %v3374 = vpop.f32.mrf.mxu0
      %v3375 = vadd.f32 0.0, %v3374
      %3376 = vmatmul.bf16.gmra.mxu0 %v3236
      %v3377 = vpop.f32.mrf.mxu0
      %v3378 = vadd.f32 0.0, %v3377
      %v3379 = vpop.f32.mrf.mxu0
      %v3380 = vadd.f32 0.0, %v3379
      %3381 = vmatmul.bf16.gmra.mxu0 %v3237
      %v3382 = vpop.f32.mrf.mxu0
      %v3383 = vadd.f32 0.0, %v3382
      %v3384 = vpop.f32.mrf.mxu0
      %v3385 = vadd.f32 0.0, %v3384
      %3386 = vmatmul.bf16.gmra.mxu0 %v3238
      %v3387 = vpop.f32.mrf.mxu0
      %v3388 = vadd.f32 0.0, %v3387
      %v3389 = vpop.f32.mrf.mxu0
      %v3390 = vadd.f32 0.0, %v3389
      %3391 = vdwg.mxu0
      %v3392 = vperm.slane %v3222, 0
      %v3393 = vadd.f32 %v3392, %v3313
      %v3394 = vadd.f32 %v3392, %v3315
      %v3395 = vadd.f32 %v3392, %v3318
      %v3396 = vadd.f32 %v3392, %v3320
      %v3397 = vadd.f32 %v3392, %v3323
      %v3398 = vadd.f32 %v3392, %v3325
      %v3399 = vadd.f32 %v3392, %v3328
      %v3400 = vadd.f32 %v3392, %v3330
      %v3401 = vadd.f32 %v3392, %v3333
      %v3402 = vadd.f32 %v3392, %v3335
      %v3403 = vadd.f32 %v3392, %v3338
      %v3404 = vadd.f32 %v3392, %v3340
      %v3405 = vadd.f32 %v3392, %v3343
      %v3406 = vadd.f32 %v3392, %v3345
      %v3407 = vadd.f32 %v3392, %v3348
      %v3408 = vadd.f32 %v3392, %v3350
      %v3409 = vadd.f32 %v3392, %v3353
      %v3410 = vadd.f32 %v3392, %v3355
      %v3411 = vadd.f32 %v3392, %v3358
      %v3412 = vadd.f32 %v3392, %v3360
      %v3413 = vadd.f32 %v3392, %v3363
      %v3414 = vadd.f32 %v3392, %v3365
      %v3415 = vadd.f32 %v3392, %v3368
      %v3416 = vadd.f32 %v3392, %v3370
      %v3417 = vadd.f32 %v3392, %v3373
      %v3418 = vadd.f32 %v3392, %v3375
      %v3419 = vadd.f32 %v3392, %v3378
      %v3420 = vadd.f32 %v3392, %v3380
      %v3421 = vadd.f32 %v3392, %v3383
      %v3422 = vadd.f32 %v3392, %v3385
      %v3423 = vadd.f32 %v3392, %v3388
      %v3424 = vadd.f32 %v3392, %v3390
      %v3425 = vpack.c.bf16 %v3145, %v3143
      %v3426 = vpack.c.bf16 %v3150, %v3148
      %v3427 = vpack.c.bf16 %v3155, %v3153
      %v3428 = vpack.c.bf16 %v3160, %v3158
      %v3429 = vpack.c.bf16 %v3165, %v3163
      %v3430 = vpack.c.bf16 %v3170, %v3168
      %v3431 = vpack.c.bf16 %v3175, %v3173
      %v3432 = vpack.c.bf16 %v3180, %v3178
      %v3433 = vpack.c.bf16 %v3185, %v3183
      %v3434 = vpack.c.bf16 %v3190, %v3188
      %v3435 = vpack.c.bf16 %v3195, %v3193
      %v3436 = vpack.c.bf16 %v3200, %v3198
      %v3437 = vpack.c.bf16 %v3205, %v3203
      %v3438 = vpack.c.bf16 %v3210, %v3208
      %v3439 = vpack.c.bf16 %v3215, %v3213
      %v3440 = vpack.c.bf16 %v3220, %v3218
      %v3441 = vld [vmem:[%s3 + $0x1c0] sm:$0xf]
      %v3442 = vld [vmem:[%s3 + $0x1c4] sm:$0xf]
      %v3443 = vld [vmem:[%s3 + $0x1c8] sm:$0xf]
      %v3444 = vld [vmem:[%s3 + $0x1cc] sm:$0xf]
      %v3445 = vld [vmem:[%s3 + $0x1d0] sm:$0xf]
      %v3446 = vld [vmem:[%s3 + $0x1d4] sm:$0xf]
      %v3447 = vld [vmem:[%s3 + $0x1d8] sm:$0xf]
      %v3448 = vld [vmem:[%s3 + $0x1dc] sm:$0xf]
      %v3449 = vld [vmem:[%s3 + $0x1e0] sm:$0xf]
      %v3450 = vld [vmem:[%s3 + $0x1e4] sm:$0xf]
      %v3451 = vld [vmem:[%s3 + $0x1e8] sm:$0xf]
      %v3452 = vld [vmem:[%s3 + $0x1ec] sm:$0xf]
      %v3453 = vld [vmem:[%s3 + $0x1f0] sm:$0xf]
      %v3454 = vld [vmem:[%s3 + $0x1f4] sm:$0xf]
      %v3455 = vld [vmem:[%s3 + $0x1f8] sm:$0xf]
      %v3456 = vld [vmem:[%s3 + $0x1fc] sm:$0xf]
      %v3473 = vunpack.c.l.b16 %v3441
      %v3474 = vunpack.c.l.b16 %v3442
      %v3475 = vunpack.c.l.b16 %v3443
      %v3476 = vunpack.c.l.b16 %v3444
      %v3477 = vunpack.c.l.b16 %v3445
      %v3478 = vunpack.c.l.b16 %v3446
      %v3479 = vunpack.c.l.b16 %v3447
      %v3480 = vunpack.c.l.b16 %v3448
      %v3481 = vunpack.c.l.b16 %v3449
      %v3482 = vunpack.c.l.b16 %v3450
      %v3483 = vunpack.c.l.b16 %v3451
      %v3484 = vunpack.c.l.b16 %v3452
      %v3485 = vunpack.c.l.b16 %v3453
      %v3486 = vunpack.c.l.b16 %v3454
      %v3487 = vunpack.c.l.b16 %v3455
      %v3488 = vunpack.c.l.b16 %v3456
      %v3489 = vpack.c.b16 %v3474, %v3473
      %v3490 = vpack.c.b16 %v3476, %v3475
      %v3491 = vpack.c.b16 %v3478, %v3477
      %v3492 = vpack.c.b16 %v3480, %v3479
      %v3493 = vpack.c.b16 %v3482, %v3481
      %v3494 = vpack.c.b16 %v3484, %v3483
      %v3495 = vpack.c.b16 %v3486, %v3485
      %v3496 = vpack.c.b16 %v3488, %v3487
      %3505 = vmatpush.bf16.msra.mxu0 %v3496
      %3506 = vmatpush.bf16.msra.mxu0 %v3495
      %3507 = vmatpush.bf16.msra.mxu0 %v3494
      %3508 = vmatpush.bf16.msra.mxu0 %v3493
      %3509 = vmatpush.bf16.msra.mxu0 %v3492
      %3510 = vmatpush.bf16.msra.mxu0 %v3491
      %3511 = vmatpush.bf16.msra.mxu0 %v3490
      %3512 = vmatpush.bf16.msra.mxu0 %v3489
      %3513 = vmatmul.bf16.gmra.mxu0 %v3425
      %v3514 = vpop.f32.mrf.mxu0
      %v3515 = vadd.f32 0.0, %v3514
      %v3516 = vpop.f32.mrf.mxu0
      %v3517 = vadd.f32 0.0, %v3516
      %3518 = vmatmul.bf16.gmra.mxu0 %v3426
      %v3519 = vpop.f32.mrf.mxu0
      %v3520 = vadd.f32 0.0, %v3519
      %v3521 = vpop.f32.mrf.mxu0
      %v3522 = vadd.f32 0.0, %v3521
      %3523 = vmatmul.bf16.gmra.mxu0 %v3427
      %v3524 = vpop.f32.mrf.mxu0
      %v3525 = vadd.f32 0.0, %v3524
      %v3526 = vpop.f32.mrf.mxu0
      %v3527 = vadd.f32 0.0, %v3526
      %3528 = vmatmul.bf16.gmra.mxu0 %v3428
      %v3529 = vpop.f32.mrf.mxu0
      %v3530 = vadd.f32 0.0, %v3529
      %v3531 = vpop.f32.mrf.mxu0
      %v3532 = vadd.f32 0.0, %v3531
      %3533 = vmatmul.bf16.gmra.mxu0 %v3429
      %v3534 = vpop.f32.mrf.mxu0
      %v3535 = vadd.f32 0.0, %v3534
      %v3536 = vpop.f32.mrf.mxu0
      %v3537 = vadd.f32 0.0, %v3536
      %3538 = vmatmul.bf16.gmra.mxu0 %v3430
      %v3539 = vpop.f32.mrf.mxu0
      %v3540 = vadd.f32 0.0, %v3539
      %v3541 = vpop.f32.mrf.mxu0
      %v3542 = vadd.f32 0.0, %v3541
      %3543 = vmatmul.bf16.gmra.mxu0 %v3431
      %v3544 = vpop.f32.mrf.mxu0
      %v3545 = vadd.f32 0.0, %v3544
      %v3546 = vpop.f32.mrf.mxu0
      %v3547 = vadd.f32 0.0, %v3546
      %3548 = vmatmul.bf16.gmra.mxu0 %v3432
      %v3549 = vpop.f32.mrf.mxu0
      %v3550 = vadd.f32 0.0, %v3549
      %v3551 = vpop.f32.mrf.mxu0
      %v3552 = vadd.f32 0.0, %v3551
      %3553 = vmatmul.bf16.gmra.mxu0 %v3433
      %v3554 = vpop.f32.mrf.mxu0
      %v3555 = vadd.f32 0.0, %v3554
      %v3556 = vpop.f32.mrf.mxu0
      %v3557 = vadd.f32 0.0, %v3556
      %3558 = vmatmul.bf16.gmra.mxu0 %v3434
      %v3559 = vpop.f32.mrf.mxu0
      %v3560 = vadd.f32 0.0, %v3559
      %v3561 = vpop.f32.mrf.mxu0
      %v3562 = vadd.f32 0.0, %v3561
      %3563 = vmatmul.bf16.gmra.mxu0 %v3435
      %v3564 = vpop.f32.mrf.mxu0
      %v3565 = vadd.f32 0.0, %v3564
      %v3566 = vpop.f32.mrf.mxu0
      %v3567 = vadd.f32 0.0, %v3566
      %3568 = vmatmul.bf16.gmra.mxu0 %v3436
      %v3569 = vpop.f32.mrf.mxu0
      %v3570 = vadd.f32 0.0, %v3569
      %v3571 = vpop.f32.mrf.mxu0
      %v3572 = vadd.f32 0.0, %v3571
      %3573 = vmatmul.bf16.gmra.mxu0 %v3437
      %v3574 = vpop.f32.mrf.mxu0
      %v3575 = vadd.f32 0.0, %v3574
      %v3576 = vpop.f32.mrf.mxu0
      %v3577 = vadd.f32 0.0, %v3576
      %3578 = vmatmul.bf16.gmra.mxu0 %v3438
      %v3579 = vpop.f32.mrf.mxu0
      %v3580 = vadd.f32 0.0, %v3579
      %v3581 = vpop.f32.mrf.mxu0
      %v3582 = vadd.f32 0.0, %v3581
      %3583 = vmatmul.bf16.gmra.mxu0 %v3439
      %v3584 = vpop.f32.mrf.mxu0
      %v3585 = vadd.f32 0.0, %v3584
      %v3586 = vpop.f32.mrf.mxu0
      %v3587 = vadd.f32 0.0, %v3586
      %3588 = vmatmul.bf16.gmra.mxu0 %v3440
      %v3589 = vpop.f32.mrf.mxu0
      %v3590 = vadd.f32 0.0, %v3589
      %v3591 = vpop.f32.mrf.mxu0
      %v3592 = vadd.f32 0.0, %v3591
      %3593 = vdwg.mxu0
      %v3594 = vadd.f32 %v3393, %v3515
      %v3595 = vadd.f32 %v3394, %v3517
      %v3596 = vadd.f32 %v3395, %v3520
      %v3597 = vadd.f32 %v3396, %v3522
      %v3598 = vadd.f32 %v3397, %v3525
      %v3599 = vadd.f32 %v3398, %v3527
      %v3600 = vadd.f32 %v3399, %v3530
      %v3601 = vadd.f32 %v3400, %v3532
      %v3602 = vadd.f32 %v3401, %v3535
      %v3603 = vadd.f32 %v3402, %v3537
      %v3604 = vadd.f32 %v3403, %v3540
      %v3605 = vadd.f32 %v3404, %v3542
      %v3606 = vadd.f32 %v3405, %v3545
      %v3607 = vadd.f32 %v3406, %v3547
      %v3608 = vadd.f32 %v3407, %v3550
      %v3609 = vadd.f32 %v3408, %v3552
      %v3610 = vadd.f32 %v3409, %v3555
      %v3611 = vadd.f32 %v3410, %v3557
      %v3612 = vadd.f32 %v3411, %v3560
      %v3613 = vadd.f32 %v3412, %v3562
      %v3614 = vadd.f32 %v3413, %v3565
      %v3615 = vadd.f32 %v3414, %v3567
      %v3616 = vadd.f32 %v3415, %v3570
      %v3617 = vadd.f32 %v3416, %v3572
      %v3618 = vadd.f32 %v3417, %v3575
      %v3619 = vadd.f32 %v3418, %v3577
      %v3620 = vadd.f32 %v3419, %v3580
      %v3621 = vadd.f32 %v3420, %v3582
      %v3622 = vadd.f32 %v3421, %v3585
      %v3623 = vadd.f32 %v3422, %v3587
      %v3624 = vadd.f32 %v3423, %v3590
      %v3625 = vadd.f32 %v3424, %v3592
      %v3626 = vpack.c.bf16 %v3005, %v3004
      %v3627 = vpack.c.bf16 %v3007, %v3006
      %v3628 = vpack.c.bf16 %v3009, %v3008
      %v3629 = vpack.c.bf16 %v3011, %v3010
      %v3630 = vpack.c.bf16 %v3013, %v3012
      %v3631 = vpack.c.bf16 %v3015, %v3014
      %v3632 = vpack.c.bf16 %v3017, %v3016
      %v3633 = vpack.c.bf16 %v3019, %v3018
      %v3634 = vpack.c.bf16 %v3021, %v3020
      %v3635 = vpack.c.bf16 %v3023, %v3022
      %v3636 = vpack.c.bf16 %v3025, %v3024
      %v3637 = vpack.c.bf16 %v3027, %v3026
      %v3638 = vpack.c.bf16 %v3029, %v3028
      %v3639 = vpack.c.bf16 %v3031, %v3030
      %v3640 = vpack.c.bf16 %v3033, %v3032
      %v3641 = vpack.c.bf16 %v3035, %v3034
      %v3642 = vld [vmem:[%s3 + $0x200] sm:$0xf]
      %v3643 = vld [vmem:[%s3 + $0x204] sm:$0xf]
      %v3644 = vld [vmem:[%s3 + $0x208] sm:$0xf]
      %v3645 = vld [vmem:[%s3 + $0x20c] sm:$0xf]
      %v3646 = vld [vmem:[%s3 + $0x210] sm:$0xf]
      %v3647 = vld [vmem:[%s3 + $0x214] sm:$0xf]
      %v3648 = vld [vmem:[%s3 + $0x218] sm:$0xf]
      %v3649 = vld [vmem:[%s3 + $0x21c] sm:$0xf]
      %v3650 = vld [vmem:[%s3 + $0x220] sm:$0xf]
      %v3651 = vld [vmem:[%s3 + $0x224] sm:$0xf]
      %v3652 = vld [vmem:[%s3 + $0x228] sm:$0xf]
      %v3653 = vld [vmem:[%s3 + $0x22c] sm:$0xf]
      %v3654 = vld [vmem:[%s3 + $0x230] sm:$0xf]
      %v3655 = vld [vmem:[%s3 + $0x234] sm:$0xf]
      %v3656 = vld [vmem:[%s3 + $0x238] sm:$0xf]
      %v3657 = vld [vmem:[%s3 + $0x23c] sm:$0xf]
      %v3674 = vunpack.c.l.b16 %v3642
      %v3675 = vunpack.c.l.b16 %v3643
      %v3676 = vunpack.c.l.b16 %v3644
      %v3677 = vunpack.c.l.b16 %v3645
      %v3678 = vunpack.c.l.b16 %v3646
      %v3679 = vunpack.c.l.b16 %v3647
      %v3680 = vunpack.c.l.b16 %v3648
      %v3681 = vunpack.c.l.b16 %v3649
      %v3682 = vunpack.c.l.b16 %v3650
      %v3683 = vunpack.c.l.b16 %v3651
      %v3684 = vunpack.c.l.b16 %v3652
      %v3685 = vunpack.c.l.b16 %v3653
      %v3686 = vunpack.c.l.b16 %v3654
      %v3687 = vunpack.c.l.b16 %v3655
      %v3688 = vunpack.c.l.b16 %v3656
      %v3689 = vunpack.c.l.b16 %v3657
      %v3690 = vpack.c.b16 %v3675, %v3674
      %v3691 = vpack.c.b16 %v3677, %v3676
      %v3692 = vpack.c.b16 %v3679, %v3678
      %v3693 = vpack.c.b16 %v3681, %v3680
      %v3694 = vpack.c.b16 %v3683, %v3682
      %v3695 = vpack.c.b16 %v3685, %v3684
      %v3696 = vpack.c.b16 %v3687, %v3686
      %v3697 = vpack.c.b16 %v3689, %v3688
      %3706 = vmatpush.bf16.msra.mxu0 %v3697
      %3707 = vmatpush.bf16.msra.mxu0 %v3696
      %3708 = vmatpush.bf16.msra.mxu0 %v3695
      %3709 = vmatpush.bf16.msra.mxu0 %v3694
      %3710 = vmatpush.bf16.msra.mxu0 %v3693
      %3711 = vmatpush.bf16.msra.mxu0 %v3692
      %3712 = vmatpush.bf16.msra.mxu0 %v3691
      %3713 = vmatpush.bf16.msra.mxu0 %v3690
      %3714 = vmatmul.bf16.gmra.mxu0 %v3626
      %v3715 = vpop.f32.mrf.mxu0
      %v3716 = vadd.f32 0.0, %v3715
      %v3717 = vpop.f32.mrf.mxu0
      %v3718 = vadd.f32 0.0, %v3717
      %3719 = vmatmul.bf16.gmra.mxu0 %v3627
      %v3720 = vpop.f32.mrf.mxu0
      %v3721 = vadd.f32 0.0, %v3720
      %v3722 = vpop.f32.mrf.mxu0
      %v3723 = vadd.f32 0.0, %v3722
      %3724 = vmatmul.bf16.gmra.mxu0 %v3628
      %v3725 = vpop.f32.mrf.mxu0
      %v3726 = vadd.f32 0.0, %v3725
      %v3727 = vpop.f32.mrf.mxu0
      %v3728 = vadd.f32 0.0, %v3727
      %3729 = vmatmul.bf16.gmra.mxu0 %v3629
      %v3730 = vpop.f32.mrf.mxu0
      %v3731 = vadd.f32 0.0, %v3730
      %v3732 = vpop.f32.mrf.mxu0
      %v3733 = vadd.f32 0.0, %v3732
      %3734 = vmatmul.bf16.gmra.mxu0 %v3630
      %v3735 = vpop.f32.mrf.mxu0
      %v3736 = vadd.f32 0.0, %v3735
      %v3737 = vpop.f32.mrf.mxu0
      %v3738 = vadd.f32 0.0, %v3737
      %3739 = vmatmul.bf16.gmra.mxu0 %v3631
      %v3740 = vpop.f32.mrf.mxu0
      %v3741 = vadd.f32 0.0, %v3740
      %v3742 = vpop.f32.mrf.mxu0
      %v3743 = vadd.f32 0.0, %v3742
      %3744 = vmatmul.bf16.gmra.mxu0 %v3632
      %v3745 = vpop.f32.mrf.mxu0
      %v3746 = vadd.f32 0.0, %v3745
      %v3747 = vpop.f32.mrf.mxu0
      %v3748 = vadd.f32 0.0, %v3747
      %3749 = vmatmul.bf16.gmra.mxu0 %v3633
      %v3750 = vpop.f32.mrf.mxu0
      %v3751 = vadd.f32 0.0, %v3750
      %v3752 = vpop.f32.mrf.mxu0
      %v3753 = vadd.f32 0.0, %v3752
      %3754 = vmatmul.bf16.gmra.mxu0 %v3634
      %v3755 = vpop.f32.mrf.mxu0
      %v3756 = vadd.f32 0.0, %v3755
      %v3757 = vpop.f32.mrf.mxu0
      %v3758 = vadd.f32 0.0, %v3757
      %3759 = vmatmul.bf16.gmra.mxu0 %v3635
      %v3760 = vpop.f32.mrf.mxu0
      %v3761 = vadd.f32 0.0, %v3760
      %v3762 = vpop.f32.mrf.mxu0
      %v3763 = vadd.f32 0.0, %v3762
      %3764 = vmatmul.bf16.gmra.mxu0 %v3636
      %v3765 = vpop.f32.mrf.mxu0
      %v3766 = vadd.f32 0.0, %v3765
      %v3767 = vpop.f32.mrf.mxu0
      %v3768 = vadd.f32 0.0, %v3767
      %3769 = vmatmul.bf16.gmra.mxu0 %v3637
      %v3770 = vpop.f32.mrf.mxu0
      %v3771 = vadd.f32 0.0, %v3770
      %v3772 = vpop.f32.mrf.mxu0
      %v3773 = vadd.f32 0.0, %v3772
      %3774 = vmatmul.bf16.gmra.mxu0 %v3638
      %v3775 = vpop.f32.mrf.mxu0
      %v3776 = vadd.f32 0.0, %v3775
      %v3777 = vpop.f32.mrf.mxu0
      %v3778 = vadd.f32 0.0, %v3777
      %3779 = vmatmul.bf16.gmra.mxu0 %v3639
      %v3780 = vpop.f32.mrf.mxu0
      %v3781 = vadd.f32 0.0, %v3780
      %v3782 = vpop.f32.mrf.mxu0
      %v3783 = vadd.f32 0.0, %v3782
      %3784 = vmatmul.bf16.gmra.mxu0 %v3640
      %v3785 = vpop.f32.mrf.mxu0
      %v3786 = vadd.f32 0.0, %v3785
      %v3787 = vpop.f32.mrf.mxu0
      %v3788 = vadd.f32 0.0, %v3787
      %3789 = vmatmul.bf16.gmra.mxu0 %v3641
      %v3790 = vpop.f32.mrf.mxu0
      %v3791 = vadd.f32 0.0, %v3790
      %v3792 = vpop.f32.mrf.mxu0
      %v3793 = vadd.f32 0.0, %v3792
      %3794 = vdwg.mxu0
      %v3795 = vadd.f32 %v3594, %v3716
      %v3796 = vadd.f32 %v3595, %v3718
      %v3797 = vadd.f32 %v3596, %v3721
      %v3798 = vadd.f32 %v3597, %v3723
      %v3799 = vadd.f32 %v3598, %v3726
      %v3800 = vadd.f32 %v3599, %v3728
      %v3801 = vadd.f32 %v3600, %v3731
      %v3802 = vadd.f32 %v3601, %v3733
      %v3803 = vadd.f32 %v3602, %v3736
      %v3804 = vadd.f32 %v3603, %v3738
      %v3805 = vadd.f32 %v3604, %v3741
      %v3806 = vadd.f32 %v3605, %v3743
      %v3807 = vadd.f32 %v3606, %v3746
      %v3808 = vadd.f32 %v3607, %v3748
      %v3809 = vadd.f32 %v3608, %v3751
      %v3810 = vadd.f32 %v3609, %v3753
      %v3811 = vadd.f32 %v3610, %v3756
      %v3812 = vadd.f32 %v3611, %v3758
      %v3813 = vadd.f32 %v3612, %v3761
      %v3814 = vadd.f32 %v3613, %v3763
      %v3815 = vadd.f32 %v3614, %v3766
      %v3816 = vadd.f32 %v3615, %v3768
      %v3817 = vadd.f32 %v3616, %v3771
      %v3818 = vadd.f32 %v3617, %v3773
      %v3819 = vadd.f32 %v3618, %v3776
      %v3820 = vadd.f32 %v3619, %v3778
      %v3821 = vadd.f32 %v3620, %v3781
      %v3822 = vadd.f32 %v3621, %v3783
      %v3823 = vadd.f32 %v3622, %v3786
      %v3824 = vadd.f32 %v3623, %v3788
      %v3825 = vadd.f32 %v3624, %v3791
      %v3826 = vadd.f32 %v3625, %v3793
      %v3827 = vmax.f32 %v3795, 0.0
      %v3828 = vmax.f32 %v3796, 0.0
      %v3829 = vmax.f32 %v3797, 0.0
      %v3830 = vmax.f32 %v3798, 0.0
      %v3831 = vmax.f32 %v3799, 0.0
      %v3832 = vmax.f32 %v3800, 0.0
      %v3833 = vmax.f32 %v3801, 0.0
      %v3834 = vmax.f32 %v3802, 0.0
      %v3835 = vmax.f32 %v3803, 0.0
      %v3836 = vmax.f32 %v3804, 0.0
      %v3837 = vmax.f32 %v3805, 0.0
      %v3838 = vmax.f32 %v3806, 0.0
      %v3839 = vmax.f32 %v3807, 0.0
      %v3840 = vmax.f32 %v3808, 0.0
      %v3841 = vmax.f32 %v3809, 0.0
      %v3842 = vmax.f32 %v3810, 0.0
      %v3843 = vmax.f32 %v3811, 0.0
      %v3844 = vmax.f32 %v3812, 0.0
      %v3845 = vmax.f32 %v3813, 0.0
      %v3846 = vmax.f32 %v3814, 0.0
      %v3847 = vmax.f32 %v3815, 0.0
      %v3848 = vmax.f32 %v3816, 0.0
      %v3849 = vmax.f32 %v3817, 0.0
      %v3850 = vmax.f32 %v3818, 0.0
      %v3851 = vmax.f32 %v3819, 0.0
      %v3852 = vmax.f32 %v3820, 0.0
      %v3853 = vmax.f32 %v3821, 0.0
      %v3854 = vmax.f32 %v3822, 0.0
      %v3855 = vmax.f32 %v3823, 0.0
      %v3856 = vmax.f32 %v3824, 0.0
      %v3857 = vmax.f32 %v3825, 0.0
      %v3858 = vmax.f32 %v3826, 0.0
      %v3859 = vpack.c.bf16 %v3828, %v3827
      %v3860 = vpack.c.bf16 %v3830, %v3829
      %v3861 = vpack.c.bf16 %v3832, %v3831
      %v3862 = vpack.c.bf16 %v3834, %v3833
      %v3863 = vpack.c.bf16 %v3836, %v3835
      %v3864 = vpack.c.bf16 %v3838, %v3837
      %v3865 = vpack.c.bf16 %v3840, %v3839
      %v3866 = vpack.c.bf16 %v3842, %v3841
      %v3867 = vpack.c.bf16 %v3844, %v3843
      %v3868 = vpack.c.bf16 %v3846, %v3845
      %v3869 = vpack.c.bf16 %v3848, %v3847
      %v3870 = vpack.c.bf16 %v3850, %v3849
      %v3871 = vpack.c.bf16 %v3852, %v3851
      %v3872 = vpack.c.bf16 %v3854, %v3853
      %v3873 = vpack.c.bf16 %v3856, %v3855
      %v3874 = vpack.c.bf16 %v3858, %v3857
      %v3875 = vld [vmem:[%s3 + $0x240] sm:$0xf]
      %v3876 = vld [vmem:[%s3 + $0x244] sm:$0xf]
      %v3877 = vld [vmem:[%s3 + $0x248] sm:$0xf]
      %v3878 = vld [vmem:[%s3 + $0x24c] sm:$0xf]
      %v3879 = vld [vmem:[%s3 + $0x250] sm:$0xf]
      %v3880 = vld [vmem:[%s3 + $0x254] sm:$0xf]
      %v3881 = vld [vmem:[%s3 + $0x258] sm:$0xf]
      %v3882 = vld [vmem:[%s3 + $0x25c] sm:$0xf]
      %v3883 = vld [vmem:[%s3 + $0x260] sm:$0xf]
      %v3884 = vld [vmem:[%s3 + $0x264] sm:$0xf]
      %v3885 = vld [vmem:[%s3 + $0x268] sm:$0xf]
      %v3886 = vld [vmem:[%s3 + $0x26c] sm:$0xf]
      %v3887 = vld [vmem:[%s3 + $0x270] sm:$0xf]
      %v3888 = vld [vmem:[%s3 + $0x274] sm:$0xf]
      %v3889 = vld [vmem:[%s3 + $0x278] sm:$0xf]
      %v3890 = vld [vmem:[%s3 + $0x27c] sm:$0xf]
      %v3891 = vld [vmem:[%s4 + $0xb] sm:$0x1]
      %v3892 = vperm.slane %v3891, 0
      %v3909 = vunpack.c.l.b16 %v3875
      %v3910 = vunpack.c.l.b16 %v3876
      %v3911 = vunpack.c.l.b16 %v3877
      %v3912 = vunpack.c.l.b16 %v3878
      %v3913 = vunpack.c.l.b16 %v3879
      %v3914 = vunpack.c.l.b16 %v3880
      %v3915 = vunpack.c.l.b16 %v3881
      %v3916 = vunpack.c.l.b16 %v3882
      %v3917 = vunpack.c.l.b16 %v3883
      %v3918 = vunpack.c.l.b16 %v3884
      %v3919 = vunpack.c.l.b16 %v3885
      %v3920 = vunpack.c.l.b16 %v3886
      %v3921 = vunpack.c.l.b16 %v3887
      %v3922 = vunpack.c.l.b16 %v3888
      %v3923 = vunpack.c.l.b16 %v3889
      %v3924 = vunpack.c.l.b16 %v3890
      %v3925 = vpack.c.b16 %v3910, %v3909
      %v3926 = vpack.c.b16 %v3912, %v3911
      %v3927 = vpack.c.b16 %v3914, %v3913
      %v3928 = vpack.c.b16 %v3916, %v3915
      %v3929 = vpack.c.b16 %v3918, %v3917
      %v3930 = vpack.c.b16 %v3920, %v3919
      %v3931 = vpack.c.b16 %v3922, %v3921
      %v3932 = vpack.c.b16 %v3924, %v3923
      %3941 = vmatpush.bf16.msra.mxu0 %v3932
      %3942 = vmatpush.bf16.msra.mxu0 %v3931
      %3943 = vmatpush.bf16.msra.mxu0 %v3930
      %3944 = vmatpush.bf16.msra.mxu0 %v3929
      %3945 = vmatpush.bf16.msra.mxu0 %v3928
      %3946 = vmatpush.bf16.msra.mxu0 %v3927
      %3947 = vmatpush.bf16.msra.mxu0 %v3926
      %3948 = vmatpush.bf16.msra.mxu0 %v3925
      %3949 = vmatmul.bf16.gmra.mxu0 %v3859
      %v3950 = vpop.f32.mrf.mxu0
      %v3951 = vadd.f32 %v3892, %v3950
      %v3952 = vpop.f32.mrf.mxu0
      %v3953 = vadd.f32 %v3892, %v3952
      %3954 = vmatmul.bf16.gmra.mxu0 %v3860
      %v3955 = vpop.f32.mrf.mxu0
      %v3956 = vadd.f32 %v3892, %v3955
      %v3957 = vpop.f32.mrf.mxu0
      %v3958 = vadd.f32 %v3892, %v3957
      %3959 = vmatmul.bf16.gmra.mxu0 %v3861
      %v3960 = vpop.f32.mrf.mxu0
      %v3961 = vadd.f32 %v3892, %v3960
      %v3962 = vpop.f32.mrf.mxu0
      %v3963 = vadd.f32 %v3892, %v3962
      %3964 = vmatmul.bf16.gmra.mxu0 %v3862
      %v3965 = vpop.f32.mrf.mxu0
      %v3966 = vadd.f32 %v3892, %v3965
      %v3967 = vpop.f32.mrf.mxu0
      %v3968 = vadd.f32 %v3892, %v3967
      %3969 = vmatmul.bf16.gmra.mxu0 %v3863
      %v3970 = vpop.f32.mrf.mxu0
      %v3971 = vadd.f32 %v3892, %v3970
      %v3972 = vpop.f32.mrf.mxu0
      %v3973 = vadd.f32 %v3892, %v3972
      %3974 = vmatmul.bf16.gmra.mxu0 %v3864
      %v3975 = vpop.f32.mrf.mxu0
      %v3976 = vadd.f32 %v3892, %v3975
      %v3977 = vpop.f32.mrf.mxu0
      %v3978 = vadd.f32 %v3892, %v3977
      %3979 = vmatmul.bf16.gmra.mxu0 %v3865
      %v3980 = vpop.f32.mrf.mxu0
      %v3981 = vadd.f32 %v3892, %v3980
      %v3982 = vpop.f32.mrf.mxu0
      %v3983 = vadd.f32 %v3892, %v3982
      %3984 = vmatmul.bf16.gmra.mxu0 %v3866
      %v3985 = vpop.f32.mrf.mxu0
      %v3986 = vadd.f32 %v3892, %v3985
      %v3987 = vpop.f32.mrf.mxu0
      %v3988 = vadd.f32 %v3892, %v3987
      %3989 = vmatmul.bf16.gmra.mxu0 %v3867
      %v3990 = vpop.f32.mrf.mxu0
      %v3991 = vadd.f32 %v3892, %v3990
      %v3992 = vpop.f32.mrf.mxu0
      %v3993 = vadd.f32 %v3892, %v3992
      %3994 = vmatmul.bf16.gmra.mxu0 %v3868
      %v3995 = vpop.f32.mrf.mxu0
      %v3996 = vadd.f32 %v3892, %v3995
      %v3997 = vpop.f32.mrf.mxu0
      %v3998 = vadd.f32 %v3892, %v3997
      %3999 = vmatmul.bf16.gmra.mxu0 %v3869
      %v4000 = vpop.f32.mrf.mxu0
      %v4001 = vadd.f32 %v3892, %v4000
      %v4002 = vpop.f32.mrf.mxu0
      %v4003 = vadd.f32 %v3892, %v4002
      %4004 = vmatmul.bf16.gmra.mxu0 %v3870
      %v4005 = vpop.f32.mrf.mxu0
      %v4006 = vadd.f32 %v3892, %v4005
      %v4007 = vpop.f32.mrf.mxu0
      %v4008 = vadd.f32 %v3892, %v4007
      %4009 = vmatmul.bf16.gmra.mxu0 %v3871
      %v4010 = vpop.f32.mrf.mxu0
      %v4011 = vadd.f32 %v3892, %v4010
      %v4012 = vpop.f32.mrf.mxu0
      %v4013 = vadd.f32 %v3892, %v4012
      %4014 = vmatmul.bf16.gmra.mxu0 %v3872
      %v4015 = vpop.f32.mrf.mxu0
      %v4016 = vadd.f32 %v3892, %v4015
      %v4017 = vpop.f32.mrf.mxu0
      %v4018 = vadd.f32 %v3892, %v4017
      %4019 = vmatmul.bf16.gmra.mxu0 %v3873
      %v4020 = vpop.f32.mrf.mxu0
      %v4021 = vadd.f32 %v3892, %v4020
      %v4022 = vpop.f32.mrf.mxu0
      %v4023 = vadd.f32 %v3892, %v4022
      %4024 = vmatmul.bf16.gmra.mxu0 %v3874
      %v4025 = vpop.f32.mrf.mxu0
      %v4026 = vadd.f32 %v3892, %v4025
      %v4027 = vpop.f32.mrf.mxu0
      %v4028 = vadd.f32 %v3892, %v4027
      %4029 = vdwg.mxu0
      %v4030 = vmax.f32 %v3951, 0.0
      %v4031 = vmax.f32 %v3953, 0.0
      %v4032 = vmax.f32 %v3956, 0.0
      %v4033 = vmax.f32 %v3958, 0.0
      %v4034 = vmax.f32 %v3961, 0.0
      %v4035 = vmax.f32 %v3963, 0.0
      %v4036 = vmax.f32 %v3966, 0.0
      %v4037 = vmax.f32 %v3968, 0.0
      %v4038 = vmax.f32 %v3971, 0.0
      %v4039 = vmax.f32 %v3973, 0.0
      %v4040 = vmax.f32 %v3976, 0.0
      %v4041 = vmax.f32 %v3978, 0.0
      %v4042 = vmax.f32 %v3981, 0.0
      %v4043 = vmax.f32 %v3983, 0.0
      %v4044 = vmax.f32 %v3986, 0.0
      %v4045 = vmax.f32 %v3988, 0.0
      %v4046 = vmax.f32 %v3991, 0.0
      %v4047 = vmax.f32 %v3993, 0.0
      %v4048 = vmax.f32 %v3996, 0.0
      %v4049 = vmax.f32 %v3998, 0.0
      %v4050 = vmax.f32 %v4001, 0.0
      %v4051 = vmax.f32 %v4003, 0.0
      %v4052 = vmax.f32 %v4006, 0.0
      %v4053 = vmax.f32 %v4008, 0.0
      %v4054 = vmax.f32 %v4011, 0.0
      %v4055 = vmax.f32 %v4013, 0.0
      %v4056 = vmax.f32 %v4016, 0.0
      %v4057 = vmax.f32 %v4018, 0.0
      %v4058 = vmax.f32 %v4021, 0.0
      %v4059 = vmax.f32 %v4023, 0.0
      %v4060 = vmax.f32 %v4026, 0.0
      %v4061 = vmax.f32 %v4028, 0.0
      %v4062 = vpack.c.bf16 %v4031, %v4030
      %v4063 = vpack.c.bf16 %v4033, %v4032
      %v4064 = vpack.c.bf16 %v4035, %v4034
      %v4065 = vpack.c.bf16 %v4037, %v4036
      %v4066 = vpack.c.bf16 %v4039, %v4038
      %v4067 = vpack.c.bf16 %v4041, %v4040
      %v4068 = vpack.c.bf16 %v4043, %v4042
      %v4069 = vpack.c.bf16 %v4045, %v4044
      %v4070 = vpack.c.bf16 %v4047, %v4046
      %v4071 = vpack.c.bf16 %v4049, %v4048
      %v4072 = vpack.c.bf16 %v4051, %v4050
      %v4073 = vpack.c.bf16 %v4053, %v4052
      %v4074 = vpack.c.bf16 %v4055, %v4054
      %v4075 = vpack.c.bf16 %v4057, %v4056
      %v4076 = vpack.c.bf16 %v4059, %v4058
      %v4077 = vpack.c.bf16 %v4061, %v4060
      %v4078 = vld [vmem:[%s3 + $0x280] sm:$0xf]
      %v4079 = vld [vmem:[%s3 + $0x284] sm:$0xf]
      %v4080 = vld [vmem:[%s3 + $0x288] sm:$0xf]
      %v4081 = vld [vmem:[%s3 + $0x28c] sm:$0xf]
      %v4082 = vld [vmem:[%s3 + $0x290] sm:$0xf]
      %v4083 = vld [vmem:[%s3 + $0x294] sm:$0xf]
      %v4084 = vld [vmem:[%s3 + $0x298] sm:$0xf]
      %v4085 = vld [vmem:[%s3 + $0x29c] sm:$0xf]
      %v4086 = vld [vmem:[%s3 + $0x2a0] sm:$0xf]
      %v4087 = vld [vmem:[%s3 + $0x2a4] sm:$0xf]
      %v4088 = vld [vmem:[%s3 + $0x2a8] sm:$0xf]
      %v4089 = vld [vmem:[%s3 + $0x2ac] sm:$0xf]
      %v4090 = vld [vmem:[%s3 + $0x2b0] sm:$0xf]
      %v4091 = vld [vmem:[%s3 + $0x2b4] sm:$0xf]
      %v4092 = vld [vmem:[%s3 + $0x2b8] sm:$0xf]
      %v4093 = vld [vmem:[%s3 + $0x2bc] sm:$0xf]
      %v4094 = vld [vmem:[%s4 + $0xc] sm:$0x1]
      %v4095 = vperm.slane %v4094, 0
      %v4112 = vunpack.c.l.b16 %v4078
      %v4113 = vunpack.c.l.b16 %v4079
      %v4114 = vunpack.c.l.b16 %v4080
      %v4115 = vunpack.c.l.b16 %v4081
      %v4116 = vunpack.c.l.b16 %v4082
      %v4117 = vunpack.c.l.b16 %v4083
      %v4118 = vunpack.c.l.b16 %v4084
      %v4119 = vunpack.c.l.b16 %v4085
      %v4120 = vunpack.c.l.b16 %v4086
      %v4121 = vunpack.c.l.b16 %v4087
      %v4122 = vunpack.c.l.b16 %v4088
      %v4123 = vunpack.c.l.b16 %v4089
      %v4124 = vunpack.c.l.b16 %v4090
      %v4125 = vunpack.c.l.b16 %v4091
      %v4126 = vunpack.c.l.b16 %v4092
      %v4127 = vunpack.c.l.b16 %v4093
      %v4128 = vpack.c.b16 %v4113, %v4112
      %v4129 = vpack.c.b16 %v4115, %v4114
      %v4130 = vpack.c.b16 %v4117, %v4116
      %v4131 = vpack.c.b16 %v4119, %v4118
      %v4132 = vpack.c.b16 %v4121, %v4120
      %v4133 = vpack.c.b16 %v4123, %v4122
      %v4134 = vpack.c.b16 %v4125, %v4124
      %v4135 = vpack.c.b16 %v4127, %v4126
      %4144 = vmatpush.bf16.msra.mxu0 %v4135
      %4145 = vmatpush.bf16.msra.mxu0 %v4134
      %4146 = vmatpush.bf16.msra.mxu0 %v4133
      %4147 = vmatpush.bf16.msra.mxu0 %v4132
      %4148 = vmatpush.bf16.msra.mxu0 %v4131
      %4149 = vmatpush.bf16.msra.mxu0 %v4130
      %4150 = vmatpush.bf16.msra.mxu0 %v4129
      %4151 = vmatpush.bf16.msra.mxu0 %v4128
      %4152 = vmatmul.bf16.gmra.mxu0 %v4062
      %v4153 = vpop.f32.mrf.mxu0
      %v4154 = vadd.f32 %v4095, %v4153
      %v4155 = vpop.f32.mrf.mxu0
      %v4156 = vadd.f32 %v4095, %v4155
      %4157 = vmatmul.bf16.gmra.mxu0 %v4063
      %v4158 = vpop.f32.mrf.mxu0
      %v4159 = vadd.f32 %v4095, %v4158
      %v4160 = vpop.f32.mrf.mxu0
      %v4161 = vadd.f32 %v4095, %v4160
      %4162 = vmatmul.bf16.gmra.mxu0 %v4064
      %v4163 = vpop.f32.mrf.mxu0
      %v4164 = vadd.f32 %v4095, %v4163
      %v4165 = vpop.f32.mrf.mxu0
      %v4166 = vadd.f32 %v4095, %v4165
      %4167 = vmatmul.bf16.gmra.mxu0 %v4065
      %v4168 = vpop.f32.mrf.mxu0
      %v4169 = vadd.f32 %v4095, %v4168
      %v4170 = vpop.f32.mrf.mxu0
      %v4171 = vadd.f32 %v4095, %v4170
      %4172 = vmatmul.bf16.gmra.mxu0 %v4066
      %v4173 = vpop.f32.mrf.mxu0
      %v4174 = vadd.f32 %v4095, %v4173
      %v4175 = vpop.f32.mrf.mxu0
      %v4176 = vadd.f32 %v4095, %v4175
      %4177 = vmatmul.bf16.gmra.mxu0 %v4067
      %v4178 = vpop.f32.mrf.mxu0
      %v4179 = vadd.f32 %v4095, %v4178
      %v4180 = vpop.f32.mrf.mxu0
      %v4181 = vadd.f32 %v4095, %v4180
      %4182 = vmatmul.bf16.gmra.mxu0 %v4068
      %v4183 = vpop.f32.mrf.mxu0
      %v4184 = vadd.f32 %v4095, %v4183
      %v4185 = vpop.f32.mrf.mxu0
      %v4186 = vadd.f32 %v4095, %v4185
      %4187 = vmatmul.bf16.gmra.mxu0 %v4069
      %v4188 = vpop.f32.mrf.mxu0
      %v4189 = vadd.f32 %v4095, %v4188
      %v4190 = vpop.f32.mrf.mxu0
      %v4191 = vadd.f32 %v4095, %v4190
      %4192 = vmatmul.bf16.gmra.mxu0 %v4070
      %v4193 = vpop.f32.mrf.mxu0
      %v4194 = vadd.f32 %v4095, %v4193
      %v4195 = vpop.f32.mrf.mxu0
      %v4196 = vadd.f32 %v4095, %v4195
      %4197 = vmatmul.bf16.gmra.mxu0 %v4071
      %v4198 = vpop.f32.mrf.mxu0
      %v4199 = vadd.f32 %v4095, %v4198
      %v4200 = vpop.f32.mrf.mxu0
      %v4201 = vadd.f32 %v4095, %v4200
      %4202 = vmatmul.bf16.gmra.mxu0 %v4072
      %v4203 = vpop.f32.mrf.mxu0
      %v4204 = vadd.f32 %v4095, %v4203
      %v4205 = vpop.f32.mrf.mxu0
      %v4206 = vadd.f32 %v4095, %v4205
      %4207 = vmatmul.bf16.gmra.mxu0 %v4073
      %v4208 = vpop.f32.mrf.mxu0
      %v4209 = vadd.f32 %v4095, %v4208
      %v4210 = vpop.f32.mrf.mxu0
      %v4211 = vadd.f32 %v4095, %v4210
      %4212 = vmatmul.bf16.gmra.mxu0 %v4074
      %v4213 = vpop.f32.mrf.mxu0
      %v4214 = vadd.f32 %v4095, %v4213
      %v4215 = vpop.f32.mrf.mxu0
      %v4216 = vadd.f32 %v4095, %v4215
      %4217 = vmatmul.bf16.gmra.mxu0 %v4075
      %v4218 = vpop.f32.mrf.mxu0
      %v4219 = vadd.f32 %v4095, %v4218
      %v4220 = vpop.f32.mrf.mxu0
      %v4221 = vadd.f32 %v4095, %v4220
      %4222 = vmatmul.bf16.gmra.mxu0 %v4076
      %v4223 = vpop.f32.mrf.mxu0
      %v4224 = vadd.f32 %v4095, %v4223
      %v4225 = vpop.f32.mrf.mxu0
      %v4226 = vadd.f32 %v4095, %v4225
      %4227 = vmatmul.bf16.gmra.mxu0 %v4077
      %v4228 = vpop.f32.mrf.mxu0
      %v4229 = vadd.f32 %v4095, %v4228
      %v4230 = vpop.f32.mrf.mxu0
      %v4231 = vadd.f32 %v4095, %v4230
      %4232 = vdwg.mxu0
      %4233 = vadd.xlane.f32.xlu0 %v4154
      %v4234 = vpop.xlane.xlu0 %4233
      %4235 = vadd.xlane.f32.xlu0 %v4156
      %v4236 = vpop.xlane.xlu0 %4235
      %4237 = vadd.xlane.f32.xlu0 %v4159
      %v4238 = vpop.xlane.xlu0 %4237
      %4239 = vadd.xlane.f32.xlu0 %v4161
      %v4240 = vpop.xlane.xlu0 %4239
      %4241 = vadd.xlane.f32.xlu0 %v4164
      %v4242 = vpop.xlane.xlu0 %4241
      %4243 = vadd.xlane.f32.xlu0 %v4166
      %v4244 = vpop.xlane.xlu0 %4243
      %4245 = vadd.xlane.f32.xlu0 %v4169
      %v4246 = vpop.xlane.xlu0 %4245
      %4247 = vadd.xlane.f32.xlu0 %v4171
      %v4248 = vpop.xlane.xlu0 %4247
      %4249 = vadd.xlane.f32.xlu0 %v4174
      %v4250 = vpop.xlane.xlu0 %4249
      %4251 = vadd.xlane.f32.xlu0 %v4176
      %v4252 = vpop.xlane.xlu0 %4251
      %4253 = vadd.xlane.f32.xlu0 %v4179
      %v4254 = vpop.xlane.xlu0 %4253
      %4255 = vadd.xlane.f32.xlu0 %v4181
      %v4256 = vpop.xlane.xlu0 %4255
      %4257 = vadd.xlane.f32.xlu0 %v4184
      %v4258 = vpop.xlane.xlu0 %4257
      %4259 = vadd.xlane.f32.xlu0 %v4186
      %v4260 = vpop.xlane.xlu0 %4259
      %4261 = vadd.xlane.f32.xlu0 %v4189
      %v4262 = vpop.xlane.xlu0 %4261
      %4263 = vadd.xlane.f32.xlu0 %v4191
      %v4264 = vpop.xlane.xlu0 %4263
      %4265 = vadd.xlane.f32.xlu0 %v4194
      %v4266 = vpop.xlane.xlu0 %4265
      %4267 = vadd.xlane.f32.xlu0 %v4196
      %v4268 = vpop.xlane.xlu0 %4267
      %4269 = vadd.xlane.f32.xlu0 %v4199
      %v4270 = vpop.xlane.xlu0 %4269
      %4271 = vadd.xlane.f32.xlu0 %v4201
      %v4272 = vpop.xlane.xlu0 %4271
      %4273 = vadd.xlane.f32.xlu0 %v4204
      %v4274 = vpop.xlane.xlu0 %4273
      %4275 = vadd.xlane.f32.xlu0 %v4206
      %v4276 = vpop.xlane.xlu0 %4275
      %4277 = vadd.xlane.f32.xlu0 %v4209
      %v4278 = vpop.xlane.xlu0 %4277
      %4279 = vadd.xlane.f32.xlu0 %v4211
      %v4280 = vpop.xlane.xlu0 %4279
      %4281 = vadd.xlane.f32.xlu0 %v4214
      %v4282 = vpop.xlane.xlu0 %4281
      %4283 = vadd.xlane.f32.xlu0 %v4216
      %v4284 = vpop.xlane.xlu0 %4283
      %4285 = vadd.xlane.f32.xlu0 %v4219
      %v4286 = vpop.xlane.xlu0 %4285
      %4287 = vadd.xlane.f32.xlu0 %v4221
      %v4288 = vpop.xlane.xlu0 %4287
      %4289 = vadd.xlane.f32.xlu0 %v4224
      %v4290 = vpop.xlane.xlu0 %4289
      %4291 = vadd.xlane.f32.xlu0 %v4226
      %v4292 = vpop.xlane.xlu0 %4291
      %4293 = vadd.xlane.f32.xlu0 %v4229
      %v4294 = vpop.xlane.xlu0 %4293
      %4295 = vadd.xlane.f32.xlu0 %v4231
      %v4296 = vpop.xlane.xlu0 %4295
      %v4297 = vmul.f32 %v4234, 0.03125
      %v4298 = vmul.f32 %v4236, 0.03125
      %v4299 = vmul.f32 %v4238, 0.03125
      %v4300 = vmul.f32 %v4240, 0.03125
      %v4301 = vmul.f32 %v4242, 0.03125
      %v4302 = vmul.f32 %v4244, 0.03125
      %v4303 = vmul.f32 %v4246, 0.03125
      %v4304 = vmul.f32 %v4248, 0.03125
      %v4305 = vmul.f32 %v4250, 0.03125
      %v4306 = vmul.f32 %v4252, 0.03125
      %v4307 = vmul.f32 %v4254, 0.03125
      %v4308 = vmul.f32 %v4256, 0.03125
      %v4309 = vmul.f32 %v4258, 0.03125
      %v4310 = vmul.f32 %v4260, 0.03125
      %v4311 = vmul.f32 %v4262, 0.03125
      %v4312 = vmul.f32 %v4264, 0.03125
      %v4313 = vmul.f32 %v4266, 0.03125
      %v4314 = vmul.f32 %v4268, 0.03125
      %v4315 = vmul.f32 %v4270, 0.03125
      %v4316 = vmul.f32 %v4272, 0.03125
      %v4317 = vmul.f32 %v4274, 0.03125
      %v4318 = vmul.f32 %v4276, 0.03125
      %v4319 = vmul.f32 %v4278, 0.03125
      %v4320 = vmul.f32 %v4280, 0.03125
      %v4321 = vmul.f32 %v4282, 0.03125
      %v4322 = vmul.f32 %v4284, 0.03125
      %v4323 = vmul.f32 %v4286, 0.03125
      %v4324 = vmul.f32 %v4288, 0.03125
      %v4325 = vmul.f32 %v4290, 0.03125
      %v4326 = vmul.f32 %v4292, 0.03125
      %v4327 = vmul.f32 %v4294, 0.03125
      %v4328 = vmul.f32 %v4296, 0.03125
      %v4329 = vmul.f32 %v4154, %v4154
      %v4330 = vmul.f32 %v4156, %v4156
      %v4331 = vmul.f32 %v4159, %v4159
      %v4332 = vmul.f32 %v4161, %v4161
      %v4333 = vmul.f32 %v4164, %v4164
      %v4334 = vmul.f32 %v4166, %v4166
      %v4335 = vmul.f32 %v4169, %v4169
      %v4336 = vmul.f32 %v4171, %v4171
      %v4337 = vmul.f32 %v4174, %v4174
      %v4338 = vmul.f32 %v4176, %v4176
      %v4339 = vmul.f32 %v4179, %v4179
      %v4340 = vmul.f32 %v4181, %v4181
      %v4341 = vmul.f32 %v4184, %v4184
      %v4342 = vmul.f32 %v4186, %v4186
      %v4343 = vmul.f32 %v4189, %v4189
      %v4344 = vmul.f32 %v4191, %v4191
      %v4345 = vmul.f32 %v4194, %v4194
      %v4346 = vmul.f32 %v4196, %v4196
      %v4347 = vmul.f32 %v4199, %v4199
      %v4348 = vmul.f32 %v4201, %v4201
      %v4349 = vmul.f32 %v4204, %v4204
      %v4350 = vmul.f32 %v4206, %v4206
      %v4351 = vmul.f32 %v4209, %v4209
      %v4352 = vmul.f32 %v4211, %v4211
      %v4353 = vmul.f32 %v4214, %v4214
      %v4354 = vmul.f32 %v4216, %v4216
      %v4355 = vmul.f32 %v4219, %v4219
      %v4356 = vmul.f32 %v4221, %v4221
      %v4357 = vmul.f32 %v4224, %v4224
      %v4358 = vmul.f32 %v4226, %v4226
      %v4359 = vmul.f32 %v4229, %v4229
      %v4360 = vmul.f32 %v4231, %v4231
      %4361 = vadd.xlane.f32.xlu0 %v4329
      %v4362 = vpop.xlane.xlu0 %4361
      %4363 = vadd.xlane.f32.xlu0 %v4330
      %v4364 = vpop.xlane.xlu0 %4363
      %4365 = vadd.xlane.f32.xlu0 %v4331
      %v4366 = vpop.xlane.xlu0 %4365
      %4367 = vadd.xlane.f32.xlu0 %v4332
      %v4368 = vpop.xlane.xlu0 %4367
      %4369 = vadd.xlane.f32.xlu0 %v4333
      %v4370 = vpop.xlane.xlu0 %4369
      %4371 = vadd.xlane.f32.xlu0 %v4334
      %v4372 = vpop.xlane.xlu0 %4371
      %4373 = vadd.xlane.f32.xlu0 %v4335
      %v4374 = vpop.xlane.xlu0 %4373
      %4375 = vadd.xlane.f32.xlu0 %v4336
      %v4376 = vpop.xlane.xlu0 %4375
      %4377 = vadd.xlane.f32.xlu0 %v4337
      %v4378 = vpop.xlane.xlu0 %4377
      %4379 = vadd.xlane.f32.xlu0 %v4338
      %v4380 = vpop.xlane.xlu0 %4379
      %4381 = vadd.xlane.f32.xlu0 %v4339
      %v4382 = vpop.xlane.xlu0 %4381
      %4383 = vadd.xlane.f32.xlu0 %v4340
      %v4384 = vpop.xlane.xlu0 %4383
      %4385 = vadd.xlane.f32.xlu0 %v4341
      %v4386 = vpop.xlane.xlu0 %4385
      %4387 = vadd.xlane.f32.xlu0 %v4342
      %v4388 = vpop.xlane.xlu0 %4387
      %4389 = vadd.xlane.f32.xlu0 %v4343
      %v4390 = vpop.xlane.xlu0 %4389
      %4391 = vadd.xlane.f32.xlu0 %v4344
      %v4392 = vpop.xlane.xlu0 %4391
      %4393 = vadd.xlane.f32.xlu0 %v4345
      %v4394 = vpop.xlane.xlu0 %4393
      %4395 = vadd.xlane.f32.xlu0 %v4346
      %v4396 = vpop.xlane.xlu0 %4395
      %4397 = vadd.xlane.f32.xlu0 %v4347
      %v4398 = vpop.xlane.xlu0 %4397
      %4399 = vadd.xlane.f32.xlu0 %v4348
      %v4400 = vpop.xlane.xlu0 %4399
      %4401 = vadd.xlane.f32.xlu0 %v4349
      %v4402 = vpop.xlane.xlu0 %4401
      %4403 = vadd.xlane.f32.xlu0 %v4350
      %v4404 = vpop.xlane.xlu0 %4403
      %4405 = vadd.xlane.f32.xlu0 %v4351
      %v4406 = vpop.xlane.xlu0 %4405
      %4407 = vadd.xlane.f32.xlu0 %v4352
      %v4408 = vpop.xlane.xlu0 %4407
      %4409 = vadd.xlane.f32.xlu0 %v4353
      %v4410 = vpop.xlane.xlu0 %4409
      %4411 = vadd.xlane.f32.xlu0 %v4354
      %v4412 = vpop.xlane.xlu0 %4411
      %4413 = vadd.xlane.f32.xlu0 %v4355
      %v4414 = vpop.xlane.xlu0 %4413
      %4415 = vadd.xlane.f32.xlu0 %v4356
      %v4416 = vpop.xlane.xlu0 %4415
      %4417 = vadd.xlane.f32.xlu0 %v4357
      %v4418 = vpop.xlane.xlu0 %4417
      %4419 = vadd.xlane.f32.xlu0 %v4358
      %v4420 = vpop.xlane.xlu0 %4419
      %4421 = vadd.xlane.f32.xlu0 %v4359
      %v4422 = vpop.xlane.xlu0 %4421
      %4423 = vadd.xlane.f32.xlu0 %v4360
      %v4424 = vpop.xlane.xlu0 %4423
      %v4425 = vmul.f32 %v4362, 0.03125
      %v4426 = vmul.f32 %v4364, 0.03125
      %v4427 = vmul.f32 %v4366, 0.03125
      %v4428 = vmul.f32 %v4368, 0.03125
      %v4429 = vmul.f32 %v4370, 0.03125
      %v4430 = vmul.f32 %v4372, 0.03125
      %v4431 = vmul.f32 %v4374, 0.03125
      %v4432 = vmul.f32 %v4376, 0.03125
      %v4433 = vmul.f32 %v4378, 0.03125
      %v4434 = vmul.f32 %v4380, 0.03125
      %v4435 = vmul.f32 %v4382, 0.03125
      %v4436 = vmul.f32 %v4384, 0.03125
      %v4437 = vmul.f32 %v4386, 0.03125
      %v4438 = vmul.f32 %v4388, 0.03125
      %v4439 = vmul.f32 %v4390, 0.03125
      %v4440 = vmul.f32 %v4392, 0.03125
      %v4441 = vmul.f32 %v4394, 0.03125
      %v4442 = vmul.f32 %v4396, 0.03125
      %v4443 = vmul.f32 %v4398, 0.03125
      %v4444 = vmul.f32 %v4400, 0.03125
      %v4445 = vmul.f32 %v4402, 0.03125
      %v4446 = vmul.f32 %v4404, 0.03125
      %v4447 = vmul.f32 %v4406, 0.03125
      %v4448 = vmul.f32 %v4408, 0.03125
      %v4449 = vmul.f32 %v4410, 0.03125
      %v4450 = vmul.f32 %v4412, 0.03125
      %v4451 = vmul.f32 %v4414, 0.03125
      %v4452 = vmul.f32 %v4416, 0.03125
      %v4453 = vmul.f32 %v4418, 0.03125
      %v4454 = vmul.f32 %v4420, 0.03125
      %v4455 = vmul.f32 %v4422, 0.03125
      %v4456 = vmul.f32 %v4424, 0.03125
      %v4457 = vmul.f32 %v4297, %v4297
      %v4458 = vmul.f32 %v4298, %v4298
      %v4459 = vmul.f32 %v4299, %v4299
      %v4460 = vmul.f32 %v4300, %v4300
      %v4461 = vmul.f32 %v4301, %v4301
      %v4462 = vmul.f32 %v4302, %v4302
      %v4463 = vmul.f32 %v4303, %v4303
      %v4464 = vmul.f32 %v4304, %v4304
      %v4465 = vmul.f32 %v4305, %v4305
      %v4466 = vmul.f32 %v4306, %v4306
      %v4467 = vmul.f32 %v4307, %v4307
      %v4468 = vmul.f32 %v4308, %v4308
      %v4469 = vmul.f32 %v4309, %v4309
      %v4470 = vmul.f32 %v4310, %v4310
      %v4471 = vmul.f32 %v4311, %v4311
      %v4472 = vmul.f32 %v4312, %v4312
      %v4473 = vmul.f32 %v4313, %v4313
      %v4474 = vmul.f32 %v4314, %v4314
      %v4475 = vmul.f32 %v4315, %v4315
      %v4476 = vmul.f32 %v4316, %v4316
      %v4477 = vmul.f32 %v4317, %v4317
      %v4478 = vmul.f32 %v4318, %v4318
      %v4479 = vmul.f32 %v4319, %v4319
      %v4480 = vmul.f32 %v4320, %v4320
      %v4481 = vmul.f32 %v4321, %v4321
      %v4482 = vmul.f32 %v4322, %v4322
      %v4483 = vmul.f32 %v4323, %v4323
      %v4484 = vmul.f32 %v4324, %v4324
      %v4485 = vmul.f32 %v4325, %v4325
      %v4486 = vmul.f32 %v4326, %v4326
      %v4487 = vmul.f32 %v4327, %v4327
      %v4488 = vmul.f32 %v4328, %v4328
      %v4489 = vsub.f32 %v4425, %v4457
      %v4490 = vsub.f32 %v4426, %v4458
      %v4491 = vsub.f32 %v4427, %v4459
      %v4492 = vsub.f32 %v4428, %v4460
      %v4493 = vsub.f32 %v4429, %v4461
      %v4494 = vsub.f32 %v4430, %v4462
      %v4495 = vsub.f32 %v4431, %v4463
      %v4496 = vsub.f32 %v4432, %v4464
      %v4497 = vsub.f32 %v4433, %v4465
      %v4498 = vsub.f32 %v4434, %v4466
      %v4499 = vsub.f32 %v4435, %v4467
      %v4500 = vsub.f32 %v4436, %v4468
      %v4501 = vsub.f32 %v4437, %v4469
      %v4502 = vsub.f32 %v4438, %v4470
      %v4503 = vsub.f32 %v4439, %v4471
      %v4504 = vsub.f32 %v4440, %v4472
      %v4505 = vsub.f32 %v4441, %v4473
      %v4506 = vsub.f32 %v4442, %v4474
      %v4507 = vsub.f32 %v4443, %v4475
      %v4508 = vsub.f32 %v4444, %v4476
      %v4509 = vsub.f32 %v4445, %v4477
      %v4510 = vsub.f32 %v4446, %v4478
      %v4511 = vsub.f32 %v4447, %v4479
      %v4512 = vsub.f32 %v4448, %v4480
      %v4513 = vsub.f32 %v4449, %v4481
      %v4514 = vsub.f32 %v4450, %v4482
      %v4515 = vsub.f32 %v4451, %v4483
      %v4516 = vsub.f32 %v4452, %v4484
      %v4517 = vsub.f32 %v4453, %v4485
      %v4518 = vsub.f32 %v4454, %v4486
      %v4519 = vsub.f32 %v4455, %v4487
      %v4520 = vsub.f32 %v4456, %v4488
      %v4521 = vadd.f32 %v4489, 1e-05
      %v4522 = vadd.f32 %v4490, 1e-05
      %v4523 = vadd.f32 %v4491, 1e-05
      %v4524 = vadd.f32 %v4492, 1e-05
      %v4525 = vadd.f32 %v4493, 1e-05
      %v4526 = vadd.f32 %v4494, 1e-05
      %v4527 = vadd.f32 %v4495, 1e-05
      %v4528 = vadd.f32 %v4496, 1e-05
      %v4529 = vadd.f32 %v4497, 1e-05
      %v4530 = vadd.f32 %v4498, 1e-05
      %v4531 = vadd.f32 %v4499, 1e-05
      %v4532 = vadd.f32 %v4500, 1e-05
      %v4533 = vadd.f32 %v4501, 1e-05
      %v4534 = vadd.f32 %v4502, 1e-05
      %v4535 = vadd.f32 %v4503, 1e-05
      %v4536 = vadd.f32 %v4504, 1e-05
      %v4537 = vadd.f32 %v4505, 1e-05
      %v4538 = vadd.f32 %v4506, 1e-05
      %v4539 = vadd.f32 %v4507, 1e-05
      %v4540 = vadd.f32 %v4508, 1e-05
      %v4541 = vadd.f32 %v4509, 1e-05
      %v4542 = vadd.f32 %v4510, 1e-05
      %v4543 = vadd.f32 %v4511, 1e-05
      %v4544 = vadd.f32 %v4512, 1e-05
      %v4545 = vadd.f32 %v4513, 1e-05
      %v4546 = vadd.f32 %v4514, 1e-05
      %v4547 = vadd.f32 %v4515, 1e-05
      %v4548 = vadd.f32 %v4516, 1e-05
      %v4549 = vadd.f32 %v4517, 1e-05
      %v4550 = vadd.f32 %v4518, 1e-05
      %v4551 = vadd.f32 %v4519, 1e-05
      %v4552 = vadd.f32 %v4520, 1e-05
      %v4553 = vrsqrt.pop %v4521
      %v4554 = vmul.f32 %v4553, %v4521
      %v4555 = vmul.f32 %v4554, %v4553
      %v4556 = vmul.f32 0.5, %v4555
      %v4557 = vsub.f32 1.5, %v4556
      %v4558 = vmul.f32 %v4553, %v4557
      %vm4559 = vweird.f32 %v4521
      %vm4560 = vweird.f32 %v4553
      %vm4561 = vmor %vm4559, %vm4560
      %v4562 = vsel %vm4561, %v4553, %v4558
      %v4563 = vrsqrt.pop %v4522
      %v4564 = vmul.f32 %v4563, %v4522
      %v4565 = vmul.f32 %v4564, %v4563
      %v4566 = vmul.f32 0.5, %v4565
      %v4567 = vsub.f32 1.5, %v4566
      %v4568 = vmul.f32 %v4563, %v4567
      %vm4569 = vweird.f32 %v4522
      %vm4570 = vweird.f32 %v4563
      %vm4571 = vmor %vm4569, %vm4570
      %v4572 = vsel %vm4571, %v4563, %v4568
      %v4573 = vrsqrt.pop %v4523
      %v4574 = vmul.f32 %v4573, %v4523
      %v4575 = vmul.f32 %v4574, %v4573
      %v4576 = vmul.f32 0.5, %v4575
      %v4577 = vsub.f32 1.5, %v4576
      %v4578 = vmul.f32 %v4573, %v4577
      %vm4579 = vweird.f32 %v4523
      %vm4580 = vweird.f32 %v4573
      %vm4581 = vmor %vm4579, %vm4580
      %v4582 = vsel %vm4581, %v4573, %v4578
      %v4583 = vrsqrt.pop %v4524
      %v4584 = vmul.f32 %v4583, %v4524
      %v4585 = vmul.f32 %v4584, %v4583
      %v4586 = vmul.f32 0.5, %v4585
      %v4587 = vsub.f32 1.5, %v4586
      %v4588 = vmul.f32 %v4583, %v4587
      %vm4589 = vweird.f32 %v4524
      %vm4590 = vweird.f32 %v4583
      %vm4591 = vmor %vm4589, %vm4590
      %v4592 = vsel %vm4591, %v4583, %v4588
      %v4593 = vrsqrt.pop %v4525
      %v4594 = vmul.f32 %v4593, %v4525
      %v4595 = vmul.f32 %v4594, %v4593
      %v4596 = vmul.f32 0.5, %v4595
      %v4597 = vsub.f32 1.5, %v4596
      %v4598 = vmul.f32 %v4593, %v4597
      %vm4599 = vweird.f32 %v4525
      %vm4600 = vweird.f32 %v4593
      %vm4601 = vmor %vm4599, %vm4600
      %v4602 = vsel %vm4601, %v4593, %v4598
      %v4603 = vrsqrt.pop %v4526
      %v4604 = vmul.f32 %v4603, %v4526
      %v4605 = vmul.f32 %v4604, %v4603
      %v4606 = vmul.f32 0.5, %v4605
      %v4607 = vsub.f32 1.5, %v4606
      %v4608 = vmul.f32 %v4603, %v4607
      %vm4609 = vweird.f32 %v4526
      %vm4610 = vweird.f32 %v4603
      %vm4611 = vmor %vm4609, %vm4610
      %v4612 = vsel %vm4611, %v4603, %v4608
      %v4613 = vrsqrt.pop %v4527
      %v4614 = vmul.f32 %v4613, %v4527
      %v4615 = vmul.f32 %v4614, %v4613
      %v4616 = vmul.f32 0.5, %v4615
      %v4617 = vsub.f32 1.5, %v4616
      %v4618 = vmul.f32 %v4613, %v4617
      %vm4619 = vweird.f32 %v4527
      %vm4620 = vweird.f32 %v4613
      %vm4621 = vmor %vm4619, %vm4620
      %v4622 = vsel %vm4621, %v4613, %v4618
      %v4623 = vrsqrt.pop %v4528
      %v4624 = vmul.f32 %v4623, %v4528
      %v4625 = vmul.f32 %v4624, %v4623
      %v4626 = vmul.f32 0.5, %v4625
      %v4627 = vsub.f32 1.5, %v4626
      %v4628 = vmul.f32 %v4623, %v4627
      %vm4629 = vweird.f32 %v4528
      %vm4630 = vweird.f32 %v4623
      %vm4631 = vmor %vm4629, %vm4630
      %v4632 = vsel %vm4631, %v4623, %v4628
      %v4633 = vrsqrt.pop %v4529
      %v4634 = vmul.f32 %v4633, %v4529
      %v4635 = vmul.f32 %v4634, %v4633
      %v4636 = vmul.f32 0.5, %v4635
      %v4637 = vsub.f32 1.5, %v4636
      %v4638 = vmul.f32 %v4633, %v4637
      %vm4639 = vweird.f32 %v4529
      %vm4640 = vweird.f32 %v4633
      %vm4641 = vmor %vm4639, %vm4640
      %v4642 = vsel %vm4641, %v4633, %v4638
      %v4643 = vrsqrt.pop %v4530
      %v4644 = vmul.f32 %v4643, %v4530
      %v4645 = vmul.f32 %v4644, %v4643
      %v4646 = vmul.f32 0.5, %v4645
      %v4647 = vsub.f32 1.5, %v4646
      %v4648 = vmul.f32 %v4643, %v4647
      %vm4649 = vweird.f32 %v4530
      %vm4650 = vweird.f32 %v4643
      %vm4651 = vmor %vm4649, %vm4650
      %v4652 = vsel %vm4651, %v4643, %v4648
      %v4653 = vrsqrt.pop %v4531
      %v4654 = vmul.f32 %v4653, %v4531
      %v4655 = vmul.f32 %v4654, %v4653
      %v4656 = vmul.f32 0.5, %v4655
      %v4657 = vsub.f32 1.5, %v4656
      %v4658 = vmul.f32 %v4653, %v4657
      %vm4659 = vweird.f32 %v4531
      %vm4660 = vweird.f32 %v4653
      %vm4661 = vmor %vm4659, %vm4660
      %v4662 = vsel %vm4661, %v4653, %v4658
      %v4663 = vrsqrt.pop %v4532
      %v4664 = vmul.f32 %v4663, %v4532
      %v4665 = vmul.f32 %v4664, %v4663
      %v4666 = vmul.f32 0.5, %v4665
      %v4667 = vsub.f32 1.5, %v4666
      %v4668 = vmul.f32 %v4663, %v4667
      %vm4669 = vweird.f32 %v4532
      %vm4670 = vweird.f32 %v4663
      %vm4671 = vmor %vm4669, %vm4670
      %v4672 = vsel %vm4671, %v4663, %v4668
      %v4673 = vrsqrt.pop %v4533
      %v4674 = vmul.f32 %v4673, %v4533
      %v4675 = vmul.f32 %v4674, %v4673
      %v4676 = vmul.f32 0.5, %v4675
      %v4677 = vsub.f32 1.5, %v4676
      %v4678 = vmul.f32 %v4673, %v4677
      %vm4679 = vweird.f32 %v4533
      %vm4680 = vweird.f32 %v4673
      %vm4681 = vmor %vm4679, %vm4680
      %v4682 = vsel %vm4681, %v4673, %v4678
      %v4683 = vrsqrt.pop %v4534
      %v4684 = vmul.f32 %v4683, %v4534
      %v4685 = vmul.f32 %v4684, %v4683
      %v4686 = vmul.f32 0.5, %v4685
      %v4687 = vsub.f32 1.5, %v4686
      %v4688 = vmul.f32 %v4683, %v4687
      %vm4689 = vweird.f32 %v4534
      %vm4690 = vweird.f32 %v4683
      %vm4691 = vmor %vm4689, %vm4690
      %v4692 = vsel %vm4691, %v4683, %v4688
      %v4693 = vrsqrt.pop %v4535
      %v4694 = vmul.f32 %v4693, %v4535
      %v4695 = vmul.f32 %v4694, %v4693
      %v4696 = vmul.f32 0.5, %v4695
      %v4697 = vsub.f32 1.5, %v4696
      %v4698 = vmul.f32 %v4693, %v4697
      %vm4699 = vweird.f32 %v4535
      %vm4700 = vweird.f32 %v4693
      %vm4701 = vmor %vm4699, %vm4700
      %v4702 = vsel %vm4701, %v4693, %v4698
      %v4703 = vrsqrt.pop %v4536
      %v4704 = vmul.f32 %v4703, %v4536
      %v4705 = vmul.f32 %v4704, %v4703
      %v4706 = vmul.f32 0.5, %v4705
      %v4707 = vsub.f32 1.5, %v4706
      %v4708 = vmul.f32 %v4703, %v4707
      %vm4709 = vweird.f32 %v4536
      %vm4710 = vweird.f32 %v4703
      %vm4711 = vmor %vm4709, %vm4710
      %v4712 = vsel %vm4711, %v4703, %v4708
      %v4713 = vrsqrt.pop %v4537
      %v4714 = vmul.f32 %v4713, %v4537
      %v4715 = vmul.f32 %v4714, %v4713
      %v4716 = vmul.f32 0.5, %v4715
      %v4717 = vsub.f32 1.5, %v4716
      %v4718 = vmul.f32 %v4713, %v4717
      %vm4719 = vweird.f32 %v4537
      %vm4720 = vweird.f32 %v4713
      %vm4721 = vmor %vm4719, %vm4720
      %v4722 = vsel %vm4721, %v4713, %v4718
      %v4723 = vrsqrt.pop %v4538
      %v4724 = vmul.f32 %v4723, %v4538
      %v4725 = vmul.f32 %v4724, %v4723
      %v4726 = vmul.f32 0.5, %v4725
      %v4727 = vsub.f32 1.5, %v4726
      %v4728 = vmul.f32 %v4723, %v4727
      %vm4729 = vweird.f32 %v4538
      %vm4730 = vweird.f32 %v4723
      %vm4731 = vmor %vm4729, %vm4730
      %v4732 = vsel %vm4731, %v4723, %v4728
      %v4733 = vrsqrt.pop %v4539
      %v4734 = vmul.f32 %v4733, %v4539
      %v4735 = vmul.f32 %v4734, %v4733
      %v4736 = vmul.f32 0.5, %v4735
      %v4737 = vsub.f32 1.5, %v4736
      %v4738 = vmul.f32 %v4733, %v4737
      %vm4739 = vweird.f32 %v4539
      %vm4740 = vweird.f32 %v4733
      %vm4741 = vmor %vm4739, %vm4740
      %v4742 = vsel %vm4741, %v4733, %v4738
      %v4743 = vrsqrt.pop %v4540
      %v4744 = vmul.f32 %v4743, %v4540
      %v4745 = vmul.f32 %v4744, %v4743
      %v4746 = vmul.f32 0.5, %v4745
      %v4747 = vsub.f32 1.5, %v4746
      %v4748 = vmul.f32 %v4743, %v4747
      %vm4749 = vweird.f32 %v4540
      %vm4750 = vweird.f32 %v4743
      %vm4751 = vmor %vm4749, %vm4750
      %v4752 = vsel %vm4751, %v4743, %v4748
      %v4753 = vrsqrt.pop %v4541
      %v4754 = vmul.f32 %v4753, %v4541
      %v4755 = vmul.f32 %v4754, %v4753
      %v4756 = vmul.f32 0.5, %v4755
      %v4757 = vsub.f32 1.5, %v4756
      %v4758 = vmul.f32 %v4753, %v4757
      %vm4759 = vweird.f32 %v4541
      %vm4760 = vweird.f32 %v4753
      %vm4761 = vmor %vm4759, %vm4760
      %v4762 = vsel %vm4761, %v4753, %v4758
      %v4763 = vrsqrt.pop %v4542
      %v4764 = vmul.f32 %v4763, %v4542
      %v4765 = vmul.f32 %v4764, %v4763
      %v4766 = vmul.f32 0.5, %v4765
      %v4767 = vsub.f32 1.5, %v4766
      %v4768 = vmul.f32 %v4763, %v4767
      %vm4769 = vweird.f32 %v4542
      %vm4770 = vweird.f32 %v4763
      %vm4771 = vmor %vm4769, %vm4770
      %v4772 = vsel %vm4771, %v4763, %v4768
      %v4773 = vrsqrt.pop %v4543
      %v4774 = vmul.f32 %v4773, %v4543
      %v4775 = vmul.f32 %v4774, %v4773
      %v4776 = vmul.f32 0.5, %v4775
      %v4777 = vsub.f32 1.5, %v4776
      %v4778 = vmul.f32 %v4773, %v4777
      %vm4779 = vweird.f32 %v4543
      %vm4780 = vweird.f32 %v4773
      %vm4781 = vmor %vm4779, %vm4780
      %v4782 = vsel %vm4781, %v4773, %v4778
      %v4783 = vrsqrt.pop %v4544
      %v4784 = vmul.f32 %v4783, %v4544
      %v4785 = vmul.f32 %v4784, %v4783
      %v4786 = vmul.f32 0.5, %v4785
      %v4787 = vsub.f32 1.5, %v4786
      %v4788 = vmul.f32 %v4783, %v4787
      %vm4789 = vweird.f32 %v4544
      %vm4790 = vweird.f32 %v4783
      %vm4791 = vmor %vm4789, %vm4790
      %v4792 = vsel %vm4791, %v4783, %v4788
      %v4793 = vrsqrt.pop %v4545
      %v4794 = vmul.f32 %v4793, %v4545
      %v4795 = vmul.f32 %v4794, %v4793
      %v4796 = vmul.f32 0.5, %v4795
      %v4797 = vsub.f32 1.5, %v4796
      %v4798 = vmul.f32 %v4793, %v4797
      %vm4799 = vweird.f32 %v4545
      %vm4800 = vweird.f32 %v4793
      %vm4801 = vmor %vm4799, %vm4800
      %v4802 = vsel %vm4801, %v4793, %v4798
      %v4803 = vrsqrt.pop %v4546
      %v4804 = vmul.f32 %v4803, %v4546
      %v4805 = vmul.f32 %v4804, %v4803
      %v4806 = vmul.f32 0.5, %v4805
      %v4807 = vsub.f32 1.5, %v4806
      %v4808 = vmul.f32 %v4803, %v4807
      %vm4809 = vweird.f32 %v4546
      %vm4810 = vweird.f32 %v4803
      %vm4811 = vmor %vm4809, %vm4810
      %v4812 = vsel %vm4811, %v4803, %v4808
      %v4813 = vrsqrt.pop %v4547
      %v4814 = vmul.f32 %v4813, %v4547
      %v4815 = vmul.f32 %v4814, %v4813
      %v4816 = vmul.f32 0.5, %v4815
      %v4817 = vsub.f32 1.5, %v4816
      %v4818 = vmul.f32 %v4813, %v4817
      %vm4819 = vweird.f32 %v4547
      %vm4820 = vweird.f32 %v4813
      %vm4821 = vmor %vm4819, %vm4820
      %v4822 = vsel %vm4821, %v4813, %v4818
      %v4823 = vrsqrt.pop %v4548
      %v4824 = vmul.f32 %v4823, %v4548
      %v4825 = vmul.f32 %v4824, %v4823
      %v4826 = vmul.f32 0.5, %v4825
      %v4827 = vsub.f32 1.5, %v4826
      %v4828 = vmul.f32 %v4823, %v4827
      %vm4829 = vweird.f32 %v4548
      %vm4830 = vweird.f32 %v4823
      %vm4831 = vmor %vm4829, %vm4830
      %v4832 = vsel %vm4831, %v4823, %v4828
      %v4833 = vrsqrt.pop %v4549
      %v4834 = vmul.f32 %v4833, %v4549
      %v4835 = vmul.f32 %v4834, %v4833
      %v4836 = vmul.f32 0.5, %v4835
      %v4837 = vsub.f32 1.5, %v4836
      %v4838 = vmul.f32 %v4833, %v4837
      %vm4839 = vweird.f32 %v4549
      %vm4840 = vweird.f32 %v4833
      %vm4841 = vmor %vm4839, %vm4840
      %v4842 = vsel %vm4841, %v4833, %v4838
      %v4843 = vrsqrt.pop %v4550
      %v4844 = vmul.f32 %v4843, %v4550
      %v4845 = vmul.f32 %v4844, %v4843
      %v4846 = vmul.f32 0.5, %v4845
      %v4847 = vsub.f32 1.5, %v4846
      %v4848 = vmul.f32 %v4843, %v4847
      %vm4849 = vweird.f32 %v4550
      %vm4850 = vweird.f32 %v4843
      %vm4851 = vmor %vm4849, %vm4850
      %v4852 = vsel %vm4851, %v4843, %v4848
      %v4853 = vrsqrt.pop %v4551
      %v4854 = vmul.f32 %v4853, %v4551
      %v4855 = vmul.f32 %v4854, %v4853
      %v4856 = vmul.f32 0.5, %v4855
      %v4857 = vsub.f32 1.5, %v4856
      %v4858 = vmul.f32 %v4853, %v4857
      %vm4859 = vweird.f32 %v4551
      %vm4860 = vweird.f32 %v4853
      %vm4861 = vmor %vm4859, %vm4860
      %v4862 = vsel %vm4861, %v4853, %v4858
      %v4863 = vrsqrt.pop %v4552
      %v4864 = vmul.f32 %v4863, %v4552
      %v4865 = vmul.f32 %v4864, %v4863
      %v4866 = vmul.f32 0.5, %v4865
      %v4867 = vsub.f32 1.5, %v4866
      %v4868 = vmul.f32 %v4863, %v4867
      %vm4869 = vweird.f32 %v4552
      %vm4870 = vweird.f32 %v4863
      %vm4871 = vmor %vm4869, %vm4870
      %v4872 = vsel %vm4871, %v4863, %v4868
      %v4873 = vsub.f32 %v4154, %v4297
      %v4874 = vsub.f32 %v4156, %v4298
      %v4875 = vsub.f32 %v4159, %v4299
      %v4876 = vsub.f32 %v4161, %v4300
      %v4877 = vsub.f32 %v4164, %v4301
      %v4878 = vsub.f32 %v4166, %v4302
      %v4879 = vsub.f32 %v4169, %v4303
      %v4880 = vsub.f32 %v4171, %v4304
      %v4881 = vsub.f32 %v4174, %v4305
      %v4882 = vsub.f32 %v4176, %v4306
      %v4883 = vsub.f32 %v4179, %v4307
      %v4884 = vsub.f32 %v4181, %v4308
      %v4885 = vsub.f32 %v4184, %v4309
      %v4886 = vsub.f32 %v4186, %v4310
      %v4887 = vsub.f32 %v4189, %v4311
      %v4888 = vsub.f32 %v4191, %v4312
      %v4889 = vsub.f32 %v4194, %v4313
      %v4890 = vsub.f32 %v4196, %v4314
      %v4891 = vsub.f32 %v4199, %v4315
      %v4892 = vsub.f32 %v4201, %v4316
      %v4893 = vsub.f32 %v4204, %v4317
      %v4894 = vsub.f32 %v4206, %v4318
      %v4895 = vsub.f32 %v4209, %v4319
      %v4896 = vsub.f32 %v4211, %v4320
      %v4897 = vsub.f32 %v4214, %v4321
      %v4898 = vsub.f32 %v4216, %v4322
      %v4899 = vsub.f32 %v4219, %v4323
      %v4900 = vsub.f32 %v4221, %v4324
      %v4901 = vsub.f32 %v4224, %v4325
      %v4902 = vsub.f32 %v4226, %v4326
      %v4903 = vsub.f32 %v4229, %v4327
      %v4904 = vsub.f32 %v4231, %v4328
      %v4905 = vmul.f32 %v4873, %v4562
      %v4906 = vmul.f32 %v4874, %v4572
      %v4907 = vmul.f32 %v4875, %v4582
      %v4908 = vmul.f32 %v4876, %v4592
      %v4909 = vmul.f32 %v4877, %v4602
      %v4910 = vmul.f32 %v4878, %v4612
      %v4911 = vmul.f32 %v4879, %v4622
      %v4912 = vmul.f32 %v4880, %v4632
      %v4913 = vmul.f32 %v4881, %v4642
      %v4914 = vmul.f32 %v4882, %v4652
      %v4915 = vmul.f32 %v4883, %v4662
      %v4916 = vmul.f32 %v4884, %v4672
      %v4917 = vmul.f32 %v4885, %v4682
      %v4918 = vmul.f32 %v4886, %v4692
      %v4919 = vmul.f32 %v4887, %v4702
      %v4920 = vmul.f32 %v4888, %v4712
      %v4921 = vmul.f32 %v4889, %v4722
      %v4922 = vmul.f32 %v4890, %v4732
      %v4923 = vmul.f32 %v4891, %v4742
      %v4924 = vmul.f32 %v4892, %v4752
      %v4925 = vmul.f32 %v4893, %v4762
      %v4926 = vmul.f32 %v4894, %v4772
      %v4927 = vmul.f32 %v4895, %v4782
      %v4928 = vmul.f32 %v4896, %v4792
      %v4929 = vmul.f32 %v4897, %v4802
      %v4930 = vmul.f32 %v4898, %v4812
      %v4931 = vmul.f32 %v4899, %v4822
      %v4932 = vmul.f32 %v4900, %v4832
      %v4933 = vmul.f32 %v4901, %v4842
      %v4934 = vmul.f32 %v4902, %v4852
      %v4935 = vmul.f32 %v4903, %v4862
      %v4936 = vmul.f32 %v4904, %v4872
      %v4937 = vld [vmem:[%s4 + $0xd] sm:$0x1]
      %v4938 = vperm.slane %v4937, 0
      %v4939 = vmul.f32 %v4905, %v4938
      %v4940 = vmul.f32 %v4906, %v4938
      %v4941 = vmul.f32 %v4907, %v4938
      %v4942 = vmul.f32 %v4908, %v4938
      %v4943 = vmul.f32 %v4909, %v4938
      %v4944 = vmul.f32 %v4910, %v4938
      %v4945 = vmul.f32 %v4911, %v4938
      %v4946 = vmul.f32 %v4912, %v4938
      %v4947 = vmul.f32 %v4913, %v4938
      %v4948 = vmul.f32 %v4914, %v4938
      %v4949 = vmul.f32 %v4915, %v4938
      %v4950 = vmul.f32 %v4916, %v4938
      %v4951 = vmul.f32 %v4917, %v4938
      %v4952 = vmul.f32 %v4918, %v4938
      %v4953 = vmul.f32 %v4919, %v4938
      %v4954 = vmul.f32 %v4920, %v4938
      %v4955 = vmul.f32 %v4921, %v4938
      %v4956 = vmul.f32 %v4922, %v4938
      %v4957 = vmul.f32 %v4923, %v4938
      %v4958 = vmul.f32 %v4924, %v4938
      %v4959 = vmul.f32 %v4925, %v4938
      %v4960 = vmul.f32 %v4926, %v4938
      %v4961 = vmul.f32 %v4927, %v4938
      %v4962 = vmul.f32 %v4928, %v4938
      %v4963 = vmul.f32 %v4929, %v4938
      %v4964 = vmul.f32 %v4930, %v4938
      %v4965 = vmul.f32 %v4931, %v4938
      %v4966 = vmul.f32 %v4932, %v4938
      %v4967 = vmul.f32 %v4933, %v4938
      %v4968 = vmul.f32 %v4934, %v4938
      %v4969 = vmul.f32 %v4935, %v4938
      %v4970 = vmul.f32 %v4936, %v4938
      %v4971 = vld [vmem:[%s4 + $0xe] sm:$0x1]
      %v4972 = vperm.slane %v4971, 0
      %v4973 = vadd.f32 %v4939, %v4972
      %v4974 = vadd.f32 %v4940, %v4972
      %v4975 = vadd.f32 %v4941, %v4972
      %v4976 = vadd.f32 %v4942, %v4972
      %v4977 = vadd.f32 %v4943, %v4972
      %v4978 = vadd.f32 %v4944, %v4972
      %v4979 = vadd.f32 %v4945, %v4972
      %v4980 = vadd.f32 %v4946, %v4972
      %v4981 = vadd.f32 %v4947, %v4972
      %v4982 = vadd.f32 %v4948, %v4972
      %v4983 = vadd.f32 %v4949, %v4972
      %v4984 = vadd.f32 %v4950, %v4972
      %v4985 = vadd.f32 %v4951, %v4972
      %v4986 = vadd.f32 %v4952, %v4972
      %v4987 = vadd.f32 %v4953, %v4972
      %v4988 = vadd.f32 %v4954, %v4972
      %v4989 = vadd.f32 %v4955, %v4972
      %v4990 = vadd.f32 %v4956, %v4972
      %v4991 = vadd.f32 %v4957, %v4972
      %v4992 = vadd.f32 %v4958, %v4972
      %v4993 = vadd.f32 %v4959, %v4972
      %v4994 = vadd.f32 %v4960, %v4972
      %v4995 = vadd.f32 %v4961, %v4972
      %v4996 = vadd.f32 %v4962, %v4972
      %v4997 = vadd.f32 %v4963, %v4972
      %v4998 = vadd.f32 %v4964, %v4972
      %v4999 = vadd.f32 %v4965, %v4972
      %v5000 = vadd.f32 %v4966, %v4972
      %v5001 = vadd.f32 %v4967, %v4972
      %v5002 = vadd.f32 %v4968, %v4972
      %v5003 = vadd.f32 %v4969, %v4972
      %v5004 = vadd.f32 %v4970, %v4972
      %v5005 = vpack.c.bf16 %v4974, %v4973
      %v5006 = vpack.c.bf16 %v4976, %v4975
      %v5007 = vpack.c.bf16 %v4978, %v4977
      %v5008 = vpack.c.bf16 %v4980, %v4979
      %v5009 = vpack.c.bf16 %v4982, %v4981
      %v5010 = vpack.c.bf16 %v4984, %v4983
      %v5011 = vpack.c.bf16 %v4986, %v4985
      %v5012 = vpack.c.bf16 %v4988, %v4987
      %v5013 = vpack.c.bf16 %v4990, %v4989
      %v5014 = vpack.c.bf16 %v4992, %v4991
      %v5015 = vpack.c.bf16 %v4994, %v4993
      %v5016 = vpack.c.bf16 %v4996, %v4995
      %v5017 = vpack.c.bf16 %v4998, %v4997
      %v5018 = vpack.c.bf16 %v5000, %v4999
      %v5019 = vpack.c.bf16 %v5002, %v5001
      %v5020 = vpack.c.bf16 %v5004, %v5003
      %5021 = vmatpush.bf16.msra.mxu0 %v5012
      %5022 = vmatpush.bf16.msra.mxu0 %v5011
      %5023 = vmatpush.bf16.msra.mxu0 %v5010
      %5024 = vmatpush.bf16.msra.mxu0 %v5009
      %5025 = vmatpush.bf16.msra.mxu0 %v5008
      %5026 = vmatpush.bf16.msra.mxu0 %v5007
      %5027 = vmatpush.bf16.msra.mxu0 %v5006
      %5028 = vmatpush.bf16.msra.mxu0 %v5005
      %5029 = vmatmul.bf16.gmra.mxu0 %v786
      %v5030 = vpop.f32.mrf.mxu0
      %v5031 = vadd.f32 0.0, %v5030
      %v5032 = vpop.f32.mrf.mxu0
      %v5033 = vadd.f32 0.0, %v5032
      %5034 = vmatmul.bf16.gmra.mxu0 %v788
      %v5035 = vpop.f32.mrf.mxu0
      %v5036 = vadd.f32 0.0, %v5035
      %v5037 = vpop.f32.mrf.mxu0
      %v5038 = vadd.f32 0.0, %v5037
      %5039 = vmatmul.bf16.gmra.mxu0 %v790
      %v5040 = vpop.f32.mrf.mxu0
      %v5041 = vadd.f32 0.0, %v5040
      %v5042 = vpop.f32.mrf.mxu0
      %v5043 = vadd.f32 0.0, %v5042
      %5044 = vmatmul.bf16.gmra.mxu0 %v792
      %v5045 = vpop.f32.mrf.mxu0
      %v5046 = vadd.f32 0.0, %v5045
      %v5047 = vpop.f32.mrf.mxu0
      %v5048 = vadd.f32 0.0, %v5047
      %5049 = vmatmul.bf16.gmra.mxu0 %v794
      %v5050 = vpop.f32.mrf.mxu0
      %v5051 = vadd.f32 0.0, %v5050
      %v5052 = vpop.f32.mrf.mxu0
      %v5053 = vadd.f32 0.0, %v5052
      %5054 = vmatmul.bf16.gmra.mxu0 %v796
      %v5055 = vpop.f32.mrf.mxu0
      %v5056 = vadd.f32 0.0, %v5055
      %v5057 = vpop.f32.mrf.mxu0
      %v5058 = vadd.f32 0.0, %v5057
      %5059 = vmatmul.bf16.gmra.mxu0 %v798
      %v5060 = vpop.f32.mrf.mxu0
      %v5061 = vadd.f32 0.0, %v5060
      %v5062 = vpop.f32.mrf.mxu0
      %v5063 = vadd.f32 0.0, %v5062
      %5064 = vmatmul.bf16.gmra.mxu0 %v800
      %v5065 = vpop.f32.mrf.mxu0
      %v5066 = vadd.f32 0.0, %v5065
      %v5067 = vpop.f32.mrf.mxu0
      %v5068 = vadd.f32 0.0, %v5067
      %5069 = vdwg.mxu0
      %5070 = vmatpush.bf16.msra.mxu0 %v5020
      %5071 = vmatpush.bf16.msra.mxu0 %v5019
      %5072 = vmatpush.bf16.msra.mxu0 %v5018
      %5073 = vmatpush.bf16.msra.mxu0 %v5017
      %5074 = vmatpush.bf16.msra.mxu0 %v5016
      %5075 = vmatpush.bf16.msra.mxu0 %v5015
      %5076 = vmatpush.bf16.msra.mxu0 %v5014
      %5077 = vmatpush.bf16.msra.mxu0 %v5013
      %5078 = vmatmul.bf16.gmra.mxu0 %v787
      %v5079 = vpop.f32.mrf.mxu0
      %v5080 = vadd.f32 %v5031, %v5079
      %v5081 = vpop.f32.mrf.mxu0
      %v5082 = vadd.f32 %v5033, %v5081
      %5083 = vmatmul.bf16.gmra.mxu0 %v789
      %v5084 = vpop.f32.mrf.mxu0
      %v5085 = vadd.f32 %v5036, %v5084
      %v5086 = vpop.f32.mrf.mxu0
      %v5087 = vadd.f32 %v5038, %v5086
      %5088 = vmatmul.bf16.gmra.mxu0 %v791
      %v5089 = vpop.f32.mrf.mxu0
      %v5090 = vadd.f32 %v5041, %v5089
      %v5091 = vpop.f32.mrf.mxu0
      %v5092 = vadd.f32 %v5043, %v5091
      %5093 = vmatmul.bf16.gmra.mxu0 %v793
      %v5094 = vpop.f32.mrf.mxu0
      %v5095 = vadd.f32 %v5046, %v5094
      %v5096 = vpop.f32.mrf.mxu0
      %v5097 = vadd.f32 %v5048, %v5096
      %5098 = vmatmul.bf16.gmra.mxu0 %v795
      %v5099 = vpop.f32.mrf.mxu0
      %v5100 = vadd.f32 %v5051, %v5099
      %v5101 = vpop.f32.mrf.mxu0
      %v5102 = vadd.f32 %v5053, %v5101
      %5103 = vmatmul.bf16.gmra.mxu0 %v797
      %v5104 = vpop.f32.mrf.mxu0
      %v5105 = vadd.f32 %v5056, %v5104
      %v5106 = vpop.f32.mrf.mxu0
      %v5107 = vadd.f32 %v5058, %v5106
      %5108 = vmatmul.bf16.gmra.mxu0 %v799
      %v5109 = vpop.f32.mrf.mxu0
      %v5110 = vadd.f32 %v5061, %v5109
      %v5111 = vpop.f32.mrf.mxu0
      %v5112 = vadd.f32 %v5063, %v5111
      %5113 = vmatmul.bf16.gmra.mxu0 %v801
      %v5114 = vpop.f32.mrf.mxu0
      %v5115 = vadd.f32 %v5066, %v5114
      %v5116 = vpop.f32.mrf.mxu0
      %v5117 = vadd.f32 %v5068, %v5116
      %5118 = vdwg.mxu0
      %v5119 = vld [vmem:[%s4 + $0xf] sm:$0x1]
      %v5120 = vld [vmem:[%s3 + $0x2c0] sm:$0xf]
      %v5121 = vld [vmem:[%s3 + $0x2c4] sm:$0xf]
      %v5122 = vld [vmem:[%s3 + $0x2c8] sm:$0xf]
      %v5123 = vld [vmem:[%s3 + $0x2cc] sm:$0xf]
      %v5124 = vld [vmem:[%s3 + $0x2d0] sm:$0xf]
      %v5125 = vld [vmem:[%s3 + $0x2d4] sm:$0xf]
      %v5126 = vld [vmem:[%s3 + $0x2d8] sm:$0xf]
      %v5127 = vld [vmem:[%s3 + $0x2dc] sm:$0xf]
      %v5128 = vld [vmem:[%s3 + $0x2e0] sm:$0xf]
      %v5129 = vld [vmem:[%s3 + $0x2e4] sm:$0xf]
      %v5130 = vld [vmem:[%s3 + $0x2e8] sm:$0xf]
      %v5131 = vld [vmem:[%s3 + $0x2ec] sm:$0xf]
      %v5132 = vld [vmem:[%s3 + $0x2f0] sm:$0xf]
      %v5133 = vld [vmem:[%s3 + $0x2f4] sm:$0xf]
      %v5134 = vld [vmem:[%s3 + $0x2f8] sm:$0xf]
      %v5135 = vld [vmem:[%s3 + $0x2fc] sm:$0xf]
      %v5152 = vunpack.c.l.b16 %v5120
      %v5153 = vunpack.c.l.b16 %v5121
      %v5154 = vunpack.c.l.b16 %v5122
      %v5155 = vunpack.c.l.b16 %v5123
      %v5156 = vunpack.c.l.b16 %v5124
      %v5157 = vunpack.c.l.b16 %v5125
      %v5158 = vunpack.c.l.b16 %v5126
      %v5159 = vunpack.c.l.b16 %v5127
      %v5160 = vunpack.c.l.b16 %v5128
      %v5161 = vunpack.c.l.b16 %v5129
      %v5162 = vunpack.c.l.b16 %v5130
      %v5163 = vunpack.c.l.b16 %v5131
      %v5164 = vunpack.c.l.b16 %v5132
      %v5165 = vunpack.c.l.b16 %v5133
      %v5166 = vunpack.c.l.b16 %v5134
      %v5167 = vunpack.c.l.b16 %v5135
      %v5168 = vpack.c.b16 %v5153, %v5152
      %v5169 = vpack.c.b16 %v5155, %v5154
      %v5170 = vpack.c.b16 %v5157, %v5156
      %v5171 = vpack.c.b16 %v5159, %v5158
      %v5172 = vpack.c.b16 %v5161, %v5160
      %v5173 = vpack.c.b16 %v5163, %v5162
      %v5174 = vpack.c.b16 %v5165, %v5164
      %v5175 = vpack.c.b16 %v5167, %v5166
      %5184 = vmatpush.bf16.msra.mxu0 %v5175
      %5185 = vmatpush.bf16.msra.mxu0 %v5174
      %5186 = vmatpush.bf16.msra.mxu0 %v5173
      %5187 = vmatpush.bf16.msra.mxu0 %v5172
      %5188 = vmatpush.bf16.msra.mxu0 %v5171
      %5189 = vmatpush.bf16.msra.mxu0 %v5170
      %5190 = vmatpush.bf16.msra.mxu0 %v5169
      %5191 = vmatpush.bf16.msra.mxu0 %v5168
      %5192 = vmatmul.bf16.gmra.mxu0 %v3036
      %v5193 = vpop.f32.mrf.mxu0
      %v5194 = vadd.f32 0.0, %v5193
      %v5195 = vpop.f32.mrf.mxu0
      %v5196 = vadd.f32 0.0, %v5195
      %5197 = vmatmul.bf16.gmra.mxu0 %v3037
      %v5198 = vpop.f32.mrf.mxu0
      %v5199 = vadd.f32 0.0, %v5198
      %v5200 = vpop.f32.mrf.mxu0
      %v5201 = vadd.f32 0.0, %v5200
      %5202 = vmatmul.bf16.gmra.mxu0 %v3038
      %v5203 = vpop.f32.mrf.mxu0
      %v5204 = vadd.f32 0.0, %v5203
      %v5205 = vpop.f32.mrf.mxu0
      %v5206 = vadd.f32 0.0, %v5205
      %5207 = vmatmul.bf16.gmra.mxu0 %v3039
      %v5208 = vpop.f32.mrf.mxu0
      %v5209 = vadd.f32 0.0, %v5208
      %v5210 = vpop.f32.mrf.mxu0
      %v5211 = vadd.f32 0.0, %v5210
      %5212 = vmatmul.bf16.gmra.mxu0 %v3040
      %v5213 = vpop.f32.mrf.mxu0
      %v5214 = vadd.f32 0.0, %v5213
      %v5215 = vpop.f32.mrf.mxu0
      %v5216 = vadd.f32 0.0, %v5215
      %5217 = vmatmul.bf16.gmra.mxu0 %v3041
      %v5218 = vpop.f32.mrf.mxu0
      %v5219 = vadd.f32 0.0, %v5218
      %v5220 = vpop.f32.mrf.mxu0
      %v5221 = vadd.f32 0.0, %v5220
      %5222 = vmatmul.bf16.gmra.mxu0 %v3042
      %v5223 = vpop.f32.mrf.mxu0
      %v5224 = vadd.f32 0.0, %v5223
      %v5225 = vpop.f32.mrf.mxu0
      %v5226 = vadd.f32 0.0, %v5225
      %5227 = vmatmul.bf16.gmra.mxu0 %v3043
      %v5228 = vpop.f32.mrf.mxu0
      %v5229 = vadd.f32 0.0, %v5228
      %v5230 = vpop.f32.mrf.mxu0
      %v5231 = vadd.f32 0.0, %v5230
      %5232 = vdwg.mxu0
      %v5233 = vperm.slane %v5119, 0
      %v5234 = vadd.f32 %v5233, %v5194
      %v5235 = vadd.f32 %v5233, %v5196
      %v5236 = vadd.f32 %v5233, %v5199
      %v5237 = vadd.f32 %v5233, %v5201
      %v5238 = vadd.f32 %v5233, %v5204
      %v5239 = vadd.f32 %v5233, %v5206
      %v5240 = vadd.f32 %v5233, %v5209
      %v5241 = vadd.f32 %v5233, %v5211
      %v5242 = vadd.f32 %v5233, %v5214
      %v5243 = vadd.f32 %v5233, %v5216
      %v5244 = vadd.f32 %v5233, %v5219
      %v5245 = vadd.f32 %v5233, %v5221
      %v5246 = vadd.f32 %v5233, %v5224
      %v5247 = vadd.f32 %v5233, %v5226
      %v5248 = vadd.f32 %v5233, %v5229
      %v5249 = vadd.f32 %v5233, %v5231
      %v5250 = vpack.c.bf16 %v5082, %v5080
      %v5251 = vpack.c.bf16 %v5087, %v5085
      %v5252 = vpack.c.bf16 %v5092, %v5090
      %v5253 = vpack.c.bf16 %v5097, %v5095
      %v5254 = vpack.c.bf16 %v5102, %v5100
      %v5255 = vpack.c.bf16 %v5107, %v5105
      %v5256 = vpack.c.bf16 %v5112, %v5110
      %v5257 = vpack.c.bf16 %v5117, %v5115
      %v5258 = vld [vmem:[%s3 + $0x300] sm:$0xf]
      %v5259 = vld [vmem:[%s3 + $0x304] sm:$0xf]
      %v5260 = vld [vmem:[%s3 + $0x308] sm:$0xf]
      %v5261 = vld [vmem:[%s3 + $0x30c] sm:$0xf]
      %v5262 = vld [vmem:[%s3 + $0x310] sm:$0xf]
      %v5263 = vld [vmem:[%s3 + $0x314] sm:$0xf]
      %v5264 = vld [vmem:[%s3 + $0x318] sm:$0xf]
      %v5265 = vld [vmem:[%s3 + $0x31c] sm:$0xf]
      %v5266 = vld [vmem:[%s3 + $0x320] sm:$0xf]
      %v5267 = vld [vmem:[%s3 + $0x324] sm:$0xf]
      %v5268 = vld [vmem:[%s3 + $0x328] sm:$0xf]
      %v5269 = vld [vmem:[%s3 + $0x32c] sm:$0xf]
      %v5270 = vld [vmem:[%s3 + $0x330] sm:$0xf]
      %v5271 = vld [vmem:[%s3 + $0x334] sm:$0xf]
      %v5272 = vld [vmem:[%s3 + $0x338] sm:$0xf]
      %v5273 = vld [vmem:[%s3 + $0x33c] sm:$0xf]
      %v5290 = vunpack.c.l.b16 %v5258
      %v5291 = vunpack.c.l.b16 %v5259
      %v5292 = vunpack.c.l.b16 %v5260
      %v5293 = vunpack.c.l.b16 %v5261
      %v5294 = vunpack.c.l.b16 %v5262
      %v5295 = vunpack.c.l.b16 %v5263
      %v5296 = vunpack.c.l.b16 %v5264
      %v5297 = vunpack.c.l.b16 %v5265
      %v5298 = vunpack.c.l.b16 %v5266
      %v5299 = vunpack.c.l.b16 %v5267
      %v5300 = vunpack.c.l.b16 %v5268
      %v5301 = vunpack.c.l.b16 %v5269
      %v5302 = vunpack.c.l.b16 %v5270
      %v5303 = vunpack.c.l.b16 %v5271
      %v5304 = vunpack.c.l.b16 %v5272
      %v5305 = vunpack.c.l.b16 %v5273
      %v5306 = vpack.c.b16 %v5291, %v5290
      %v5307 = vpack.c.b16 %v5293, %v5292
      %v5308 = vpack.c.b16 %v5295, %v5294
      %v5309 = vpack.c.b16 %v5297, %v5296
      %v5310 = vpack.c.b16 %v5299, %v5298
      %v5311 = vpack.c.b16 %v5301, %v5300
      %v5312 = vpack.c.b16 %v5303, %v5302
      %v5313 = vpack.c.b16 %v5305, %v5304
      %5322 = vmatpush.bf16.msra.mxu0 %v5313
      %5323 = vmatpush.bf16.msra.mxu0 %v5312
      %5324 = vmatpush.bf16.msra.mxu0 %v5311
      %5325 = vmatpush.bf16.msra.mxu0 %v5310
      %5326 = vmatpush.bf16.msra.mxu0 %v5309
      %5327 = vmatpush.bf16.msra.mxu0 %v5308
      %5328 = vmatpush.bf16.msra.mxu0 %v5307
      %5329 = vmatpush.bf16.msra.mxu0 %v5306
      %5330 = vmatmul.bf16.gmra.mxu0 %v5250
      %v5331 = vpop.f32.mrf.mxu0
      %v5332 = vadd.f32 0.0, %v5331
      %v5333 = vpop.f32.mrf.mxu0
      %v5334 = vadd.f32 0.0, %v5333
      %5335 = vmatmul.bf16.gmra.mxu0 %v5251
      %v5336 = vpop.f32.mrf.mxu0
      %v5337 = vadd.f32 0.0, %v5336
      %v5338 = vpop.f32.mrf.mxu0
      %v5339 = vadd.f32 0.0, %v5338
      %5340 = vmatmul.bf16.gmra.mxu0 %v5252
      %v5341 = vpop.f32.mrf.mxu0
      %v5342 = vadd.f32 0.0, %v5341
      %v5343 = vpop.f32.mrf.mxu0
      %v5344 = vadd.f32 0.0, %v5343
      %5345 = vmatmul.bf16.gmra.mxu0 %v5253
      %v5346 = vpop.f32.mrf.mxu0
      %v5347 = vadd.f32 0.0, %v5346
      %v5348 = vpop.f32.mrf.mxu0
      %v5349 = vadd.f32 0.0, %v5348
      %5350 = vmatmul.bf16.gmra.mxu0 %v5254
      %v5351 = vpop.f32.mrf.mxu0
      %v5352 = vadd.f32 0.0, %v5351
      %v5353 = vpop.f32.mrf.mxu0
      %v5354 = vadd.f32 0.0, %v5353
      %5355 = vmatmul.bf16.gmra.mxu0 %v5255
      %v5356 = vpop.f32.mrf.mxu0
      %v5357 = vadd.f32 0.0, %v5356
      %v5358 = vpop.f32.mrf.mxu0
      %v5359 = vadd.f32 0.0, %v5358
      %5360 = vmatmul.bf16.gmra.mxu0 %v5256
      %v5361 = vpop.f32.mrf.mxu0
      %v5362 = vadd.f32 0.0, %v5361
      %v5363 = vpop.f32.mrf.mxu0
      %v5364 = vadd.f32 0.0, %v5363
      %5365 = vmatmul.bf16.gmra.mxu0 %v5257
      %v5366 = vpop.f32.mrf.mxu0
      %v5367 = vadd.f32 0.0, %v5366
      %v5368 = vpop.f32.mrf.mxu0
      %v5369 = vadd.f32 0.0, %v5368
      %5370 = vdwg.mxu0
      %v5371 = vadd.f32 %v5234, %v5332
      %v5372 = vadd.f32 %v5235, %v5334
      %v5373 = vadd.f32 %v5236, %v5337
      %v5374 = vadd.f32 %v5237, %v5339
      %v5375 = vadd.f32 %v5238, %v5342
      %v5376 = vadd.f32 %v5239, %v5344
      %v5377 = vadd.f32 %v5240, %v5347
      %v5378 = vadd.f32 %v5241, %v5349
      %v5379 = vadd.f32 %v5242, %v5352
      %v5380 = vadd.f32 %v5243, %v5354
      %v5381 = vadd.f32 %v5244, %v5357
      %v5382 = vadd.f32 %v5245, %v5359
      %v5383 = vadd.f32 %v5246, %v5362
      %v5384 = vadd.f32 %v5247, %v5364
      %v5385 = vadd.f32 %v5248, %v5367
      %v5386 = vadd.f32 %v5249, %v5369
      %v5387 = vmax.f32 %v5371, 0.0
      %v5388 = vmax.f32 %v5372, 0.0
      %v5389 = vmax.f32 %v5373, 0.0
      %v5390 = vmax.f32 %v5374, 0.0
      %v5391 = vmax.f32 %v5375, 0.0
      %v5392 = vmax.f32 %v5376, 0.0
      %v5393 = vmax.f32 %v5377, 0.0
      %v5394 = vmax.f32 %v5378, 0.0
      %v5395 = vmax.f32 %v5379, 0.0
      %v5396 = vmax.f32 %v5380, 0.0
      %v5397 = vmax.f32 %v5381, 0.0
      %v5398 = vmax.f32 %v5382, 0.0
      %v5399 = vmax.f32 %v5383, 0.0
      %v5400 = vmax.f32 %v5384, 0.0
      %v5401 = vmax.f32 %v5385, 0.0
      %v5402 = vmax.f32 %v5386, 0.0
      %v5403 = vpack.c.bf16 %v5388, %v5387
      %v5404 = vpack.c.bf16 %v5390, %v5389
      %v5405 = vpack.c.bf16 %v5392, %v5391
      %v5406 = vpack.c.bf16 %v5394, %v5393
      %v5407 = vpack.c.bf16 %v5396, %v5395
      %v5408 = vpack.c.bf16 %v5398, %v5397
      %v5409 = vpack.c.bf16 %v5400, %v5399
      %v5410 = vpack.c.bf16 %v5402, %v5401
      %v5411 = vld [vmem:[%s3 + $0x340] sm:$0xf]
      %v5412 = vld [vmem:[%s3 + $0x344] sm:$0xf]
      %v5413 = vld [vmem:[%s3 + $0x348] sm:$0xf]
      %v5414 = vld [vmem:[%s3 + $0x34c] sm:$0xf]
      %v5415 = vld [vmem:[%s3 + $0x350] sm:$0xf]
      %v5416 = vld [vmem:[%s3 + $0x354] sm:$0xf]
      %v5417 = vld [vmem:[%s3 + $0x358] sm:$0xf]
      %v5418 = vld [vmem:[%s3 + $0x35c] sm:$0xf]
      %v5419 = vld [vmem:[%s3 + $0x360] sm:$0xf]
      %v5420 = vld [vmem:[%s3 + $0x364] sm:$0xf]
      %v5421 = vld [vmem:[%s3 + $0x368] sm:$0xf]
      %v5422 = vld [vmem:[%s3 + $0x36c] sm:$0xf]
      %v5423 = vld [vmem:[%s3 + $0x370] sm:$0xf]
      %v5424 = vld [vmem:[%s3 + $0x374] sm:$0xf]
      %v5425 = vld [vmem:[%s3 + $0x378] sm:$0xf]
      %v5426 = vld [vmem:[%s3 + $0x37c] sm:$0xf]
      %v5427 = vld [vmem:[%s4 + $0x10] sm:$0x1]
      %v5428 = vperm.slane %v5427, 0
      %v5445 = vunpack.c.l.b16 %v5411
      %v5446 = vunpack.c.l.b16 %v5412
      %v5447 = vunpack.c.l.b16 %v5413
      %v5448 = vunpack.c.l.b16 %v5414
      %v5449 = vunpack.c.l.b16 %v5415
      %v5450 = vunpack.c.l.b16 %v5416
      %v5451 = vunpack.c.l.b16 %v5417
      %v5452 = vunpack.c.l.b16 %v5418
      %v5453 = vunpack.c.l.b16 %v5419
      %v5454 = vunpack.c.l.b16 %v5420
      %v5455 = vunpack.c.l.b16 %v5421
      %v5456 = vunpack.c.l.b16 %v5422
      %v5457 = vunpack.c.l.b16 %v5423
      %v5458 = vunpack.c.l.b16 %v5424
      %v5459 = vunpack.c.l.b16 %v5425
      %v5460 = vunpack.c.l.b16 %v5426
      %v5461 = vpack.c.b16 %v5446, %v5445
      %v5462 = vpack.c.b16 %v5448, %v5447
      %v5463 = vpack.c.b16 %v5450, %v5449
      %v5464 = vpack.c.b16 %v5452, %v5451
      %v5465 = vpack.c.b16 %v5454, %v5453
      %v5466 = vpack.c.b16 %v5456, %v5455
      %v5467 = vpack.c.b16 %v5458, %v5457
      %v5468 = vpack.c.b16 %v5460, %v5459
      %5477 = vmatpush.bf16.msra.mxu0 %v5468
      %5478 = vmatpush.bf16.msra.mxu0 %v5467
      %5479 = vmatpush.bf16.msra.mxu0 %v5466
      %5480 = vmatpush.bf16.msra.mxu0 %v5465
      %5481 = vmatpush.bf16.msra.mxu0 %v5464
      %5482 = vmatpush.bf16.msra.mxu0 %v5463
      %5483 = vmatpush.bf16.msra.mxu0 %v5462
      %5484 = vmatpush.bf16.msra.mxu0 %v5461
      %5485 = vmatmul.bf16.gmra.mxu0 %v5403
      %v5486 = vpop.f32.mrf.mxu0
      %v5487 = vadd.f32 %v5428, %v5486
      %v5488 = vpop.f32.mrf.mxu0
      %v5489 = vadd.f32 %v5428, %v5488
      %5490 = vmatmul.bf16.gmra.mxu0 %v5404
      %v5491 = vpop.f32.mrf.mxu0
      %v5492 = vadd.f32 %v5428, %v5491
      %v5493 = vpop.f32.mrf.mxu0
      %v5494 = vadd.f32 %v5428, %v5493
      %5495 = vmatmul.bf16.gmra.mxu0 %v5405
      %v5496 = vpop.f32.mrf.mxu0
      %v5497 = vadd.f32 %v5428, %v5496
      %v5498 = vpop.f32.mrf.mxu0
      %v5499 = vadd.f32 %v5428, %v5498
      %5500 = vmatmul.bf16.gmra.mxu0 %v5406
      %v5501 = vpop.f32.mrf.mxu0
      %v5502 = vadd.f32 %v5428, %v5501
      %v5503 = vpop.f32.mrf.mxu0
      %v5504 = vadd.f32 %v5428, %v5503
      %5505 = vmatmul.bf16.gmra.mxu0 %v5407
      %v5506 = vpop.f32.mrf.mxu0
      %v5507 = vadd.f32 %v5428, %v5506
      %v5508 = vpop.f32.mrf.mxu0
      %v5509 = vadd.f32 %v5428, %v5508
      %5510 = vmatmul.bf16.gmra.mxu0 %v5408
      %v5511 = vpop.f32.mrf.mxu0
      %v5512 = vadd.f32 %v5428, %v5511
      %v5513 = vpop.f32.mrf.mxu0
      %v5514 = vadd.f32 %v5428, %v5513
      %5515 = vmatmul.bf16.gmra.mxu0 %v5409
      %v5516 = vpop.f32.mrf.mxu0
      %v5517 = vadd.f32 %v5428, %v5516
      %v5518 = vpop.f32.mrf.mxu0
      %v5519 = vadd.f32 %v5428, %v5518
      %5520 = vmatmul.bf16.gmra.mxu0 %v5410
      %v5521 = vpop.f32.mrf.mxu0
      %v5522 = vadd.f32 %v5428, %v5521
      %v5523 = vpop.f32.mrf.mxu0
      %v5524 = vadd.f32 %v5428, %v5523
      %5525 = vdwg.mxu0
      %v5526 = vmax.f32 %v5487, 0.0
      %v5527 = vmax.f32 %v5489, 0.0
      %v5528 = vmax.f32 %v5492, 0.0
      %v5529 = vmax.f32 %v5494, 0.0
      %v5530 = vmax.f32 %v5497, 0.0
      %v5531 = vmax.f32 %v5499, 0.0
      %v5532 = vmax.f32 %v5502, 0.0
      %v5533 = vmax.f32 %v5504, 0.0
      %v5534 = vmax.f32 %v5507, 0.0
      %v5535 = vmax.f32 %v5509, 0.0
      %v5536 = vmax.f32 %v5512, 0.0
      %v5537 = vmax.f32 %v5514, 0.0
      %v5538 = vmax.f32 %v5517, 0.0
      %v5539 = vmax.f32 %v5519, 0.0
      %v5540 = vmax.f32 %v5522, 0.0
      %v5541 = vmax.f32 %v5524, 0.0
      %v5542 = vpack.c.bf16 %v5527, %v5526
      %v5543 = vpack.c.bf16 %v5529, %v5528
      %v5544 = vpack.c.bf16 %v5531, %v5530
      %v5545 = vpack.c.bf16 %v5533, %v5532
      %v5546 = vpack.c.bf16 %v5535, %v5534
      %v5547 = vpack.c.bf16 %v5537, %v5536
      %v5548 = vpack.c.bf16 %v5539, %v5538
      %v5549 = vpack.c.bf16 %v5541, %v5540
      %v5550 = vld [vmem:[%s3 + $0x380] sm:$0xf]
      %v5551 = vld [vmem:[%s3 + $0x384] sm:$0xf]
      %v5552 = vld [vmem:[%s3 + $0x388] sm:$0xf]
      %v5553 = vld [vmem:[%s3 + $0x38c] sm:$0xf]
      %v5554 = vld [vmem:[%s3 + $0x390] sm:$0xf]
      %v5555 = vld [vmem:[%s3 + $0x394] sm:$0xf]
      %v5556 = vld [vmem:[%s3 + $0x398] sm:$0xf]
      %v5557 = vld [vmem:[%s3 + $0x39c] sm:$0xf]
      %v5558 = vld [vmem:[%s3 + $0x3a0] sm:$0xf]
      %v5559 = vld [vmem:[%s3 + $0x3a4] sm:$0xf]
      %v5560 = vld [vmem:[%s3 + $0x3a8] sm:$0xf]
      %v5561 = vld [vmem:[%s3 + $0x3ac] sm:$0xf]
      %v5562 = vld [vmem:[%s3 + $0x3b0] sm:$0xf]
      %v5563 = vld [vmem:[%s3 + $0x3b4] sm:$0xf]
      %v5564 = vld [vmem:[%s3 + $0x3b8] sm:$0xf]
      %v5565 = vld [vmem:[%s3 + $0x3bc] sm:$0xf]
      %v5566 = vld [vmem:[%s4 + $0x11] sm:$0x1]
      %v5567 = vperm.slane %v5566, 0
      %v5584 = vunpack.c.l.b16 %v5550
      %v5585 = vunpack.c.l.b16 %v5551
      %v5586 = vunpack.c.l.b16 %v5552
      %v5587 = vunpack.c.l.b16 %v5553
      %v5588 = vunpack.c.l.b16 %v5554
      %v5589 = vunpack.c.l.b16 %v5555
      %v5590 = vunpack.c.l.b16 %v5556
      %v5591 = vunpack.c.l.b16 %v5557
      %v5592 = vunpack.c.l.b16 %v5558
      %v5593 = vunpack.c.l.b16 %v5559
      %v5594 = vunpack.c.l.b16 %v5560
      %v5595 = vunpack.c.l.b16 %v5561
      %v5596 = vunpack.c.l.b16 %v5562
      %v5597 = vunpack.c.l.b16 %v5563
      %v5598 = vunpack.c.l.b16 %v5564
      %v5599 = vunpack.c.l.b16 %v5565
      %v5600 = vpack.c.b16 %v5585, %v5584
      %v5601 = vpack.c.b16 %v5587, %v5586
      %v5602 = vpack.c.b16 %v5589, %v5588
      %v5603 = vpack.c.b16 %v5591, %v5590
      %v5604 = vpack.c.b16 %v5593, %v5592
      %v5605 = vpack.c.b16 %v5595, %v5594
      %v5606 = vpack.c.b16 %v5597, %v5596
      %v5607 = vpack.c.b16 %v5599, %v5598
      %5616 = vmatpush.bf16.msra.mxu0 %v5607
      %5617 = vmatpush.bf16.msra.mxu0 %v5606
      %5618 = vmatpush.bf16.msra.mxu0 %v5605
      %5619 = vmatpush.bf16.msra.mxu0 %v5604
      %5620 = vmatpush.bf16.msra.mxu0 %v5603
      %5621 = vmatpush.bf16.msra.mxu0 %v5602
      %5622 = vmatpush.bf16.msra.mxu0 %v5601
      %5623 = vmatpush.bf16.msra.mxu0 %v5600
      %5624 = vmatmul.bf16.gmra.mxu0 %v5542
      %v5625 = vpop.f32.mrf.mxu0
      %v5626 = vadd.f32 %v5567, %v5625
      %v5627 = vpop.f32.mrf.mxu0
      %v5628 = vadd.f32 %v5567, %v5627
      %5629 = vmatmul.bf16.gmra.mxu0 %v5543
      %v5630 = vpop.f32.mrf.mxu0
      %v5631 = vadd.f32 %v5567, %v5630
      %v5632 = vpop.f32.mrf.mxu0
      %v5633 = vadd.f32 %v5567, %v5632
      %5634 = vmatmul.bf16.gmra.mxu0 %v5544
      %v5635 = vpop.f32.mrf.mxu0
      %v5636 = vadd.f32 %v5567, %v5635
      %v5637 = vpop.f32.mrf.mxu0
      %v5638 = vadd.f32 %v5567, %v5637
      %5639 = vmatmul.bf16.gmra.mxu0 %v5545
      %v5640 = vpop.f32.mrf.mxu0
      %v5641 = vadd.f32 %v5567, %v5640
      %v5642 = vpop.f32.mrf.mxu0
      %v5643 = vadd.f32 %v5567, %v5642
      %5644 = vmatmul.bf16.gmra.mxu0 %v5546
      %v5645 = vpop.f32.mrf.mxu0
      %v5646 = vadd.f32 %v5567, %v5645
      %v5647 = vpop.f32.mrf.mxu0
      %v5648 = vadd.f32 %v5567, %v5647
      %5649 = vmatmul.bf16.gmra.mxu0 %v5547
      %v5650 = vpop.f32.mrf.mxu0
      %v5651 = vadd.f32 %v5567, %v5650
      %v5652 = vpop.f32.mrf.mxu0
      %v5653 = vadd.f32 %v5567, %v5652
      %5654 = vmatmul.bf16.gmra.mxu0 %v5548
      %v5655 = vpop.f32.mrf.mxu0
      %v5656 = vadd.f32 %v5567, %v5655
      %v5657 = vpop.f32.mrf.mxu0
      %v5658 = vadd.f32 %v5567, %v5657
      %5659 = vmatmul.bf16.gmra.mxu0 %v5549
      %v5660 = vpop.f32.mrf.mxu0
      %v5661 = vadd.f32 %v5567, %v5660
      %v5662 = vpop.f32.mrf.mxu0
      %v5663 = vadd.f32 %v5567, %v5662
      %5664 = vdwg.mxu0
      %5665 = vadd.xlane.f32.xlu0 %v5626
      %v5666 = vpop.xlane.xlu0 %5665
      %5667 = vadd.xlane.f32.xlu0 %v5628
      %v5668 = vpop.xlane.xlu0 %5667
      %5669 = vadd.xlane.f32.xlu0 %v5631
      %v5670 = vpop.xlane.xlu0 %5669
      %5671 = vadd.xlane.f32.xlu0 %v5633
      %v5672 = vpop.xlane.xlu0 %5671
      %5673 = vadd.xlane.f32.xlu0 %v5636
      %v5674 = vpop.xlane.xlu0 %5673
      %5675 = vadd.xlane.f32.xlu0 %v5638
      %v5676 = vpop.xlane.xlu0 %5675
      %5677 = vadd.xlane.f32.xlu0 %v5641
      %v5678 = vpop.xlane.xlu0 %5677
      %5679 = vadd.xlane.f32.xlu0 %v5643
      %v5680 = vpop.xlane.xlu0 %5679
      %5681 = vadd.xlane.f32.xlu0 %v5646
      %v5682 = vpop.xlane.xlu0 %5681
      %5683 = vadd.xlane.f32.xlu0 %v5648
      %v5684 = vpop.xlane.xlu0 %5683
      %5685 = vadd.xlane.f32.xlu0 %v5651
      %v5686 = vpop.xlane.xlu0 %5685
      %5687 = vadd.xlane.f32.xlu0 %v5653
      %v5688 = vpop.xlane.xlu0 %5687
      %5689 = vadd.xlane.f32.xlu0 %v5656
      %v5690 = vpop.xlane.xlu0 %5689
      %5691 = vadd.xlane.f32.xlu0 %v5658
      %v5692 = vpop.xlane.xlu0 %5691
      %5693 = vadd.xlane.f32.xlu0 %v5661
      %v5694 = vpop.xlane.xlu0 %5693
      %5695 = vadd.xlane.f32.xlu0 %v5663
      %v5696 = vpop.xlane.xlu0 %5695
      %v5697 = vmul.f32 %v5666, 0.03125
      %v5698 = vmul.f32 %v5668, 0.03125
      %v5699 = vmul.f32 %v5670, 0.03125
      %v5700 = vmul.f32 %v5672, 0.03125
      %v5701 = vmul.f32 %v5674, 0.03125
      %v5702 = vmul.f32 %v5676, 0.03125
      %v5703 = vmul.f32 %v5678, 0.03125
      %v5704 = vmul.f32 %v5680, 0.03125
      %v5705 = vmul.f32 %v5682, 0.03125
      %v5706 = vmul.f32 %v5684, 0.03125
      %v5707 = vmul.f32 %v5686, 0.03125
      %v5708 = vmul.f32 %v5688, 0.03125
      %v5709 = vmul.f32 %v5690, 0.03125
      %v5710 = vmul.f32 %v5692, 0.03125
      %v5711 = vmul.f32 %v5694, 0.03125
      %v5712 = vmul.f32 %v5696, 0.03125
      %v5713 = vmul.f32 %v5626, %v5626
      %v5714 = vmul.f32 %v5628, %v5628
      %v5715 = vmul.f32 %v5631, %v5631
      %v5716 = vmul.f32 %v5633, %v5633
      %v5717 = vmul.f32 %v5636, %v5636
      %v5718 = vmul.f32 %v5638, %v5638
      %v5719 = vmul.f32 %v5641, %v5641
      %v5720 = vmul.f32 %v5643, %v5643
      %v5721 = vmul.f32 %v5646, %v5646
      %v5722 = vmul.f32 %v5648, %v5648
      %v5723 = vmul.f32 %v5651, %v5651
      %v5724 = vmul.f32 %v5653, %v5653
      %v5725 = vmul.f32 %v5656, %v5656
      %v5726 = vmul.f32 %v5658, %v5658
      %v5727 = vmul.f32 %v5661, %v5661
      %v5728 = vmul.f32 %v5663, %v5663
      %5729 = vadd.xlane.f32.xlu0 %v5713
      %v5730 = vpop.xlane.xlu0 %5729
      %5731 = vadd.xlane.f32.xlu0 %v5714
      %v5732 = vpop.xlane.xlu0 %5731
      %5733 = vadd.xlane.f32.xlu0 %v5715
      %v5734 = vpop.xlane.xlu0 %5733
      %5735 = vadd.xlane.f32.xlu0 %v5716
      %v5736 = vpop.xlane.xlu0 %5735
      %5737 = vadd.xlane.f32.xlu0 %v5717
      %v5738 = vpop.xlane.xlu0 %5737
      %5739 = vadd.xlane.f32.xlu0 %v5718
      %v5740 = vpop.xlane.xlu0 %5739
      %5741 = vadd.xlane.f32.xlu0 %v5719
      %v5742 = vpop.xlane.xlu0 %5741
      %5743 = vadd.xlane.f32.xlu0 %v5720
      %v5744 = vpop.xlane.xlu0 %5743
      %5745 = vadd.xlane.f32.xlu0 %v5721
      %v5746 = vpop.xlane.xlu0 %5745
      %5747 = vadd.xlane.f32.xlu0 %v5722
      %v5748 = vpop.xlane.xlu0 %5747
      %5749 = vadd.xlane.f32.xlu0 %v5723
      %v5750 = vpop.xlane.xlu0 %5749
      %5751 = vadd.xlane.f32.xlu0 %v5724
      %v5752 = vpop.xlane.xlu0 %5751
      %5753 = vadd.xlane.f32.xlu0 %v5725
      %v5754 = vpop.xlane.xlu0 %5753
      %5755 = vadd.xlane.f32.xlu0 %v5726
      %v5756 = vpop.xlane.xlu0 %5755
      %5757 = vadd.xlane.f32.xlu0 %v5727
      %v5758 = vpop.xlane.xlu0 %5757
      %5759 = vadd.xlane.f32.xlu0 %v5728
      %v5760 = vpop.xlane.xlu0 %5759
      %v5761 = vmul.f32 %v5730, 0.03125
      %v5762 = vmul.f32 %v5732, 0.03125
      %v5763 = vmul.f32 %v5734, 0.03125
      %v5764 = vmul.f32 %v5736, 0.03125
      %v5765 = vmul.f32 %v5738, 0.03125
      %v5766 = vmul.f32 %v5740, 0.03125
      %v5767 = vmul.f32 %v5742, 0.03125
      %v5768 = vmul.f32 %v5744, 0.03125
      %v5769 = vmul.f32 %v5746, 0.03125
      %v5770 = vmul.f32 %v5748, 0.03125
      %v5771 = vmul.f32 %v5750, 0.03125
      %v5772 = vmul.f32 %v5752, 0.03125
      %v5773 = vmul.f32 %v5754, 0.03125
      %v5774 = vmul.f32 %v5756, 0.03125
      %v5775 = vmul.f32 %v5758, 0.03125
      %v5776 = vmul.f32 %v5760, 0.03125
      %v5777 = vmul.f32 %v5697, %v5697
      %v5778 = vmul.f32 %v5698, %v5698
      %v5779 = vmul.f32 %v5699, %v5699
      %v5780 = vmul.f32 %v5700, %v5700
      %v5781 = vmul.f32 %v5701, %v5701
      %v5782 = vmul.f32 %v5702, %v5702
      %v5783 = vmul.f32 %v5703, %v5703
      %v5784 = vmul.f32 %v5704, %v5704
      %v5785 = vmul.f32 %v5705, %v5705
      %v5786 = vmul.f32 %v5706, %v5706
      %v5787 = vmul.f32 %v5707, %v5707
      %v5788 = vmul.f32 %v5708, %v5708
      %v5789 = vmul.f32 %v5709, %v5709
      %v5790 = vmul.f32 %v5710, %v5710
      %v5791 = vmul.f32 %v5711, %v5711
      %v5792 = vmul.f32 %v5712, %v5712
      %v5793 = vsub.f32 %v5761, %v5777
      %v5794 = vsub.f32 %v5762, %v5778
      %v5795 = vsub.f32 %v5763, %v5779
      %v5796 = vsub.f32 %v5764, %v5780
      %v5797 = vsub.f32 %v5765, %v5781
      %v5798 = vsub.f32 %v5766, %v5782
      %v5799 = vsub.f32 %v5767, %v5783
      %v5800 = vsub.f32 %v5768, %v5784
      %v5801 = vsub.f32 %v5769, %v5785
      %v5802 = vsub.f32 %v5770, %v5786
      %v5803 = vsub.f32 %v5771, %v5787
      %v5804 = vsub.f32 %v5772, %v5788
      %v5805 = vsub.f32 %v5773, %v5789
      %v5806 = vsub.f32 %v5774, %v5790
      %v5807 = vsub.f32 %v5775, %v5791
      %v5808 = vsub.f32 %v5776, %v5792
      %v5809 = vadd.f32 %v5793, 1e-05
      %v5810 = vadd.f32 %v5794, 1e-05
      %v5811 = vadd.f32 %v5795, 1e-05
      %v5812 = vadd.f32 %v5796, 1e-05
      %v5813 = vadd.f32 %v5797, 1e-05
      %v5814 = vadd.f32 %v5798, 1e-05
      %v5815 = vadd.f32 %v5799, 1e-05
      %v5816 = vadd.f32 %v5800, 1e-05
      %v5817 = vadd.f32 %v5801, 1e-05
      %v5818 = vadd.f32 %v5802, 1e-05
      %v5819 = vadd.f32 %v5803, 1e-05
      %v5820 = vadd.f32 %v5804, 1e-05
      %v5821 = vadd.f32 %v5805, 1e-05
      %v5822 = vadd.f32 %v5806, 1e-05
      %v5823 = vadd.f32 %v5807, 1e-05
      %v5824 = vadd.f32 %v5808, 1e-05
      %v5825 = vrsqrt.pop %v5809
      %v5826 = vmul.f32 %v5825, %v5809
      %v5827 = vmul.f32 %v5826, %v5825
      %v5828 = vmul.f32 0.5, %v5827
      %v5829 = vsub.f32 1.5, %v5828
      %v5830 = vmul.f32 %v5825, %v5829
      %vm5831 = vweird.f32 %v5809
      %vm5832 = vweird.f32 %v5825
      %vm5833 = vmor %vm5831, %vm5832
      %v5834 = vsel %vm5833, %v5825, %v5830
      %v5835 = vrsqrt.pop %v5810
      %v5836 = vmul.f32 %v5835, %v5810
      %v5837 = vmul.f32 %v5836, %v5835
      %v5838 = vmul.f32 0.5, %v5837
      %v5839 = vsub.f32 1.5, %v5838
      %v5840 = vmul.f32 %v5835, %v5839
      %vm5841 = vweird.f32 %v5810
      %vm5842 = vweird.f32 %v5835
      %vm5843 = vmor %vm5841, %vm5842
      %v5844 = vsel %vm5843, %v5835, %v5840
      %v5845 = vrsqrt.pop %v5811
      %v5846 = vmul.f32 %v5845, %v5811
      %v5847 = vmul.f32 %v5846, %v5845
      %v5848 = vmul.f32 0.5, %v5847
      %v5849 = vsub.f32 1.5, %v5848
      %v5850 = vmul.f32 %v5845, %v5849
      %vm5851 = vweird.f32 %v5811
      %vm5852 = vweird.f32 %v5845
      %vm5853 = vmor %vm5851, %vm5852
      %v5854 = vsel %vm5853, %v5845, %v5850
      %v5855 = vrsqrt.pop %v5812
      %v5856 = vmul.f32 %v5855, %v5812
      %v5857 = vmul.f32 %v5856, %v5855
      %v5858 = vmul.f32 0.5, %v5857
      %v5859 = vsub.f32 1.5, %v5858
      %v5860 = vmul.f32 %v5855, %v5859
      %vm5861 = vweird.f32 %v5812
      %vm5862 = vweird.f32 %v5855
      %vm5863 = vmor %vm5861, %vm5862
      %v5864 = vsel %vm5863, %v5855, %v5860
      %v5865 = vrsqrt.pop %v5813
      %v5866 = vmul.f32 %v5865, %v5813
      %v5867 = vmul.f32 %v5866, %v5865
      %v5868 = vmul.f32 0.5, %v5867
      %v5869 = vsub.f32 1.5, %v5868
      %v5870 = vmul.f32 %v5865, %v5869
      %vm5871 = vweird.f32 %v5813
      %vm5872 = vweird.f32 %v5865
      %vm5873 = vmor %vm5871, %vm5872
      %v5874 = vsel %vm5873, %v5865, %v5870
      %v5875 = vrsqrt.pop %v5814
      %v5876 = vmul.f32 %v5875, %v5814
      %v5877 = vmul.f32 %v5876, %v5875
      %v5878 = vmul.f32 0.5, %v5877
      %v5879 = vsub.f32 1.5, %v5878
      %v5880 = vmul.f32 %v5875, %v5879
      %vm5881 = vweird.f32 %v5814
      %vm5882 = vweird.f32 %v5875
      %vm5883 = vmor %vm5881, %vm5882
      %v5884 = vsel %vm5883, %v5875, %v5880
      %v5885 = vrsqrt.pop %v5815
      %v5886 = vmul.f32 %v5885, %v5815
      %v5887 = vmul.f32 %v5886, %v5885
      %v5888 = vmul.f32 0.5, %v5887
      %v5889 = vsub.f32 1.5, %v5888
      %v5890 = vmul.f32 %v5885, %v5889
      %vm5891 = vweird.f32 %v5815
      %vm5892 = vweird.f32 %v5885
      %vm5893 = vmor %vm5891, %vm5892
      %v5894 = vsel %vm5893, %v5885, %v5890
      %v5895 = vrsqrt.pop %v5816
      %v5896 = vmul.f32 %v5895, %v5816
      %v5897 = vmul.f32 %v5896, %v5895
      %v5898 = vmul.f32 0.5, %v5897
      %v5899 = vsub.f32 1.5, %v5898
      %v5900 = vmul.f32 %v5895, %v5899
      %vm5901 = vweird.f32 %v5816
      %vm5902 = vweird.f32 %v5895
      %vm5903 = vmor %vm5901, %vm5902
      %v5904 = vsel %vm5903, %v5895, %v5900
      %v5905 = vrsqrt.pop %v5817
      %v5906 = vmul.f32 %v5905, %v5817
      %v5907 = vmul.f32 %v5906, %v5905
      %v5908 = vmul.f32 0.5, %v5907
      %v5909 = vsub.f32 1.5, %v5908
      %v5910 = vmul.f32 %v5905, %v5909
      %vm5911 = vweird.f32 %v5817
      %vm5912 = vweird.f32 %v5905
      %vm5913 = vmor %vm5911, %vm5912
      %v5914 = vsel %vm5913, %v5905, %v5910
      %v5915 = vrsqrt.pop %v5818
      %v5916 = vmul.f32 %v5915, %v5818
      %v5917 = vmul.f32 %v5916, %v5915
      %v5918 = vmul.f32 0.5, %v5917
      %v5919 = vsub.f32 1.5, %v5918
      %v5920 = vmul.f32 %v5915, %v5919
      %vm5921 = vweird.f32 %v5818
      %vm5922 = vweird.f32 %v5915
      %vm5923 = vmor %vm5921, %vm5922
      %v5924 = vsel %vm5923, %v5915, %v5920
      %v5925 = vrsqrt.pop %v5819
      %v5926 = vmul.f32 %v5925, %v5819
      %v5927 = vmul.f32 %v5926, %v5925
      %v5928 = vmul.f32 0.5, %v5927
      %v5929 = vsub.f32 1.5, %v5928
      %v5930 = vmul.f32 %v5925, %v5929
      %vm5931 = vweird.f32 %v5819
      %vm5932 = vweird.f32 %v5925
      %vm5933 = vmor %vm5931, %vm5932
      %v5934 = vsel %vm5933, %v5925, %v5930
      %v5935 = vrsqrt.pop %v5820
      %v5936 = vmul.f32 %v5935, %v5820
      %v5937 = vmul.f32 %v5936, %v5935
      %v5938 = vmul.f32 0.5, %v5937
      %v5939 = vsub.f32 1.5, %v5938
      %v5940 = vmul.f32 %v5935, %v5939
      %vm5941 = vweird.f32 %v5820
      %vm5942 = vweird.f32 %v5935
      %vm5943 = vmor %vm5941, %vm5942
      %v5944 = vsel %vm5943, %v5935, %v5940
      %v5945 = vrsqrt.pop %v5821
      %v5946 = vmul.f32 %v5945, %v5821
      %v5947 = vmul.f32 %v5946, %v5945
      %v5948 = vmul.f32 0.5, %v5947
      %v5949 = vsub.f32 1.5, %v5948
      %v5950 = vmul.f32 %v5945, %v5949
      %vm5951 = vweird.f32 %v5821
      %vm5952 = vweird.f32 %v5945
      %vm5953 = vmor %vm5951, %vm5952
      %v5954 = vsel %vm5953, %v5945, %v5950
      %v5955 = vrsqrt.pop %v5822
      %v5956 = vmul.f32 %v5955, %v5822
      %v5957 = vmul.f32 %v5956, %v5955
      %v5958 = vmul.f32 0.5, %v5957
      %v5959 = vsub.f32 1.5, %v5958
      %v5960 = vmul.f32 %v5955, %v5959
      %vm5961 = vweird.f32 %v5822
      %vm5962 = vweird.f32 %v5955
      %vm5963 = vmor %vm5961, %vm5962
      %v5964 = vsel %vm5963, %v5955, %v5960
      %v5965 = vrsqrt.pop %v5823
      %v5966 = vmul.f32 %v5965, %v5823
      %v5967 = vmul.f32 %v5966, %v5965
      %v5968 = vmul.f32 0.5, %v5967
      %v5969 = vsub.f32 1.5, %v5968
      %v5970 = vmul.f32 %v5965, %v5969
      %vm5971 = vweird.f32 %v5823
      %vm5972 = vweird.f32 %v5965
      %vm5973 = vmor %vm5971, %vm5972
      %v5974 = vsel %vm5973, %v5965, %v5970
      %v5975 = vrsqrt.pop %v5824
      %v5976 = vmul.f32 %v5975, %v5824
      %v5977 = vmul.f32 %v5976, %v5975
      %v5978 = vmul.f32 0.5, %v5977
      %v5979 = vsub.f32 1.5, %v5978
      %v5980 = vmul.f32 %v5975, %v5979
      %vm5981 = vweird.f32 %v5824
      %vm5982 = vweird.f32 %v5975
      %vm5983 = vmor %vm5981, %vm5982
      %v5984 = vsel %vm5983, %v5975, %v5980
      %v5985 = vsub.f32 %v5626, %v5697
      %v5986 = vsub.f32 %v5628, %v5698
      %v5987 = vsub.f32 %v5631, %v5699
      %v5988 = vsub.f32 %v5633, %v5700
      %v5989 = vsub.f32 %v5636, %v5701
      %v5990 = vsub.f32 %v5638, %v5702
      %v5991 = vsub.f32 %v5641, %v5703
      %v5992 = vsub.f32 %v5643, %v5704
      %v5993 = vsub.f32 %v5646, %v5705
      %v5994 = vsub.f32 %v5648, %v5706
      %v5995 = vsub.f32 %v5651, %v5707
      %v5996 = vsub.f32 %v5653, %v5708
      %v5997 = vsub.f32 %v5656, %v5709
      %v5998 = vsub.f32 %v5658, %v5710
      %v5999 = vsub.f32 %v5661, %v5711
      %v6000 = vsub.f32 %v5663, %v5712
      %v6001 = vmul.f32 %v5985, %v5834
      %v6002 = vmul.f32 %v5986, %v5844
      %v6003 = vmul.f32 %v5987, %v5854
      %v6004 = vmul.f32 %v5988, %v5864
      %v6005 = vmul.f32 %v5989, %v5874
      %v6006 = vmul.f32 %v5990, %v5884
      %v6007 = vmul.f32 %v5991, %v5894
      %v6008 = vmul.f32 %v5992, %v5904
      %v6009 = vmul.f32 %v5993, %v5914
      %v6010 = vmul.f32 %v5994, %v5924
      %v6011 = vmul.f32 %v5995, %v5934
      %v6012 = vmul.f32 %v5996, %v5944
      %v6013 = vmul.f32 %v5997, %v5954
      %v6014 = vmul.f32 %v5998, %v5964
      %v6015 = vmul.f32 %v5999, %v5974
      %v6016 = vmul.f32 %v6000, %v5984
      %v6017 = vld [vmem:[%s4 + $0x12] sm:$0x1]
      %v6018 = vperm.slane %v6017, 0
      %v6019 = vmul.f32 %v6001, %v6018
      %v6020 = vmul.f32 %v6002, %v6018
      %v6021 = vmul.f32 %v6003, %v6018
      %v6022 = vmul.f32 %v6004, %v6018
      %v6023 = vmul.f32 %v6005, %v6018
      %v6024 = vmul.f32 %v6006, %v6018
      %v6025 = vmul.f32 %v6007, %v6018
      %v6026 = vmul.f32 %v6008, %v6018
      %v6027 = vmul.f32 %v6009, %v6018
      %v6028 = vmul.f32 %v6010, %v6018
      %v6029 = vmul.f32 %v6011, %v6018
      %v6030 = vmul.f32 %v6012, %v6018
      %v6031 = vmul.f32 %v6013, %v6018
      %v6032 = vmul.f32 %v6014, %v6018
      %v6033 = vmul.f32 %v6015, %v6018
      %v6034 = vmul.f32 %v6016, %v6018
      %v6035 = vld [vmem:[%s4 + $0x13] sm:$0x1]
      %v6036 = vperm.slane %v6035, 0
      %v6037 = vadd.f32 %v6019, %v6036
      %v6038 = vadd.f32 %v6020, %v6036
      %v6039 = vadd.f32 %v6021, %v6036
      %v6040 = vadd.f32 %v6022, %v6036
      %v6041 = vadd.f32 %v6023, %v6036
      %v6042 = vadd.f32 %v6024, %v6036
      %v6043 = vadd.f32 %v6025, %v6036
      %v6044 = vadd.f32 %v6026, %v6036
      %v6045 = vadd.f32 %v6027, %v6036
      %v6046 = vadd.f32 %v6028, %v6036
      %v6047 = vadd.f32 %v6029, %v6036
      %v6048 = vadd.f32 %v6030, %v6036
      %v6049 = vadd.f32 %v6031, %v6036
      %v6050 = vadd.f32 %v6032, %v6036
      %v6051 = vadd.f32 %v6033, %v6036
      %v6052 = vadd.f32 %v6034, %v6036
      %v6053 = vadd.f32 %v1607, %v6037
      %v6054 = vadd.f32 %v1608, %v6038
      %v6055 = vadd.f32 %v1609, %v6039
      %v6056 = vadd.f32 %v1610, %v6040
      %v6057 = vadd.f32 %v1611, %v6041
      %v6058 = vadd.f32 %v1612, %v6042
      %v6059 = vadd.f32 %v1613, %v6043
      %v6060 = vadd.f32 %v1614, %v6044
      %v6061 = vadd.f32 %v1615, %v6045
      %v6062 = vadd.f32 %v1616, %v6046
      %v6063 = vadd.f32 %v1617, %v6047
      %v6064 = vadd.f32 %v1618, %v6048
      %v6065 = vadd.f32 %v1619, %v6049
      %v6066 = vadd.f32 %v1620, %v6050
      %v6067 = vadd.f32 %v1621, %v6051
      %v6068 = vadd.f32 %v1622, %v6052
      %v6069 = vadd.f32 %v3004, %v4973
      %v6070 = vadd.f32 %v3005, %v4974
      %v6071 = vadd.f32 %v3006, %v4975
      %v6072 = vadd.f32 %v3007, %v4976
      %v6073 = vadd.f32 %v3008, %v4977
      %v6074 = vadd.f32 %v3009, %v4978
      %v6075 = vadd.f32 %v3010, %v4979
      %v6076 = vadd.f32 %v3011, %v4980
      %v6077 = vadd.f32 %v3012, %v4981
      %v6078 = vadd.f32 %v3013, %v4982
      %v6079 = vadd.f32 %v3014, %v4983
      %v6080 = vadd.f32 %v3015, %v4984
      %v6081 = vadd.f32 %v3016, %v4985
      %v6082 = vadd.f32 %v3017, %v4986
      %v6083 = vadd.f32 %v3018, %v4987
      %v6084 = vadd.f32 %v3019, %v4988
      %v6085 = vadd.f32 %v3020, %v4989
      %v6086 = vadd.f32 %v3021, %v4990
      %v6087 = vadd.f32 %v3022, %v4991
      %v6088 = vadd.f32 %v3023, %v4992
      %v6089 = vadd.f32 %v3024, %v4993
      %v6090 = vadd.f32 %v3025, %v4994
      %v6091 = vadd.f32 %v3026, %v4995
      %v6092 = vadd.f32 %v3027, %v4996
      %v6093 = vadd.f32 %v3028, %v4997
      %v6094 = vadd.f32 %v3029, %v4998
      %v6095 = vadd.f32 %v3030, %v4999
      %v6096 = vadd.f32 %v3031, %v5000
      %v6097 = vadd.f32 %v3032, %v5001
      %v6098 = vadd.f32 %v3033, %v5002
      %v6099 = vadd.f32 %v3034, %v5003
      %v6100 = vadd.f32 %v3035, %v5004
      %v6101 = vpack.c.bf16 %v6054, %v6053
      %v6102 = vpack.c.bf16 %v6056, %v6055
      %v6103 = vpack.c.bf16 %v6058, %v6057
      %v6104 = vpack.c.bf16 %v6060, %v6059
      %v6105 = vpack.c.bf16 %v6062, %v6061
      %v6106 = vpack.c.bf16 %v6064, %v6063
      %v6107 = vpack.c.bf16 %v6066, %v6065
      %v6108 = vpack.c.bf16 %v6068, %v6067
      %6109 = vmatpush.bf16.msra.mxu0 %v6108
      %6110 = vmatpush.bf16.msra.mxu0 %v6107
      %6111 = vmatpush.bf16.msra.mxu0 %v6106
      %6112 = vmatpush.bf16.msra.mxu0 %v6105
      %6113 = vmatpush.bf16.msra.mxu0 %v6104
      %6114 = vmatpush.bf16.msra.mxu0 %v6103
      %6115 = vmatpush.bf16.msra.mxu0 %v6102
      %6116 = vmatpush.bf16.msra.mxu0 %v6101
      %6117 = vmatmul.bf16.gmra.mxu0 %v498
      %v6118 = vpop.f32.mrf.mxu0
      %v6119 = vadd.f32 0.0, %v6118
      %v6120 = vpop.f32.mrf.mxu0
      %v6121 = vadd.f32 0.0, %v6120
      %6122 = vmatmul.bf16.gmra.mxu0 %v499
      %v6123 = vpop.f32.mrf.mxu0
      %v6124 = vadd.f32 0.0, %v6123
      %v6125 = vpop.f32.mrf.mxu0
      %v6126 = vadd.f32 0.0, %v6125
      %6127 = vmatmul.bf16.gmra.mxu0 %v500
      %v6128 = vpop.f32.mrf.mxu0
      %v6129 = vadd.f32 0.0, %v6128
      %v6130 = vpop.f32.mrf.mxu0
      %v6131 = vadd.f32 0.0, %v6130
      %6132 = vmatmul.bf16.gmra.mxu0 %v501
      %v6133 = vpop.f32.mrf.mxu0
      %v6134 = vadd.f32 0.0, %v6133
      %v6135 = vpop.f32.mrf.mxu0
      %v6136 = vadd.f32 0.0, %v6135
      %6137 = vmatmul.bf16.gmra.mxu0 %v502
      %v6138 = vpop.f32.mrf.mxu0
      %v6139 = vadd.f32 0.0, %v6138
      %v6140 = vpop.f32.mrf.mxu0
      %v6141 = vadd.f32 0.0, %v6140
      %6142 = vmatmul.bf16.gmra.mxu0 %v503
      %v6143 = vpop.f32.mrf.mxu0
      %v6144 = vadd.f32 0.0, %v6143
      %v6145 = vpop.f32.mrf.mxu0
      %v6146 = vadd.f32 0.0, %v6145
      %6147 = vmatmul.bf16.gmra.mxu0 %v504
      %v6148 = vpop.f32.mrf.mxu0
      %v6149 = vadd.f32 0.0, %v6148
      %v6150 = vpop.f32.mrf.mxu0
      %v6151 = vadd.f32 0.0, %v6150
      %6152 = vmatmul.bf16.gmra.mxu0 %v505
      %v6153 = vpop.f32.mrf.mxu0
      %v6154 = vadd.f32 0.0, %v6153
      %v6155 = vpop.f32.mrf.mxu0
      %v6156 = vadd.f32 0.0, %v6155
      %6157 = vmatmul.bf16.gmra.mxu0 %v506
      %v6158 = vpop.f32.mrf.mxu0
      %v6159 = vadd.f32 0.0, %v6158
      %v6160 = vpop.f32.mrf.mxu0
      %v6161 = vadd.f32 0.0, %v6160
      %6162 = vmatmul.bf16.gmra.mxu0 %v507
      %v6163 = vpop.f32.mrf.mxu0
      %v6164 = vadd.f32 0.0, %v6163
      %v6165 = vpop.f32.mrf.mxu0
      %v6166 = vadd.f32 0.0, %v6165
      %6167 = vmatmul.bf16.gmra.mxu0 %v508
      %v6168 = vpop.f32.mrf.mxu0
      %v6169 = vadd.f32 0.0, %v6168
      %v6170 = vpop.f32.mrf.mxu0
      %v6171 = vadd.f32 0.0, %v6170
      %6172 = vmatmul.bf16.gmra.mxu0 %v509
      %v6173 = vpop.f32.mrf.mxu0
      %v6174 = vadd.f32 0.0, %v6173
      %v6175 = vpop.f32.mrf.mxu0
      %v6176 = vadd.f32 0.0, %v6175
      %6177 = vmatmul.bf16.gmra.mxu0 %v510
      %v6178 = vpop.f32.mrf.mxu0
      %v6179 = vadd.f32 0.0, %v6178
      %v6180 = vpop.f32.mrf.mxu0
      %v6181 = vadd.f32 0.0, %v6180
      %6182 = vmatmul.bf16.gmra.mxu0 %v511
      %v6183 = vpop.f32.mrf.mxu0
      %v6184 = vadd.f32 0.0, %v6183
      %v6185 = vpop.f32.mrf.mxu0
      %v6186 = vadd.f32 0.0, %v6185
      %6187 = vmatmul.bf16.gmra.mxu0 %v512
      %v6188 = vpop.f32.mrf.mxu0
      %v6189 = vadd.f32 0.0, %v6188
      %v6190 = vpop.f32.mrf.mxu0
      %v6191 = vadd.f32 0.0, %v6190
      %6192 = vmatmul.bf16.gmra.mxu0 %v513
      %v6193 = vpop.f32.mrf.mxu0
      %v6194 = vadd.f32 0.0, %v6193
      %v6195 = vpop.f32.mrf.mxu0
      %v6196 = vadd.f32 0.0, %v6195
      %6197 = vdwg.mxu0
      %6198 = vmatpush.bf16.msra.mxu0 %v6108
      %6199 = vmatpush.bf16.msra.mxu0 %v6107
      %6200 = vmatpush.bf16.msra.mxu0 %v6106
      %6201 = vmatpush.bf16.msra.mxu0 %v6105
      %6202 = vmatpush.bf16.msra.mxu0 %v6104
      %6203 = vmatpush.bf16.msra.mxu0 %v6103
      %6204 = vmatpush.bf16.msra.mxu0 %v6102
      %6205 = vmatpush.bf16.msra.mxu0 %v6101
      %6206 = vmatmul.bf16.gmra.mxu0 %v706
      %v6207 = vpop.f32.mrf.mxu0
      %v6208 = vadd.f32 0.0, %v6207
      %v6209 = vpop.f32.mrf.mxu0
      %v6210 = vadd.f32 0.0, %v6209
      %6211 = vmatmul.bf16.gmra.mxu0 %v707
      %v6212 = vpop.f32.mrf.mxu0
      %v6213 = vadd.f32 0.0, %v6212
      %v6214 = vpop.f32.mrf.mxu0
      %v6215 = vadd.f32 0.0, %v6214
      %6216 = vmatmul.bf16.gmra.mxu0 %v708
      %v6217 = vpop.f32.mrf.mxu0
      %v6218 = vadd.f32 0.0, %v6217
      %v6219 = vpop.f32.mrf.mxu0
      %v6220 = vadd.f32 0.0, %v6219
      %6221 = vmatmul.bf16.gmra.mxu0 %v709
      %v6222 = vpop.f32.mrf.mxu0
      %v6223 = vadd.f32 0.0, %v6222
      %v6224 = vpop.f32.mrf.mxu0
      %v6225 = vadd.f32 0.0, %v6224
      %6226 = vmatmul.bf16.gmra.mxu0 %v710
      %v6227 = vpop.f32.mrf.mxu0
      %v6228 = vadd.f32 0.0, %v6227
      %v6229 = vpop.f32.mrf.mxu0
      %v6230 = vadd.f32 0.0, %v6229
      %6231 = vmatmul.bf16.gmra.mxu0 %v711
      %v6232 = vpop.f32.mrf.mxu0
      %v6233 = vadd.f32 0.0, %v6232
      %v6234 = vpop.f32.mrf.mxu0
      %v6235 = vadd.f32 0.0, %v6234
      %6236 = vmatmul.bf16.gmra.mxu0 %v712
      %v6237 = vpop.f32.mrf.mxu0
      %v6238 = vadd.f32 0.0, %v6237
      %v6239 = vpop.f32.mrf.mxu0
      %v6240 = vadd.f32 0.0, %v6239
      %6241 = vmatmul.bf16.gmra.mxu0 %v713
      %v6242 = vpop.f32.mrf.mxu0
      %v6243 = vadd.f32 0.0, %v6242
      %v6244 = vpop.f32.mrf.mxu0
      %v6245 = vadd.f32 0.0, %v6244
      %6246 = vmatmul.bf16.gmra.mxu0 %v714
      %v6247 = vpop.f32.mrf.mxu0
      %v6248 = vadd.f32 0.0, %v6247
      %v6249 = vpop.f32.mrf.mxu0
      %v6250 = vadd.f32 0.0, %v6249
      %6251 = vmatmul.bf16.gmra.mxu0 %v715
      %v6252 = vpop.f32.mrf.mxu0
      %v6253 = vadd.f32 0.0, %v6252
      %v6254 = vpop.f32.mrf.mxu0
      %v6255 = vadd.f32 0.0, %v6254
      %6256 = vmatmul.bf16.gmra.mxu0 %v716
      %v6257 = vpop.f32.mrf.mxu0
      %v6258 = vadd.f32 0.0, %v6257
      %v6259 = vpop.f32.mrf.mxu0
      %v6260 = vadd.f32 0.0, %v6259
      %6261 = vmatmul.bf16.gmra.mxu0 %v717
      %v6262 = vpop.f32.mrf.mxu0
      %v6263 = vadd.f32 0.0, %v6262
      %v6264 = vpop.f32.mrf.mxu0
      %v6265 = vadd.f32 0.0, %v6264
      %6266 = vmatmul.bf16.gmra.mxu0 %v718
      %v6267 = vpop.f32.mrf.mxu0
      %v6268 = vadd.f32 0.0, %v6267
      %v6269 = vpop.f32.mrf.mxu0
      %v6270 = vadd.f32 0.0, %v6269
      %6271 = vmatmul.bf16.gmra.mxu0 %v719
      %v6272 = vpop.f32.mrf.mxu0
      %v6273 = vadd.f32 0.0, %v6272
      %v6274 = vpop.f32.mrf.mxu0
      %v6275 = vadd.f32 0.0, %v6274
      %6276 = vmatmul.bf16.gmra.mxu0 %v720
      %v6277 = vpop.f32.mrf.mxu0
      %v6278 = vadd.f32 0.0, %v6277
      %v6279 = vpop.f32.mrf.mxu0
      %v6280 = vadd.f32 0.0, %v6279
      %6281 = vmatmul.bf16.gmra.mxu0 %v721
      %v6282 = vpop.f32.mrf.mxu0
      %v6283 = vadd.f32 0.0, %v6282
      %v6284 = vpop.f32.mrf.mxu0
      %v6285 = vadd.f32 0.0, %v6284
      %6286 = vdwg.mxu0
      %v6287 = vld [vmem:[%s4 + $0x14] sm:$0x1]
      %v6288 = vpack.c.bf16 %v6121, %v6119
      %v6289 = vpack.c.bf16 %v6126, %v6124
      %v6290 = vpack.c.bf16 %v6131, %v6129
      %v6291 = vpack.c.bf16 %v6136, %v6134
      %v6292 = vpack.c.bf16 %v6141, %v6139
      %v6293 = vpack.c.bf16 %v6146, %v6144
      %v6294 = vpack.c.bf16 %v6151, %v6149
      %v6295 = vpack.c.bf16 %v6156, %v6154
      %v6296 = vpack.c.bf16 %v6161, %v6159
      %v6297 = vpack.c.bf16 %v6166, %v6164
      %v6298 = vpack.c.bf16 %v6171, %v6169
      %v6299 = vpack.c.bf16 %v6176, %v6174
      %v6300 = vpack.c.bf16 %v6181, %v6179
      %v6301 = vpack.c.bf16 %v6186, %v6184
      %v6302 = vpack.c.bf16 %v6191, %v6189
      %v6303 = vpack.c.bf16 %v6196, %v6194
      %v6304 = vld [vmem:[%s3 + $0x3c0] sm:$0xf]
      %v6305 = vld [vmem:[%s3 + $0x3c4] sm:$0xf]
      %v6306 = vld [vmem:[%s3 + $0x3c8] sm:$0xf]
      %v6307 = vld [vmem:[%s3 + $0x3cc] sm:$0xf]
      %v6308 = vld [vmem:[%s3 + $0x3d0] sm:$0xf]
      %v6309 = vld [vmem:[%s3 + $0x3d4] sm:$0xf]
      %v6310 = vld [vmem:[%s3 + $0x3d8] sm:$0xf]
      %v6311 = vld [vmem:[%s3 + $0x3dc] sm:$0xf]
      %v6312 = vld [vmem:[%s3 + $0x3e0] sm:$0xf]
      %v6313 = vld [vmem:[%s3 + $0x3e4] sm:$0xf]
      %v6314 = vld [vmem:[%s3 + $0x3e8] sm:$0xf]
      %v6315 = vld [vmem:[%s3 + $0x3ec] sm:$0xf]
      %v6316 = vld [vmem:[%s3 + $0x3f0] sm:$0xf]
      %v6317 = vld [vmem:[%s3 + $0x3f4] sm:$0xf]
      %v6318 = vld [vmem:[%s3 + $0x3f8] sm:$0xf]
      %v6319 = vld [vmem:[%s3 + $0x3fc] sm:$0xf]
      %v6336 = vunpack.c.l.b16 %v6304
      %v6337 = vunpack.c.l.b16 %v6305
      %v6338 = vunpack.c.l.b16 %v6306
      %v6339 = vunpack.c.l.b16 %v6307
      %v6340 = vunpack.c.l.b16 %v6308
      %v6341 = vunpack.c.l.b16 %v6309
      %v6342 = vunpack.c.l.b16 %v6310
      %v6343 = vunpack.c.l.b16 %v6311
      %v6344 = vunpack.c.l.b16 %v6312
      %v6345 = vunpack.c.l.b16 %v6313
      %v6346 = vunpack.c.l.b16 %v6314
      %v6347 = vunpack.c.l.b16 %v6315
      %v6348 = vunpack.c.l.b16 %v6316
      %v6349 = vunpack.c.l.b16 %v6317
      %v6350 = vunpack.c.l.b16 %v6318
      %v6351 = vunpack.c.l.b16 %v6319
      %v6352 = vpack.c.b16 %v6337, %v6336
      %v6353 = vpack.c.b16 %v6339, %v6338
      %v6354 = vpack.c.b16 %v6341, %v6340
      %v6355 = vpack.c.b16 %v6343, %v6342
      %v6356 = vpack.c.b16 %v6345, %v6344
      %v6357 = vpack.c.b16 %v6347, %v6346
      %v6358 = vpack.c.b16 %v6349, %v6348
      %v6359 = vpack.c.b16 %v6351, %v6350
      %6368 = vmatpush.bf16.msra.mxu0 %v6359
      %6369 = vmatpush.bf16.msra.mxu0 %v6358
      %6370 = vmatpush.bf16.msra.mxu0 %v6357
      %6371 = vmatpush.bf16.msra.mxu0 %v6356
      %6372 = vmatpush.bf16.msra.mxu0 %v6355
      %6373 = vmatpush.bf16.msra.mxu0 %v6354
      %6374 = vmatpush.bf16.msra.mxu0 %v6353
      %6375 = vmatpush.bf16.msra.mxu0 %v6352
      %6376 = vmatmul.bf16.gmra.mxu0 %v6288
      %v6377 = vpop.f32.mrf.mxu0
      %v6378 = vadd.f32 0.0, %v6377
      %v6379 = vpop.f32.mrf.mxu0
      %v6380 = vadd.f32 0.0, %v6379
      %6381 = vmatmul.bf16.gmra.mxu0 %v6289
      %v6382 = vpop.f32.mrf.mxu0
      %v6383 = vadd.f32 0.0, %v6382
      %v6384 = vpop.f32.mrf.mxu0
      %v6385 = vadd.f32 0.0, %v6384
      %6386 = vmatmul.bf16.gmra.mxu0 %v6290
      %v6387 = vpop.f32.mrf.mxu0
      %v6388 = vadd.f32 0.0, %v6387
      %v6389 = vpop.f32.mrf.mxu0
      %v6390 = vadd.f32 0.0, %v6389
      %6391 = vmatmul.bf16.gmra.mxu0 %v6291
      %v6392 = vpop.f32.mrf.mxu0
      %v6393 = vadd.f32 0.0, %v6392
      %v6394 = vpop.f32.mrf.mxu0
      %v6395 = vadd.f32 0.0, %v6394
      %6396 = vmatmul.bf16.gmra.mxu0 %v6292
      %v6397 = vpop.f32.mrf.mxu0
      %v6398 = vadd.f32 0.0, %v6397
      %v6399 = vpop.f32.mrf.mxu0
      %v6400 = vadd.f32 0.0, %v6399
      %6401 = vmatmul.bf16.gmra.mxu0 %v6293
      %v6402 = vpop.f32.mrf.mxu0
      %v6403 = vadd.f32 0.0, %v6402
      %v6404 = vpop.f32.mrf.mxu0
      %v6405 = vadd.f32 0.0, %v6404
      %6406 = vmatmul.bf16.gmra.mxu0 %v6294
      %v6407 = vpop.f32.mrf.mxu0
      %v6408 = vadd.f32 0.0, %v6407
      %v6409 = vpop.f32.mrf.mxu0
      %v6410 = vadd.f32 0.0, %v6409
      %6411 = vmatmul.bf16.gmra.mxu0 %v6295
      %v6412 = vpop.f32.mrf.mxu0
      %v6413 = vadd.f32 0.0, %v6412
      %v6414 = vpop.f32.mrf.mxu0
      %v6415 = vadd.f32 0.0, %v6414
      %6416 = vmatmul.bf16.gmra.mxu0 %v6296
      %v6417 = vpop.f32.mrf.mxu0
      %v6418 = vadd.f32 0.0, %v6417
      %v6419 = vpop.f32.mrf.mxu0
      %v6420 = vadd.f32 0.0, %v6419
      %6421 = vmatmul.bf16.gmra.mxu0 %v6297
      %v6422 = vpop.f32.mrf.mxu0
      %v6423 = vadd.f32 0.0, %v6422
      %v6424 = vpop.f32.mrf.mxu0
      %v6425 = vadd.f32 0.0, %v6424
      %6426 = vmatmul.bf16.gmra.mxu0 %v6298
      %v6427 = vpop.f32.mrf.mxu0
      %v6428 = vadd.f32 0.0, %v6427
      %v6429 = vpop.f32.mrf.mxu0
      %v6430 = vadd.f32 0.0, %v6429
      %6431 = vmatmul.bf16.gmra.mxu0 %v6299
      %v6432 = vpop.f32.mrf.mxu0
      %v6433 = vadd.f32 0.0, %v6432
      %v6434 = vpop.f32.mrf.mxu0
      %v6435 = vadd.f32 0.0, %v6434
      %6436 = vmatmul.bf16.gmra.mxu0 %v6300
      %v6437 = vpop.f32.mrf.mxu0
      %v6438 = vadd.f32 0.0, %v6437
      %v6439 = vpop.f32.mrf.mxu0
      %v6440 = vadd.f32 0.0, %v6439
      %6441 = vmatmul.bf16.gmra.mxu0 %v6301
      %v6442 = vpop.f32.mrf.mxu0
      %v6443 = vadd.f32 0.0, %v6442
      %v6444 = vpop.f32.mrf.mxu0
      %v6445 = vadd.f32 0.0, %v6444
      %6446 = vmatmul.bf16.gmra.mxu0 %v6302
      %v6447 = vpop.f32.mrf.mxu0
      %v6448 = vadd.f32 0.0, %v6447
      %v6449 = vpop.f32.mrf.mxu0
      %v6450 = vadd.f32 0.0, %v6449
      %6451 = vmatmul.bf16.gmra.mxu0 %v6303
      %v6452 = vpop.f32.mrf.mxu0
      %v6453 = vadd.f32 0.0, %v6452
      %v6454 = vpop.f32.mrf.mxu0
      %v6455 = vadd.f32 0.0, %v6454
      %6456 = vdwg.mxu0
      %v6457 = vperm.slane %v6287, 0
      %v6458 = vadd.f32 %v6457, %v6378
      %v6459 = vadd.f32 %v6457, %v6380
      %v6460 = vadd.f32 %v6457, %v6383
      %v6461 = vadd.f32 %v6457, %v6385
      %v6462 = vadd.f32 %v6457, %v6388
      %v6463 = vadd.f32 %v6457, %v6390
      %v6464 = vadd.f32 %v6457, %v6393
      %v6465 = vadd.f32 %v6457, %v6395
      %v6466 = vadd.f32 %v6457, %v6398
      %v6467 = vadd.f32 %v6457, %v6400
      %v6468 = vadd.f32 %v6457, %v6403
      %v6469 = vadd.f32 %v6457, %v6405
      %v6470 = vadd.f32 %v6457, %v6408
      %v6471 = vadd.f32 %v6457, %v6410
      %v6472 = vadd.f32 %v6457, %v6413
      %v6473 = vadd.f32 %v6457, %v6415
      %v6474 = vadd.f32 %v6457, %v6418
      %v6475 = vadd.f32 %v6457, %v6420
      %v6476 = vadd.f32 %v6457, %v6423
      %v6477 = vadd.f32 %v6457, %v6425
      %v6478 = vadd.f32 %v6457, %v6428
      %v6479 = vadd.f32 %v6457, %v6430
      %v6480 = vadd.f32 %v6457, %v6433
      %v6481 = vadd.f32 %v6457, %v6435
      %v6482 = vadd.f32 %v6457, %v6438
      %v6483 = vadd.f32 %v6457, %v6440
      %v6484 = vadd.f32 %v6457, %v6443
      %v6485 = vadd.f32 %v6457, %v6445
      %v6486 = vadd.f32 %v6457, %v6448
      %v6487 = vadd.f32 %v6457, %v6450
      %v6488 = vadd.f32 %v6457, %v6453
      %v6489 = vadd.f32 %v6457, %v6455
      %v6490 = vpack.c.bf16 %v6210, %v6208
      %v6491 = vpack.c.bf16 %v6215, %v6213
      %v6492 = vpack.c.bf16 %v6220, %v6218
      %v6493 = vpack.c.bf16 %v6225, %v6223
      %v6494 = vpack.c.bf16 %v6230, %v6228
      %v6495 = vpack.c.bf16 %v6235, %v6233
      %v6496 = vpack.c.bf16 %v6240, %v6238
      %v6497 = vpack.c.bf16 %v6245, %v6243
      %v6498 = vpack.c.bf16 %v6250, %v6248
      %v6499 = vpack.c.bf16 %v6255, %v6253
      %v6500 = vpack.c.bf16 %v6260, %v6258
      %v6501 = vpack.c.bf16 %v6265, %v6263
      %v6502 = vpack.c.bf16 %v6270, %v6268
      %v6503 = vpack.c.bf16 %v6275, %v6273
      %v6504 = vpack.c.bf16 %v6280, %v6278
      %v6505 = vpack.c.bf16 %v6285, %v6283
      %v6506 = vld [vmem:[%s3 + $0x400] sm:$0xf]
      %v6507 = vld [vmem:[%s3 + $0x404] sm:$0xf]
      %v6508 = vld [vmem:[%s3 + $0x408] sm:$0xf]
      %v6509 = vld [vmem:[%s3 + $0x40c] sm:$0xf]
      %v6510 = vld [vmem:[%s3 + $0x410] sm:$0xf]
      %v6511 = vld [vmem:[%s3 + $0x414] sm:$0xf]
      %v6512 = vld [vmem:[%s3 + $0x418] sm:$0xf]
      %v6513 = vld [vmem:[%s3 + $0x41c] sm:$0xf]
      %v6514 = vld [vmem:[%s3 + $0x420] sm:$0xf]
      %v6515 = vld [vmem:[%s3 + $0x424] sm:$0xf]
      %v6516 = vld [vmem:[%s3 + $0x428] sm:$0xf]
      %v6517 = vld [vmem:[%s3 + $0x42c] sm:$0xf]
      %v6518 = vld [vmem:[%s3 + $0x430] sm:$0xf]
      %v6519 = vld [vmem:[%s3 + $0x434] sm:$0xf]
      %v6520 = vld [vmem:[%s3 + $0x438] sm:$0xf]
      %v6521 = vld [vmem:[%s3 + $0x43c] sm:$0xf]
      %v6538 = vunpack.c.l.b16 %v6506
      %v6539 = vunpack.c.l.b16 %v6507
      %v6540 = vunpack.c.l.b16 %v6508
      %v6541 = vunpack.c.l.b16 %v6509
      %v6542 = vunpack.c.l.b16 %v6510
      %v6543 = vunpack.c.l.b16 %v6511
      %v6544 = vunpack.c.l.b16 %v6512
      %v6545 = vunpack.c.l.b16 %v6513
      %v6546 = vunpack.c.l.b16 %v6514
      %v6547 = vunpack.c.l.b16 %v6515
      %v6548 = vunpack.c.l.b16 %v6516
      %v6549 = vunpack.c.l.b16 %v6517
      %v6550 = vunpack.c.l.b16 %v6518
      %v6551 = vunpack.c.l.b16 %v6519
      %v6552 = vunpack.c.l.b16 %v6520
      %v6553 = vunpack.c.l.b16 %v6521
      %v6554 = vpack.c.b16 %v6539, %v6538
      %v6555 = vpack.c.b16 %v6541, %v6540
      %v6556 = vpack.c.b16 %v6543, %v6542
      %v6557 = vpack.c.b16 %v6545, %v6544
      %v6558 = vpack.c.b16 %v6547, %v6546
      %v6559 = vpack.c.b16 %v6549, %v6548
      %v6560 = vpack.c.b16 %v6551, %v6550
      %v6561 = vpack.c.b16 %v6553, %v6552
      %6570 = vmatpush.bf16.msra.mxu0 %v6561
      %6571 = vmatpush.bf16.msra.mxu0 %v6560
      %6572 = vmatpush.bf16.msra.mxu0 %v6559
      %6573 = vmatpush.bf16.msra.mxu0 %v6558
      %6574 = vmatpush.bf16.msra.mxu0 %v6557
      %6575 = vmatpush.bf16.msra.mxu0 %v6556
      %6576 = vmatpush.bf16.msra.mxu0 %v6555
      %6577 = vmatpush.bf16.msra.mxu0 %v6554
      %6578 = vmatmul.bf16.gmra.mxu0 %v6490
      %v6579 = vpop.f32.mrf.mxu0
      %v6580 = vadd.f32 0.0, %v6579
      %v6581 = vpop.f32.mrf.mxu0
      %v6582 = vadd.f32 0.0, %v6581
      %6583 = vmatmul.bf16.gmra.mxu0 %v6491
      %v6584 = vpop.f32.mrf.mxu0
      %v6585 = vadd.f32 0.0, %v6584
      %v6586 = vpop.f32.mrf.mxu0
      %v6587 = vadd.f32 0.0, %v6586
      %6588 = vmatmul.bf16.gmra.mxu0 %v6492
      %v6589 = vpop.f32.mrf.mxu0
      %v6590 = vadd.f32 0.0, %v6589
      %v6591 = vpop.f32.mrf.mxu0
      %v6592 = vadd.f32 0.0, %v6591
      %6593 = vmatmul.bf16.gmra.mxu0 %v6493
      %v6594 = vpop.f32.mrf.mxu0
      %v6595 = vadd.f32 0.0, %v6594
      %v6596 = vpop.f32.mrf.mxu0
      %v6597 = vadd.f32 0.0, %v6596
      %6598 = vmatmul.bf16.gmra.mxu0 %v6494
      %v6599 = vpop.f32.mrf.mxu0
      %v6600 = vadd.f32 0.0, %v6599
      %v6601 = vpop.f32.mrf.mxu0
      %v6602 = vadd.f32 0.0, %v6601
      %6603 = vmatmul.bf16.gmra.mxu0 %v6495
      %v6604 = vpop.f32.mrf.mxu0
      %v6605 = vadd.f32 0.0, %v6604
      %v6606 = vpop.f32.mrf.mxu0
      %v6607 = vadd.f32 0.0, %v6606
      %6608 = vmatmul.bf16.gmra.mxu0 %v6496
      %v6609 = vpop.f32.mrf.mxu0
      %v6610 = vadd.f32 0.0, %v6609
      %v6611 = vpop.f32.mrf.mxu0
      %v6612 = vadd.f32 0.0, %v6611
      %6613 = vmatmul.bf16.gmra.mxu0 %v6497
      %v6614 = vpop.f32.mrf.mxu0
      %v6615 = vadd.f32 0.0, %v6614
      %v6616 = vpop.f32.mrf.mxu0
      %v6617 = vadd.f32 0.0, %v6616
      %6618 = vmatmul.bf16.gmra.mxu0 %v6498
      %v6619 = vpop.f32.mrf.mxu0
      %v6620 = vadd.f32 0.0, %v6619
      %v6621 = vpop.f32.mrf.mxu0
      %v6622 = vadd.f32 0.0, %v6621
      %6623 = vmatmul.bf16.gmra.mxu0 %v6499
      %v6624 = vpop.f32.mrf.mxu0
      %v6625 = vadd.f32 0.0, %v6624
      %v6626 = vpop.f32.mrf.mxu0
      %v6627 = vadd.f32 0.0, %v6626
      %6628 = vmatmul.bf16.gmra.mxu0 %v6500
      %v6629 = vpop.f32.mrf.mxu0
      %v6630 = vadd.f32 0.0, %v6629
      %v6631 = vpop.f32.mrf.mxu0
      %v6632 = vadd.f32 0.0, %v6631
      %6633 = vmatmul.bf16.gmra.mxu0 %v6501
      %v6634 = vpop.f32.mrf.mxu0
      %v6635 = vadd.f32 0.0, %v6634
      %v6636 = vpop.f32.mrf.mxu0
      %v6637 = vadd.f32 0.0, %v6636
      %6638 = vmatmul.bf16.gmra.mxu0 %v6502
      %v6639 = vpop.f32.mrf.mxu0
      %v6640 = vadd.f32 0.0, %v6639
      %v6641 = vpop.f32.mrf.mxu0
      %v6642 = vadd.f32 0.0, %v6641
      %6643 = vmatmul.bf16.gmra.mxu0 %v6503
      %v6644 = vpop.f32.mrf.mxu0
      %v6645 = vadd.f32 0.0, %v6644
      %v6646 = vpop.f32.mrf.mxu0
      %v6647 = vadd.f32 0.0, %v6646
      %6648 = vmatmul.bf16.gmra.mxu0 %v6504
      %v6649 = vpop.f32.mrf.mxu0
      %v6650 = vadd.f32 0.0, %v6649
      %v6651 = vpop.f32.mrf.mxu0
      %v6652 = vadd.f32 0.0, %v6651
      %6653 = vmatmul.bf16.gmra.mxu0 %v6505
      %v6654 = vpop.f32.mrf.mxu0
      %v6655 = vadd.f32 0.0, %v6654
      %v6656 = vpop.f32.mrf.mxu0
      %v6657 = vadd.f32 0.0, %v6656
      %6658 = vdwg.mxu0
      %v6659 = vadd.f32 %v6458, %v6580
      %v6660 = vadd.f32 %v6459, %v6582
      %v6661 = vadd.f32 %v6460, %v6585
      %v6662 = vadd.f32 %v6461, %v6587
      %v6663 = vadd.f32 %v6462, %v6590
      %v6664 = vadd.f32 %v6463, %v6592
      %v6665 = vadd.f32 %v6464, %v6595
      %v6666 = vadd.f32 %v6465, %v6597
      %v6667 = vadd.f32 %v6466, %v6600
      %v6668 = vadd.f32 %v6467, %v6602
      %v6669 = vadd.f32 %v6468, %v6605
      %v6670 = vadd.f32 %v6469, %v6607
      %v6671 = vadd.f32 %v6470, %v6610
      %v6672 = vadd.f32 %v6471, %v6612
      %v6673 = vadd.f32 %v6472, %v6615
      %v6674 = vadd.f32 %v6473, %v6617
      %v6675 = vadd.f32 %v6474, %v6620
      %v6676 = vadd.f32 %v6475, %v6622
      %v6677 = vadd.f32 %v6476, %v6625
      %v6678 = vadd.f32 %v6477, %v6627
      %v6679 = vadd.f32 %v6478, %v6630
      %v6680 = vadd.f32 %v6479, %v6632
      %v6681 = vadd.f32 %v6480, %v6635
      %v6682 = vadd.f32 %v6481, %v6637
      %v6683 = vadd.f32 %v6482, %v6640
      %v6684 = vadd.f32 %v6483, %v6642
      %v6685 = vadd.f32 %v6484, %v6645
      %v6686 = vadd.f32 %v6485, %v6647
      %v6687 = vadd.f32 %v6486, %v6650
      %v6688 = vadd.f32 %v6487, %v6652
      %v6689 = vadd.f32 %v6488, %v6655
      %v6690 = vadd.f32 %v6489, %v6657
      %v6691 = vpack.c.bf16 %v6070, %v6069
      %v6692 = vpack.c.bf16 %v6072, %v6071
      %v6693 = vpack.c.bf16 %v6074, %v6073
      %v6694 = vpack.c.bf16 %v6076, %v6075
      %v6695 = vpack.c.bf16 %v6078, %v6077
      %v6696 = vpack.c.bf16 %v6080, %v6079
      %v6697 = vpack.c.bf16 %v6082, %v6081
      %v6698 = vpack.c.bf16 %v6084, %v6083
      %v6699 = vpack.c.bf16 %v6086, %v6085
      %v6700 = vpack.c.bf16 %v6088, %v6087
      %v6701 = vpack.c.bf16 %v6090, %v6089
      %v6702 = vpack.c.bf16 %v6092, %v6091
      %v6703 = vpack.c.bf16 %v6094, %v6093
      %v6704 = vpack.c.bf16 %v6096, %v6095
      %v6705 = vpack.c.bf16 %v6098, %v6097
      %v6706 = vpack.c.bf16 %v6100, %v6099
      %v6707 = vld [vmem:[%s3 + $0x440] sm:$0xf]
      %v6708 = vld [vmem:[%s3 + $0x444] sm:$0xf]
      %v6709 = vld [vmem:[%s3 + $0x448] sm:$0xf]
      %v6710 = vld [vmem:[%s3 + $0x44c] sm:$0xf]
      %v6711 = vld [vmem:[%s3 + $0x450] sm:$0xf]
      %v6712 = vld [vmem:[%s3 + $0x454] sm:$0xf]
      %v6713 = vld [vmem:[%s3 + $0x458] sm:$0xf]
      %v6714 = vld [vmem:[%s3 + $0x45c] sm:$0xf]
      %v6715 = vld [vmem:[%s3 + $0x460] sm:$0xf]
      %v6716 = vld [vmem:[%s3 + $0x464] sm:$0xf]
      %v6717 = vld [vmem:[%s3 + $0x468] sm:$0xf]
      %v6718 = vld [vmem:[%s3 + $0x46c] sm:$0xf]
      %v6719 = vld [vmem:[%s3 + $0x470] sm:$0xf]
      %v6720 = vld [vmem:[%s3 + $0x474] sm:$0xf]
      %v6721 = vld [vmem:[%s3 + $0x478] sm:$0xf]
      %v6722 = vld [vmem:[%s3 + $0x47c] sm:$0xf]
      %v6739 = vunpack.c.l.b16 %v6707
      %v6740 = vunpack.c.l.b16 %v6708
      %v6741 = vunpack.c.l.b16 %v6709
      %v6742 = vunpack.c.l.b16 %v6710
      %v6743 = vunpack.c.l.b16 %v6711
      %v6744 = vunpack.c.l.b16 %v6712
      %v6745 = vunpack.c.l.b16 %v6713
      %v6746 = vunpack.c.l.b16 %v6714
      %v6747 = vunpack.c.l.b16 %v6715
      %v6748 = vunpack.c.l.b16 %v6716
      %v6749 = vunpack.c.l.b16 %v6717
      %v6750 = vunpack.c.l.b16 %v6718
      %v6751 = vunpack.c.l.b16 %v6719
      %v6752 = vunpack.c.l.b16 %v6720
      %v6753 = vunpack.c.l.b16 %v6721
      %v6754 = vunpack.c.l.b16 %v6722
      %v6755 = vpack.c.b16 %v6740, %v6739
      %v6756 = vpack.c.b16 %v6742, %v6741
      %v6757 = vpack.c.b16 %v6744, %v6743
      %v6758 = vpack.c.b16 %v6746, %v6745
      %v6759 = vpack.c.b16 %v6748, %v6747
      %v6760 = vpack.c.b16 %v6750, %v6749
      %v6761 = vpack.c.b16 %v6752, %v6751
      %v6762 = vpack.c.b16 %v6754, %v6753
      %6771 = vmatpush.bf16.msra.mxu0 %v6762
      %6772 = vmatpush.bf16.msra.mxu0 %v6761
      %6773 = vmatpush.bf16.msra.mxu0 %v6760
      %6774 = vmatpush.bf16.msra.mxu0 %v6759
      %6775 = vmatpush.bf16.msra.mxu0 %v6758
      %6776 = vmatpush.bf16.msra.mxu0 %v6757
      %6777 = vmatpush.bf16.msra.mxu0 %v6756
      %6778 = vmatpush.bf16.msra.mxu0 %v6755
      %6779 = vmatmul.bf16.gmra.mxu0 %v6691
      %v6780 = vpop.f32.mrf.mxu0
      %v6781 = vadd.f32 0.0, %v6780
      %v6782 = vpop.f32.mrf.mxu0
      %v6783 = vadd.f32 0.0, %v6782
      %6784 = vmatmul.bf16.gmra.mxu0 %v6692
      %v6785 = vpop.f32.mrf.mxu0
      %v6786 = vadd.f32 0.0, %v6785
      %v6787 = vpop.f32.mrf.mxu0
      %v6788 = vadd.f32 0.0, %v6787
      %6789 = vmatmul.bf16.gmra.mxu0 %v6693
      %v6790 = vpop.f32.mrf.mxu0
      %v6791 = vadd.f32 0.0, %v6790
      %v6792 = vpop.f32.mrf.mxu0
      %v6793 = vadd.f32 0.0, %v6792
      %6794 = vmatmul.bf16.gmra.mxu0 %v6694
      %v6795 = vpop.f32.mrf.mxu0
      %v6796 = vadd.f32 0.0, %v6795
      %v6797 = vpop.f32.mrf.mxu0
      %v6798 = vadd.f32 0.0, %v6797
      %6799 = vmatmul.bf16.gmra.mxu0 %v6695
      %v6800 = vpop.f32.mrf.mxu0
      %v6801 = vadd.f32 0.0, %v6800
      %v6802 = vpop.f32.mrf.mxu0
      %v6803 = vadd.f32 0.0, %v6802
      %6804 = vmatmul.bf16.gmra.mxu0 %v6696
      %v6805 = vpop.f32.mrf.mxu0
      %v6806 = vadd.f32 0.0, %v6805
      %v6807 = vpop.f32.mrf.mxu0
      %v6808 = vadd.f32 0.0, %v6807
      %6809 = vmatmul.bf16.gmra.mxu0 %v6697
      %v6810 = vpop.f32.mrf.mxu0
      %v6811 = vadd.f32 0.0, %v6810
      %v6812 = vpop.f32.mrf.mxu0
      %v6813 = vadd.f32 0.0, %v6812
      %6814 = vmatmul.bf16.gmra.mxu0 %v6698
      %v6815 = vpop.f32.mrf.mxu0
      %v6816 = vadd.f32 0.0, %v6815
      %v6817 = vpop.f32.mrf.mxu0
      %v6818 = vadd.f32 0.0, %v6817
      %6819 = vmatmul.bf16.gmra.mxu0 %v6699
      %v6820 = vpop.f32.mrf.mxu0
      %v6821 = vadd.f32 0.0, %v6820
      %v6822 = vpop.f32.mrf.mxu0
      %v6823 = vadd.f32 0.0, %v6822
      %6824 = vmatmul.bf16.gmra.mxu0 %v6700
      %v6825 = vpop.f32.mrf.mxu0
      %v6826 = vadd.f32 0.0, %v6825
      %v6827 = vpop.f32.mrf.mxu0
      %v6828 = vadd.f32 0.0, %v6827
      %6829 = vmatmul.bf16.gmra.mxu0 %v6701
      %v6830 = vpop.f32.mrf.mxu0
      %v6831 = vadd.f32 0.0, %v6830
      %v6832 = vpop.f32.mrf.mxu0
      %v6833 = vadd.f32 0.0, %v6832
      %6834 = vmatmul.bf16.gmra.mxu0 %v6702
      %v6835 = vpop.f32.mrf.mxu0
      %v6836 = vadd.f32 0.0, %v6835
      %v6837 = vpop.f32.mrf.mxu0
      %v6838 = vadd.f32 0.0, %v6837
      %6839 = vmatmul.bf16.gmra.mxu0 %v6703
      %v6840 = vpop.f32.mrf.mxu0
      %v6841 = vadd.f32 0.0, %v6840
      %v6842 = vpop.f32.mrf.mxu0
      %v6843 = vadd.f32 0.0, %v6842
      %6844 = vmatmul.bf16.gmra.mxu0 %v6704
      %v6845 = vpop.f32.mrf.mxu0
      %v6846 = vadd.f32 0.0, %v6845
      %v6847 = vpop.f32.mrf.mxu0
      %v6848 = vadd.f32 0.0, %v6847
      %6849 = vmatmul.bf16.gmra.mxu0 %v6705
      %v6850 = vpop.f32.mrf.mxu0
      %v6851 = vadd.f32 0.0, %v6850
      %v6852 = vpop.f32.mrf.mxu0
      %v6853 = vadd.f32 0.0, %v6852
      %6854 = vmatmul.bf16.gmra.mxu0 %v6706
      %v6855 = vpop.f32.mrf.mxu0
      %v6856 = vadd.f32 0.0, %v6855
      %v6857 = vpop.f32.mrf.mxu0
      %v6858 = vadd.f32 0.0, %v6857
      %6859 = vdwg.mxu0
      %v6860 = vadd.f32 %v6659, %v6781
      %v6861 = vadd.f32 %v6660, %v6783
      %v6862 = vadd.f32 %v6661, %v6786
      %v6863 = vadd.f32 %v6662, %v6788
      %v6864 = vadd.f32 %v6663, %v6791
      %v6865 = vadd.f32 %v6664, %v6793
      %v6866 = vadd.f32 %v6665, %v6796
      %v6867 = vadd.f32 %v6666, %v6798
      %v6868 = vadd.f32 %v6667, %v6801
      %v6869 = vadd.f32 %v6668, %v6803
      %v6870 = vadd.f32 %v6669, %v6806
      %v6871 = vadd.f32 %v6670, %v6808
      %v6872 = vadd.f32 %v6671, %v6811
      %v6873 = vadd.f32 %v6672, %v6813
      %v6874 = vadd.f32 %v6673, %v6816
      %v6875 = vadd.f32 %v6674, %v6818
      %v6876 = vadd.f32 %v6675, %v6821
      %v6877 = vadd.f32 %v6676, %v6823
      %v6878 = vadd.f32 %v6677, %v6826
      %v6879 = vadd.f32 %v6678, %v6828
      %v6880 = vadd.f32 %v6679, %v6831
      %v6881 = vadd.f32 %v6680, %v6833
      %v6882 = vadd.f32 %v6681, %v6836
      %v6883 = vadd.f32 %v6682, %v6838
      %v6884 = vadd.f32 %v6683, %v6841
      %v6885 = vadd.f32 %v6684, %v6843
      %v6886 = vadd.f32 %v6685, %v6846
      %v6887 = vadd.f32 %v6686, %v6848
      %v6888 = vadd.f32 %v6687, %v6851
      %v6889 = vadd.f32 %v6688, %v6853
      %v6890 = vadd.f32 %v6689, %v6856
      %v6891 = vadd.f32 %v6690, %v6858
      %v6892 = vmax.f32 %v6860, 0.0
      %v6893 = vmax.f32 %v6861, 0.0
      %v6894 = vmax.f32 %v6862, 0.0
      %v6895 = vmax.f32 %v6863, 0.0
      %v6896 = vmax.f32 %v6864, 0.0
      %v6897 = vmax.f32 %v6865, 0.0
      %v6898 = vmax.f32 %v6866, 0.0
      %v6899 = vmax.f32 %v6867, 0.0
      %v6900 = vmax.f32 %v6868, 0.0
      %v6901 = vmax.f32 %v6869, 0.0
      %v6902 = vmax.f32 %v6870, 0.0
      %v6903 = vmax.f32 %v6871, 0.0
      %v6904 = vmax.f32 %v6872, 0.0
      %v6905 = vmax.f32 %v6873, 0.0
      %v6906 = vmax.f32 %v6874, 0.0
      %v6907 = vmax.f32 %v6875, 0.0
      %v6908 = vmax.f32 %v6876, 0.0
      %v6909 = vmax.f32 %v6877, 0.0
      %v6910 = vmax.f32 %v6878, 0.0
      %v6911 = vmax.f32 %v6879, 0.0
      %v6912 = vmax.f32 %v6880, 0.0
      %v6913 = vmax.f32 %v6881, 0.0
      %v6914 = vmax.f32 %v6882, 0.0
      %v6915 = vmax.f32 %v6883, 0.0
      %v6916 = vmax.f32 %v6884, 0.0
      %v6917 = vmax.f32 %v6885, 0.0
      %v6918 = vmax.f32 %v6886, 0.0
      %v6919 = vmax.f32 %v6887, 0.0
      %v6920 = vmax.f32 %v6888, 0.0
      %v6921 = vmax.f32 %v6889, 0.0
      %v6922 = vmax.f32 %v6890, 0.0
      %v6923 = vmax.f32 %v6891, 0.0
      %v6924 = vpack.c.bf16 %v6893, %v6892
      %v6925 = vpack.c.bf16 %v6895, %v6894
      %v6926 = vpack.c.bf16 %v6897, %v6896
      %v6927 = vpack.c.bf16 %v6899, %v6898
      %v6928 = vpack.c.bf16 %v6901, %v6900
      %v6929 = vpack.c.bf16 %v6903, %v6902
      %v6930 = vpack.c.bf16 %v6905, %v6904
      %v6931 = vpack.c.bf16 %v6907, %v6906
      %v6932 = vpack.c.bf16 %v6909, %v6908
      %v6933 = vpack.c.bf16 %v6911, %v6910
      %v6934 = vpack.c.bf16 %v6913, %v6912
      %v6935 = vpack.c.bf16 %v6915, %v6914
      %v6936 = vpack.c.bf16 %v6917, %v6916
      %v6937 = vpack.c.bf16 %v6919, %v6918
      %v6938 = vpack.c.bf16 %v6921, %v6920
      %v6939 = vpack.c.bf16 %v6923, %v6922
      %v6940 = vld [vmem:[%s3 + $0x480] sm:$0xf]
      %v6941 = vld [vmem:[%s3 + $0x484] sm:$0xf]
      %v6942 = vld [vmem:[%s3 + $0x488] sm:$0xf]
      %v6943 = vld [vmem:[%s3 + $0x48c] sm:$0xf]
      %v6944 = vld [vmem:[%s3 + $0x490] sm:$0xf]
      %v6945 = vld [vmem:[%s3 + $0x494] sm:$0xf]
      %v6946 = vld [vmem:[%s3 + $0x498] sm:$0xf]
      %v6947 = vld [vmem:[%s3 + $0x49c] sm:$0xf]
      %v6948 = vld [vmem:[%s3 + $0x4a0] sm:$0xf]
      %v6949 = vld [vmem:[%s3 + $0x4a4] sm:$0xf]
      %v6950 = vld [vmem:[%s3 + $0x4a8] sm:$0xf]
      %v6951 = vld [vmem:[%s3 + $0x4ac] sm:$0xf]
      %v6952 = vld [vmem:[%s3 + $0x4b0] sm:$0xf]
      %v6953 = vld [vmem:[%s3 + $0x4b4] sm:$0xf]
      %v6954 = vld [vmem:[%s3 + $0x4b8] sm:$0xf]
      %v6955 = vld [vmem:[%s3 + $0x4bc] sm:$0xf]
      %v6956 = vld [vmem:[%s4 + $0x15] sm:$0x1]
      %v6957 = vperm.slane %v6956, 0
      %v6974 = vunpack.c.l.b16 %v6940
      %v6975 = vunpack.c.l.b16 %v6941
      %v6976 = vunpack.c.l.b16 %v6942
      %v6977 = vunpack.c.l.b16 %v6943
      %v6978 = vunpack.c.l.b16 %v6944
      %v6979 = vunpack.c.l.b16 %v6945
      %v6980 = vunpack.c.l.b16 %v6946
      %v6981 = vunpack.c.l.b16 %v6947
      %v6982 = vunpack.c.l.b16 %v6948
      %v6983 = vunpack.c.l.b16 %v6949
      %v6984 = vunpack.c.l.b16 %v6950
      %v6985 = vunpack.c.l.b16 %v6951
      %v6986 = vunpack.c.l.b16 %v6952
      %v6987 = vunpack.c.l.b16 %v6953
      %v6988 = vunpack.c.l.b16 %v6954
      %v6989 = vunpack.c.l.b16 %v6955
      %v6990 = vpack.c.b16 %v6975, %v6974
      %v6991 = vpack.c.b16 %v6977, %v6976
      %v6992 = vpack.c.b16 %v6979, %v6978
      %v6993 = vpack.c.b16 %v6981, %v6980
      %v6994 = vpack.c.b16 %v6983, %v6982
      %v6995 = vpack.c.b16 %v6985, %v6984
      %v6996 = vpack.c.b16 %v6987, %v6986
      %v6997 = vpack.c.b16 %v6989, %v6988
      %7006 = vmatpush.bf16.msra.mxu0 %v6997
      %7007 = vmatpush.bf16.msra.mxu0 %v6996
      %7008 = vmatpush.bf16.msra.mxu0 %v6995
      %7009 = vmatpush.bf16.msra.mxu0 %v6994
      %7010 = vmatpush.bf16.msra.mxu0 %v6993
      %7011 = vmatpush.bf16.msra.mxu0 %v6992
      %7012 = vmatpush.bf16.msra.mxu0 %v6991
      %7013 = vmatpush.bf16.msra.mxu0 %v6990
      %7014 = vmatmul.bf16.gmra.mxu0 %v6924
      %v7015 = vpop.f32.mrf.mxu0
      %v7016 = vadd.f32 %v6957, %v7015
      %v7017 = vpop.f32.mrf.mxu0
      %v7018 = vadd.f32 %v6957, %v7017
      %7019 = vmatmul.bf16.gmra.mxu0 %v6925
      %v7020 = vpop.f32.mrf.mxu0
      %v7021 = vadd.f32 %v6957, %v7020
      %v7022 = vpop.f32.mrf.mxu0
      %v7023 = vadd.f32 %v6957, %v7022
      %7024 = vmatmul.bf16.gmra.mxu0 %v6926
      %v7025 = vpop.f32.mrf.mxu0
      %v7026 = vadd.f32 %v6957, %v7025
      %v7027 = vpop.f32.mrf.mxu0
      %v7028 = vadd.f32 %v6957, %v7027
      %7029 = vmatmul.bf16.gmra.mxu0 %v6927
      %v7030 = vpop.f32.mrf.mxu0
      %v7031 = vadd.f32 %v6957, %v7030
      %v7032 = vpop.f32.mrf.mxu0
      %v7033 = vadd.f32 %v6957, %v7032
      %7034 = vmatmul.bf16.gmra.mxu0 %v6928
      %v7035 = vpop.f32.mrf.mxu0
      %v7036 = vadd.f32 %v6957, %v7035
      %v7037 = vpop.f32.mrf.mxu0
      %v7038 = vadd.f32 %v6957, %v7037
      %7039 = vmatmul.bf16.gmra.mxu0 %v6929
      %v7040 = vpop.f32.mrf.mxu0
      %v7041 = vadd.f32 %v6957, %v7040
      %v7042 = vpop.f32.mrf.mxu0
      %v7043 = vadd.f32 %v6957, %v7042
      %7044 = vmatmul.bf16.gmra.mxu0 %v6930
      %v7045 = vpop.f32.mrf.mxu0
      %v7046 = vadd.f32 %v6957, %v7045
      %v7047 = vpop.f32.mrf.mxu0
      %v7048 = vadd.f32 %v6957, %v7047
      %7049 = vmatmul.bf16.gmra.mxu0 %v6931
      %v7050 = vpop.f32.mrf.mxu0
      %v7051 = vadd.f32 %v6957, %v7050
      %v7052 = vpop.f32.mrf.mxu0
      %v7053 = vadd.f32 %v6957, %v7052
      %7054 = vmatmul.bf16.gmra.mxu0 %v6932
      %v7055 = vpop.f32.mrf.mxu0
      %v7056 = vadd.f32 %v6957, %v7055
      %v7057 = vpop.f32.mrf.mxu0
      %v7058 = vadd.f32 %v6957, %v7057
      %7059 = vmatmul.bf16.gmra.mxu0 %v6933
      %v7060 = vpop.f32.mrf.mxu0
      %v7061 = vadd.f32 %v6957, %v7060
      %v7062 = vpop.f32.mrf.mxu0
      %v7063 = vadd.f32 %v6957, %v7062
      %7064 = vmatmul.bf16.gmra.mxu0 %v6934
      %v7065 = vpop.f32.mrf.mxu0
      %v7066 = vadd.f32 %v6957, %v7065
      %v7067 = vpop.f32.mrf.mxu0
      %v7068 = vadd.f32 %v6957, %v7067
      %7069 = vmatmul.bf16.gmra.mxu0 %v6935
      %v7070 = vpop.f32.mrf.mxu0
      %v7071 = vadd.f32 %v6957, %v7070
      %v7072 = vpop.f32.mrf.mxu0
      %v7073 = vadd.f32 %v6957, %v7072
      %7074 = vmatmul.bf16.gmra.mxu0 %v6936
      %v7075 = vpop.f32.mrf.mxu0
      %v7076 = vadd.f32 %v6957, %v7075
      %v7077 = vpop.f32.mrf.mxu0
      %v7078 = vadd.f32 %v6957, %v7077
      %7079 = vmatmul.bf16.gmra.mxu0 %v6937
      %v7080 = vpop.f32.mrf.mxu0
      %v7081 = vadd.f32 %v6957, %v7080
      %v7082 = vpop.f32.mrf.mxu0
      %v7083 = vadd.f32 %v6957, %v7082
      %7084 = vmatmul.bf16.gmra.mxu0 %v6938
      %v7085 = vpop.f32.mrf.mxu0
      %v7086 = vadd.f32 %v6957, %v7085
      %v7087 = vpop.f32.mrf.mxu0
      %v7088 = vadd.f32 %v6957, %v7087
      %7089 = vmatmul.bf16.gmra.mxu0 %v6939
      %v7090 = vpop.f32.mrf.mxu0
      %v7091 = vadd.f32 %v6957, %v7090
      %v7092 = vpop.f32.mrf.mxu0
      %v7093 = vadd.f32 %v6957, %v7092
      %7094 = vdwg.mxu0
      %v7095 = vmax.f32 %v7016, 0.0
      %v7096 = vmax.f32 %v7018, 0.0
      %v7097 = vmax.f32 %v7021, 0.0
      %v7098 = vmax.f32 %v7023, 0.0
      %v7099 = vmax.f32 %v7026, 0.0
      %v7100 = vmax.f32 %v7028, 0.0
      %v7101 = vmax.f32 %v7031, 0.0
      %v7102 = vmax.f32 %v7033, 0.0
      %v7103 = vmax.f32 %v7036, 0.0
      %v7104 = vmax.f32 %v7038, 0.0
      %v7105 = vmax.f32 %v7041, 0.0
      %v7106 = vmax.f32 %v7043, 0.0
      %v7107 = vmax.f32 %v7046, 0.0
      %v7108 = vmax.f32 %v7048, 0.0
      %v7109 = vmax.f32 %v7051, 0.0
      %v7110 = vmax.f32 %v7053, 0.0
      %v7111 = vmax.f32 %v7056, 0.0
      %v7112 = vmax.f32 %v7058, 0.0
      %v7113 = vmax.f32 %v7061, 0.0
      %v7114 = vmax.f32 %v7063, 0.0
      %v7115 = vmax.f32 %v7066, 0.0
      %v7116 = vmax.f32 %v7068, 0.0
      %v7117 = vmax.f32 %v7071, 0.0
      %v7118 = vmax.f32 %v7073, 0.0
      %v7119 = vmax.f32 %v7076, 0.0
      %v7120 = vmax.f32 %v7078, 0.0
      %v7121 = vmax.f32 %v7081, 0.0
      %v7122 = vmax.f32 %v7083, 0.0
      %v7123 = vmax.f32 %v7086, 0.0
      %v7124 = vmax.f32 %v7088, 0.0
      %v7125 = vmax.f32 %v7091, 0.0
      %v7126 = vmax.f32 %v7093, 0.0
      %v7127 = vpack.c.bf16 %v7096, %v7095
      %v7128 = vpack.c.bf16 %v7098, %v7097
      %v7129 = vpack.c.bf16 %v7100, %v7099
      %v7130 = vpack.c.bf16 %v7102, %v7101
      %v7131 = vpack.c.bf16 %v7104, %v7103
      %v7132 = vpack.c.bf16 %v7106, %v7105
      %v7133 = vpack.c.bf16 %v7108, %v7107
      %v7134 = vpack.c.bf16 %v7110, %v7109
      %v7135 = vpack.c.bf16 %v7112, %v7111
      %v7136 = vpack.c.bf16 %v7114, %v7113
      %v7137 = vpack.c.bf16 %v7116, %v7115
      %v7138 = vpack.c.bf16 %v7118, %v7117
      %v7139 = vpack.c.bf16 %v7120, %v7119
      %v7140 = vpack.c.bf16 %v7122, %v7121
      %v7141 = vpack.c.bf16 %v7124, %v7123
      %v7142 = vpack.c.bf16 %v7126, %v7125
      %v7143 = vld [vmem:[%s3 + $0x4c0] sm:$0xf]
      %v7144 = vld [vmem:[%s3 + $0x4c4] sm:$0xf]
      %v7145 = vld [vmem:[%s3 + $0x4c8] sm:$0xf]
      %v7146 = vld [vmem:[%s3 + $0x4cc] sm:$0xf]
      %v7147 = vld [vmem:[%s3 + $0x4d0] sm:$0xf]
      %v7148 = vld [vmem:[%s3 + $0x4d4] sm:$0xf]
      %v7149 = vld [vmem:[%s3 + $0x4d8] sm:$0xf]
      %v7150 = vld [vmem:[%s3 + $0x4dc] sm:$0xf]
      %v7151 = vld [vmem:[%s3 + $0x4e0] sm:$0xf]
      %v7152 = vld [vmem:[%s3 + $0x4e4] sm:$0xf]
      %v7153 = vld [vmem:[%s3 + $0x4e8] sm:$0xf]
      %v7154 = vld [vmem:[%s3 + $0x4ec] sm:$0xf]
      %v7155 = vld [vmem:[%s3 + $0x4f0] sm:$0xf]
      %v7156 = vld [vmem:[%s3 + $0x4f4] sm:$0xf]
      %v7157 = vld [vmem:[%s3 + $0x4f8] sm:$0xf]
      %v7158 = vld [vmem:[%s3 + $0x4fc] sm:$0xf]
      %v7159 = vld [vmem:[%s4 + $0x16] sm:$0x1]
      %v7160 = vperm.slane %v7159, 0
      %v7177 = vunpack.c.l.b16 %v7143
      %v7178 = vunpack.c.l.b16 %v7144
      %v7179 = vunpack.c.l.b16 %v7145
      %v7180 = vunpack.c.l.b16 %v7146
      %v7181 = vunpack.c.l.b16 %v7147
      %v7182 = vunpack.c.l.b16 %v7148
      %v7183 = vunpack.c.l.b16 %v7149
      %v7184 = vunpack.c.l.b16 %v7150
      %v7185 = vunpack.c.l.b16 %v7151
      %v7186 = vunpack.c.l.b16 %v7152
      %v7187 = vunpack.c.l.b16 %v7153
      %v7188 = vunpack.c.l.b16 %v7154
      %v7189 = vunpack.c.l.b16 %v7155
      %v7190 = vunpack.c.l.b16 %v7156
      %v7191 = vunpack.c.l.b16 %v7157
      %v7192 = vunpack.c.l.b16 %v7158
      %v7193 = vpack.c.b16 %v7178, %v7177
      %v7194 = vpack.c.b16 %v7180, %v7179
      %v7195 = vpack.c.b16 %v7182, %v7181
      %v7196 = vpack.c.b16 %v7184, %v7183
      %v7197 = vpack.c.b16 %v7186, %v7185
      %v7198 = vpack.c.b16 %v7188, %v7187
      %v7199 = vpack.c.b16 %v7190, %v7189
      %v7200 = vpack.c.b16 %v7192, %v7191
      %7209 = vmatpush.bf16.msra.mxu0 %v7200
      %7210 = vmatpush.bf16.msra.mxu0 %v7199
      %7211 = vmatpush.bf16.msra.mxu0 %v7198
      %7212 = vmatpush.bf16.msra.mxu0 %v7197
      %7213 = vmatpush.bf16.msra.mxu0 %v7196
      %7214 = vmatpush.bf16.msra.mxu0 %v7195
      %7215 = vmatpush.bf16.msra.mxu0 %v7194
      %7216 = vmatpush.bf16.msra.mxu0 %v7193
      %7217 = vmatmul.bf16.gmra.mxu0 %v7127
      %v7218 = vpop.f32.mrf.mxu0
      %v7219 = vadd.f32 %v7160, %v7218
      %v7220 = vpop.f32.mrf.mxu0
      %v7221 = vadd.f32 %v7160, %v7220
      %7222 = vmatmul.bf16.gmra.mxu0 %v7128
      %v7223 = vpop.f32.mrf.mxu0
      %v7224 = vadd.f32 %v7160, %v7223
      %v7225 = vpop.f32.mrf.mxu0
      %v7226 = vadd.f32 %v7160, %v7225
      %7227 = vmatmul.bf16.gmra.mxu0 %v7129
      %v7228 = vpop.f32.mrf.mxu0
      %v7229 = vadd.f32 %v7160, %v7228
      %v7230 = vpop.f32.mrf.mxu0
      %v7231 = vadd.f32 %v7160, %v7230
      %7232 = vmatmul.bf16.gmra.mxu0 %v7130
      %v7233 = vpop.f32.mrf.mxu0
      %v7234 = vadd.f32 %v7160, %v7233
      %v7235 = vpop.f32.mrf.mxu0
      %v7236 = vadd.f32 %v7160, %v7235
      %7237 = vmatmul.bf16.gmra.mxu0 %v7131
      %v7238 = vpop.f32.mrf.mxu0
      %v7239 = vadd.f32 %v7160, %v7238
      %v7240 = vpop.f32.mrf.mxu0
      %v7241 = vadd.f32 %v7160, %v7240
      %7242 = vmatmul.bf16.gmra.mxu0 %v7132
      %v7243 = vpop.f32.mrf.mxu0
      %v7244 = vadd.f32 %v7160, %v7243
      %v7245 = vpop.f32.mrf.mxu0
      %v7246 = vadd.f32 %v7160, %v7245
      %7247 = vmatmul.bf16.gmra.mxu0 %v7133
      %v7248 = vpop.f32.mrf.mxu0
      %v7249 = vadd.f32 %v7160, %v7248
      %v7250 = vpop.f32.mrf.mxu0
      %v7251 = vadd.f32 %v7160, %v7250
      %7252 = vmatmul.bf16.gmra.mxu0 %v7134
      %v7253 = vpop.f32.mrf.mxu0
      %v7254 = vadd.f32 %v7160, %v7253
      %v7255 = vpop.f32.mrf.mxu0
      %v7256 = vadd.f32 %v7160, %v7255
      %7257 = vmatmul.bf16.gmra.mxu0 %v7135
      %v7258 = vpop.f32.mrf.mxu0
      %v7259 = vadd.f32 %v7160, %v7258
      %v7260 = vpop.f32.mrf.mxu0
      %v7261 = vadd.f32 %v7160, %v7260
      %7262 = vmatmul.bf16.gmra.mxu0 %v7136
      %v7263 = vpop.f32.mrf.mxu0
      %v7264 = vadd.f32 %v7160, %v7263
      %v7265 = vpop.f32.mrf.mxu0
      %v7266 = vadd.f32 %v7160, %v7265
      %7267 = vmatmul.bf16.gmra.mxu0 %v7137
      %v7268 = vpop.f32.mrf.mxu0
      %v7269 = vadd.f32 %v7160, %v7268
      %v7270 = vpop.f32.mrf.mxu0
      %v7271 = vadd.f32 %v7160, %v7270
      %7272 = vmatmul.bf16.gmra.mxu0 %v7138
      %v7273 = vpop.f32.mrf.mxu0
      %v7274 = vadd.f32 %v7160, %v7273
      %v7275 = vpop.f32.mrf.mxu0
      %v7276 = vadd.f32 %v7160, %v7275
      %7277 = vmatmul.bf16.gmra.mxu0 %v7139
      %v7278 = vpop.f32.mrf.mxu0
      %v7279 = vadd.f32 %v7160, %v7278
      %v7280 = vpop.f32.mrf.mxu0
      %v7281 = vadd.f32 %v7160, %v7280
      %7282 = vmatmul.bf16.gmra.mxu0 %v7140
      %v7283 = vpop.f32.mrf.mxu0
      %v7284 = vadd.f32 %v7160, %v7283
      %v7285 = vpop.f32.mrf.mxu0
      %v7286 = vadd.f32 %v7160, %v7285
      %7287 = vmatmul.bf16.gmra.mxu0 %v7141
      %v7288 = vpop.f32.mrf.mxu0
      %v7289 = vadd.f32 %v7160, %v7288
      %v7290 = vpop.f32.mrf.mxu0
      %v7291 = vadd.f32 %v7160, %v7290
      %7292 = vmatmul.bf16.gmra.mxu0 %v7142
      %v7293 = vpop.f32.mrf.mxu0
      %v7294 = vadd.f32 %v7160, %v7293
      %v7295 = vpop.f32.mrf.mxu0
      %v7296 = vadd.f32 %v7160, %v7295
      %7297 = vdwg.mxu0
      %7298 = vadd.xlane.f32.xlu0 %v7219
      %v7299 = vpop.xlane.xlu0 %7298
      %7300 = vadd.xlane.f32.xlu0 %v7221
      %v7301 = vpop.xlane.xlu0 %7300
      %7302 = vadd.xlane.f32.xlu0 %v7224
      %v7303 = vpop.xlane.xlu0 %7302
      %7304 = vadd.xlane.f32.xlu0 %v7226
      %v7305 = vpop.xlane.xlu0 %7304
      %7306 = vadd.xlane.f32.xlu0 %v7229
      %v7307 = vpop.xlane.xlu0 %7306
      %7308 = vadd.xlane.f32.xlu0 %v7231
      %v7309 = vpop.xlane.xlu0 %7308
      %7310 = vadd.xlane.f32.xlu0 %v7234
      %v7311 = vpop.xlane.xlu0 %7310
      %7312 = vadd.xlane.f32.xlu0 %v7236
      %v7313 = vpop.xlane.xlu0 %7312
      %7314 = vadd.xlane.f32.xlu0 %v7239
      %v7315 = vpop.xlane.xlu0 %7314
      %7316 = vadd.xlane.f32.xlu0 %v7241
      %v7317 = vpop.xlane.xlu0 %7316
      %7318 = vadd.xlane.f32.xlu0 %v7244
      %v7319 = vpop.xlane.xlu0 %7318
      %7320 = vadd.xlane.f32.xlu0 %v7246
      %v7321 = vpop.xlane.xlu0 %7320
      %7322 = vadd.xlane.f32.xlu0 %v7249
      %v7323 = vpop.xlane.xlu0 %7322
      %7324 = vadd.xlane.f32.xlu0 %v7251
      %v7325 = vpop.xlane.xlu0 %7324
      %7326 = vadd.xlane.f32.xlu0 %v7254
      %v7327 = vpop.xlane.xlu0 %7326
      %7328 = vadd.xlane.f32.xlu0 %v7256
      %v7329 = vpop.xlane.xlu0 %7328
      %7330 = vadd.xlane.f32.xlu0 %v7259
      %v7331 = vpop.xlane.xlu0 %7330
      %7332 = vadd.xlane.f32.xlu0 %v7261
      %v7333 = vpop.xlane.xlu0 %7332
      %7334 = vadd.xlane.f32.xlu0 %v7264
      %v7335 = vpop.xlane.xlu0 %7334
      %7336 = vadd.xlane.f32.xlu0 %v7266
      %v7337 = vpop.xlane.xlu0 %7336
      %7338 = vadd.xlane.f32.xlu0 %v7269
      %v7339 = vpop.xlane.xlu0 %7338
      %7340 = vadd.xlane.f32.xlu0 %v7271
      %v7341 = vpop.xlane.xlu0 %7340
      %7342 = vadd.xlane.f32.xlu0 %v7274
      %v7343 = vpop.xlane.xlu0 %7342
      %7344 = vadd.xlane.f32.xlu0 %v7276
      %v7345 = vpop.xlane.xlu0 %7344
      %7346 = vadd.xlane.f32.xlu0 %v7279
      %v7347 = vpop.xlane.xlu0 %7346
      %7348 = vadd.xlane.f32.xlu0 %v7281
      %v7349 = vpop.xlane.xlu0 %7348
      %7350 = vadd.xlane.f32.xlu0 %v7284
      %v7351 = vpop.xlane.xlu0 %7350
      %7352 = vadd.xlane.f32.xlu0 %v7286
      %v7353 = vpop.xlane.xlu0 %7352
      %7354 = vadd.xlane.f32.xlu0 %v7289
      %v7355 = vpop.xlane.xlu0 %7354
      %7356 = vadd.xlane.f32.xlu0 %v7291
      %v7357 = vpop.xlane.xlu0 %7356
      %7358 = vadd.xlane.f32.xlu0 %v7294
      %v7359 = vpop.xlane.xlu0 %7358
      %7360 = vadd.xlane.f32.xlu0 %v7296
      %v7361 = vpop.xlane.xlu0 %7360
      %v7362 = vmul.f32 %v7299, 0.03125
      %v7363 = vmul.f32 %v7301, 0.03125
      %v7364 = vmul.f32 %v7303, 0.03125
      %v7365 = vmul.f32 %v7305, 0.03125
      %v7366 = vmul.f32 %v7307, 0.03125
      %v7367 = vmul.f32 %v7309, 0.03125
      %v7368 = vmul.f32 %v7311, 0.03125
      %v7369 = vmul.f32 %v7313, 0.03125
      %v7370 = vmul.f32 %v7315, 0.03125
      %v7371 = vmul.f32 %v7317, 0.03125
      %v7372 = vmul.f32 %v7319, 0.03125
      %v7373 = vmul.f32 %v7321, 0.03125
      %v7374 = vmul.f32 %v7323, 0.03125
      %v7375 = vmul.f32 %v7325, 0.03125
      %v7376 = vmul.f32 %v7327, 0.03125
      %v7377 = vmul.f32 %v7329, 0.03125
      %v7378 = vmul.f32 %v7331, 0.03125
      %v7379 = vmul.f32 %v7333, 0.03125
      %v7380 = vmul.f32 %v7335, 0.03125
      %v7381 = vmul.f32 %v7337, 0.03125
      %v7382 = vmul.f32 %v7339, 0.03125
      %v7383 = vmul.f32 %v7341, 0.03125
      %v7384 = vmul.f32 %v7343, 0.03125
      %v7385 = vmul.f32 %v7345, 0.03125
      %v7386 = vmul.f32 %v7347, 0.03125
      %v7387 = vmul.f32 %v7349, 0.03125
      %v7388 = vmul.f32 %v7351, 0.03125
      %v7389 = vmul.f32 %v7353, 0.03125
      %v7390 = vmul.f32 %v7355, 0.03125
      %v7391 = vmul.f32 %v7357, 0.03125
      %v7392 = vmul.f32 %v7359, 0.03125
      %v7393 = vmul.f32 %v7361, 0.03125
      %v7394 = vmul.f32 %v7219, %v7219
      %v7395 = vmul.f32 %v7221, %v7221
      %v7396 = vmul.f32 %v7224, %v7224
      %v7397 = vmul.f32 %v7226, %v7226
      %v7398 = vmul.f32 %v7229, %v7229
      %v7399 = vmul.f32 %v7231, %v7231
      %v7400 = vmul.f32 %v7234, %v7234
      %v7401 = vmul.f32 %v7236, %v7236
      %v7402 = vmul.f32 %v7239, %v7239
      %v7403 = vmul.f32 %v7241, %v7241
      %v7404 = vmul.f32 %v7244, %v7244
      %v7405 = vmul.f32 %v7246, %v7246
      %v7406 = vmul.f32 %v7249, %v7249
      %v7407 = vmul.f32 %v7251, %v7251
      %v7408 = vmul.f32 %v7254, %v7254
      %v7409 = vmul.f32 %v7256, %v7256
      %v7410 = vmul.f32 %v7259, %v7259
      %v7411 = vmul.f32 %v7261, %v7261
      %v7412 = vmul.f32 %v7264, %v7264
      %v7413 = vmul.f32 %v7266, %v7266
      %v7414 = vmul.f32 %v7269, %v7269
      %v7415 = vmul.f32 %v7271, %v7271
      %v7416 = vmul.f32 %v7274, %v7274
      %v7417 = vmul.f32 %v7276, %v7276
      %v7418 = vmul.f32 %v7279, %v7279
      %v7419 = vmul.f32 %v7281, %v7281
      %v7420 = vmul.f32 %v7284, %v7284
      %v7421 = vmul.f32 %v7286, %v7286
      %v7422 = vmul.f32 %v7289, %v7289
      %v7423 = vmul.f32 %v7291, %v7291
      %v7424 = vmul.f32 %v7294, %v7294
      %v7425 = vmul.f32 %v7296, %v7296
      %7426 = vadd.xlane.f32.xlu0 %v7394
      %v7427 = vpop.xlane.xlu0 %7426
      %7428 = vadd.xlane.f32.xlu0 %v7395
      %v7429 = vpop.xlane.xlu0 %7428
      %7430 = vadd.xlane.f32.xlu0 %v7396
      %v7431 = vpop.xlane.xlu0 %7430
      %7432 = vadd.xlane.f32.xlu0 %v7397
      %v7433 = vpop.xlane.xlu0 %7432
      %7434 = vadd.xlane.f32.xlu0 %v7398
      %v7435 = vpop.xlane.xlu0 %7434
      %7436 = vadd.xlane.f32.xlu0 %v7399
      %v7437 = vpop.xlane.xlu0 %7436
      %7438 = vadd.xlane.f32.xlu0 %v7400
      %v7439 = vpop.xlane.xlu0 %7438
      %7440 = vadd.xlane.f32.xlu0 %v7401
      %v7441 = vpop.xlane.xlu0 %7440
      %7442 = vadd.xlane.f32.xlu0 %v7402
      %v7443 = vpop.xlane.xlu0 %7442
      %7444 = vadd.xlane.f32.xlu0 %v7403
      %v7445 = vpop.xlane.xlu0 %7444
      %7446 = vadd.xlane.f32.xlu0 %v7404
      %v7447 = vpop.xlane.xlu0 %7446
      %7448 = vadd.xlane.f32.xlu0 %v7405
      %v7449 = vpop.xlane.xlu0 %7448
      %7450 = vadd.xlane.f32.xlu0 %v7406
      %v7451 = vpop.xlane.xlu0 %7450
      %7452 = vadd.xlane.f32.xlu0 %v7407
      %v7453 = vpop.xlane.xlu0 %7452
      %7454 = vadd.xlane.f32.xlu0 %v7408
      %v7455 = vpop.xlane.xlu0 %7454
      %7456 = vadd.xlane.f32.xlu0 %v7409
      %v7457 = vpop.xlane.xlu0 %7456
      %7458 = vadd.xlane.f32.xlu0 %v7410
      %v7459 = vpop.xlane.xlu0 %7458
      %7460 = vadd.xlane.f32.xlu0 %v7411
      %v7461 = vpop.xlane.xlu0 %7460
      %7462 = vadd.xlane.f32.xlu0 %v7412
      %v7463 = vpop.xlane.xlu0 %7462
      %7464 = vadd.xlane.f32.xlu0 %v7413
      %v7465 = vpop.xlane.xlu0 %7464
      %7466 = vadd.xlane.f32.xlu0 %v7414
      %v7467 = vpop.xlane.xlu0 %7466
      %7468 = vadd.xlane.f32.xlu0 %v7415
      %v7469 = vpop.xlane.xlu0 %7468
      %7470 = vadd.xlane.f32.xlu0 %v7416
      %v7471 = vpop.xlane.xlu0 %7470
      %7472 = vadd.xlane.f32.xlu0 %v7417
      %v7473 = vpop.xlane.xlu0 %7472
      %7474 = vadd.xlane.f32.xlu0 %v7418
      %v7475 = vpop.xlane.xlu0 %7474
      %7476 = vadd.xlane.f32.xlu0 %v7419
      %v7477 = vpop.xlane.xlu0 %7476
      %7478 = vadd.xlane.f32.xlu0 %v7420
      %v7479 = vpop.xlane.xlu0 %7478
      %7480 = vadd.xlane.f32.xlu0 %v7421
      %v7481 = vpop.xlane.xlu0 %7480
      %7482 = vadd.xlane.f32.xlu0 %v7422
      %v7483 = vpop.xlane.xlu0 %7482
      %7484 = vadd.xlane.f32.xlu0 %v7423
      %v7485 = vpop.xlane.xlu0 %7484
      %7486 = vadd.xlane.f32.xlu0 %v7424
      %v7487 = vpop.xlane.xlu0 %7486
      %7488 = vadd.xlane.f32.xlu0 %v7425
      %v7489 = vpop.xlane.xlu0 %7488
      %v7490 = vmul.f32 %v7427, 0.03125
      %v7491 = vmul.f32 %v7429, 0.03125
      %v7492 = vmul.f32 %v7431, 0.03125
      %v7493 = vmul.f32 %v7433, 0.03125
      %v7494 = vmul.f32 %v7435, 0.03125
      %v7495 = vmul.f32 %v7437, 0.03125
      %v7496 = vmul.f32 %v7439, 0.03125
      %v7497 = vmul.f32 %v7441, 0.03125
      %v7498 = vmul.f32 %v7443, 0.03125
      %v7499 = vmul.f32 %v7445, 0.03125
      %v7500 = vmul.f32 %v7447, 0.03125
      %v7501 = vmul.f32 %v7449, 0.03125
      %v7502 = vmul.f32 %v7451, 0.03125
      %v7503 = vmul.f32 %v7453, 0.03125
      %v7504 = vmul.f32 %v7455, 0.03125
      %v7505 = vmul.f32 %v7457, 0.03125
      %v7506 = vmul.f32 %v7459, 0.03125
      %v7507 = vmul.f32 %v7461, 0.03125
      %v7508 = vmul.f32 %v7463, 0.03125
      %v7509 = vmul.f32 %v7465, 0.03125
      %v7510 = vmul.f32 %v7467, 0.03125
      %v7511 = vmul.f32 %v7469, 0.03125
      %v7512 = vmul.f32 %v7471, 0.03125
      %v7513 = vmul.f32 %v7473, 0.03125
      %v7514 = vmul.f32 %v7475, 0.03125
      %v7515 = vmul.f32 %v7477, 0.03125
      %v7516 = vmul.f32 %v7479, 0.03125
      %v7517 = vmul.f32 %v7481, 0.03125
      %v7518 = vmul.f32 %v7483, 0.03125
      %v7519 = vmul.f32 %v7485, 0.03125
      %v7520 = vmul.f32 %v7487, 0.03125
      %v7521 = vmul.f32 %v7489, 0.03125
      %v7522 = vmul.f32 %v7362, %v7362
      %v7523 = vmul.f32 %v7363, %v7363
      %v7524 = vmul.f32 %v7364, %v7364
      %v7525 = vmul.f32 %v7365, %v7365
      %v7526 = vmul.f32 %v7366, %v7366
      %v7527 = vmul.f32 %v7367, %v7367
      %v7528 = vmul.f32 %v7368, %v7368
      %v7529 = vmul.f32 %v7369, %v7369
      %v7530 = vmul.f32 %v7370, %v7370
      %v7531 = vmul.f32 %v7371, %v7371
      %v7532 = vmul.f32 %v7372, %v7372
      %v7533 = vmul.f32 %v7373, %v7373
      %v7534 = vmul.f32 %v7374, %v7374
      %v7535 = vmul.f32 %v7375, %v7375
      %v7536 = vmul.f32 %v7376, %v7376
      %v7537 = vmul.f32 %v7377, %v7377
      %v7538 = vmul.f32 %v7378, %v7378
      %v7539 = vmul.f32 %v7379, %v7379
      %v7540 = vmul.f32 %v7380, %v7380
      %v7541 = vmul.f32 %v7381, %v7381
      %v7542 = vmul.f32 %v7382, %v7382
      %v7543 = vmul.f32 %v7383, %v7383
      %v7544 = vmul.f32 %v7384, %v7384
      %v7545 = vmul.f32 %v7385, %v7385
      %v7546 = vmul.f32 %v7386, %v7386
      %v7547 = vmul.f32 %v7387, %v7387
      %v7548 = vmul.f32 %v7388, %v7388
      %v7549 = vmul.f32 %v7389, %v7389
      %v7550 = vmul.f32 %v7390, %v7390
      %v7551 = vmul.f32 %v7391, %v7391
      %v7552 = vmul.f32 %v7392, %v7392
      %v7553 = vmul.f32 %v7393, %v7393
      %v7554 = vsub.f32 %v7490, %v7522
      %v7555 = vsub.f32 %v7491, %v7523
      %v7556 = vsub.f32 %v7492, %v7524
      %v7557 = vsub.f32 %v7493, %v7525
      %v7558 = vsub.f32 %v7494, %v7526
      %v7559 = vsub.f32 %v7495, %v7527
      %v7560 = vsub.f32 %v7496, %v7528
      %v7561 = vsub.f32 %v7497, %v7529
      %v7562 = vsub.f32 %v7498, %v7530
      %v7563 = vsub.f32 %v7499, %v7531
      %v7564 = vsub.f32 %v7500, %v7532
      %v7565 = vsub.f32 %v7501, %v7533
      %v7566 = vsub.f32 %v7502, %v7534
      %v7567 = vsub.f32 %v7503, %v7535
      %v7568 = vsub.f32 %v7504, %v7536
      %v7569 = vsub.f32 %v7505, %v7537
      %v7570 = vsub.f32 %v7506, %v7538
      %v7571 = vsub.f32 %v7507, %v7539
      %v7572 = vsub.f32 %v7508, %v7540
      %v7573 = vsub.f32 %v7509, %v7541
      %v7574 = vsub.f32 %v7510, %v7542
      %v7575 = vsub.f32 %v7511, %v7543
      %v7576 = vsub.f32 %v7512, %v7544
      %v7577 = vsub.f32 %v7513, %v7545
      %v7578 = vsub.f32 %v7514, %v7546
      %v7579 = vsub.f32 %v7515, %v7547
      %v7580 = vsub.f32 %v7516, %v7548
      %v7581 = vsub.f32 %v7517, %v7549
      %v7582 = vsub.f32 %v7518, %v7550
      %v7583 = vsub.f32 %v7519, %v7551
      %v7584 = vsub.f32 %v7520, %v7552
      %v7585 = vsub.f32 %v7521, %v7553
      %v7586 = vadd.f32 %v7554, 1e-05
      %v7587 = vadd.f32 %v7555, 1e-05
      %v7588 = vadd.f32 %v7556, 1e-05
      %v7589 = vadd.f32 %v7557, 1e-05
      %v7590 = vadd.f32 %v7558, 1e-05
      %v7591 = vadd.f32 %v7559, 1e-05
      %v7592 = vadd.f32 %v7560, 1e-05
      %v7593 = vadd.f32 %v7561, 1e-05
      %v7594 = vadd.f32 %v7562, 1e-05
      %v7595 = vadd.f32 %v7563, 1e-05
      %v7596 = vadd.f32 %v7564, 1e-05
      %v7597 = vadd.f32 %v7565, 1e-05
      %v7598 = vadd.f32 %v7566, 1e-05
      %v7599 = vadd.f32 %v7567, 1e-05
      %v7600 = vadd.f32 %v7568, 1e-05
      %v7601 = vadd.f32 %v7569, 1e-05
      %v7602 = vadd.f32 %v7570, 1e-05
      %v7603 = vadd.f32 %v7571, 1e-05
      %v7604 = vadd.f32 %v7572, 1e-05
      %v7605 = vadd.f32 %v7573, 1e-05
      %v7606 = vadd.f32 %v7574, 1e-05
      %v7607 = vadd.f32 %v7575, 1e-05
      %v7608 = vadd.f32 %v7576, 1e-05
      %v7609 = vadd.f32 %v7577, 1e-05
      %v7610 = vadd.f32 %v7578, 1e-05
      %v7611 = vadd.f32 %v7579, 1e-05
      %v7612 = vadd.f32 %v7580, 1e-05
      %v7613 = vadd.f32 %v7581, 1e-05
      %v7614 = vadd.f32 %v7582, 1e-05
      %v7615 = vadd.f32 %v7583, 1e-05
      %v7616 = vadd.f32 %v7584, 1e-05
      %v7617 = vadd.f32 %v7585, 1e-05
      %v7618 = vrsqrt.pop %v7586
      %v7619 = vmul.f32 %v7618, %v7586
      %v7620 = vmul.f32 %v7619, %v7618
      %v7621 = vmul.f32 0.5, %v7620
      %v7622 = vsub.f32 1.5, %v7621
      %v7623 = vmul.f32 %v7618, %v7622
      %vm7624 = vweird.f32 %v7586
      %vm7625 = vweird.f32 %v7618
      %vm7626 = vmor %vm7624, %vm7625
      %v7627 = vsel %vm7626, %v7618, %v7623
      %v7628 = vrsqrt.pop %v7587
      %v7629 = vmul.f32 %v7628, %v7587
      %v7630 = vmul.f32 %v7629, %v7628
      %v7631 = vmul.f32 0.5, %v7630
      %v7632 = vsub.f32 1.5, %v7631
      %v7633 = vmul.f32 %v7628, %v7632
      %vm7634 = vweird.f32 %v7587
      %vm7635 = vweird.f32 %v7628
      %vm7636 = vmor %vm7634, %vm7635
      %v7637 = vsel %vm7636, %v7628, %v7633
      %v7638 = vrsqrt.pop %v7588
      %v7639 = vmul.f32 %v7638, %v7588
      %v7640 = vmul.f32 %v7639, %v7638
      %v7641 = vmul.f32 0.5, %v7640
      %v7642 = vsub.f32 1.5, %v7641
      %v7643 = vmul.f32 %v7638, %v7642
      %vm7644 = vweird.f32 %v7588
      %vm7645 = vweird.f32 %v7638
      %vm7646 = vmor %vm7644, %vm7645
      %v7647 = vsel %vm7646, %v7638, %v7643
      %v7648 = vrsqrt.pop %v7589
      %v7649 = vmul.f32 %v7648, %v7589
      %v7650 = vmul.f32 %v7649, %v7648
      %v7651 = vmul.f32 0.5, %v7650
      %v7652 = vsub.f32 1.5, %v7651
      %v7653 = vmul.f32 %v7648, %v7652
      %vm7654 = vweird.f32 %v7589
      %vm7655 = vweird.f32 %v7648
      %vm7656 = vmor %vm7654, %vm7655
      %v7657 = vsel %vm7656, %v7648, %v7653
      %v7658 = vrsqrt.pop %v7590
      %v7659 = vmul.f32 %v7658, %v7590
      %v7660 = vmul.f32 %v7659, %v7658
      %v7661 = vmul.f32 0.5, %v7660
      %v7662 = vsub.f32 1.5, %v7661
      %v7663 = vmul.f32 %v7658, %v7662
      %vm7664 = vweird.f32 %v7590
      %vm7665 = vweird.f32 %v7658
      %vm7666 = vmor %vm7664, %vm7665
      %v7667 = vsel %vm7666, %v7658, %v7663
      %v7668 = vrsqrt.pop %v7591
      %v7669 = vmul.f32 %v7668, %v7591
      %v7670 = vmul.f32 %v7669, %v7668
      %v7671 = vmul.f32 0.5, %v7670
      %v7672 = vsub.f32 1.5, %v7671
      %v7673 = vmul.f32 %v7668, %v7672
      %vm7674 = vweird.f32 %v7591
      %vm7675 = vweird.f32 %v7668
      %vm7676 = vmor %vm7674, %vm7675
      %v7677 = vsel %vm7676, %v7668, %v7673
      %v7678 = vrsqrt.pop %v7592
      %v7679 = vmul.f32 %v7678, %v7592
      %v7680 = vmul.f32 %v7679, %v7678
      %v7681 = vmul.f32 0.5, %v7680
      %v7682 = vsub.f32 1.5, %v7681
      %v7683 = vmul.f32 %v7678, %v7682
      %vm7684 = vweird.f32 %v7592
      %vm7685 = vweird.f32 %v7678
      %vm7686 = vmor %vm7684, %vm7685
      %v7687 = vsel %vm7686, %v7678, %v7683
      %v7688 = vrsqrt.pop %v7593
      %v7689 = vmul.f32 %v7688, %v7593
      %v7690 = vmul.f32 %v7689, %v7688
      %v7691 = vmul.f32 0.5, %v7690
      %v7692 = vsub.f32 1.5, %v7691
      %v7693 = vmul.f32 %v7688, %v7692
      %vm7694 = vweird.f32 %v7593
      %vm7695 = vweird.f32 %v7688
      %vm7696 = vmor %vm7694, %vm7695
      %v7697 = vsel %vm7696, %v7688, %v7693
      %v7698 = vrsqrt.pop %v7594
      %v7699 = vmul.f32 %v7698, %v7594
      %v7700 = vmul.f32 %v7699, %v7698
      %v7701 = vmul.f32 0.5, %v7700
      %v7702 = vsub.f32 1.5, %v7701
      %v7703 = vmul.f32 %v7698, %v7702
      %vm7704 = vweird.f32 %v7594
      %vm7705 = vweird.f32 %v7698
      %vm7706 = vmor %vm7704, %vm7705
      %v7707 = vsel %vm7706, %v7698, %v7703
      %v7708 = vrsqrt.pop %v7595
      %v7709 = vmul.f32 %v7708, %v7595
      %v7710 = vmul.f32 %v7709, %v7708
      %v7711 = vmul.f32 0.5, %v7710
      %v7712 = vsub.f32 1.5, %v7711
      %v7713 = vmul.f32 %v7708, %v7712
      %vm7714 = vweird.f32 %v7595
      %vm7715 = vweird.f32 %v7708
      %vm7716 = vmor %vm7714, %vm7715
      %v7717 = vsel %vm7716, %v7708, %v7713
      %v7718 = vrsqrt.pop %v7596
      %v7719 = vmul.f32 %v7718, %v7596
      %v7720 = vmul.f32 %v7719, %v7718
      %v7721 = vmul.f32 0.5, %v7720
      %v7722 = vsub.f32 1.5, %v7721
      %v7723 = vmul.f32 %v7718, %v7722
      %vm7724 = vweird.f32 %v7596
      %vm7725 = vweird.f32 %v7718
      %vm7726 = vmor %vm7724, %vm7725
      %v7727 = vsel %vm7726, %v7718, %v7723
      %v7728 = vrsqrt.pop %v7597
      %v7729 = vmul.f32 %v7728, %v7597
      %v7730 = vmul.f32 %v7729, %v7728
      %v7731 = vmul.f32 0.5, %v7730
      %v7732 = vsub.f32 1.5, %v7731
      %v7733 = vmul.f32 %v7728, %v7732
      %vm7734 = vweird.f32 %v7597
      %vm7735 = vweird.f32 %v7728
      %vm7736 = vmor %vm7734, %vm7735
      %v7737 = vsel %vm7736, %v7728, %v7733
      %v7738 = vrsqrt.pop %v7598
      %v7739 = vmul.f32 %v7738, %v7598
      %v7740 = vmul.f32 %v7739, %v7738
      %v7741 = vmul.f32 0.5, %v7740
      %v7742 = vsub.f32 1.5, %v7741
      %v7743 = vmul.f32 %v7738, %v7742
      %vm7744 = vweird.f32 %v7598
      %vm7745 = vweird.f32 %v7738
      %vm7746 = vmor %vm7744, %vm7745
      %v7747 = vsel %vm7746, %v7738, %v7743
      %v7748 = vrsqrt.pop %v7599
      %v7749 = vmul.f32 %v7748, %v7599
      %v7750 = vmul.f32 %v7749, %v7748
      %v7751 = vmul.f32 0.5, %v7750
      %v7752 = vsub.f32 1.5, %v7751
      %v7753 = vmul.f32 %v7748, %v7752
      %vm7754 = vweird.f32 %v7599
      %vm7755 = vweird.f32 %v7748
      %vm7756 = vmor %vm7754, %vm7755
      %v7757 = vsel %vm7756, %v7748, %v7753
      %v7758 = vrsqrt.pop %v7600
      %v7759 = vmul.f32 %v7758, %v7600
      %v7760 = vmul.f32 %v7759, %v7758
      %v7761 = vmul.f32 0.5, %v7760
      %v7762 = vsub.f32 1.5, %v7761
      %v7763 = vmul.f32 %v7758, %v7762
      %vm7764 = vweird.f32 %v7600
      %vm7765 = vweird.f32 %v7758
      %vm7766 = vmor %vm7764, %vm7765
      %v7767 = vsel %vm7766, %v7758, %v7763
      %v7768 = vrsqrt.pop %v7601
      %v7769 = vmul.f32 %v7768, %v7601
      %v7770 = vmul.f32 %v7769, %v7768
      %v7771 = vmul.f32 0.5, %v7770
      %v7772 = vsub.f32 1.5, %v7771
      %v7773 = vmul.f32 %v7768, %v7772
      %vm7774 = vweird.f32 %v7601
      %vm7775 = vweird.f32 %v7768
      %vm7776 = vmor %vm7774, %vm7775
      %v7777 = vsel %vm7776, %v7768, %v7773
      %v7778 = vrsqrt.pop %v7602
      %v7779 = vmul.f32 %v7778, %v7602
      %v7780 = vmul.f32 %v7779, %v7778
      %v7781 = vmul.f32 0.5, %v7780
      %v7782 = vsub.f32 1.5, %v7781
      %v7783 = vmul.f32 %v7778, %v7782
      %vm7784 = vweird.f32 %v7602
      %vm7785 = vweird.f32 %v7778
      %vm7786 = vmor %vm7784, %vm7785
      %v7787 = vsel %vm7786, %v7778, %v7783
      %v7788 = vrsqrt.pop %v7603
      %v7789 = vmul.f32 %v7788, %v7603
      %v7790 = vmul.f32 %v7789, %v7788
      %v7791 = vmul.f32 0.5, %v7790
      %v7792 = vsub.f32 1.5, %v7791
      %v7793 = vmul.f32 %v7788, %v7792
      %vm7794 = vweird.f32 %v7603
      %vm7795 = vweird.f32 %v7788
      %vm7796 = vmor %vm7794, %vm7795
      %v7797 = vsel %vm7796, %v7788, %v7793
      %v7798 = vrsqrt.pop %v7604
      %v7799 = vmul.f32 %v7798, %v7604
      %v7800 = vmul.f32 %v7799, %v7798
      %v7801 = vmul.f32 0.5, %v7800
      %v7802 = vsub.f32 1.5, %v7801
      %v7803 = vmul.f32 %v7798, %v7802
      %vm7804 = vweird.f32 %v7604
      %vm7805 = vweird.f32 %v7798
      %vm7806 = vmor %vm7804, %vm7805
      %v7807 = vsel %vm7806, %v7798, %v7803
      %v7808 = vrsqrt.pop %v7605
      %v7809 = vmul.f32 %v7808, %v7605
      %v7810 = vmul.f32 %v7809, %v7808
      %v7811 = vmul.f32 0.5, %v7810
      %v7812 = vsub.f32 1.5, %v7811
      %v7813 = vmul.f32 %v7808, %v7812
      %vm7814 = vweird.f32 %v7605
      %vm7815 = vweird.f32 %v7808
      %vm7816 = vmor %vm7814, %vm7815
      %v7817 = vsel %vm7816, %v7808, %v7813
      %v7818 = vrsqrt.pop %v7606
      %v7819 = vmul.f32 %v7818, %v7606
      %v7820 = vmul.f32 %v7819, %v7818
      %v7821 = vmul.f32 0.5, %v7820
      %v7822 = vsub.f32 1.5, %v7821
      %v7823 = vmul.f32 %v7818, %v7822
      %vm7824 = vweird.f32 %v7606
      %vm7825 = vweird.f32 %v7818
      %vm7826 = vmor %vm7824, %vm7825
      %v7827 = vsel %vm7826, %v7818, %v7823
      %v7828 = vrsqrt.pop %v7607
      %v7829 = vmul.f32 %v7828, %v7607
      %v7830 = vmul.f32 %v7829, %v7828
      %v7831 = vmul.f32 0.5, %v7830
      %v7832 = vsub.f32 1.5, %v7831
      %v7833 = vmul.f32 %v7828, %v7832
      %vm7834 = vweird.f32 %v7607
      %vm7835 = vweird.f32 %v7828
      %vm7836 = vmor %vm7834, %vm7835
      %v7837 = vsel %vm7836, %v7828, %v7833
      %v7838 = vrsqrt.pop %v7608
      %v7839 = vmul.f32 %v7838, %v7608
      %v7840 = vmul.f32 %v7839, %v7838
      %v7841 = vmul.f32 0.5, %v7840
      %v7842 = vsub.f32 1.5, %v7841
      %v7843 = vmul.f32 %v7838, %v7842
      %vm7844 = vweird.f32 %v7608
      %vm7845 = vweird.f32 %v7838
      %vm7846 = vmor %vm7844, %vm7845
      %v7847 = vsel %vm7846, %v7838, %v7843
      %v7848 = vrsqrt.pop %v7609
      %v7849 = vmul.f32 %v7848, %v7609
      %v7850 = vmul.f32 %v7849, %v7848
      %v7851 = vmul.f32 0.5, %v7850
      %v7852 = vsub.f32 1.5, %v7851
      %v7853 = vmul.f32 %v7848, %v7852
      %vm7854 = vweird.f32 %v7609
      %vm7855 = vweird.f32 %v7848
      %vm7856 = vmor %vm7854, %vm7855
      %v7857 = vsel %vm7856, %v7848, %v7853
      %v7858 = vrsqrt.pop %v7610
      %v7859 = vmul.f32 %v7858, %v7610
      %v7860 = vmul.f32 %v7859, %v7858
      %v7861 = vmul.f32 0.5, %v7860
      %v7862 = vsub.f32 1.5, %v7861
      %v7863 = vmul.f32 %v7858, %v7862
      %vm7864 = vweird.f32 %v7610
      %vm7865 = vweird.f32 %v7858
      %vm7866 = vmor %vm7864, %vm7865
      %v7867 = vsel %vm7866, %v7858, %v7863
      %v7868 = vrsqrt.pop %v7611
      %v7869 = vmul.f32 %v7868, %v7611
      %v7870 = vmul.f32 %v7869, %v7868
      %v7871 = vmul.f32 0.5, %v7870
      %v7872 = vsub.f32 1.5, %v7871
      %v7873 = vmul.f32 %v7868, %v7872
      %vm7874 = vweird.f32 %v7611
      %vm7875 = vweird.f32 %v7868
      %vm7876 = vmor %vm7874, %vm7875
      %v7877 = vsel %vm7876, %v7868, %v7873
      %v7878 = vrsqrt.pop %v7612
      %v7879 = vmul.f32 %v7878, %v7612
      %v7880 = vmul.f32 %v7879, %v7878
      %v7881 = vmul.f32 0.5, %v7880
      %v7882 = vsub.f32 1.5, %v7881
      %v7883 = vmul.f32 %v7878, %v7882
      %vm7884 = vweird.f32 %v7612
      %vm7885 = vweird.f32 %v7878
      %vm7886 = vmor %vm7884, %vm7885
      %v7887 = vsel %vm7886, %v7878, %v7883
      %v7888 = vrsqrt.pop %v7613
      %v7889 = vmul.f32 %v7888, %v7613
      %v7890 = vmul.f32 %v7889, %v7888
      %v7891 = vmul.f32 0.5, %v7890
      %v7892 = vsub.f32 1.5, %v7891
      %v7893 = vmul.f32 %v7888, %v7892
      %vm7894 = vweird.f32 %v7613
      %vm7895 = vweird.f32 %v7888
      %vm7896 = vmor %vm7894, %vm7895
      %v7897 = vsel %vm7896, %v7888, %v7893
      %v7898 = vrsqrt.pop %v7614
      %v7899 = vmul.f32 %v7898, %v7614
      %v7900 = vmul.f32 %v7899, %v7898
      %v7901 = vmul.f32 0.5, %v7900
      %v7902 = vsub.f32 1.5, %v7901
      %v7903 = vmul.f32 %v7898, %v7902
      %vm7904 = vweird.f32 %v7614
      %vm7905 = vweird.f32 %v7898
      %vm7906 = vmor %vm7904, %vm7905
      %v7907 = vsel %vm7906, %v7898, %v7903
      %v7908 = vrsqrt.pop %v7615
      %v7909 = vmul.f32 %v7908, %v7615
      %v7910 = vmul.f32 %v7909, %v7908
      %v7911 = vmul.f32 0.5, %v7910
      %v7912 = vsub.f32 1.5, %v7911
      %v7913 = vmul.f32 %v7908, %v7912
      %vm7914 = vweird.f32 %v7615
      %vm7915 = vweird.f32 %v7908
      %vm7916 = vmor %vm7914, %vm7915
      %v7917 = vsel %vm7916, %v7908, %v7913
      %v7918 = vrsqrt.pop %v7616
      %v7919 = vmul.f32 %v7918, %v7616
      %v7920 = vmul.f32 %v7919, %v7918
      %v7921 = vmul.f32 0.5, %v7920
      %v7922 = vsub.f32 1.5, %v7921
      %v7923 = vmul.f32 %v7918, %v7922
      %vm7924 = vweird.f32 %v7616
      %vm7925 = vweird.f32 %v7918
      %vm7926 = vmor %vm7924, %vm7925
      %v7927 = vsel %vm7926, %v7918, %v7923
      %v7928 = vrsqrt.pop %v7617
      %v7929 = vmul.f32 %v7928, %v7617
      %v7930 = vmul.f32 %v7929, %v7928
      %v7931 = vmul.f32 0.5, %v7930
      %v7932 = vsub.f32 1.5, %v7931
      %v7933 = vmul.f32 %v7928, %v7932
      %vm7934 = vweird.f32 %v7617
      %vm7935 = vweird.f32 %v7928
      %vm7936 = vmor %vm7934, %vm7935
      %v7937 = vsel %vm7936, %v7928, %v7933
      %v7938 = vsub.f32 %v7219, %v7362
      %v7939 = vsub.f32 %v7221, %v7363
      %v7940 = vsub.f32 %v7224, %v7364
      %v7941 = vsub.f32 %v7226, %v7365
      %v7942 = vsub.f32 %v7229, %v7366
      %v7943 = vsub.f32 %v7231, %v7367
      %v7944 = vsub.f32 %v7234, %v7368
      %v7945 = vsub.f32 %v7236, %v7369
      %v7946 = vsub.f32 %v7239, %v7370
      %v7947 = vsub.f32 %v7241, %v7371
      %v7948 = vsub.f32 %v7244, %v7372
      %v7949 = vsub.f32 %v7246, %v7373
      %v7950 = vsub.f32 %v7249, %v7374
      %v7951 = vsub.f32 %v7251, %v7375
      %v7952 = vsub.f32 %v7254, %v7376
      %v7953 = vsub.f32 %v7256, %v7377
      %v7954 = vsub.f32 %v7259, %v7378
      %v7955 = vsub.f32 %v7261, %v7379
      %v7956 = vsub.f32 %v7264, %v7380
      %v7957 = vsub.f32 %v7266, %v7381
      %v7958 = vsub.f32 %v7269, %v7382
      %v7959 = vsub.f32 %v7271, %v7383
      %v7960 = vsub.f32 %v7274, %v7384
      %v7961 = vsub.f32 %v7276, %v7385
      %v7962 = vsub.f32 %v7279, %v7386
      %v7963 = vsub.f32 %v7281, %v7387
      %v7964 = vsub.f32 %v7284, %v7388
      %v7965 = vsub.f32 %v7286, %v7389
      %v7966 = vsub.f32 %v7289, %v7390
      %v7967 = vsub.f32 %v7291, %v7391
      %v7968 = vsub.f32 %v7294, %v7392
      %v7969 = vsub.f32 %v7296, %v7393
      %v7970 = vmul.f32 %v7938, %v7627
      %v7971 = vmul.f32 %v7939, %v7637
      %v7972 = vmul.f32 %v7940, %v7647
      %v7973 = vmul.f32 %v7941, %v7657
      %v7974 = vmul.f32 %v7942, %v7667
      %v7975 = vmul.f32 %v7943, %v7677
      %v7976 = vmul.f32 %v7944, %v7687
      %v7977 = vmul.f32 %v7945, %v7697
      %v7978 = vmul.f32 %v7946, %v7707
      %v7979 = vmul.f32 %v7947, %v7717
      %v7980 = vmul.f32 %v7948, %v7727
      %v7981 = vmul.f32 %v7949, %v7737
      %v7982 = vmul.f32 %v7950, %v7747
      %v7983 = vmul.f32 %v7951, %v7757
      %v7984 = vmul.f32 %v7952, %v7767
      %v7985 = vmul.f32 %v7953, %v7777
      %v7986 = vmul.f32 %v7954, %v7787
      %v7987 = vmul.f32 %v7955, %v7797
      %v7988 = vmul.f32 %v7956, %v7807
      %v7989 = vmul.f32 %v7957, %v7817
      %v7990 = vmul.f32 %v7958, %v7827
      %v7991 = vmul.f32 %v7959, %v7837
      %v7992 = vmul.f32 %v7960, %v7847
      %v7993 = vmul.f32 %v7961, %v7857
      %v7994 = vmul.f32 %v7962, %v7867
      %v7995 = vmul.f32 %v7963, %v7877
      %v7996 = vmul.f32 %v7964, %v7887
      %v7997 = vmul.f32 %v7965, %v7897
      %v7998 = vmul.f32 %v7966, %v7907
      %v7999 = vmul.f32 %v7967, %v7917
      %v8000 = vmul.f32 %v7968, %v7927
      %v8001 = vmul.f32 %v7969, %v7937
      %v8002 = vld [vmem:[%s4 + $0x17] sm:$0x1]
      %v8003 = vperm.slane %v8002, 0
      %v8004 = vmul.f32 %v7970, %v8003
      %v8005 = vmul.f32 %v7971, %v8003
      %v8006 = vmul.f32 %v7972, %v8003
      %v8007 = vmul.f32 %v7973, %v8003
      %v8008 = vmul.f32 %v7974, %v8003
      %v8009 = vmul.f32 %v7975, %v8003
      %v8010 = vmul.f32 %v7976, %v8003
      %v8011 = vmul.f32 %v7977, %v8003
      %v8012 = vmul.f32 %v7978, %v8003
      %v8013 = vmul.f32 %v7979, %v8003
      %v8014 = vmul.f32 %v7980, %v8003
      %v8015 = vmul.f32 %v7981, %v8003
      %v8016 = vmul.f32 %v7982, %v8003
      %v8017 = vmul.f32 %v7983, %v8003
      %v8018 = vmul.f32 %v7984, %v8003
      %v8019 = vmul.f32 %v7985, %v8003
      %v8020 = vmul.f32 %v7986, %v8003
      %v8021 = vmul.f32 %v7987, %v8003
      %v8022 = vmul.f32 %v7988, %v8003
      %v8023 = vmul.f32 %v7989, %v8003
      %v8024 = vmul.f32 %v7990, %v8003
      %v8025 = vmul.f32 %v7991, %v8003
      %v8026 = vmul.f32 %v7992, %v8003
      %v8027 = vmul.f32 %v7993, %v8003
      %v8028 = vmul.f32 %v7994, %v8003
      %v8029 = vmul.f32 %v7995, %v8003
      %v8030 = vmul.f32 %v7996, %v8003
      %v8031 = vmul.f32 %v7997, %v8003
      %v8032 = vmul.f32 %v7998, %v8003
      %v8033 = vmul.f32 %v7999, %v8003
      %v8034 = vmul.f32 %v8000, %v8003
      %v8035 = vmul.f32 %v8001, %v8003
      %v8036 = vld [vmem:[%s4 + $0x18] sm:$0x1]
      %v8037 = vperm.slane %v8036, 0
      %v8038 = vadd.f32 %v8004, %v8037
      %v8039 = vadd.f32 %v8005, %v8037
      %v8040 = vadd.f32 %v8006, %v8037
      %v8041 = vadd.f32 %v8007, %v8037
      %v8042 = vadd.f32 %v8008, %v8037
      %v8043 = vadd.f32 %v8009, %v8037
      %v8044 = vadd.f32 %v8010, %v8037
      %v8045 = vadd.f32 %v8011, %v8037
      %v8046 = vadd.f32 %v8012, %v8037
      %v8047 = vadd.f32 %v8013, %v8037
      %v8048 = vadd.f32 %v8014, %v8037
      %v8049 = vadd.f32 %v8015, %v8037
      %v8050 = vadd.f32 %v8016, %v8037
      %v8051 = vadd.f32 %v8017, %v8037
      %v8052 = vadd.f32 %v8018, %v8037
      %v8053 = vadd.f32 %v8019, %v8037
      %v8054 = vadd.f32 %v8020, %v8037
      %v8055 = vadd.f32 %v8021, %v8037
      %v8056 = vadd.f32 %v8022, %v8037
      %v8057 = vadd.f32 %v8023, %v8037
      %v8058 = vadd.f32 %v8024, %v8037
      %v8059 = vadd.f32 %v8025, %v8037
      %v8060 = vadd.f32 %v8026, %v8037
      %v8061 = vadd.f32 %v8027, %v8037
      %v8062 = vadd.f32 %v8028, %v8037
      %v8063 = vadd.f32 %v8029, %v8037
      %v8064 = vadd.f32 %v8030, %v8037
      %v8065 = vadd.f32 %v8031, %v8037
      %v8066 = vadd.f32 %v8032, %v8037
      %v8067 = vadd.f32 %v8033, %v8037
      %v8068 = vadd.f32 %v8034, %v8037
      %v8069 = vadd.f32 %v8035, %v8037
      %v8070 = vpack.c.bf16 %v8039, %v8038
      %v8071 = vpack.c.bf16 %v8041, %v8040
      %v8072 = vpack.c.bf16 %v8043, %v8042
      %v8073 = vpack.c.bf16 %v8045, %v8044
      %v8074 = vpack.c.bf16 %v8047, %v8046
      %v8075 = vpack.c.bf16 %v8049, %v8048
      %v8076 = vpack.c.bf16 %v8051, %v8050
      %v8077 = vpack.c.bf16 %v8053, %v8052
      %v8078 = vpack.c.bf16 %v8055, %v8054
      %v8079 = vpack.c.bf16 %v8057, %v8056
      %v8080 = vpack.c.bf16 %v8059, %v8058
      %v8081 = vpack.c.bf16 %v8061, %v8060
      %v8082 = vpack.c.bf16 %v8063, %v8062
      %v8083 = vpack.c.bf16 %v8065, %v8064
      %v8084 = vpack.c.bf16 %v8067, %v8066
      %v8085 = vpack.c.bf16 %v8069, %v8068
      %8086 = vmatpush.bf16.msra.mxu0 %v8077
      %8087 = vmatpush.bf16.msra.mxu0 %v8076
      %8088 = vmatpush.bf16.msra.mxu0 %v8075
      %8089 = vmatpush.bf16.msra.mxu0 %v8074
      %8090 = vmatpush.bf16.msra.mxu0 %v8073
      %8091 = vmatpush.bf16.msra.mxu0 %v8072
      %8092 = vmatpush.bf16.msra.mxu0 %v8071
      %8093 = vmatpush.bf16.msra.mxu0 %v8070
      %8094 = vmatmul.bf16.gmra.mxu0 %v786
      %v8095 = vpop.f32.mrf.mxu0
      %v8096 = vadd.f32 0.0, %v8095
      %v8097 = vpop.f32.mrf.mxu0
      %v8098 = vadd.f32 0.0, %v8097
      %8099 = vmatmul.bf16.gmra.mxu0 %v788
      %v8100 = vpop.f32.mrf.mxu0
      %v8101 = vadd.f32 0.0, %v8100
      %v8102 = vpop.f32.mrf.mxu0
      %v8103 = vadd.f32 0.0, %v8102
      %8104 = vmatmul.bf16.gmra.mxu0 %v790
      %v8105 = vpop.f32.mrf.mxu0
      %v8106 = vadd.f32 0.0, %v8105
      %v8107 = vpop.f32.mrf.mxu0
      %v8108 = vadd.f32 0.0, %v8107
      %8109 = vmatmul.bf16.gmra.mxu0 %v792
      %v8110 = vpop.f32.mrf.mxu0
      %v8111 = vadd.f32 0.0, %v8110
      %v8112 = vpop.f32.mrf.mxu0
      %v8113 = vadd.f32 0.0, %v8112
      %8114 = vmatmul.bf16.gmra.mxu0 %v794
      %v8115 = vpop.f32.mrf.mxu0
      %v8116 = vadd.f32 0.0, %v8115
      %v8117 = vpop.f32.mrf.mxu0
      %v8118 = vadd.f32 0.0, %v8117
      %8119 = vmatmul.bf16.gmra.mxu0 %v796
      %v8120 = vpop.f32.mrf.mxu0
      %v8121 = vadd.f32 0.0, %v8120
      %v8122 = vpop.f32.mrf.mxu0
      %v8123 = vadd.f32 0.0, %v8122
      %8124 = vmatmul.bf16.gmra.mxu0 %v798
      %v8125 = vpop.f32.mrf.mxu0
      %v8126 = vadd.f32 0.0, %v8125
      %v8127 = vpop.f32.mrf.mxu0
      %v8128 = vadd.f32 0.0, %v8127
      %8129 = vmatmul.bf16.gmra.mxu0 %v800
      %v8130 = vpop.f32.mrf.mxu0
      %v8131 = vadd.f32 0.0, %v8130
      %v8132 = vpop.f32.mrf.mxu0
      %v8133 = vadd.f32 0.0, %v8132
      %8134 = vdwg.mxu0
      %8135 = vmatpush.bf16.msra.mxu0 %v8085
      %8136 = vmatpush.bf16.msra.mxu0 %v8084
      %8137 = vmatpush.bf16.msra.mxu0 %v8083
      %8138 = vmatpush.bf16.msra.mxu0 %v8082
      %8139 = vmatpush.bf16.msra.mxu0 %v8081
      %8140 = vmatpush.bf16.msra.mxu0 %v8080
      %8141 = vmatpush.bf16.msra.mxu0 %v8079
      %8142 = vmatpush.bf16.msra.mxu0 %v8078
      %8143 = vmatmul.bf16.gmra.mxu0 %v787
      %v8144 = vpop.f32.mrf.mxu0
      %v8145 = vadd.f32 %v8096, %v8144
      %v8146 = vpop.f32.mrf.mxu0
      %v8147 = vadd.f32 %v8098, %v8146
      %8148 = vmatmul.bf16.gmra.mxu0 %v789
      %v8149 = vpop.f32.mrf.mxu0
      %v8150 = vadd.f32 %v8101, %v8149
      %v8151 = vpop.f32.mrf.mxu0
      %v8152 = vadd.f32 %v8103, %v8151
      %8153 = vmatmul.bf16.gmra.mxu0 %v791
      %v8154 = vpop.f32.mrf.mxu0
      %v8155 = vadd.f32 %v8106, %v8154
      %v8156 = vpop.f32.mrf.mxu0
      %v8157 = vadd.f32 %v8108, %v8156
      %8158 = vmatmul.bf16.gmra.mxu0 %v793
      %v8159 = vpop.f32.mrf.mxu0
      %v8160 = vadd.f32 %v8111, %v8159
      %v8161 = vpop.f32.mrf.mxu0
      %v8162 = vadd.f32 %v8113, %v8161
      %8163 = vmatmul.bf16.gmra.mxu0 %v795
      %v8164 = vpop.f32.mrf.mxu0
      %v8165 = vadd.f32 %v8116, %v8164
      %v8166 = vpop.f32.mrf.mxu0
      %v8167 = vadd.f32 %v8118, %v8166
      %8168 = vmatmul.bf16.gmra.mxu0 %v797
      %v8169 = vpop.f32.mrf.mxu0
      %v8170 = vadd.f32 %v8121, %v8169
      %v8171 = vpop.f32.mrf.mxu0
      %v8172 = vadd.f32 %v8123, %v8171
      %8173 = vmatmul.bf16.gmra.mxu0 %v799
      %v8174 = vpop.f32.mrf.mxu0
      %v8175 = vadd.f32 %v8126, %v8174
      %v8176 = vpop.f32.mrf.mxu0
      %v8177 = vadd.f32 %v8128, %v8176
      %8178 = vmatmul.bf16.gmra.mxu0 %v801
      %v8179 = vpop.f32.mrf.mxu0
      %v8180 = vadd.f32 %v8131, %v8179
      %v8181 = vpop.f32.mrf.mxu0
      %v8182 = vadd.f32 %v8133, %v8181
      %8183 = vdwg.mxu0
      %v8184 = vld [vmem:[%s4 + $0x19] sm:$0x1]
      %v8185 = vld [vmem:[%s3 + $0x500] sm:$0xf]
      %v8186 = vld [vmem:[%s3 + $0x504] sm:$0xf]
      %v8187 = vld [vmem:[%s3 + $0x508] sm:$0xf]
      %v8188 = vld [vmem:[%s3 + $0x50c] sm:$0xf]
      %v8189 = vld [vmem:[%s3 + $0x510] sm:$0xf]
      %v8190 = vld [vmem:[%s3 + $0x514] sm:$0xf]
      %v8191 = vld [vmem:[%s3 + $0x518] sm:$0xf]
      %v8192 = vld [vmem:[%s3 + $0x51c] sm:$0xf]
      %v8193 = vld [vmem:[%s3 + $0x520] sm:$0xf]
      %v8194 = vld [vmem:[%s3 + $0x524] sm:$0xf]
      %v8195 = vld [vmem:[%s3 + $0x528] sm:$0xf]
      %v8196 = vld [vmem:[%s3 + $0x52c] sm:$0xf]
      %v8197 = vld [vmem:[%s3 + $0x530] sm:$0xf]
      %v8198 = vld [vmem:[%s3 + $0x534] sm:$0xf]
      %v8199 = vld [vmem:[%s3 + $0x538] sm:$0xf]
      %v8200 = vld [vmem:[%s3 + $0x53c] sm:$0xf]
      %v8217 = vunpack.c.l.b16 %v8185
      %v8218 = vunpack.c.l.b16 %v8186
      %v8219 = vunpack.c.l.b16 %v8187
      %v8220 = vunpack.c.l.b16 %v8188
      %v8221 = vunpack.c.l.b16 %v8189
      %v8222 = vunpack.c.l.b16 %v8190
      %v8223 = vunpack.c.l.b16 %v8191
      %v8224 = vunpack.c.l.b16 %v8192
      %v8225 = vunpack.c.l.b16 %v8193
      %v8226 = vunpack.c.l.b16 %v8194
      %v8227 = vunpack.c.l.b16 %v8195
      %v8228 = vunpack.c.l.b16 %v8196
      %v8229 = vunpack.c.l.b16 %v8197
      %v8230 = vunpack.c.l.b16 %v8198
      %v8231 = vunpack.c.l.b16 %v8199
      %v8232 = vunpack.c.l.b16 %v8200
      %v8233 = vpack.c.b16 %v8218, %v8217
      %v8234 = vpack.c.b16 %v8220, %v8219
      %v8235 = vpack.c.b16 %v8222, %v8221
      %v8236 = vpack.c.b16 %v8224, %v8223
      %v8237 = vpack.c.b16 %v8226, %v8225
      %v8238 = vpack.c.b16 %v8228, %v8227
      %v8239 = vpack.c.b16 %v8230, %v8229
      %v8240 = vpack.c.b16 %v8232, %v8231
      %8249 = vmatpush.bf16.msra.mxu0 %v8240
      %8250 = vmatpush.bf16.msra.mxu0 %v8239
      %8251 = vmatpush.bf16.msra.mxu0 %v8238
      %8252 = vmatpush.bf16.msra.mxu0 %v8237
      %8253 = vmatpush.bf16.msra.mxu0 %v8236
      %8254 = vmatpush.bf16.msra.mxu0 %v8235
      %8255 = vmatpush.bf16.msra.mxu0 %v8234
      %8256 = vmatpush.bf16.msra.mxu0 %v8233
      %8257 = vmatmul.bf16.gmra.mxu0 %v6101
      %v8258 = vpop.f32.mrf.mxu0
      %v8259 = vadd.f32 0.0, %v8258
      %v8260 = vpop.f32.mrf.mxu0
      %v8261 = vadd.f32 0.0, %v8260
      %8262 = vmatmul.bf16.gmra.mxu0 %v6102
      %v8263 = vpop.f32.mrf.mxu0
      %v8264 = vadd.f32 0.0, %v8263
      %v8265 = vpop.f32.mrf.mxu0
      %v8266 = vadd.f32 0.0, %v8265
      %8267 = vmatmul.bf16.gmra.mxu0 %v6103
      %v8268 = vpop.f32.mrf.mxu0
      %v8269 = vadd.f32 0.0, %v8268
      %v8270 = vpop.f32.mrf.mxu0
      %v8271 = vadd.f32 0.0, %v8270
      %8272 = vmatmul.bf16.gmra.mxu0 %v6104
      %v8273 = vpop.f32.mrf.mxu0
      %v8274 = vadd.f32 0.0, %v8273
      %v8275 = vpop.f32.mrf.mxu0
      %v8276 = vadd.f32 0.0, %v8275
      %8277 = vmatmul.bf16.gmra.mxu0 %v6105
      %v8278 = vpop.f32.mrf.mxu0
      %v8279 = vadd.f32 0.0, %v8278
      %v8280 = vpop.f32.mrf.mxu0
      %v8281 = vadd.f32 0.0, %v8280
      %8282 = vmatmul.bf16.gmra.mxu0 %v6106
      %v8283 = vpop.f32.mrf.mxu0
      %v8284 = vadd.f32 0.0, %v8283
      %v8285 = vpop.f32.mrf.mxu0
      %v8286 = vadd.f32 0.0, %v8285
      %8287 = vmatmul.bf16.gmra.mxu0 %v6107
      %v8288 = vpop.f32.mrf.mxu0
      %v8289 = vadd.f32 0.0, %v8288
      %v8290 = vpop.f32.mrf.mxu0
      %v8291 = vadd.f32 0.0, %v8290
      %8292 = vmatmul.bf16.gmra.mxu0 %v6108
      %v8293 = vpop.f32.mrf.mxu0
      %v8294 = vadd.f32 0.0, %v8293
      %v8295 = vpop.f32.mrf.mxu0
      %v8296 = vadd.f32 0.0, %v8295
      %8297 = vdwg.mxu0
      %v8298 = vperm.slane %v8184, 0
      %v8299 = vadd.f32 %v8298, %v8259
      %v8300 = vadd.f32 %v8298, %v8261
      %v8301 = vadd.f32 %v8298, %v8264
      %v8302 = vadd.f32 %v8298, %v8266
      %v8303 = vadd.f32 %v8298, %v8269
      %v8304 = vadd.f32 %v8298, %v8271
      %v8305 = vadd.f32 %v8298, %v8274
      %v8306 = vadd.f32 %v8298, %v8276
      %v8307 = vadd.f32 %v8298, %v8279
      %v8308 = vadd.f32 %v8298, %v8281
      %v8309 = vadd.f32 %v8298, %v8284
      %v8310 = vadd.f32 %v8298, %v8286
      %v8311 = vadd.f32 %v8298, %v8289
      %v8312 = vadd.f32 %v8298, %v8291
      %v8313 = vadd.f32 %v8298, %v8294
      %v8314 = vadd.f32 %v8298, %v8296
      %v8315 = vpack.c.bf16 %v8147, %v8145
      %v8316 = vpack.c.bf16 %v8152, %v8150
      %v8317 = vpack.c.bf16 %v8157, %v8155
      %v8318 = vpack.c.bf16 %v8162, %v8160
      %v8319 = vpack.c.bf16 %v8167, %v8165
      %v8320 = vpack.c.bf16 %v8172, %v8170
      %v8321 = vpack.c.bf16 %v8177, %v8175
      %v8322 = vpack.c.bf16 %v8182, %v8180
      %v8323 = vld [vmem:[%s3 + $0x540] sm:$0xf]
      %v8324 = vld [vmem:[%s3 + $0x544] sm:$0xf]
      %v8325 = vld [vmem:[%s3 + $0x548] sm:$0xf]
      %v8326 = vld [vmem:[%s3 + $0x54c] sm:$0xf]
      %v8327 = vld [vmem:[%s3 + $0x550] sm:$0xf]
      %v8328 = vld [vmem:[%s3 + $0x554] sm:$0xf]
      %v8329 = vld [vmem:[%s3 + $0x558] sm:$0xf]
      %v8330 = vld [vmem:[%s3 + $0x55c] sm:$0xf]
      %v8331 = vld [vmem:[%s3 + $0x560] sm:$0xf]
      %v8332 = vld [vmem:[%s3 + $0x564] sm:$0xf]
      %v8333 = vld [vmem:[%s3 + $0x568] sm:$0xf]
      %v8334 = vld [vmem:[%s3 + $0x56c] sm:$0xf]
      %v8335 = vld [vmem:[%s3 + $0x570] sm:$0xf]
      %v8336 = vld [vmem:[%s3 + $0x574] sm:$0xf]
      %v8337 = vld [vmem:[%s3 + $0x578] sm:$0xf]
      %v8338 = vld [vmem:[%s3 + $0x57c] sm:$0xf]
      %v8355 = vunpack.c.l.b16 %v8323
      %v8356 = vunpack.c.l.b16 %v8324
      %v8357 = vunpack.c.l.b16 %v8325
      %v8358 = vunpack.c.l.b16 %v8326
      %v8359 = vunpack.c.l.b16 %v8327
      %v8360 = vunpack.c.l.b16 %v8328
      %v8361 = vunpack.c.l.b16 %v8329
      %v8362 = vunpack.c.l.b16 %v8330
      %v8363 = vunpack.c.l.b16 %v8331
      %v8364 = vunpack.c.l.b16 %v8332
      %v8365 = vunpack.c.l.b16 %v8333
      %v8366 = vunpack.c.l.b16 %v8334
      %v8367 = vunpack.c.l.b16 %v8335
      %v8368 = vunpack.c.l.b16 %v8336
      %v8369 = vunpack.c.l.b16 %v8337
      %v8370 = vunpack.c.l.b16 %v8338
      %v8371 = vpack.c.b16 %v8356, %v8355
      %v8372 = vpack.c.b16 %v8358, %v8357
      %v8373 = vpack.c.b16 %v8360, %v8359
      %v8374 = vpack.c.b16 %v8362, %v8361
      %v8375 = vpack.c.b16 %v8364, %v8363
      %v8376 = vpack.c.b16 %v8366, %v8365
      %v8377 = vpack.c.b16 %v8368, %v8367
      %v8378 = vpack.c.b16 %v8370, %v8369
      %8387 = vmatpush.bf16.msra.mxu0 %v8378
      %8388 = vmatpush.bf16.msra.mxu0 %v8377
      %8389 = vmatpush.bf16.msra.mxu0 %v8376
      %8390 = vmatpush.bf16.msra.mxu0 %v8375
      %8391 = vmatpush.bf16.msra.mxu0 %v8374
      %8392 = vmatpush.bf16.msra.mxu0 %v8373
      %8393 = vmatpush.bf16.msra.mxu0 %v8372
      %8394 = vmatpush.bf16.msra.mxu0 %v8371
      %8395 = vmatmul.bf16.gmra.mxu0 %v8315
      %v8396 = vpop.f32.mrf.mxu0
      %v8397 = vadd.f32 0.0, %v8396
      %v8398 = vpop.f32.mrf.mxu0
      %v8399 = vadd.f32 0.0, %v8398
      %8400 = vmatmul.bf16.gmra.mxu0 %v8316
      %v8401 = vpop.f32.mrf.mxu0
      %v8402 = vadd.f32 0.0, %v8401
      %v8403 = vpop.f32.mrf.mxu0
      %v8404 = vadd.f32 0.0, %v8403
      %8405 = vmatmul.bf16.gmra.mxu0 %v8317
      %v8406 = vpop.f32.mrf.mxu0
      %v8407 = vadd.f32 0.0, %v8406
      %v8408 = vpop.f32.mrf.mxu0
      %v8409 = vadd.f32 0.0, %v8408
      %8410 = vmatmul.bf16.gmra.mxu0 %v8318
      %v8411 = vpop.f32.mrf.mxu0
      %v8412 = vadd.f32 0.0, %v8411
      %v8413 = vpop.f32.mrf.mxu0
      %v8414 = vadd.f32 0.0, %v8413
      %8415 = vmatmul.bf16.gmra.mxu0 %v8319
      %v8416 = vpop.f32.mrf.mxu0
      %v8417 = vadd.f32 0.0, %v8416
      %v8418 = vpop.f32.mrf.mxu0
      %v8419 = vadd.f32 0.0, %v8418
      %8420 = vmatmul.bf16.gmra.mxu0 %v8320
      %v8421 = vpop.f32.mrf.mxu0
      %v8422 = vadd.f32 0.0, %v8421
      %v8423 = vpop.f32.mrf.mxu0
      %v8424 = vadd.f32 0.0, %v8423
      %8425 = vmatmul.bf16.gmra.mxu0 %v8321
      %v8426 = vpop.f32.mrf.mxu0
      %v8427 = vadd.f32 0.0, %v8426
      %v8428 = vpop.f32.mrf.mxu0
      %v8429 = vadd.f32 0.0, %v8428
      %8430 = vmatmul.bf16.gmra.mxu0 %v8322
      %v8431 = vpop.f32.mrf.mxu0
      %v8432 = vadd.f32 0.0, %v8431
      %v8433 = vpop.f32.mrf.mxu0
      %v8434 = vadd.f32 0.0, %v8433
      %8435 = vdwg.mxu0
      %v8436 = vadd.f32 %v8299, %v8397
      %v8437 = vadd.f32 %v8300, %v8399
      %v8438 = vadd.f32 %v8301, %v8402
      %v8439 = vadd.f32 %v8302, %v8404
      %v8440 = vadd.f32 %v8303, %v8407
      %v8441 = vadd.f32 %v8304, %v8409
      %v8442 = vadd.f32 %v8305, %v8412
      %v8443 = vadd.f32 %v8306, %v8414
      %v8444 = vadd.f32 %v8307, %v8417
      %v8445 = vadd.f32 %v8308, %v8419
      %v8446 = vadd.f32 %v8309, %v8422
      %v8447 = vadd.f32 %v8310, %v8424
      %v8448 = vadd.f32 %v8311, %v8427
      %v8449 = vadd.f32 %v8312, %v8429
      %v8450 = vadd.f32 %v8313, %v8432
      %v8451 = vadd.f32 %v8314, %v8434
      %v8452 = vmax.f32 %v8436, 0.0
      %v8453 = vmax.f32 %v8437, 0.0
      %v8454 = vmax.f32 %v8438, 0.0
      %v8455 = vmax.f32 %v8439, 0.0
      %v8456 = vmax.f32 %v8440, 0.0
      %v8457 = vmax.f32 %v8441, 0.0
      %v8458 = vmax.f32 %v8442, 0.0
      %v8459 = vmax.f32 %v8443, 0.0
      %v8460 = vmax.f32 %v8444, 0.0
      %v8461 = vmax.f32 %v8445, 0.0
      %v8462 = vmax.f32 %v8446, 0.0
      %v8463 = vmax.f32 %v8447, 0.0
      %v8464 = vmax.f32 %v8448, 0.0
      %v8465 = vmax.f32 %v8449, 0.0
      %v8466 = vmax.f32 %v8450, 0.0
      %v8467 = vmax.f32 %v8451, 0.0
      %v8468 = vpack.c.bf16 %v8453, %v8452
      %v8469 = vpack.c.bf16 %v8455, %v8454
      %v8470 = vpack.c.bf16 %v8457, %v8456
      %v8471 = vpack.c.bf16 %v8459, %v8458
      %v8472 = vpack.c.bf16 %v8461, %v8460
      %v8473 = vpack.c.bf16 %v8463, %v8462
      %v8474 = vpack.c.bf16 %v8465, %v8464
      %v8475 = vpack.c.bf16 %v8467, %v8466
      %v8476 = vld [vmem:[%s3 + $0x580] sm:$0xf]
      %v8477 = vld [vmem:[%s3 + $0x584] sm:$0xf]
      %v8478 = vld [vmem:[%s3 + $0x588] sm:$0xf]
      %v8479 = vld [vmem:[%s3 + $0x58c] sm:$0xf]
      %v8480 = vld [vmem:[%s3 + $0x590] sm:$0xf]
      %v8481 = vld [vmem:[%s3 + $0x594] sm:$0xf]
      %v8482 = vld [vmem:[%s3 + $0x598] sm:$0xf]
      %v8483 = vld [vmem:[%s3 + $0x59c] sm:$0xf]
      %v8484 = vld [vmem:[%s3 + $0x5a0] sm:$0xf]
      %v8485 = vld [vmem:[%s3 + $0x5a4] sm:$0xf]
      %v8486 = vld [vmem:[%s3 + $0x5a8] sm:$0xf]
      %v8487 = vld [vmem:[%s3 + $0x5ac] sm:$0xf]
      %v8488 = vld [vmem:[%s3 + $0x5b0] sm:$0xf]
      %v8489 = vld [vmem:[%s3 + $0x5b4] sm:$0xf]
      %v8490 = vld [vmem:[%s3 + $0x5b8] sm:$0xf]
      %v8491 = vld [vmem:[%s3 + $0x5bc] sm:$0xf]
      %v8492 = vld [vmem:[%s4 + $0x1a] sm:$0x1]
      %v8493 = vperm.slane %v8492, 0
      %v8510 = vunpack.c.l.b16 %v8476
      %v8511 = vunpack.c.l.b16 %v8477
      %v8512 = vunpack.c.l.b16 %v8478
      %v8513 = vunpack.c.l.b16 %v8479
      %v8514 = vunpack.c.l.b16 %v8480
      %v8515 = vunpack.c.l.b16 %v8481
      %v8516 = vunpack.c.l.b16 %v8482
      %v8517 = vunpack.c.l.b16 %v8483
      %v8518 = vunpack.c.l.b16 %v8484
      %v8519 = vunpack.c.l.b16 %v8485
      %v8520 = vunpack.c.l.b16 %v8486
      %v8521 = vunpack.c.l.b16 %v8487
      %v8522 = vunpack.c.l.b16 %v8488
      %v8523 = vunpack.c.l.b16 %v8489
      %v8524 = vunpack.c.l.b16 %v8490
      %v8525 = vunpack.c.l.b16 %v8491
      %v8526 = vpack.c.b16 %v8511, %v8510
      %v8527 = vpack.c.b16 %v8513, %v8512
      %v8528 = vpack.c.b16 %v8515, %v8514
      %v8529 = vpack.c.b16 %v8517, %v8516
      %v8530 = vpack.c.b16 %v8519, %v8518
      %v8531 = vpack.c.b16 %v8521, %v8520
      %v8532 = vpack.c.b16 %v8523, %v8522
      %v8533 = vpack.c.b16 %v8525, %v8524
      %8542 = vmatpush.bf16.msra.mxu0 %v8533
      %8543 = vmatpush.bf16.msra.mxu0 %v8532
      %8544 = vmatpush.bf16.msra.mxu0 %v8531
      %8545 = vmatpush.bf16.msra.mxu0 %v8530
      %8546 = vmatpush.bf16.msra.mxu0 %v8529
      %8547 = vmatpush.bf16.msra.mxu0 %v8528
      %8548 = vmatpush.bf16.msra.mxu0 %v8527
      %8549 = vmatpush.bf16.msra.mxu0 %v8526
      %8550 = vmatmul.bf16.gmra.mxu0 %v8468
      %v8551 = vpop.f32.mrf.mxu0
      %v8552 = vadd.f32 %v8493, %v8551
      %v8553 = vpop.f32.mrf.mxu0
      %v8554 = vadd.f32 %v8493, %v8553
      %8555 = vmatmul.bf16.gmra.mxu0 %v8469
      %v8556 = vpop.f32.mrf.mxu0
      %v8557 = vadd.f32 %v8493, %v8556
      %v8558 = vpop.f32.mrf.mxu0
      %v8559 = vadd.f32 %v8493, %v8558
      %8560 = vmatmul.bf16.gmra.mxu0 %v8470
      %v8561 = vpop.f32.mrf.mxu0
      %v8562 = vadd.f32 %v8493, %v8561
      %v8563 = vpop.f32.mrf.mxu0
      %v8564 = vadd.f32 %v8493, %v8563
      %8565 = vmatmul.bf16.gmra.mxu0 %v8471
      %v8566 = vpop.f32.mrf.mxu0
      %v8567 = vadd.f32 %v8493, %v8566
      %v8568 = vpop.f32.mrf.mxu0
      %v8569 = vadd.f32 %v8493, %v8568
      %8570 = vmatmul.bf16.gmra.mxu0 %v8472
      %v8571 = vpop.f32.mrf.mxu0
      %v8572 = vadd.f32 %v8493, %v8571
      %v8573 = vpop.f32.mrf.mxu0
      %v8574 = vadd.f32 %v8493, %v8573
      %8575 = vmatmul.bf16.gmra.mxu0 %v8473
      %v8576 = vpop.f32.mrf.mxu0
      %v8577 = vadd.f32 %v8493, %v8576
      %v8578 = vpop.f32.mrf.mxu0
      %v8579 = vadd.f32 %v8493, %v8578
      %8580 = vmatmul.bf16.gmra.mxu0 %v8474
      %v8581 = vpop.f32.mrf.mxu0
      %v8582 = vadd.f32 %v8493, %v8581
      %v8583 = vpop.f32.mrf.mxu0
      %v8584 = vadd.f32 %v8493, %v8583
      %8585 = vmatmul.bf16.gmra.mxu0 %v8475
      %v8586 = vpop.f32.mrf.mxu0
      %v8587 = vadd.f32 %v8493, %v8586
      %v8588 = vpop.f32.mrf.mxu0
      %v8589 = vadd.f32 %v8493, %v8588
      %8590 = vdwg.mxu0
      %v8591 = vmax.f32 %v8552, 0.0
      %v8592 = vmax.f32 %v8554, 0.0
      %v8593 = vmax.f32 %v8557, 0.0
      %v8594 = vmax.f32 %v8559, 0.0
      %v8595 = vmax.f32 %v8562, 0.0
      %v8596 = vmax.f32 %v8564, 0.0
      %v8597 = vmax.f32 %v8567, 0.0
      %v8598 = vmax.f32 %v8569, 0.0
      %v8599 = vmax.f32 %v8572, 0.0
      %v8600 = vmax.f32 %v8574, 0.0
      %v8601 = vmax.f32 %v8577, 0.0
      %v8602 = vmax.f32 %v8579, 0.0
      %v8603 = vmax.f32 %v8582, 0.0
      %v8604 = vmax.f32 %v8584, 0.0
      %v8605 = vmax.f32 %v8587, 0.0
      %v8606 = vmax.f32 %v8589, 0.0
      %v8607 = vpack.c.bf16 %v8592, %v8591
      %v8608 = vpack.c.bf16 %v8594, %v8593
      %v8609 = vpack.c.bf16 %v8596, %v8595
      %v8610 = vpack.c.bf16 %v8598, %v8597
      %v8611 = vpack.c.bf16 %v8600, %v8599
      %v8612 = vpack.c.bf16 %v8602, %v8601
      %v8613 = vpack.c.bf16 %v8604, %v8603
      %v8614 = vpack.c.bf16 %v8606, %v8605
      %v8615 = vld [vmem:[%s3 + $0x5c0] sm:$0xf]
      %v8616 = vld [vmem:[%s3 + $0x5c4] sm:$0xf]
      %v8617 = vld [vmem:[%s3 + $0x5c8] sm:$0xf]
      %v8618 = vld [vmem:[%s3 + $0x5cc] sm:$0xf]
      %v8619 = vld [vmem:[%s3 + $0x5d0] sm:$0xf]
      %v8620 = vld [vmem:[%s3 + $0x5d4] sm:$0xf]
      %v8621 = vld [vmem:[%s3 + $0x5d8] sm:$0xf]
      %v8622 = vld [vmem:[%s3 + $0x5dc] sm:$0xf]
      %v8623 = vld [vmem:[%s3 + $0x5e0] sm:$0xf]
      %v8624 = vld [vmem:[%s3 + $0x5e4] sm:$0xf]
      %v8625 = vld [vmem:[%s3 + $0x5e8] sm:$0xf]
      %v8626 = vld [vmem:[%s3 + $0x5ec] sm:$0xf]
      %v8627 = vld [vmem:[%s3 + $0x5f0] sm:$0xf]
      %v8628 = vld [vmem:[%s3 + $0x5f4] sm:$0xf]
      %v8629 = vld [vmem:[%s3 + $0x5f8] sm:$0xf]
      %v8630 = vld [vmem:[%s3 + $0x5fc] sm:$0xf]
      %v8631 = vld [vmem:[%s4 + $0x1b] sm:$0x1]
      %v8632 = vperm.slane %v8631, 0
      %v8649 = vunpack.c.l.b16 %v8615
      %v8650 = vunpack.c.l.b16 %v8616
      %v8651 = vunpack.c.l.b16 %v8617
      %v8652 = vunpack.c.l.b16 %v8618
      %v8653 = vunpack.c.l.b16 %v8619
      %v8654 = vunpack.c.l.b16 %v8620
      %v8655 = vunpack.c.l.b16 %v8621
      %v8656 = vunpack.c.l.b16 %v8622
      %v8657 = vunpack.c.l.b16 %v8623
      %v8658 = vunpack.c.l.b16 %v8624
      %v8659 = vunpack.c.l.b16 %v8625
      %v8660 = vunpack.c.l.b16 %v8626
      %v8661 = vunpack.c.l.b16 %v8627
      %v8662 = vunpack.c.l.b16 %v8628
      %v8663 = vunpack.c.l.b16 %v8629
      %v8664 = vunpack.c.l.b16 %v8630
      %v8665 = vpack.c.b16 %v8650, %v8649
      %v8666 = vpack.c.b16 %v8652, %v8651
      %v8667 = vpack.c.b16 %v8654, %v8653
      %v8668 = vpack.c.b16 %v8656, %v8655
      %v8669 = vpack.c.b16 %v8658, %v8657
      %v8670 = vpack.c.b16 %v8660, %v8659
      %v8671 = vpack.c.b16 %v8662, %v8661
      %v8672 = vpack.c.b16 %v8664, %v8663
      %8681 = vmatpush.bf16.msra.mxu0 %v8672
      %8682 = vmatpush.bf16.msra.mxu0 %v8671
      %8683 = vmatpush.bf16.msra.mxu0 %v8670
      %8684 = vmatpush.bf16.msra.mxu0 %v8669
      %8685 = vmatpush.bf16.msra.mxu0 %v8668
      %8686 = vmatpush.bf16.msra.mxu0 %v8667
      %8687 = vmatpush.bf16.msra.mxu0 %v8666
      %8688 = vmatpush.bf16.msra.mxu0 %v8665
      %8689 = vmatmul.bf16.gmra.mxu0 %v8607
      %v8690 = vpop.f32.mrf.mxu0
      %v8691 = vadd.f32 %v8632, %v8690
      %v8692 = vpop.f32.mrf.mxu0
      %v8693 = vadd.f32 %v8632, %v8692
      %8694 = vmatmul.bf16.gmra.mxu0 %v8608
      %v8695 = vpop.f32.mrf.mxu0
      %v8696 = vadd.f32 %v8632, %v8695
      %v8697 = vpop.f32.mrf.mxu0
      %v8698 = vadd.f32 %v8632, %v8697
      %8699 = vmatmul.bf16.gmra.mxu0 %v8609
      %v8700 = vpop.f32.mrf.mxu0
      %v8701 = vadd.f32 %v8632, %v8700
      %v8702 = vpop.f32.mrf.mxu0
      %v8703 = vadd.f32 %v8632, %v8702
      %8704 = vmatmul.bf16.gmra.mxu0 %v8610
      %v8705 = vpop.f32.mrf.mxu0
      %v8706 = vadd.f32 %v8632, %v8705
      %v8707 = vpop.f32.mrf.mxu0
      %v8708 = vadd.f32 %v8632, %v8707
      %8709 = vmatmul.bf16.gmra.mxu0 %v8611
      %v8710 = vpop.f32.mrf.mxu0
      %v8711 = vadd.f32 %v8632, %v8710
      %v8712 = vpop.f32.mrf.mxu0
      %v8713 = vadd.f32 %v8632, %v8712
      %8714 = vmatmul.bf16.gmra.mxu0 %v8612
      %v8715 = vpop.f32.mrf.mxu0
      %v8716 = vadd.f32 %v8632, %v8715
      %v8717 = vpop.f32.mrf.mxu0
      %v8718 = vadd.f32 %v8632, %v8717
      %8719 = vmatmul.bf16.gmra.mxu0 %v8613
      %v8720 = vpop.f32.mrf.mxu0
      %v8721 = vadd.f32 %v8632, %v8720
      %v8722 = vpop.f32.mrf.mxu0
      %v8723 = vadd.f32 %v8632, %v8722
      %8724 = vmatmul.bf16.gmra.mxu0 %v8614
      %v8725 = vpop.f32.mrf.mxu0
      %v8726 = vadd.f32 %v8632, %v8725
      %v8727 = vpop.f32.mrf.mxu0
      %v8728 = vadd.f32 %v8632, %v8727
      %8729 = vdwg.mxu0
      %8730 = vadd.xlane.f32.xlu0 %v8691
      %v8731 = vpop.xlane.xlu0 %8730
      %8732 = vadd.xlane.f32.xlu0 %v8693
      %v8733 = vpop.xlane.xlu0 %8732
      %8734 = vadd.xlane.f32.xlu0 %v8696
      %v8735 = vpop.xlane.xlu0 %8734
      %8736 = vadd.xlane.f32.xlu0 %v8698
      %v8737 = vpop.xlane.xlu0 %8736
      %8738 = vadd.xlane.f32.xlu0 %v8701
      %v8739 = vpop.xlane.xlu0 %8738
      %8740 = vadd.xlane.f32.xlu0 %v8703
      %v8741 = vpop.xlane.xlu0 %8740
      %8742 = vadd.xlane.f32.xlu0 %v8706
      %v8743 = vpop.xlane.xlu0 %8742
      %8744 = vadd.xlane.f32.xlu0 %v8708
      %v8745 = vpop.xlane.xlu0 %8744
      %8746 = vadd.xlane.f32.xlu0 %v8711
      %v8747 = vpop.xlane.xlu0 %8746
      %8748 = vadd.xlane.f32.xlu0 %v8713
      %v8749 = vpop.xlane.xlu0 %8748
      %8750 = vadd.xlane.f32.xlu0 %v8716
      %v8751 = vpop.xlane.xlu0 %8750
      %8752 = vadd.xlane.f32.xlu0 %v8718
      %v8753 = vpop.xlane.xlu0 %8752
      %8754 = vadd.xlane.f32.xlu0 %v8721
      %v8755 = vpop.xlane.xlu0 %8754
      %8756 = vadd.xlane.f32.xlu0 %v8723
      %v8757 = vpop.xlane.xlu0 %8756
      %8758 = vadd.xlane.f32.xlu0 %v8726
      %v8759 = vpop.xlane.xlu0 %8758
      %8760 = vadd.xlane.f32.xlu0 %v8728
      %v8761 = vpop.xlane.xlu0 %8760
      %v8762 = vmul.f32 %v8731, 0.03125
      %v8763 = vmul.f32 %v8733, 0.03125
      %v8764 = vmul.f32 %v8735, 0.03125
      %v8765 = vmul.f32 %v8737, 0.03125
      %v8766 = vmul.f32 %v8739, 0.03125
      %v8767 = vmul.f32 %v8741, 0.03125
      %v8768 = vmul.f32 %v8743, 0.03125
      %v8769 = vmul.f32 %v8745, 0.03125
      %v8770 = vmul.f32 %v8747, 0.03125
      %v8771 = vmul.f32 %v8749, 0.03125
      %v8772 = vmul.f32 %v8751, 0.03125
      %v8773 = vmul.f32 %v8753, 0.03125
      %v8774 = vmul.f32 %v8755, 0.03125
      %v8775 = vmul.f32 %v8757, 0.03125
      %v8776 = vmul.f32 %v8759, 0.03125
      %v8777 = vmul.f32 %v8761, 0.03125
      %v8778 = vmul.f32 %v8691, %v8691
      %v8779 = vmul.f32 %v8693, %v8693
      %v8780 = vmul.f32 %v8696, %v8696
      %v8781 = vmul.f32 %v8698, %v8698
      %v8782 = vmul.f32 %v8701, %v8701
      %v8783 = vmul.f32 %v8703, %v8703
      %v8784 = vmul.f32 %v8706, %v8706
      %v8785 = vmul.f32 %v8708, %v8708
      %v8786 = vmul.f32 %v8711, %v8711
      %v8787 = vmul.f32 %v8713, %v8713
      %v8788 = vmul.f32 %v8716, %v8716
      %v8789 = vmul.f32 %v8718, %v8718
      %v8790 = vmul.f32 %v8721, %v8721
      %v8791 = vmul.f32 %v8723, %v8723
      %v8792 = vmul.f32 %v8726, %v8726
      %v8793 = vmul.f32 %v8728, %v8728
      %8794 = vadd.xlane.f32.xlu0 %v8778
      %v8795 = vpop.xlane.xlu0 %8794
      %8796 = vadd.xlane.f32.xlu0 %v8779
      %v8797 = vpop.xlane.xlu0 %8796
      %8798 = vadd.xlane.f32.xlu0 %v8780
      %v8799 = vpop.xlane.xlu0 %8798
      %8800 = vadd.xlane.f32.xlu0 %v8781
      %v8801 = vpop.xlane.xlu0 %8800
      %8802 = vadd.xlane.f32.xlu0 %v8782
      %v8803 = vpop.xlane.xlu0 %8802
      %8804 = vadd.xlane.f32.xlu0 %v8783
      %v8805 = vpop.xlane.xlu0 %8804
      %8806 = vadd.xlane.f32.xlu0 %v8784
      %v8807 = vpop.xlane.xlu0 %8806
      %8808 = vadd.xlane.f32.xlu0 %v8785
      %v8809 = vpop.xlane.xlu0 %8808
      %8810 = vadd.xlane.f32.xlu0 %v8786
      %v8811 = vpop.xlane.xlu0 %8810
      %8812 = vadd.xlane.f32.xlu0 %v8787
      %v8813 = vpop.xlane.xlu0 %8812
      %8814 = vadd.xlane.f32.xlu0 %v8788
      %v8815 = vpop.xlane.xlu0 %8814
      %8816 = vadd.xlane.f32.xlu0 %v8789
      %v8817 = vpop.xlane.xlu0 %8816
      %8818 = vadd.xlane.f32.xlu0 %v8790
      %v8819 = vpop.xlane.xlu0 %8818
      %8820 = vadd.xlane.f32.xlu0 %v8791
      %v8821 = vpop.xlane.xlu0 %8820
      %8822 = vadd.xlane.f32.xlu0 %v8792
      %v8823 = vpop.xlane.xlu0 %8822
      %8824 = vadd.xlane.f32.xlu0 %v8793
      %v8825 = vpop.xlane.xlu0 %8824
      %v8826 = vmul.f32 %v8795, 0.03125
      %v8827 = vmul.f32 %v8797, 0.03125
      %v8828 = vmul.f32 %v8799, 0.03125
      %v8829 = vmul.f32 %v8801, 0.03125
      %v8830 = vmul.f32 %v8803, 0.03125
      %v8831 = vmul.f32 %v8805, 0.03125
      %v8832 = vmul.f32 %v8807, 0.03125
      %v8833 = vmul.f32 %v8809, 0.03125
      %v8834 = vmul.f32 %v8811, 0.03125
      %v8835 = vmul.f32 %v8813, 0.03125
      %v8836 = vmul.f32 %v8815, 0.03125
      %v8837 = vmul.f32 %v8817, 0.03125
      %v8838 = vmul.f32 %v8819, 0.03125
      %v8839 = vmul.f32 %v8821, 0.03125
      %v8840 = vmul.f32 %v8823, 0.03125
      %v8841 = vmul.f32 %v8825, 0.03125
      %v8842 = vmul.f32 %v8762, %v8762
      %v8843 = vmul.f32 %v8763, %v8763
      %v8844 = vmul.f32 %v8764, %v8764
      %v8845 = vmul.f32 %v8765, %v8765
      %v8846 = vmul.f32 %v8766, %v8766
      %v8847 = vmul.f32 %v8767, %v8767
      %v8848 = vmul.f32 %v8768, %v8768
      %v8849 = vmul.f32 %v8769, %v8769
      %v8850 = vmul.f32 %v8770, %v8770
      %v8851 = vmul.f32 %v8771, %v8771
      %v8852 = vmul.f32 %v8772, %v8772
      %v8853 = vmul.f32 %v8773, %v8773
      %v8854 = vmul.f32 %v8774, %v8774
      %v8855 = vmul.f32 %v8775, %v8775
      %v8856 = vmul.f32 %v8776, %v8776
      %v8857 = vmul.f32 %v8777, %v8777
      %v8858 = vsub.f32 %v8826, %v8842
      %v8859 = vsub.f32 %v8827, %v8843
      %v8860 = vsub.f32 %v8828, %v8844
      %v8861 = vsub.f32 %v8829, %v8845
      %v8862 = vsub.f32 %v8830, %v8846
      %v8863 = vsub.f32 %v8831, %v8847
      %v8864 = vsub.f32 %v8832, %v8848
      %v8865 = vsub.f32 %v8833, %v8849
      %v8866 = vsub.f32 %v8834, %v8850
      %v8867 = vsub.f32 %v8835, %v8851
      %v8868 = vsub.f32 %v8836, %v8852
      %v8869 = vsub.f32 %v8837, %v8853
      %v8870 = vsub.f32 %v8838, %v8854
      %v8871 = vsub.f32 %v8839, %v8855
      %v8872 = vsub.f32 %v8840, %v8856
      %v8873 = vsub.f32 %v8841, %v8857
      %v8874 = vadd.f32 %v8858, 1e-05
      %v8875 = vadd.f32 %v8859, 1e-05
      %v8876 = vadd.f32 %v8860, 1e-05
      %v8877 = vadd.f32 %v8861, 1e-05
      %v8878 = vadd.f32 %v8862, 1e-05
      %v8879 = vadd.f32 %v8863, 1e-05
      %v8880 = vadd.f32 %v8864, 1e-05
      %v8881 = vadd.f32 %v8865, 1e-05
      %v8882 = vadd.f32 %v8866, 1e-05
      %v8883 = vadd.f32 %v8867, 1e-05
      %v8884 = vadd.f32 %v8868, 1e-05
      %v8885 = vadd.f32 %v8869, 1e-05
      %v8886 = vadd.f32 %v8870, 1e-05
      %v8887 = vadd.f32 %v8871, 1e-05
      %v8888 = vadd.f32 %v8872, 1e-05
      %v8889 = vadd.f32 %v8873, 1e-05
      %v8890 = vrsqrt.pop %v8874
      %v8891 = vmul.f32 %v8890, %v8874
      %v8892 = vmul.f32 %v8891, %v8890
      %v8893 = vmul.f32 0.5, %v8892
      %v8894 = vsub.f32 1.5, %v8893
      %v8895 = vmul.f32 %v8890, %v8894
      %vm8896 = vweird.f32 %v8874
      %vm8897 = vweird.f32 %v8890
      %vm8898 = vmor %vm8896, %vm8897
      %v8899 = vsel %vm8898, %v8890, %v8895
      %v8900 = vrsqrt.pop %v8875
      %v8901 = vmul.f32 %v8900, %v8875
      %v8902 = vmul.f32 %v8901, %v8900
      %v8903 = vmul.f32 0.5, %v8902
      %v8904 = vsub.f32 1.5, %v8903
      %v8905 = vmul.f32 %v8900, %v8904
      %vm8906 = vweird.f32 %v8875
      %vm8907 = vweird.f32 %v8900
      %vm8908 = vmor %vm8906, %vm8907
      %v8909 = vsel %vm8908, %v8900, %v8905
      %v8910 = vrsqrt.pop %v8876
      %v8911 = vmul.f32 %v8910, %v8876
      %v8912 = vmul.f32 %v8911, %v8910
      %v8913 = vmul.f32 0.5, %v8912
      %v8914 = vsub.f32 1.5, %v8913
      %v8915 = vmul.f32 %v8910, %v8914
      %vm8916 = vweird.f32 %v8876
      %vm8917 = vweird.f32 %v8910
      %vm8918 = vmor %vm8916, %vm8917
      %v8919 = vsel %vm8918, %v8910, %v8915
      %v8920 = vrsqrt.pop %v8877
      %v8921 = vmul.f32 %v8920, %v8877
      %v8922 = vmul.f32 %v8921, %v8920
      %v8923 = vmul.f32 0.5, %v8922
      %v8924 = vsub.f32 1.5, %v8923
      %v8925 = vmul.f32 %v8920, %v8924
      %vm8926 = vweird.f32 %v8877
      %vm8927 = vweird.f32 %v8920
      %vm8928 = vmor %vm8926, %vm8927
      %v8929 = vsel %vm8928, %v8920, %v8925
      %v8930 = vrsqrt.pop %v8878
      %v8931 = vmul.f32 %v8930, %v8878
      %v8932 = vmul.f32 %v8931, %v8930
      %v8933 = vmul.f32 0.5, %v8932
      %v8934 = vsub.f32 1.5, %v8933
      %v8935 = vmul.f32 %v8930, %v8934
      %vm8936 = vweird.f32 %v8878
      %vm8937 = vweird.f32 %v8930
      %vm8938 = vmor %vm8936, %vm8937
      %v8939 = vsel %vm8938, %v8930, %v8935
      %v8940 = vrsqrt.pop %v8879
      %v8941 = vmul.f32 %v8940, %v8879
      %v8942 = vmul.f32 %v8941, %v8940
      %v8943 = vmul.f32 0.5, %v8942
      %v8944 = vsub.f32 1.5, %v8943
      %v8945 = vmul.f32 %v8940, %v8944
      %vm8946 = vweird.f32 %v8879
      %vm8947 = vweird.f32 %v8940
      %vm8948 = vmor %vm8946, %vm8947
      %v8949 = vsel %vm8948, %v8940, %v8945
      %v8950 = vrsqrt.pop %v8880
      %v8951 = vmul.f32 %v8950, %v8880
      %v8952 = vmul.f32 %v8951, %v8950
      %v8953 = vmul.f32 0.5, %v8952
      %v8954 = vsub.f32 1.5, %v8953
      %v8955 = vmul.f32 %v8950, %v8954
      %vm8956 = vweird.f32 %v8880
      %vm8957 = vweird.f32 %v8950
      %vm8958 = vmor %vm8956, %vm8957
      %v8959 = vsel %vm8958, %v8950, %v8955
      %v8960 = vrsqrt.pop %v8881
      %v8961 = vmul.f32 %v8960, %v8881
      %v8962 = vmul.f32 %v8961, %v8960
      %v8963 = vmul.f32 0.5, %v8962
      %v8964 = vsub.f32 1.5, %v8963
      %v8965 = vmul.f32 %v8960, %v8964
      %vm8966 = vweird.f32 %v8881
      %vm8967 = vweird.f32 %v8960
      %vm8968 = vmor %vm8966, %vm8967
      %v8969 = vsel %vm8968, %v8960, %v8965
      %v8970 = vrsqrt.pop %v8882
      %v8971 = vmul.f32 %v8970, %v8882
      %v8972 = vmul.f32 %v8971, %v8970
      %v8973 = vmul.f32 0.5, %v8972
      %v8974 = vsub.f32 1.5, %v8973
      %v8975 = vmul.f32 %v8970, %v8974
      %vm8976 = vweird.f32 %v8882
      %vm8977 = vweird.f32 %v8970
      %vm8978 = vmor %vm8976, %vm8977
      %v8979 = vsel %vm8978, %v8970, %v8975
      %v8980 = vrsqrt.pop %v8883
      %v8981 = vmul.f32 %v8980, %v8883
      %v8982 = vmul.f32 %v8981, %v8980
      %v8983 = vmul.f32 0.5, %v8982
      %v8984 = vsub.f32 1.5, %v8983
      %v8985 = vmul.f32 %v8980, %v8984
      %vm8986 = vweird.f32 %v8883
      %vm8987 = vweird.f32 %v8980
      %vm8988 = vmor %vm8986, %vm8987
      %v8989 = vsel %vm8988, %v8980, %v8985
      %v8990 = vrsqrt.pop %v8884
      %v8991 = vmul.f32 %v8990, %v8884
      %v8992 = vmul.f32 %v8991, %v8990
      %v8993 = vmul.f32 0.5, %v8992
      %v8994 = vsub.f32 1.5, %v8993
      %v8995 = vmul.f32 %v8990, %v8994
      %vm8996 = vweird.f32 %v8884
      %vm8997 = vweird.f32 %v8990
      %vm8998 = vmor %vm8996, %vm8997
      %v8999 = vsel %vm8998, %v8990, %v8995
      %v9000 = vrsqrt.pop %v8885
      %v9001 = vmul.f32 %v9000, %v8885
      %v9002 = vmul.f32 %v9001, %v9000
      %v9003 = vmul.f32 0.5, %v9002
      %v9004 = vsub.f32 1.5, %v9003
      %v9005 = vmul.f32 %v9000, %v9004
      %vm9006 = vweird.f32 %v8885
      %vm9007 = vweird.f32 %v9000
      %vm9008 = vmor %vm9006, %vm9007
      %v9009 = vsel %vm9008, %v9000, %v9005
      %v9010 = vrsqrt.pop %v8886
      %v9011 = vmul.f32 %v9010, %v8886
      %v9012 = vmul.f32 %v9011, %v9010
      %v9013 = vmul.f32 0.5, %v9012
      %v9014 = vsub.f32 1.5, %v9013
      %v9015 = vmul.f32 %v9010, %v9014
      %vm9016 = vweird.f32 %v8886
      %vm9017 = vweird.f32 %v9010
      %vm9018 = vmor %vm9016, %vm9017
      %v9019 = vsel %vm9018, %v9010, %v9015
      %v9020 = vrsqrt.pop %v8887
      %v9021 = vmul.f32 %v9020, %v8887
      %v9022 = vmul.f32 %v9021, %v9020
      %v9023 = vmul.f32 0.5, %v9022
      %v9024 = vsub.f32 1.5, %v9023
      %v9025 = vmul.f32 %v9020, %v9024
      %vm9026 = vweird.f32 %v8887
      %vm9027 = vweird.f32 %v9020
      %vm9028 = vmor %vm9026, %vm9027
      %v9029 = vsel %vm9028, %v9020, %v9025
      %v9030 = vrsqrt.pop %v8888
      %v9031 = vmul.f32 %v9030, %v8888
      %v9032 = vmul.f32 %v9031, %v9030
      %v9033 = vmul.f32 0.5, %v9032
      %v9034 = vsub.f32 1.5, %v9033
      %v9035 = vmul.f32 %v9030, %v9034
      %vm9036 = vweird.f32 %v8888
      %vm9037 = vweird.f32 %v9030
      %vm9038 = vmor %vm9036, %vm9037
      %v9039 = vsel %vm9038, %v9030, %v9035
      %v9040 = vrsqrt.pop %v8889
      %v9041 = vmul.f32 %v9040, %v8889
      %v9042 = vmul.f32 %v9041, %v9040
      %v9043 = vmul.f32 0.5, %v9042
      %v9044 = vsub.f32 1.5, %v9043
      %v9045 = vmul.f32 %v9040, %v9044
      %vm9046 = vweird.f32 %v8889
      %vm9047 = vweird.f32 %v9040
      %vm9048 = vmor %vm9046, %vm9047
      %v9049 = vsel %vm9048, %v9040, %v9045
      %v9050 = vsub.f32 %v8691, %v8762
      %v9051 = vsub.f32 %v8693, %v8763
      %v9052 = vsub.f32 %v8696, %v8764
      %v9053 = vsub.f32 %v8698, %v8765
      %v9054 = vsub.f32 %v8701, %v8766
      %v9055 = vsub.f32 %v8703, %v8767
      %v9056 = vsub.f32 %v8706, %v8768
      %v9057 = vsub.f32 %v8708, %v8769
      %v9058 = vsub.f32 %v8711, %v8770
      %v9059 = vsub.f32 %v8713, %v8771
      %v9060 = vsub.f32 %v8716, %v8772
      %v9061 = vsub.f32 %v8718, %v8773
      %v9062 = vsub.f32 %v8721, %v8774
      %v9063 = vsub.f32 %v8723, %v8775
      %v9064 = vsub.f32 %v8726, %v8776
      %v9065 = vsub.f32 %v8728, %v8777
      %v9066 = vmul.f32 %v9050, %v8899
      %v9067 = vmul.f32 %v9051, %v8909
      %v9068 = vmul.f32 %v9052, %v8919
      %v9069 = vmul.f32 %v9053, %v8929
      %v9070 = vmul.f32 %v9054, %v8939
      %v9071 = vmul.f32 %v9055, %v8949
      %v9072 = vmul.f32 %v9056, %v8959
      %v9073 = vmul.f32 %v9057, %v8969
      %v9074 = vmul.f32 %v9058, %v8979
      %v9075 = vmul.f32 %v9059, %v8989
      %v9076 = vmul.f32 %v9060, %v8999
      %v9077 = vmul.f32 %v9061, %v9009
      %v9078 = vmul.f32 %v9062, %v9019
      %v9079 = vmul.f32 %v9063, %v9029
      %v9080 = vmul.f32 %v9064, %v9039
      %v9081 = vmul.f32 %v9065, %v9049
      %v9082 = vld [vmem:[%s4 + $0x1c] sm:$0x1]
      %v9083 = vperm.slane %v9082, 0
      %v9084 = vmul.f32 %v9066, %v9083
      %v9085 = vmul.f32 %v9067, %v9083
      %v9086 = vmul.f32 %v9068, %v9083
      %v9087 = vmul.f32 %v9069, %v9083
      %v9088 = vmul.f32 %v9070, %v9083
      %v9089 = vmul.f32 %v9071, %v9083
      %v9090 = vmul.f32 %v9072, %v9083
      %v9091 = vmul.f32 %v9073, %v9083
      %v9092 = vmul.f32 %v9074, %v9083
      %v9093 = vmul.f32 %v9075, %v9083
      %v9094 = vmul.f32 %v9076, %v9083
      %v9095 = vmul.f32 %v9077, %v9083
      %v9096 = vmul.f32 %v9078, %v9083
      %v9097 = vmul.f32 %v9079, %v9083
      %v9098 = vmul.f32 %v9080, %v9083
      %v9099 = vmul.f32 %v9081, %v9083
      %v9100 = vld [vmem:[%s4 + $0x1d] sm:$0x1]
      %v9101 = vperm.slane %v9100, 0
      %v9102 = vadd.f32 %v9084, %v9101
      %v9103 = vadd.f32 %v9085, %v9101
      %v9104 = vadd.f32 %v9086, %v9101
      %v9105 = vadd.f32 %v9087, %v9101
      %v9106 = vadd.f32 %v9088, %v9101
      %v9107 = vadd.f32 %v9089, %v9101
      %v9108 = vadd.f32 %v9090, %v9101
      %v9109 = vadd.f32 %v9091, %v9101
      %v9110 = vadd.f32 %v9092, %v9101
      %v9111 = vadd.f32 %v9093, %v9101
      %v9112 = vadd.f32 %v9094, %v9101
      %v9113 = vadd.f32 %v9095, %v9101
      %v9114 = vadd.f32 %v9096, %v9101
      %v9115 = vadd.f32 %v9097, %v9101
      %v9116 = vadd.f32 %v9098, %v9101
      %v9117 = vadd.f32 %v9099, %v9101
      %v9118 = vadd.f32 %v6053, %v9102
      %v9119 = vadd.f32 %v6054, %v9103
      %v9120 = vadd.f32 %v6055, %v9104
      %v9121 = vadd.f32 %v6056, %v9105
      %v9122 = vadd.f32 %v6057, %v9106
      %v9123 = vadd.f32 %v6058, %v9107
      %v9124 = vadd.f32 %v6059, %v9108
      %v9125 = vadd.f32 %v6060, %v9109
      %v9126 = vadd.f32 %v6061, %v9110
      %v9127 = vadd.f32 %v6062, %v9111
      %v9128 = vadd.f32 %v6063, %v9112
      %v9129 = vadd.f32 %v6064, %v9113
      %v9130 = vadd.f32 %v6065, %v9114
      %v9131 = vadd.f32 %v6066, %v9115
      %v9132 = vadd.f32 %v6067, %v9116
      %v9133 = vadd.f32 %v6068, %v9117
      %v9134 = vld [vmem:[%s4 + $0x1e] sm:$0x1]
      %v9135 = vpack.c.bf16 %v9119, %v9118
      %v9136 = vpack.c.bf16 %v9121, %v9120
      %v9137 = vpack.c.bf16 %v9123, %v9122
      %v9138 = vpack.c.bf16 %v9125, %v9124
      %v9139 = vpack.c.bf16 %v9127, %v9126
      %v9140 = vpack.c.bf16 %v9129, %v9128
      %v9141 = vpack.c.bf16 %v9131, %v9130
      %v9142 = vpack.c.bf16 %v9133, %v9132
      %v9143 = vld [vmem:[%s3 + $0x600] sm:$0xf]
      %v9144 = vld [vmem:[%s3 + $0x604] sm:$0xf]
      %v9145 = vld [vmem:[%s3 + $0x608] sm:$0xf]
      %v9146 = vld [vmem:[%s3 + $0x60c] sm:$0xf]
      %v9147 = vld [vmem:[%s3 + $0x610] sm:$0xf]
      %v9148 = vld [vmem:[%s3 + $0x614] sm:$0xf]
      %v9149 = vld [vmem:[%s3 + $0x618] sm:$0xf]
      %v9150 = vld [vmem:[%s3 + $0x61c] sm:$0xf]
      %v9151 = vld [vmem:[%s3 + $0x620] sm:$0xf]
      %v9152 = vld [vmem:[%s3 + $0x624] sm:$0xf]
      %v9153 = vld [vmem:[%s3 + $0x628] sm:$0xf]
      %v9154 = vld [vmem:[%s3 + $0x62c] sm:$0xf]
      %v9155 = vld [vmem:[%s3 + $0x630] sm:$0xf]
      %v9156 = vld [vmem:[%s3 + $0x634] sm:$0xf]
      %v9157 = vld [vmem:[%s3 + $0x638] sm:$0xf]
      %v9158 = vld [vmem:[%s3 + $0x63c] sm:$0xf]
      %v9175 = vunpack.c.l.b16 %v9143
      %v9176 = vunpack.c.l.b16 %v9144
      %v9177 = vunpack.c.l.b16 %v9145
      %v9178 = vunpack.c.l.b16 %v9146
      %v9179 = vunpack.c.l.b16 %v9147
      %v9180 = vunpack.c.l.b16 %v9148
      %v9181 = vunpack.c.l.b16 %v9149
      %v9182 = vunpack.c.l.b16 %v9150
      %v9183 = vunpack.c.l.b16 %v9151
      %v9184 = vunpack.c.l.b16 %v9152
      %v9185 = vunpack.c.l.b16 %v9153
      %v9186 = vunpack.c.l.b16 %v9154
      %v9187 = vunpack.c.l.b16 %v9155
      %v9188 = vunpack.c.l.b16 %v9156
      %v9189 = vunpack.c.l.b16 %v9157
      %v9190 = vunpack.c.l.b16 %v9158
      %v9191 = vpack.c.b16 %v9176, %v9175
      %v9192 = vpack.c.b16 %v9178, %v9177
      %v9193 = vpack.c.b16 %v9180, %v9179
      %v9194 = vpack.c.b16 %v9182, %v9181
      %v9195 = vpack.c.b16 %v9184, %v9183
      %v9196 = vpack.c.b16 %v9186, %v9185
      %v9197 = vpack.c.b16 %v9188, %v9187
      %v9198 = vpack.c.b16 %v9190, %v9189
      %9207 = vmatpush.bf16.msra.mxu0 %v9198
      %9208 = vmatpush.bf16.msra.mxu0 %v9197
      %9209 = vmatpush.bf16.msra.mxu0 %v9196
      %9210 = vmatpush.bf16.msra.mxu0 %v9195
      %9211 = vmatpush.bf16.msra.mxu0 %v9194
      %9212 = vmatpush.bf16.msra.mxu0 %v9193
      %9213 = vmatpush.bf16.msra.mxu0 %v9192
      %9214 = vmatpush.bf16.msra.mxu0 %v9191
      %9215 = vmatmul.bf16.gmra.mxu0 %v9135
      %v9216 = vpop.f32.mrf.mxu0
      %v9217 = vadd.f32 0.0, %v9216
      %v9218 = vpop.f32.mrf.mxu0
      %v9219 = vadd.f32 0.0, %v9218
      %9220 = vmatmul.bf16.gmra.mxu0 %v9136
      %v9221 = vpop.f32.mrf.mxu0
      %v9222 = vadd.f32 0.0, %v9221
      %v9223 = vpop.f32.mrf.mxu0
      %v9224 = vadd.f32 0.0, %v9223
      %9225 = vmatmul.bf16.gmra.mxu0 %v9137
      %v9226 = vpop.f32.mrf.mxu0
      %v9227 = vadd.f32 0.0, %v9226
      %v9228 = vpop.f32.mrf.mxu0
      %v9229 = vadd.f32 0.0, %v9228
      %9230 = vmatmul.bf16.gmra.mxu0 %v9138
      %v9231 = vpop.f32.mrf.mxu0
      %v9232 = vadd.f32 0.0, %v9231
      %v9233 = vpop.f32.mrf.mxu0
      %v9234 = vadd.f32 0.0, %v9233
      %9235 = vmatmul.bf16.gmra.mxu0 %v9139
      %v9236 = vpop.f32.mrf.mxu0
      %v9237 = vadd.f32 0.0, %v9236
      %v9238 = vpop.f32.mrf.mxu0
      %v9239 = vadd.f32 0.0, %v9238
      %9240 = vmatmul.bf16.gmra.mxu0 %v9140
      %v9241 = vpop.f32.mrf.mxu0
      %v9242 = vadd.f32 0.0, %v9241
      %v9243 = vpop.f32.mrf.mxu0
      %v9244 = vadd.f32 0.0, %v9243
      %9245 = vmatmul.bf16.gmra.mxu0 %v9141
      %v9246 = vpop.f32.mrf.mxu0
      %v9247 = vadd.f32 0.0, %v9246
      %v9248 = vpop.f32.mrf.mxu0
      %v9249 = vadd.f32 0.0, %v9248
      %9250 = vmatmul.bf16.gmra.mxu0 %v9142
      %v9251 = vpop.f32.mrf.mxu0
      %v9252 = vadd.f32 0.0, %v9251
      %v9253 = vpop.f32.mrf.mxu0
      %v9254 = vadd.f32 0.0, %v9253
      %9255 = vdwg.mxu0
      %v9256 = vperm.slane %v9134, 0
      %v9257 = vadd.f32 %v9256, %v9217
      %v9258 = vadd.f32 %v9256, %v9219
      %v9259 = vadd.f32 %v9256, %v9222
      %v9260 = vadd.f32 %v9256, %v9224
      %v9261 = vadd.f32 %v9256, %v9227
      %v9262 = vadd.f32 %v9256, %v9229
      %v9263 = vadd.f32 %v9256, %v9232
      %v9264 = vadd.f32 %v9256, %v9234
      %v9265 = vadd.f32 %v9256, %v9237
      %v9266 = vadd.f32 %v9256, %v9239
      %v9267 = vadd.f32 %v9256, %v9242
      %v9268 = vadd.f32 %v9256, %v9244
      %v9269 = vadd.f32 %v9256, %v9247
      %v9270 = vadd.f32 %v9256, %v9249
      %v9271 = vadd.f32 %v9256, %v9252
      %v9272 = vadd.f32 %v9256, %v9254
      %v9273 = vmax.f32 %v9257, 0.0
      %v9274 = vmax.f32 %v9258, 0.0
      %v9275 = vmax.f32 %v9259, 0.0
      %v9276 = vmax.f32 %v9260, 0.0
      %v9277 = vmax.f32 %v9261, 0.0
      %v9278 = vmax.f32 %v9262, 0.0
      %v9279 = vmax.f32 %v9263, 0.0
      %v9280 = vmax.f32 %v9264, 0.0
      %v9281 = vmax.f32 %v9265, 0.0
      %v9282 = vmax.f32 %v9266, 0.0
      %v9283 = vmax.f32 %v9267, 0.0
      %v9284 = vmax.f32 %v9268, 0.0
      %v9285 = vmax.f32 %v9269, 0.0
      %v9286 = vmax.f32 %v9270, 0.0
      %v9287 = vmax.f32 %v9271, 0.0
      %v9288 = vmax.f32 %v9272, 0.0
      %v9289 = vpack.c.bf16 %v9274, %v9273
      %v9290 = vpack.c.bf16 %v9276, %v9275
      %v9291 = vpack.c.bf16 %v9278, %v9277
      %v9292 = vpack.c.bf16 %v9280, %v9279
      %v9293 = vpack.c.bf16 %v9282, %v9281
      %v9294 = vpack.c.bf16 %v9284, %v9283
      %v9295 = vpack.c.bf16 %v9286, %v9285
      %v9296 = vpack.c.bf16 %v9288, %v9287
      %v9297 = vld [vmem:[%s3 + $0x640] sm:$0xf]
      %v9298 = vld [vmem:[%s3 + $0x644] sm:$0xf]
      %v9299 = vld [vmem:[%s3 + $0x648] sm:$0xf]
      %v9300 = vld [vmem:[%s3 + $0x64c] sm:$0xf]
      %v9301 = vld [vmem:[%s3 + $0x650] sm:$0xf]
      %v9302 = vld [vmem:[%s3 + $0x654] sm:$0xf]
      %v9303 = vld [vmem:[%s3 + $0x658] sm:$0xf]
      %v9304 = vld [vmem:[%s3 + $0x65c] sm:$0xf]
      %v9305 = vld [vmem:[%s3 + $0x660] sm:$0xf]
      %v9306 = vld [vmem:[%s3 + $0x664] sm:$0xf]
      %v9307 = vld [vmem:[%s3 + $0x668] sm:$0xf]
      %v9308 = vld [vmem:[%s3 + $0x66c] sm:$0xf]
      %v9309 = vld [vmem:[%s3 + $0x670] sm:$0xf]
      %v9310 = vld [vmem:[%s3 + $0x674] sm:$0xf]
      %v9311 = vld [vmem:[%s3 + $0x678] sm:$0xf]
      %v9312 = vld [vmem:[%s3 + $0x67c] sm:$0xf]
      %v9313 = vld [vmem:[%s4 + $0x1f] sm:$0x1]
      %v9314 = vperm.slane %v9313, 0
      %v9331 = vunpack.c.l.b16 %v9297
      %v9332 = vunpack.c.l.b16 %v9298
      %v9333 = vunpack.c.l.b16 %v9299
      %v9334 = vunpack.c.l.b16 %v9300
      %v9335 = vunpack.c.l.b16 %v9301
      %v9336 = vunpack.c.l.b16 %v9302
      %v9337 = vunpack.c.l.b16 %v9303
      %v9338 = vunpack.c.l.b16 %v9304
      %v9339 = vunpack.c.l.b16 %v9305
      %v9340 = vunpack.c.l.b16 %v9306
      %v9341 = vunpack.c.l.b16 %v9307
      %v9342 = vunpack.c.l.b16 %v9308
      %v9343 = vunpack.c.l.b16 %v9309
      %v9344 = vunpack.c.l.b16 %v9310
      %v9345 = vunpack.c.l.b16 %v9311
      %v9346 = vunpack.c.l.b16 %v9312
      %v9347 = vpack.c.b16 %v9332, %v9331
      %v9348 = vpack.c.b16 %v9334, %v9333
      %v9349 = vpack.c.b16 %v9336, %v9335
      %v9350 = vpack.c.b16 %v9338, %v9337
      %v9351 = vpack.c.b16 %v9340, %v9339
      %v9352 = vpack.c.b16 %v9342, %v9341
      %v9353 = vpack.c.b16 %v9344, %v9343
      %v9354 = vpack.c.b16 %v9346, %v9345
      %9363 = vmatpush.bf16.msra.mxu0 %v9354
      %9364 = vmatpush.bf16.msra.mxu0 %v9353
      %9365 = vmatpush.bf16.msra.mxu0 %v9352
      %9366 = vmatpush.bf16.msra.mxu0 %v9351
      %9367 = vmatpush.bf16.msra.mxu0 %v9350
      %9368 = vmatpush.bf16.msra.mxu0 %v9349
      %9369 = vmatpush.bf16.msra.mxu0 %v9348
      %9370 = vmatpush.bf16.msra.mxu0 %v9347
      %9371 = vmatmul.bf16.gmra.mxu0 %v9289
      %v9372 = vpop.f32.mrf.mxu0
      %v9373 = vadd.f32 %v9314, %v9372
      %v9374 = vpop.f32.mrf.mxu0
      %v9375 = vadd.f32 %v9314, %v9374
      %9376 = vmatmul.bf16.gmra.mxu0 %v9290
      %v9377 = vpop.f32.mrf.mxu0
      %v9378 = vadd.f32 %v9314, %v9377
      %v9379 = vpop.f32.mrf.mxu0
      %v9380 = vadd.f32 %v9314, %v9379
      %9381 = vmatmul.bf16.gmra.mxu0 %v9291
      %v9382 = vpop.f32.mrf.mxu0
      %v9383 = vadd.f32 %v9314, %v9382
      %v9384 = vpop.f32.mrf.mxu0
      %v9385 = vadd.f32 %v9314, %v9384
      %9386 = vmatmul.bf16.gmra.mxu0 %v9292
      %v9387 = vpop.f32.mrf.mxu0
      %v9388 = vadd.f32 %v9314, %v9387
      %v9389 = vpop.f32.mrf.mxu0
      %v9390 = vadd.f32 %v9314, %v9389
      %9391 = vmatmul.bf16.gmra.mxu0 %v9293
      %v9392 = vpop.f32.mrf.mxu0
      %v9393 = vadd.f32 %v9314, %v9392
      %v9394 = vpop.f32.mrf.mxu0
      %v9395 = vadd.f32 %v9314, %v9394
      %9396 = vmatmul.bf16.gmra.mxu0 %v9294
      %v9397 = vpop.f32.mrf.mxu0
      %v9398 = vadd.f32 %v9314, %v9397
      %v9399 = vpop.f32.mrf.mxu0
      %v9400 = vadd.f32 %v9314, %v9399
      %9401 = vmatmul.bf16.gmra.mxu0 %v9295
      %v9402 = vpop.f32.mrf.mxu0
      %v9403 = vadd.f32 %v9314, %v9402
      %v9404 = vpop.f32.mrf.mxu0
      %v9405 = vadd.f32 %v9314, %v9404
      %9406 = vmatmul.bf16.gmra.mxu0 %v9296
      %v9407 = vpop.f32.mrf.mxu0
      %v9408 = vadd.f32 %v9314, %v9407
      %v9409 = vpop.f32.mrf.mxu0
      %v9410 = vadd.f32 %v9314, %v9409
      %9411 = vdwg.mxu0
      %v9412 = vmax.f32 %v9373, 0.0
      %v9413 = vmax.f32 %v9375, 0.0
      %v9414 = vmax.f32 %v9378, 0.0
      %v9415 = vmax.f32 %v9380, 0.0
      %v9416 = vmax.f32 %v9383, 0.0
      %v9417 = vmax.f32 %v9385, 0.0
      %v9418 = vmax.f32 %v9388, 0.0
      %v9419 = vmax.f32 %v9390, 0.0
      %v9420 = vmax.f32 %v9393, 0.0
      %v9421 = vmax.f32 %v9395, 0.0
      %v9422 = vmax.f32 %v9398, 0.0
      %v9423 = vmax.f32 %v9400, 0.0
      %v9424 = vmax.f32 %v9403, 0.0
      %v9425 = vmax.f32 %v9405, 0.0
      %v9426 = vmax.f32 %v9408, 0.0
      %v9427 = vmax.f32 %v9410, 0.0
      %v9428 = vpack.c.bf16 %v9413, %v9412
      %v9429 = vpack.c.bf16 %v9415, %v9414
      %v9430 = vpack.c.bf16 %v9417, %v9416
      %v9431 = vpack.c.bf16 %v9419, %v9418
      %v9432 = vpack.c.bf16 %v9421, %v9420
      %v9433 = vpack.c.bf16 %v9423, %v9422
      %v9434 = vpack.c.bf16 %v9425, %v9424
      %v9435 = vpack.c.bf16 %v9427, %v9426
      %v9436 = vld [vmem:[%s3 + $0x680] sm:$0xf]
      %v9437 = vld [vmem:[%s3 + $0x684] sm:$0xf]
      %v9438 = vld [vmem:[%s3 + $0x688] sm:$0xf]
      %v9439 = vld [vmem:[%s3 + $0x68c] sm:$0xf]
      %v9440 = vld [vmem:[%s3 + $0x690] sm:$0xf]
      %v9441 = vld [vmem:[%s3 + $0x694] sm:$0xf]
      %v9442 = vld [vmem:[%s3 + $0x698] sm:$0xf]
      %v9443 = vld [vmem:[%s3 + $0x69c] sm:$0xf]
      %v9444 = vld [vmem:[%s3 + $0x6a0] sm:$0xf]
      %v9445 = vld [vmem:[%s3 + $0x6a4] sm:$0xf]
      %v9446 = vld [vmem:[%s3 + $0x6a8] sm:$0xf]
      %v9447 = vld [vmem:[%s3 + $0x6ac] sm:$0xf]
      %v9448 = vld [vmem:[%s3 + $0x6b0] sm:$0xf]
      %v9449 = vld [vmem:[%s3 + $0x6b4] sm:$0xf]
      %v9450 = vld [vmem:[%s3 + $0x6b8] sm:$0xf]
      %v9451 = vld [vmem:[%s3 + $0x6bc] sm:$0xf]
      %v9452 = vld [vmem:[%s4 + $0x20] sm:$0x1]
      %v9453 = vperm.slane %v9452, 0
      %v9470 = vunpack.c.l.b16 %v9436
      %v9471 = vunpack.c.l.b16 %v9437
      %v9472 = vunpack.c.l.b16 %v9438
      %v9473 = vunpack.c.l.b16 %v9439
      %v9474 = vunpack.c.l.b16 %v9440
      %v9475 = vunpack.c.l.b16 %v9441
      %v9476 = vunpack.c.l.b16 %v9442
      %v9477 = vunpack.c.l.b16 %v9443
      %v9478 = vunpack.c.l.b16 %v9444
      %v9479 = vunpack.c.l.b16 %v9445
      %v9480 = vunpack.c.l.b16 %v9446
      %v9481 = vunpack.c.l.b16 %v9447
      %v9482 = vunpack.c.l.b16 %v9448
      %v9483 = vunpack.c.l.b16 %v9449
      %v9484 = vunpack.c.l.b16 %v9450
      %v9485 = vunpack.c.l.b16 %v9451
      %v9486 = vpack.c.b16 %v9471, %v9470
      %v9487 = vpack.c.b16 %v9473, %v9472
      %v9488 = vpack.c.b16 %v9475, %v9474
      %v9489 = vpack.c.b16 %v9477, %v9476
      %v9490 = vpack.c.b16 %v9479, %v9478
      %v9491 = vpack.c.b16 %v9481, %v9480
      %v9492 = vpack.c.b16 %v9483, %v9482
      %v9493 = vpack.c.b16 %v9485, %v9484
      %9502 = vmatpush.bf16.msra.mxu0 %v9493
      %9503 = vmatpush.bf16.msra.mxu0 %v9492
      %9504 = vmatpush.bf16.msra.mxu0 %v9491
      %9505 = vmatpush.bf16.msra.mxu0 %v9490
      %9506 = vmatpush.bf16.msra.mxu0 %v9489
      %9507 = vmatpush.bf16.msra.mxu0 %v9488
      %9508 = vmatpush.bf16.msra.mxu0 %v9487
      %9509 = vmatpush.bf16.msra.mxu0 %v9486
      %9510 = vmatmul.bf16.gmra.mxu0 %v9428
      %v9511 = vpop.f32.mrf.mxu0
      %v9512 = vadd.f32 %v9453, %v9511
      %v9513 = vpop.f32.mrf.mxu0
      %v9514 = vadd.f32 %v9453, %v9513
      %9515 = vmatmul.bf16.gmra.mxu0 %v9429
      %v9516 = vpop.f32.mrf.mxu0
      %v9517 = vadd.f32 %v9453, %v9516
      %v9518 = vpop.f32.mrf.mxu0
      %v9519 = vadd.f32 %v9453, %v9518
      %9520 = vmatmul.bf16.gmra.mxu0 %v9430
      %v9521 = vpop.f32.mrf.mxu0
      %v9522 = vadd.f32 %v9453, %v9521
      %v9523 = vpop.f32.mrf.mxu0
      %v9524 = vadd.f32 %v9453, %v9523
      %9525 = vmatmul.bf16.gmra.mxu0 %v9431
      %v9526 = vpop.f32.mrf.mxu0
      %v9527 = vadd.f32 %v9453, %v9526
      %v9528 = vpop.f32.mrf.mxu0
      %v9529 = vadd.f32 %v9453, %v9528
      %9530 = vmatmul.bf16.gmra.mxu0 %v9432
      %v9531 = vpop.f32.mrf.mxu0
      %v9532 = vadd.f32 %v9453, %v9531
      %v9533 = vpop.f32.mrf.mxu0
      %v9534 = vadd.f32 %v9453, %v9533
      %9535 = vmatmul.bf16.gmra.mxu0 %v9433
      %v9536 = vpop.f32.mrf.mxu0
      %v9537 = vadd.f32 %v9453, %v9536
      %v9538 = vpop.f32.mrf.mxu0
      %v9539 = vadd.f32 %v9453, %v9538
      %9540 = vmatmul.bf16.gmra.mxu0 %v9434
      %v9541 = vpop.f32.mrf.mxu0
      %v9542 = vadd.f32 %v9453, %v9541
      %v9543 = vpop.f32.mrf.mxu0
      %v9544 = vadd.f32 %v9453, %v9543
      %9545 = vmatmul.bf16.gmra.mxu0 %v9435
      %v9546 = vpop.f32.mrf.mxu0
      %v9547 = vadd.f32 %v9453, %v9546
      %v9548 = vpop.f32.mrf.mxu0
      %v9549 = vadd.f32 %v9453, %v9548
      %9550 = vdwg.mxu0
      %9551 = vst [vmem:[%s270] sm:$0xff] %v9512
      %9552 = vst [vmem:[%s270 + $0x8] sm:$0xff] %v9514
      %9553 = vst [vmem:[%s270 + $0x10] sm:$0xff] %v9517
      %9554 = vst [vmem:[%s270 + $0x18] sm:$0xff] %v9519
      %9555 = vst [vmem:[%s270 + $0x20] sm:$0xff] %v9522
      %9556 = vst [vmem:[%s270 + $0x28] sm:$0xff] %v9524
      %9557 = vst [vmem:[%s270 + $0x30] sm:$0xff] %v9527
      %9558 = vst [vmem:[%s270 + $0x38] sm:$0xff] %v9529
      %9559 = vst [vmem:[%s270 + $0x40] sm:$0xff] %v9532
      %9560 = vst [vmem:[%s270 + $0x48] sm:$0xff] %v9534
      %9561 = vst [vmem:[%s270 + $0x50] sm:$0xff] %v9537
      %9562 = vst [vmem:[%s270 + $0x58] sm:$0xff] %v9539
      %9563 = vst [vmem:[%s270 + $0x60] sm:$0xff] %v9542
      %9564 = vst [vmem:[%s270 + $0x68] sm:$0xff] %v9544
      %9565 = vst [vmem:[%s270 + $0x70] sm:$0xff] %v9547
      %9566 = vst [vmem:[%s270 + $0x78] sm:$0xff] %v9549
      %s9567 = smul.u32 16, %s16
      %p9568 = scmp.lt.s32.totalorder %s9567, 31
      %s9569 = scalar_select %p9568, %s9567, 31
      %s9570 = smul.addr %s9569, 8
      %s9571 = scalar_lea.vmem %s5, %s9570
      // Predicated region
      $region41: #{encode_process_decode.1} parent=39 // pred_check
        %p9572 = pneg %p154
      $region42: #{encode_process_decode.1} parent=39 // pred_check_branch
        %9574 = sbr.rel (%p9572) target = $region44
      $region43: #{encode_process_decode.1} parent=39 // pred_region
        %s9575 = smul.u32 16, %s16
      $region44: #{encode_process_decode.1} parent=39 // pred_fallthru
        _
    $region40: #{encode_process_decode.1} parent=5 // pred_fallthru
      _
    %p9576 = scmp.le.s32.totalorder 2, %s11
    // Predicated region
    $region45: #{encode_process_decode.1} parent=5 // pred_check
      %p9577 = pneg %p9576
    $region46: #{encode_process_decode.1} parent=5 // pred_check_branch
      %9579 = sbr.rel (%p9577) target = $region48
    $region47: #{encode_process_decode.1} parent=5 // pred_region
      %s9580 = ssub.s32 %s11, 2
      // Predicated region
      $region49: #{encode_process_decode.1} parent=47 // pred_check
        %p9581 = pneg %p160
      $region50: #{encode_process_decode.1} parent=47 // pred_check_branch
        %9583 = sbr.rel (%p9581) target = $region52
      $region51: #{encode_process_decode.1} parent=47 // pred_region
        %s9584 = smul.u32 16, %s17
        %p9585 = scmp.lt.s32.totalorder %s9584, 31
        %s9586 = scalar_select %p9585, %s9584, 31
        %s9587 = smul.addr %s9586, 8
        %s9588 = scalar_lea.vmem %s5, %s9587
      $region52: #{encode_process_decode.1} parent=47 // pred_fallthru
        _
    $region48: #{encode_process_decode.1} parent=5 // pred_fallthru
      _
  $region6: #{encode_process_decode.1} parent=0 // loop_footer
    %s15 = sadd.s32 1, %s11
  $region7: #{encode_process_decode.1} parent=0 // loop_footer_branch
    %10 = sbr.rel target = $region3
  $region8: #{encode_process_decode.1} parent=0 // loop_exit
    _

</llo_original>
